<compile_context>
chip_gen: v7x
topology: tpu7x:2x2x1
jax: 0.10.0
libtpu: 0.0.40
codegen_flags: <defaults>
</compile_context>

<pallas_src>
import functools
import math

import jax
import jax.numpy as jnp
from jax.experimental import pallas as pl
from jax.experimental.pallas import tpu as pltpu

BN_EPS = 1e-5
IN_EPS = 1e-3
DOT_DTYPE = jnp.bfloat16      # MXU operand dtype (f32 accumulation)
ACT_DTYPE = jnp.bfloat16      # HBM dtype for large intermediates

_VMEM_LIMIT_CACHE = None


def _vmem_limit():
    """Scoped-VMEM budget: ~3/4 of physical, capped at 100 MiB (v5e/v6e: ~96 MiB, v7x: ~48 MiB)."""
    global _VMEM_LIMIT_CACHE
    if _VMEM_LIMIT_CACHE is None:
        try:
            cap = int(pltpu.get_tpu_info().vmem_capacity_bytes)
        except Exception:
            cap = 64 * 1024 * 1024
        _VMEM_LIMIT_CACHE = min(cap * 3 // 4, 100 * 1024 * 1024)
    return _VMEM_LIMIT_CACHE


# --------------------------------------------------------------------------- #
# pallas_call helper: grid over the batch dimension, marked "parallel".
# --------------------------------------------------------------------------- #
def per_batch_call(kernel, batch, inputs, out_shapes, flops=0, transcendentals=0):
    """inputs: list of (array, kind). kind 'b' -> blocked (1, ...) per batch index,
    kind 'c' -> whole array visible to every grid step."""
    arrays, in_specs = [], []
    for arr, kind in inputs:
        arrays.append(arr)
        if kind == 'b':
            in_specs.append(
                pl.BlockSpec((1,) + arr.shape[1:],
                             lambda b, _n=arr.ndim - 1: (b,) + (0,) * _n))
        else:
            in_specs.append(
                pl.BlockSpec(arr.shape, lambda b, _n=arr.ndim: (0,) * _n))
    out_specs = tuple(
        pl.BlockSpec((1,) + s.shape[1:],
                     lambda b, _n=len(s.shape) - 1: (b,) + (0,) * _n)
        for s in out_shapes)
    bytes_accessed = (
        sum(int(a.size) * a.dtype.itemsize for a, _ in inputs)
        + sum(math.prod(s.shape) * s.dtype.itemsize for s in out_shapes))
    return pl.pallas_call(
        kernel,
        out_shape=tuple(out_shapes),
        grid=(batch,),
        in_specs=in_specs,
        out_specs=out_specs,
        compiler_params=pltpu.CompilerParams(
            dimension_semantics=("parallel",),
            vmem_limit_bytes=_vmem_limit()),
        cost_estimate=pl.CostEstimate(flops=int(flops),
                                      transcendentals=int(transcendentals),
                                      bytes_accessed=int(bytes_accessed)),
    )(*arrays)


# --------------------------------------------------------------------------- #
# Kernels
# --------------------------------------------------------------------------- #
def _kA_graph_cv1_kernel(xt_ref, wx_ref, wd_ref, b_ref,
                         h1_ref, diff_ref, stats_ref, *, N, K, C):
    """Fused: pairwise distance + in-kernel top-K + batched neighbour gather +
    conv1 (1,3)/stride(1,3) + BN(cv1) partial sums + per-sample IN stats of the
    graph feature (for mlp1).  The distance matrix never leaves VMEM."""
    C2 = 2 * C
    x = xt_ref[0].astype(jnp.float32)                                     # (N, C)
    x_bf = x.astype(DOT_DTYPE)

    # ---- kNN: -||xi-xj||^2 up to a per-row constant (dropped: can't change top-k).
    gram = jax.lax.dot_general(x, x, (((1,), (1,)), ((), ())),
                               preferred_element_type=jnp.float32)        # (N, N)
    ones = jnp.ones((1, C), jnp.float32)
    sq_row = jax.lax.dot_general(ones, x * x, (((1,), (1,)), ((), ())),
                                 preferred_element_type=jnp.float32)      # (1, N)
    d = 2.0 * gram - sq_row

    colsf = jax.lax.broadcasted_iota(jnp.int32, (N, N), 1).astype(jnp.float32)
    masked = jnp.float32(-1e30)
    onehots = []
    for _ in range(K):
        m = jnp.max(d, axis=1, keepdims=True)                             # (N, 1)
        j_sel = jnp.min(jnp.where(d >= m, colsf, jnp.float32(N)),
                        axis=1, keepdims=True)                            # (N, 1)
        eq = colsf == j_sel
        onehots.append(jnp.where(eq, 1.0, 0.0))
        d = jnp.where(eq, masked, d)

    # ---- batched neighbour gather: one (K*N, N) @ (N, C) bf16 MXU op.
    onehot_all = jnp.concatenate(onehots, axis=0).astype(DOT_DTYPE)       # (K*N, N)
    nbr = jnp.dot(onehot_all, x_bf, preferred_element_type=jnp.float32)   # (K*N, C)
    diff = jnp.concatenate([x] * K, axis=0) - nbr                         # (K*N, C)
    diff_ref[0] = diff.astype(diff_ref.dtype)

    # ---- per-sample InstanceNorm stats of [x | x - nbr] over the N*K extent.
    inv_n = 1.0 / float(N)
    mu_x = jnp.sum(x, axis=0, keepdims=True) * inv_n
    var_x = jnp.sum(x * x, axis=0, keepdims=True) * inv_n - mu_x * mu_x
    inv_nk = 1.0 / float(N * K)
    mu_d = jnp.sum(diff, axis=0, keepdims=True) * inv_nk
    var_d = jnp.sum(diff * diff, axis=0, keepdims=True) * inv_nk - mu_d * mu_d

    # ---- conv1 (1,3) stride (1,3): x-half weights pre-summed over taps, diff taps
    #      channel-packed per window -> one (3N, 3C) @ (3C, 2C) matmul.
    bias = b_ref[...]                                                     # (1, C2)
    hxb = jnp.dot(x_bf, wx_ref[...], preferred_element_type=jnp.float32) + bias
    diff_bf = diff.astype(DOT_DTYPE)
    win_all = jnp.concatenate(
        [jnp.concatenate(
            [jax.lax.slice(diff_bf, ((3 * j + w) * N, 0), ((3 * j + w + 1) * N, C))
             for w in range(3)], axis=1)
         for j in range(3)], axis=0)                                      # (3N, 3C)
    h1 = jnp.dot(win_all, wd_ref[...], preferred_element_type=jnp.float32)
    h1 = h1 + jnp.concatenate([hxb, hxb, hxb], axis=0)                    # (3N, C2)
    h1_ref[0] = h1.astype(h1_ref.dtype)

    s = jnp.sum(h1, axis=0, keepdims=True)
    ss = jnp.sum(h1 * h1, axis=0, keepdims=True)
    stats_ref[0] = jnp.concatenate([s, ss, mu_x, var_x, mu_d, var_d], axis=-1)


def _kB_mlp1_cv2_kernel(xt_ref, diff_ref, h1_ref, scm_ref, shm_ref,
                        sc1_ref, sh1_ref, wmx_ref, wmd_ref, bm_ref,
                        w2_ref, b2_ref, p_ref, h2_ref, stats_ref, *, N, K, C):
    """Fused: mlp1 (IN∘BN affine + ReLU + 1x1 conv + max over K) on the stored
    diffs, and cv2 (BN_cv1 affine + ReLU + (1,3) conv) on the stored h1 windows."""
    C2 = 2 * C
    x = xt_ref[0].astype(jnp.float32)                                     # (N, C)
    diff = diff_ref[0].astype(jnp.float32)                                # (K*N, C)
    scm = scm_ref[0]                                                      # (1, 2C)
    shm = shm_ref[0]
    sc_x = jax.lax.slice(scm, (0, 0), (1, C))
    sc_d = jax.lax.slice(scm, (0, C), (1, C2))
    sh_x = jax.lax.slice(shm, (0, 0), (1, C))
    sh_d = jax.lax.slice(shm, (0, C), (1, C2))

    # mlp1 branch: one (K*N, C) @ (C, 2C) matmul, then max over the K row groups.
    ax = jnp.maximum(x * sc_x + sh_x, 0.0)
    hx = jnp.dot(ax.astype(DOT_DTYPE), wmx_ref[...],
                 preferred_element_type=jnp.float32) + bm_ref[...]        # (N, C2)
    ad = jnp.maximum(diff * sc_d + sh_d, 0.0)                             # (K*N, C)
    hd = jnp.dot(ad.astype(DOT_DTYPE), wmd_ref[...],
                 preferred_element_type=jnp.float32)                      # (K*N, C2)
    hd_max = jax.lax.slice(hd, (0, 0), (N, C2))
    for k in range(1, K):
        hd_max = jnp.maximum(hd_max, jax.lax.slice(hd, (k * N, 0), ((k + 1) * N, C2)))
    p = hx + hd_max                                                       # (N, C2)
    p_ref[0] = p.astype(p_ref.dtype)
    inv_n = 1.0 / float(N)
    p_mu = jnp.sum(p, axis=0, keepdims=True) * inv_n
    p_var = jnp.sum(p * p, axis=0, keepdims=True) * inv_n - p_mu * p_mu

    # cv2 branch: windows channel-packed -> one (N, 3*C2) @ (3*C2, C2) matmul.
    h1 = h1_ref[0].astype(jnp.float32)                                    # (3N, C2)
    a1 = jnp.maximum(h1 * sc1_ref[...] + sh1_ref[...], 0.0)
    a1w = jnp.concatenate(
        [jax.lax.slice(a1, (j * N, 0), ((j + 1) * N, C2)) for j in range(3)],
        axis=1).astype(DOT_DTYPE)                                         # (N, 3*C2)
    h2 = jnp.dot(a1w, w2_ref[...], preferred_element_type=jnp.float32) + b2_ref[...]
    h2_ref[0] = h2.astype(h2_ref.dtype)
    h2_s = jnp.sum(h2, axis=0, keepdims=True)
    h2_ss = jnp.sum(h2 * h2, axis=0, keepdims=True)
    stats_ref[0] = jnp.concatenate([p_mu, p_var, h2_s, h2_ss], axis=-1)


def _kC_change2_a2stats_kernel(p_ref, h2_ref, scc2_ref, shc2_ref, sc2_ref, sh2_ref,
                               w_ref, b_ref, om_ref, stats_ref, *, N):
    """Fused: change2 (IN∘BN affine + ReLU + 1x1 conv) on the mlp1 output, plus the
    per-sample stats of relu(BN_cv2(h2)) needed by change1's IN∘BN combine."""
    a = jnp.maximum(p_ref[0].astype(jnp.float32) * scc2_ref[0] + shc2_ref[0], 0.0)
    om = jnp.dot(a.astype(DOT_DTYPE), w_ref[...],
                 preferred_element_type=jnp.float32) + b_ref[...]
    om_ref[0] = om.astype(om_ref.dtype)
    a2 = jnp.maximum(h2_ref[0].astype(jnp.float32) * sc2_ref[...] + sh2_ref[...], 0.0)
    inv_n = 1.0 / float(N)
    mu = jnp.sum(a2, axis=0, keepdims=True) * inv_n
    var = jnp.sum(a2 * a2, axis=0, keepdims=True) * inv_n - mu * mu
    stats_ref[0] = jnp.concatenate([mu, var], axis=-1)


def _kD_change1_aff1_kernel(h2_ref, om_ref, sc2_ref, sh2_ref, scc1_ref, shc1_ref,
                            wc1_ref, bc1_ref, wl1_ref, bl1_ref,
                            oa_ref, stats_ref, *, N):
    """Fused: change1 apply (BN_cv2 affine + ReLU + IN∘BN affine + ReLU + 1x1 conv)
    and AFF stage 1 (xa = x + residual, average pool, al1 matmul BN partial sums)."""
    a2 = jnp.maximum(h2_ref[0].astype(jnp.float32) * sc2_ref[...] + sh2_ref[...], 0.0)
    a = jnp.maximum(a2 * scc1_ref[0] + shc1_ref[0], 0.0)
    oa = jnp.dot(a.astype(DOT_DTYPE), wc1_ref[...],
                 preferred_element_type=jnp.float32) + bc1_ref[...]       # (N, C)
    oa_ref[0] = oa.astype(oa_ref.dtype)
    xa = om_ref[0].astype(jnp.float32) + oa
    pooled = jnp.sum(xa, axis=0, keepdims=True) * (1.0 / float(N))        # (1, C)
    hl = jnp.dot(xa.astype(DOT_DTYPE), wl1_ref[...],
                 preferred_element_type=jnp.float32) + bl1_ref[...]       # (N, inter)
    s = jnp.sum(hl, axis=0, keepdims=True)
    ss = jnp.sum(hl * hl, axis=0, keepdims=True)
    stats_ref[0] = jnp.concatenate([pooled, s, ss], axis=-1)


def _kE_aff_global_kernel(p_ref, w1_ref, b1_ref, g1_ref, bt1_ref,
                          w2_ref, b2_ref, g2_ref, bt2_ref, o_ref):
    """AFF global branch on the pooled (B, C) tensor: conv->BN->ReLU->conv->BN."""
    x = p_ref[...].astype(jnp.float32)
    h = jnp.dot(x.astype(DOT_DTYPE), w1_ref[...],
                preferred_element_type=jnp.float32) + b1_ref[...]
    mu = jnp.mean(h, axis=0, keepdims=True)
    var = jnp.maximum(jnp.mean(h * h, axis=0, keepdims=True) - mu * mu, 0.0)
    hn = jnp.maximum((h - mu) * jax.lax.rsqrt(var + BN_EPS) * g1_ref[...] + bt1_ref[...],
                     0.0)
    h2 = jnp.dot(hn.astype(DOT_DTYPE), w2_ref[...],
                 preferred_element_type=jnp.float32) + b2_ref[...]
    mu2 = jnp.mean(h2, axis=0, keepdims=True)
    var2 = jnp.maximum(jnp.mean(h2 * h2, axis=0, keepdims=True) - mu2 * mu2, 0.0)
    o_ref[...] = (h2 - mu2) * jax.lax.rsqrt(var2 + BN_EPS) * g2_ref[...] + bt2_ref[...]


def _kF_aff_local2_kernel(om_ref, oa_ref, sc_ref, sh_ref, w1_ref, b1_ref, w2_ref, b2_ref,
                          o_ref, stats_ref):
    """AFF stage 2: recompute xa and hl (cheap), apply BN_al1 + ReLU, al2 matmul,
    emit per-batch partial sums for BN_al2."""
    xa = om_ref[0].astype(jnp.float32) + oa_ref[0].astype(jnp.float32)
    hl = jnp.dot(xa.astype(DOT_DTYPE), w1_ref[...],
                 preferred_element_type=jnp.float32) + b1_ref[...]
    a = jnp.maximum(hl * sc_ref[...] + sh_ref[...], 0.0)
    h2 = jnp.dot(a.astype(DOT_DTYPE), w2_ref[...],
                 preferred_element_type=jnp.float32) + b2_ref[...]
    o_ref[0] = h2.astype(o_ref.dtype)
    s = jnp.sum(h2, axis=0, keepdims=True)
    ss = jnp.sum(h2 * h2, axis=0, keepdims=True)
    stats_ref[0] = jnp.concatenate([s, ss], axis=-1)


def _kG_aff_fuse_kernel(om_ref, oa_ref, hl_ref, xg_ref, sc_ref, sh_ref, o_ref):
    """BN_al2 affine + sigmoid gating + final AFF mix, fused."""
    xm = om_ref[0].astype(jnp.float32)
    xr = oa_ref[0].astype(jnp.float32)
    xl = hl_ref[0].astype(jnp.float32) * sc_ref[...] + sh_ref[...]
    wei = jax.nn.sigmoid(xl + xg_ref[0])
    o_ref[0] = 2.0 * xm * wei + 2.0 * xr * (1.0 - wei)


# --------------------------------------------------------------------------- #
# XLA glue: tiny (C,)-sized BatchNorm statistic combines.
# --------------------------------------------------------------------------- #
def _bn_affine(s, ss, count, gamma, beta, eps=BN_EPS):
    mean = jnp.sum(s[:, 0, :], axis=0) / count
    var = jnp.maximum(jnp.sum(ss[:, 0, :], axis=0) / count - mean * mean, 0.0)
    scale = gamma * jax.lax.rsqrt(var + eps)
    shift = beta - mean * scale
    return scale[None, :], shift[None, :]


def _in_bn_affine(mu_b, var_b, gamma, beta, eps_in=IN_EPS, eps_bn=BN_EPS):
    # BatchNorm(InstanceNorm(x)) in train mode collapses to a per-sample affine.
    mu_b = mu_b[:, 0, :]
    var_b = jnp.maximum(var_b[:, 0, :], 0.0)
    var_bn = jnp.mean(var_b / (var_b + eps_in), axis=0)
    g_eff = gamma * jax.lax.rsqrt(var_bn + eps_bn)
    scale_b = g_eff[None, :] * jax.lax.rsqrt(var_b + eps_in)
    shift_b = beta[None, :] - mu_b * scale_b
    return scale_b[:, None, :], shift_b[:, None, :]


# --------------------------------------------------------------------------- #
# parameter init / weight layout helpers
# --------------------------------------------------------------------------- #
def w1x1_to_mat(w):
    return jnp.transpose(w[:, :, 0, 0], (1, 0))


def w1x3_to_mat(w):
    cout, cin, _, kw = w.shape
    return jnp.transpose(w[:, :, 0, :], (2, 1, 0)).reshape(kw * cin, cout)


def init_params(key, in_channel, knn_num=9):
    assert knn_num == 9
    C = in_channel
    C2 = 2 * C
    inter = C // 4
    keys = iter(jax.random.split(key, 18))

    def conv(cout, cin, kw):
        bound = float((cin * kw) ** -0.5)
        w = jax.random.uniform(next(keys), (cout, cin, 1, kw), jnp.float32, -bound, bound)
        b = jax.random.uniform(next(keys), (cout,), jnp.float32, -bound, bound)
        return w, b

    p = {}
    p['cv1_w'], p['cv1_b'] = conv(C2, C2, 3)
    p['cv2_w'], p['cv2_b'] = conv(C2, C2, 3)
    p['mlp1_w'], p['mlp1_b'] = conv(C2, C2, 1)
    p['ch1_w'], p['ch1_b'] = conv(C, C2, 1)
    p['ch2_w'], p['ch2_b'] = conv(C, C2, 1)
    p['al1_w'], p['al1_b'] = conv(inter, C, 1)
    p['al2_w'], p['al2_b'] = conv(C, inter, 1)
    p['ag1_w'], p['ag1_b'] = conv(inter, C, 1)
    p['ag2_w'], p['ag2_b'] = conv(C, inter, 1)
    for name, ch in [('cv1', C2), ('cv2', C2), ('mlp1', C2), ('ch1', C2), ('ch2', C2),
                     ('al1', inter), ('al2', C), ('ag1', inter), ('ag2', C)]:
        p[f'bn_{name}_g'] = jnp.ones((ch,), jnp.float32)
        p[f'bn_{name}_b'] = jnp.zeros((ch,), jnp.float32)
    return p


# --------------------------------------------------------------------------- #
# forward
# --------------------------------------------------------------------------- #
def gca_forward(features, params, knn_num=9):
    B, C, N, _ = features.shape
    assert knn_num == 9  # TODO(synk): knn_num==6 conv branch not implemented
    K = knn_num
    C2 = 2 * C
    inter = C // 4

    x_t = jnp.transpose(features[:, :, :, 0], (0, 2, 1)).astype(jnp.float32)  # (B, N, C)

    # prepared weights (channels-last matmul layout, bf16 MXU operands)
    w_cv1 = w1x3_to_mat(params['cv1_w'])
    w_cv1_x = (w_cv1[0:C] + w_cv1[C2:C2 + C] + w_cv1[2 * C2:2 * C2 + C]).astype(DOT_DTYPE)
    w_cv1_d = jnp.concatenate(
        [w_cv1[w * C2 + C:(w + 1) * C2] for w in range(3)], axis=0).astype(DOT_DTYPE)
    w_cv2 = w1x3_to_mat(params['cv2_w']).astype(DOT_DTYPE)                  # (3*C2, C2)
    w_mlp1 = w1x1_to_mat(params['mlp1_w'])
    w_mlp1_x = w_mlp1[0:C].astype(DOT_DTYPE)
    w_mlp1_d = w_mlp1[C:].astype(DOT_DTYPE)
    w_ch1 = w1x1_to_mat(params['ch1_w']).astype(DOT_DTYPE)
    w_ch2 = w1x1_to_mat(params['ch2_w']).astype(DOT_DTYPE)
    w_al1 = w1x1_to_mat(params['al1_w']).astype(DOT_DTYPE)
    w_al2 = w1x1_to_mat(params['al2_w']).astype(DOT_DTYPE)
    w_ag1 = w1x1_to_mat(params['ag1_w']).astype(DOT_DTYPE)
    w_ag2 = w1x1_to_mat(params['ag2_w']).astype(DOT_DTYPE)

    def cbias(name, n):
        return params[name + '_b'].reshape(1, n).astype(jnp.float32)

    # ---- K_A: kNN + graph feature (VMEM only) + conv1 + packed statistics.
    kA = functools.partial(_kA_graph_cv1_kernel, N=N, K=K, C=C)
    h1, diff_all, statsA = per_batch_call(
        kA, B,
        [(x_t, 'b'), (w_cv1_x, 'c'), (w_cv1_d, 'c'), (cbias('cv1', C2), 'c')],
        [jax.ShapeDtypeStruct((B, 3 * N, C2), ACT_DTYPE),
         jax.ShapeDtypeStruct((B, K * N, C), ACT_DTYPE),
         jax.ShapeDtypeStruct((B, 1, 2 * C2 + 4 * C), jnp.float32)],
        flops=B * (2 * N * N * C * (2 + K) + 2 * 3 * N * 3 * C * C2 + 2 * N * C * C2))

    h1_s, h1_ss = statsA[:, :, 0:C2], statsA[:, :, C2:2 * C2]
    mu_x = statsA[:, :, 2 * C2:2 * C2 + C]
    var_x = statsA[:, :, 2 * C2 + C:2 * C2 + 2 * C]
    mu_d = statsA[:, :, 2 * C2 + 2 * C:2 * C2 + 3 * C]
    var_d = statsA[:, :, 2 * C2 + 3 * C:]
    sc_cv1, sh_cv1 = _bn_affine(h1_s, h1_ss, float(B * N * 3),
                                params['bn_cv1_g'], params['bn_cv1_b'])
    sc_m, sh_m = _in_bn_affine(jnp.concatenate([mu_x, mu_d], -1),
                               jnp.concatenate([var_x, var_d], -1),
                               params['bn_mlp1_g'], params['bn_mlp1_b'])

    # ---- K_B: mlp1 (max over K) + cv2, fused.
    kB = functools.partial(_kB_mlp1_cv2_kernel, N=N, K=K, C=C)
    p, h2, statsB = per_batch_call(
        kB, B,
        [(x_t, 'b'), (diff_all, 'b'), (h1, 'b'), (sc_m, 'b'), (sh_m, 'b'),
         (sc_cv1, 'c'), (sh_cv1, 'c'),
         (w_mlp1_x, 'c'), (w_mlp1_d, 'c'), (cbias('mlp1', C2), 'c'),
         (w_cv2, 'c'), (cbias('cv2', C2), 'c')],
        [jax.ShapeDtypeStruct((B, N, C2), ACT_DTYPE),
         jax.ShapeDtypeStruct((B, N, C2), ACT_DTYPE),
         jax.ShapeDtypeStruct((B, 1, 4 * C2), jnp.float32)],
        flops=B * (2 * K * N * C * C2 + 2 * N * C * C2 + 2 * N * 3 * C2 * C2))

    p_mu, p_var = statsB[:, :, 0:C2], statsB[:, :, C2:2 * C2]
    h2_s, h2_ss = statsB[:, :, 2 * C2:3 * C2], statsB[:, :, 3 * C2:]
    sc_cv2, sh_cv2 = _bn_affine(h2_s, h2_ss, float(B * N),
                                params['bn_cv2_g'], params['bn_cv2_b'])
    sc_ch2, sh_ch2 = _in_bn_affine(p_mu, p_var, params['bn_ch2_g'], params['bn_ch2_b'])

    # ---- K_C: change2 + per-sample stats of relu(BN_cv2(h2)).
    kC = functools.partial(_kC_change2_a2stats_kernel, N=N)
    out_max, statsC = per_batch_call(
        kC, B,
        [(p, 'b'), (h2, 'b'), (sc_ch2, 'b'), (sh_ch2, 'b'),
         (sc_cv2, 'c'), (sh_cv2, 'c'), (w_ch2, 'c'), (cbias('ch2', C), 'c')],
        [jax.ShapeDtypeStruct((B, N, C), ACT_DTYPE),
         jax.ShapeDtypeStruct((B, 1, 2 * C2), jnp.float32)],
        flops=B * 2 * N * C2 * C)
    sc_ch1, sh_ch1 = _in_bn_affine(statsC[:, :, 0:C2], statsC[:, :, C2:],
                                   params['bn_ch1_g'], params['bn_ch1_b'])

    # ---- K_D: change1 + AFF stage 1 (add + pool + al1 partial BN sums).
    kD = functools.partial(_kD_change1_aff1_kernel, N=N)
    out_an, statsD = per_batch_call(
        kD, B,
        [(h2, 'b'), (out_max, 'b'), (sc_cv2, 'c'), (sh_cv2, 'c'),
         (sc_ch1, 'b'), (sh_ch1, 'b'), (w_ch1, 'c'), (cbias('ch1', C), 'c'),
         (w_al1, 'c'), (cbias('al1', inter), 'c')],
        [jax.ShapeDtypeStruct((B, N, C), ACT_DTYPE),
         jax.ShapeDtypeStruct((B, 1, C + 2 * inter), jnp.float32)],
        flops=B * (2 * N * C2 * C + 2 * N * C * inter))
    pooled = statsD[:, 0, 0:C]
    hl_s = statsD[:, :, C:C + inter]
    hl_ss = statsD[:, :, C + inter:]
    sc_al1, sh_al1 = _bn_affine(hl_s, hl_ss, float(B * N),
                                params['bn_al1_g'], params['bn_al1_b'])

    # ---- K_E: AFF global branch (tiny, whole batch at once).
    xg = pl.pallas_call(
        _kE_aff_global_kernel,
        out_shape=jax.ShapeDtypeStruct((B, C), jnp.float32),
        compiler_params=pltpu.CompilerParams(vmem_limit_bytes=_vmem_limit()),
    )(pooled, w_ag1, cbias('ag1', inter),
      params['bn_ag1_g'].reshape(1, inter), params['bn_ag1_b'].reshape(1, inter),
      w_ag2, cbias('ag2', C),
      params['bn_ag2_g'].reshape(1, C), params['bn_ag2_b'].reshape(1, C))

    # ---- K_F: AFF local stage 2 (BN_al1 + ReLU + al2, partial sums for BN_al2).
    h2l, statsF = per_batch_call(
        _kF_aff_local2_kernel, B,
        [(out_max, 'b'), (out_an, 'b'), (sc_al1, 'c'), (sh_al1, 'c'),
         (w_al1, 'c'), (cbias('al1', inter), 'c'), (w_al2, 'c'), (cbias('al2', C), 'c')],
        [jax.ShapeDtypeStruct((B, N, C), ACT_DTYPE),
         jax.ShapeDtypeStruct((B, 1, 2 * C), jnp.float32)],
        flops=B * 4 * N * C * inter)
    sc_al2, sh_al2 = _bn_affine(statsF[:, :, 0:C], statsF[:, :, C:], float(B * N),
                                params['bn_al2_g'], params['bn_al2_b'])

    # ---- K_G: final AFF fuse (BN_al2 affine + sigmoid gate + mix).
    (out,) = per_batch_call(
        _kG_aff_fuse_kernel, B,
        [(out_max, 'b'), (out_an, 'b'), (h2l, 'b'), (xg[:, None, :], 'b'),
         (sc_al2, 'c'), (sh_al2, 'c')],
        [jax.ShapeDtypeStruct((B, N, C), jnp.float32)],
        flops=B * N * C * 10, transcendentals=B * N * C)

    return jnp.transpose(out, (0, 2, 1))[:, :, :, None]


# --------------------------------------------------------------------------- #
if __name__ == "__main__":
    B, C, N, K = 2, 32, 16, 9   # in_channel=32, knn_num=9, 16 points
    key = jax.random.PRNGKey(0)
    kf, kp = jax.random.split(key)
    features = jax.random.normal(kf, (B, C, N, 1), jnp.float32)
    params = init_params(kp, in_channel=C, knn_num=K)

    fwd = jax.jit(functools.partial(gca_forward, knn_num=K))
    out = jax.block_until_ready(fwd(features, params))
    assert out.shape == (B, C, N, 1), out.shape
    assert bool(jnp.all(jnp.isfinite(out)))
    print("KERNEL_OK")
</pallas_src>

<mosaic_0001>
module attributes {stable_mosaic.version = 11 : i64} {
  func.func @_kA_graph_cv1_kernel(%arg0: i32, %arg1: memref<1x16x32xf32, #tpu.memory_space<vmem>>, %arg2: memref<32x64xbf16, #tpu.memory_space<vmem>>, %arg3: memref<96x64xbf16, #tpu.memory_space<vmem>>, %arg4: memref<1x64xf32, #tpu.memory_space<vmem>>, %arg5: memref<1x48x64xbf16, #tpu.memory_space<vmem>>, %arg6: memref<1x144x32xbf16, #tpu.memory_space<vmem>>, %arg7: memref<1x1x256xf32, #tpu.memory_space<vmem>>) attributes {dimension_semantics = [#tpu.dimension_semantics<parallel>], iteration_bounds = array<i64: 2>, scalar_prefetch = 0 : i64, scratch_operands = 0 : i64, tpu.core_type = #tpu.core_type<tc>, window_params = [{transform_indices = @transform_0, window_bounds = array<i64: 1, 16, 32>}, {pipeline_mode = #tpu.pipeline_mode<synchronous>, transform_indices = @transform_1, window_bounds = array<i64: 32, 64>}, {pipeline_mode = #tpu.pipeline_mode<synchronous>, transform_indices = @transform_2, window_bounds = array<i64: 96, 64>}, {pipeline_mode = #tpu.pipeline_mode<synchronous>, transform_indices = @transform_3, window_bounds = array<i64: 1, 64>}, {transform_indices = @transform_4, window_bounds = array<i64: 1, 48, 64>}, {transform_indices = @transform_5, window_bounds = array<i64: 1, 144, 32>}, {transform_indices = @transform_6, window_bounds = array<i64: 1, 1, 256>}]} {
    %c0 = arith.constant 0 : index
    %c0_0 = arith.constant 0 : index
    %c0_1 = arith.constant 0 : index
    %0 = vector.load %arg1[%c0, %c0_0, %c0_1] : memref<1x16x32xf32, #tpu.memory_space<vmem>>, vector<1x16x32xf32>
    %1 = vector.shape_cast %0 : vector<1x16x32xf32> to vector<16x32xf32>
    %2 = arith.truncf %1 : vector<16x32xf32> to vector<16x32xbf16>
    %cst = arith.constant dense<0.000000e+00> : vector<16x16xf32>
    %3 = tpu.matmul %1, %1, %cst {dimension_numbers = #tpu.dot_dimension_numbers<[1], [1], [0], [0], [0, 0, 1, 0], [], []>} : vector<16x32xf32>, vector<16x32xf32>, vector<16x16xf32> -> vector<16x16xf32>
    %cst_2 = arith.constant 1.000000e+00 : f32
    %4 = vector.broadcast %cst_2 : f32 to vector<1x32xf32>
    %5 = arith.mulf %1, %1 : vector<16x32xf32>
    %cst_3 = arith.constant dense<0.000000e+00> : vector<1x16xf32>
    %6 = tpu.matmul %4, %5, %cst_3 {dimension_numbers = #tpu.dot_dimension_numbers<[1], [1], [0], [0], [0, 0, 1, 0], [], []>} : vector<1x32xf32>, vector<16x32xf32>, vector<1x16xf32> -> vector<1x16xf32>
    %cst_4 = arith.constant 2.000000e+00 : f32
    %7 = vector.broadcast %cst_4 : f32 to vector<16x16xf32>
    %8 = arith.mulf %7, %3 : vector<16x16xf32>
    %9 = vector.broadcast %6 : vector<1x16xf32> to vector<16x16xf32>
    %10 = arith.subf %8, %9 : vector<16x16xf32>
    %11 = tpu.iota {dimensions = array<i32: 1>} : vector<16x16xi32>
    %12 = arith.sitofp %11 : vector<16x16xi32> to vector<16x16xf32>
    %cst_5 = arith.constant dense<0xFF800000> : vector<16xf32>
    %13 = vector.multi_reduction <maximumf>, %10, %cst_5 [1] : vector<16x16xf32> to vector<16xf32>
    %14 = vector.shape_cast %13 : vector<16xf32> to vector<16x1xf32>
    %15 = vector.broadcast %14 : vector<16x1xf32> to vector<16x16xf32>
    %16 = arith.cmpf oge, %10, %15 : vector<16x16xf32>
    %cst_6 = arith.constant 1.600000e+01 : f32
    %17 = vector.broadcast %cst_6 : f32 to vector<16x16xf32>
    %18 = arith.select %16, %12, %17 : vector<16x16xi1>, vector<16x16xf32>
    %cst_7 = arith.constant dense<0x7F800000> : vector<16xf32>
    %19 = vector.multi_reduction <minimumf>, %18, %cst_7 [1] : vector<16x16xf32> to vector<16xf32>
    %20 = vector.shape_cast %19 : vector<16xf32> to vector<16x1xf32>
    %21 = vector.broadcast %20 : vector<16x1xf32> to vector<16x16xf32>
    %22 = arith.cmpf oeq, %12, %21 : vector<16x16xf32>
    %cst_8 = arith.constant 1.000000e+00 : f32
    %cst_9 = arith.constant 0.000000e+00 : f32
    %23 = vector.broadcast %cst_8 : f32 to vector<16x16xf32>
    %24 = vector.broadcast %cst_9 : f32 to vector<16x16xf32>
    %25 = arith.select %22, %23, %24 : vector<16x16xi1>, vector<16x16xf32>
    %cst_10 = arith.constant -1.000000e+30 : f32
    %26 = vector.broadcast %cst_10 : f32 to vector<16x16xf32>
    %27 = arith.select %22, %26, %10 : vector<16x16xi1>, vector<16x16xf32>
    %cst_11 = arith.constant dense<0xFF800000> : vector<16xf32>
    %28 = vector.multi_reduction <maximumf>, %27, %cst_11 [1] : vector<16x16xf32> to vector<16xf32>
    %29 = vector.shape_cast %28 : vector<16xf32> to vector<16x1xf32>
    %30 = vector.broadcast %29 : vector<16x1xf32> to vector<16x16xf32>
    %31 = arith.cmpf oge, %27, %30 : vector<16x16xf32>
    %cst_12 = arith.constant 1.600000e+01 : f32
    %32 = vector.broadcast %cst_12 : f32 to vector<16x16xf32>
    %33 = arith.select %31, %12, %32 : vector<16x16xi1>, vector<16x16xf32>
    %cst_13 = arith.constant dense<0x7F800000> : vector<16xf32>
    %34 = vector.multi_reduction <minimumf>, %33, %cst_13 [1] : vector<16x16xf32> to vector<16xf32>
    %35 = vector.shape_cast %34 : vector<16xf32> to vector<16x1xf32>
    %36 = vector.broadcast %35 : vector<16x1xf32> to vector<16x16xf32>
    %37 = arith.cmpf oeq, %12, %36 : vector<16x16xf32>
    %cst_14 = arith.constant 1.000000e+00 : f32
    %cst_15 = arith.constant 0.000000e+00 : f32
    %38 = vector.broadcast %cst_14 : f32 to vector<16x16xf32>
    %39 = vector.broadcast %cst_15 : f32 to vector<16x16xf32>
    %40 = arith.select %37, %38, %39 : vector<16x16xi1>, vector<16x16xf32>
    %cst_16 = arith.constant -1.000000e+30 : f32
    %41 = vector.broadcast %cst_16 : f32 to vector<16x16xf32>
    %42 = arith.select %37, %41, %27 : vector<16x16xi1>, vector<16x16xf32>
    %cst_17 = arith.constant dense<0xFF800000> : vector<16xf32>
    %43 = vector.multi_reduction <maximumf>, %42, %cst_17 [1] : vector<16x16xf32> to vector<16xf32>
    %44 = vector.shape_cast %43 : vector<16xf32> to vector<16x1xf32>
    %45 = vector.broadcast %44 : vector<16x1xf32> to vector<16x16xf32>
    %46 = arith.cmpf oge, %42, %45 : vector<16x16xf32>
    %cst_18 = arith.constant 1.600000e+01 : f32
    %47 = vector.broadcast %cst_18 : f32 to vector<16x16xf32>
    %48 = arith.select %46, %12, %47 : vector<16x16xi1>, vector<16x16xf32>
    %cst_19 = arith.constant dense<0x7F800000> : vector<16xf32>
    %49 = vector.multi_reduction <minimumf>, %48, %cst_19 [1] : vector<16x16xf32> to vector<16xf32>
    %50 = vector.shape_cast %49 : vector<16xf32> to vector<16x1xf32>
    %51 = vector.broadcast %50 : vector<16x1xf32> to vector<16x16xf32>
    %52 = arith.cmpf oeq, %12, %51 : vector<16x16xf32>
    %cst_20 = arith.constant 1.000000e+00 : f32
    %cst_21 = arith.constant 0.000000e+00 : f32
    %53 = vector.broadcast %cst_20 : f32 to vector<16x16xf32>
    %54 = vector.broadcast %cst_21 : f32 to vector<16x16xf32>
    %55 = arith.select %52, %53, %54 : vector<16x16xi1>, vector<16x16xf32>
    %cst_22 = arith.constant -1.000000e+30 : f32
    %56 = vector.broadcast %cst_22 : f32 to vector<16x16xf32>
    %57 = arith.select %52, %56, %42 : vector<16x16xi1>, vector<16x16xf32>
    %cst_23 = arith.constant dense<0xFF800000> : vector<16xf32>
    %58 = vector.multi_reduction <maximumf>, %57, %cst_23 [1] : vector<16x16xf32> to vector<16xf32>
    %59 = vector.shape_cast %58 : vector<16xf32> to vector<16x1xf32>
    %60 = vector.broadcast %59 : vector<16x1xf32> to vector<16x16xf32>
    %61 = arith.cmpf oge, %57, %60 : vector<16x16xf32>
    %cst_24 = arith.constant 1.600000e+01 : f32
    %62 = vector.broadcast %cst_24 : f32 to vector<16x16xf32>
    %63 = arith.select %61, %12, %62 : vector<16x16xi1>, vector<16x16xf32>
    %cst_25 = arith.constant dense<0x7F800000> : vector<16xf32>
    %64 = vector.multi_reduction <minimumf>, %63, %cst_25 [1] : vector<16x16xf32> to vector<16xf32>
    %65 = vector.shape_cast %64 : vector<16xf32> to vector<16x1xf32>
    %66 = vector.broadcast %65 : vector<16x1xf32> to vector<16x16xf32>
    %67 = arith.cmpf oeq, %12, %66 : vector<16x16xf32>
    %cst_26 = arith.constant 1.000000e+00 : f32
    %cst_27 = arith.constant 0.000000e+00 : f32
    %68 = vector.broadcast %cst_26 : f32 to vector<16x16xf32>
    %69 = vector.broadcast %cst_27 : f32 to vector<16x16xf32>
    %70 = arith.select %67, %68, %69 : vector<16x16xi1>, vector<16x16xf32>
    %cst_28 = arith.constant -1.000000e+30 : f32
    %71 = vector.broadcast %cst_28 : f32 to vector<16x16xf32>
    %72 = arith.select %67, %71, %57 : vector<16x16xi1>, vector<16x16xf32>
    %cst_29 = arith.constant dense<0xFF800000> : vector<16xf32>
    %73 = vector.multi_reduction <maximumf>, %72, %cst_29 [1] : vector<16x16xf32> to vector<16xf32>
    %74 = vector.shape_cast %73 : vector<16xf32> to vector<16x1xf32>
    %75 = vector.broadcast %74 : vector<16x1xf32> to vector<16x16xf32>
    %76 = arith.cmpf oge, %72, %75 : vector<16x16xf32>
    %cst_30 = arith.constant 1.600000e+01 : f32
    %77 = vector.broadcast %cst_30 : f32 to vector<16x16xf32>
    %78 = arith.select %76, %12, %77 : vector<16x16xi1>, vector<16x16xf32>
    %cst_31 = arith.constant dense<0x7F800000> : vector<16xf32>
    %79 = vector.multi_reduction <minimumf>, %78, %cst_31 [1] : vector<16x16xf32> to vector<16xf32>
    %80 = vector.shape_cast %79 : vector<16xf32> to vector<16x1xf32>
    %81 = vector.broadcast %80 : vector<16x1xf32> to vector<16x16xf32>
    %82 = arith.cmpf oeq, %12, %81 : vector<16x16xf32>
    %cst_32 = arith.constant 1.000000e+00 : f32
    %cst_33 = arith.constant 0.000000e+00 : f32
    %83 = vector.broadcast %cst_32 : f32 to vector<16x16xf32>
    %84 = vector.broadcast %cst_33 : f32 to vector<16x16xf32>
    %85 = arith.select %82, %83, %84 : vector<16x16xi1>, vector<16x16xf32>
    %cst_34 = arith.constant -1.000000e+30 : f32
    %86 = vector.broadcast %cst_34 : f32 to vector<16x16xf32>
    %87 = arith.select %82, %86, %72 : vector<16x16xi1>, vector<16x16xf32>
    %cst_35 = arith.constant dense<0xFF800000> : vector<16xf32>
    %88 = vector.multi_reduction <maximumf>, %87, %cst_35 [1] : vector<16x16xf32> to vector<16xf32>
    %89 = vector.shape_cast %88 : vector<16xf32> to vector<16x1xf32>
    %90 = vector.broadcast %89 : vector<16x1xf32> to vector<16x16xf32>
    %91 = arith.cmpf oge, %87, %90 : vector<16x16xf32>
    %cst_36 = arith.constant 1.600000e+01 : f32
    %92 = vector.broadcast %cst_36 : f32 to vector<16x16xf32>
    %93 = arith.select %91, %12, %92 : vector<16x16xi1>, vector<16x16xf32>
    %cst_37 = arith.constant dense<0x7F800000> : vector<16xf32>
    %94 = vector.multi_reduction <minimumf>, %93, %cst_37 [1] : vector<16x16xf32> to vector<16xf32>
    %95 = vector.shape_cast %94 : vector<16xf32> to vector<16x1xf32>
    %96 = vector.broadcast %95 : vector<16x1xf32> to vector<16x16xf32>
    %97 = arith.cmpf oeq, %12, %96 : vector<16x16xf32>
    %cst_38 = arith.constant 1.000000e+00 : f32
    %cst_39 = arith.constant 0.000000e+00 : f32
    %98 = vector.broadcast %cst_38 : f32 to vector<16x16xf32>
    %99 = vector.broadcast %cst_39 : f32 to vector<16x16xf32>
    %100 = arith.select %97, %98, %99 : vector<16x16xi1>, vector<16x16xf32>
    %cst_40 = arith.constant -1.000000e+30 : f32
    %101 = vector.broadcast %cst_40 : f32 to vector<16x16xf32>
    %102 = arith.select %97, %101, %87 : vector<16x16xi1>, vector<16x16xf32>
    %cst_41 = arith.constant dense<0xFF800000> : vector<16xf32>
    %103 = vector.multi_reduction <maximumf>, %102, %cst_41 [1] : vector<16x16xf32> to vector<16xf32>
    %104 = vector.shape_cast %103 : vector<16xf32> to vector<16x1xf32>
    %105 = vector.broadcast %104 : vector<16x1xf32> to vector<16x16xf32>
    %106 = arith.cmpf oge, %102, %105 : vector<16x16xf32>
    %cst_42 = arith.constant 1.600000e+01 : f32
    %107 = vector.broadcast %cst_42 : f32 to vector<16x16xf32>
    %108 = arith.select %106, %12, %107 : vector<16x16xi1>, vector<16x16xf32>
    %cst_43 = arith.constant dense<0x7F800000> : vector<16xf32>
    %109 = vector.multi_reduction <minimumf>, %108, %cst_43 [1] : vector<16x16xf32> to vector<16xf32>
    %110 = vector.shape_cast %109 : vector<16xf32> to vector<16x1xf32>
    %111 = vector.broadcast %110 : vector<16x1xf32> to vector<16x16xf32>
    %112 = arith.cmpf oeq, %12, %111 : vector<16x16xf32>
    %cst_44 = arith.constant 1.000000e+00 : f32
    %cst_45 = arith.constant 0.000000e+00 : f32
    %113 = vector.broadcast %cst_44 : f32 to vector<16x16xf32>
    %114 = vector.broadcast %cst_45 : f32 to vector<16x16xf32>
    %115 = arith.select %112, %113, %114 : vector<16x16xi1>, vector<16x16xf32>
    %cst_46 = arith.constant -1.000000e+30 : f32
    %116 = vector.broadcast %cst_46 : f32 to vector<16x16xf32>
    %117 = arith.select %112, %116, %102 : vector<16x16xi1>, vector<16x16xf32>
    %cst_47 = arith.constant dense<0xFF800000> : vector<16xf32>
    %118 = vector.multi_reduction <maximumf>, %117, %cst_47 [1] : vector<16x16xf32> to vector<16xf32>
    %119 = vector.shape_cast %118 : vector<16xf32> to vector<16x1xf32>
    %120 = vector.broadcast %119 : vector<16x1xf32> to vector<16x16xf32>
    %121 = arith.cmpf oge, %117, %120 : vector<16x16xf32>
    %cst_48 = arith.constant 1.600000e+01 : f32
    %122 = vector.broadcast %cst_48 : f32 to vector<16x16xf32>
    %123 = arith.select %121, %12, %122 : vector<16x16xi1>, vector<16x16xf32>
    %cst_49 = arith.constant dense<0x7F800000> : vector<16xf32>
    %124 = vector.multi_reduction <minimumf>, %123, %cst_49 [1] : vector<16x16xf32> to vector<16xf32>
    %125 = vector.shape_cast %124 : vector<16xf32> to vector<16x1xf32>
    %126 = vector.broadcast %125 : vector<16x1xf32> to vector<16x16xf32>
    %127 = arith.cmpf oeq, %12, %126 : vector<16x16xf32>
    %cst_50 = arith.constant 1.000000e+00 : f32
    %cst_51 = arith.constant 0.000000e+00 : f32
    %128 = vector.broadcast %cst_50 : f32 to vector<16x16xf32>
    %129 = vector.broadcast %cst_51 : f32 to vector<16x16xf32>
    %130 = arith.select %127, %128, %129 : vector<16x16xi1>, vector<16x16xf32>
    %cst_52 = arith.constant -1.000000e+30 : f32
    %131 = vector.broadcast %cst_52 : f32 to vector<16x16xf32>
    %132 = arith.select %127, %131, %117 : vector<16x16xi1>, vector<16x16xf32>
    %cst_53 = arith.constant dense<0xFF800000> : vector<16xf32>
    %133 = vector.multi_reduction <maximumf>, %132, %cst_53 [1] : vector<16x16xf32> to vector<16xf32>
    %134 = vector.shape_cast %133 : vector<16xf32> to vector<16x1xf32>
    %135 = vector.broadcast %134 : vector<16x1xf32> to vector<16x16xf32>
    %136 = arith.cmpf oge, %132, %135 : vector<16x16xf32>
    %cst_54 = arith.constant 1.600000e+01 : f32
    %137 = vector.broadcast %cst_54 : f32 to vector<16x16xf32>
    %138 = arith.select %136, %12, %137 : vector<16x16xi1>, vector<16x16xf32>
    %cst_55 = arith.constant dense<0x7F800000> : vector<16xf32>
    %139 = vector.multi_reduction <minimumf>, %138, %cst_55 [1] : vector<16x16xf32> to vector<16xf32>
    %140 = vector.shape_cast %139 : vector<16xf32> to vector<16x1xf32>
    %141 = vector.broadcast %140 : vector<16x1xf32> to vector<16x16xf32>
    %142 = arith.cmpf oeq, %12, %141 : vector<16x16xf32>
    %cst_56 = arith.constant 1.000000e+00 : f32
    %cst_57 = arith.constant 0.000000e+00 : f32
    %143 = vector.broadcast %cst_56 : f32 to vector<16x16xf32>
    %144 = vector.broadcast %cst_57 : f32 to vector<16x16xf32>
    %145 = arith.select %142, %143, %144 : vector<16x16xi1>, vector<16x16xf32>
    %146 = tpu.concatenate %25, %40, %55, %70, %85, %100, %115, %130, %145 in 0 : vector<16x16xf32>, vector<16x16xf32>, vector<16x16xf32>, vector<16x16xf32>, vector<16x16xf32>, vector<16x16xf32>, vector<16x16xf32>, vector<16x16xf32>, vector<16x16xf32> -> vector<144x16xf32>
    %147 = arith.truncf %146 : vector<144x16xf32> to vector<144x16xbf16>
    %cst_58 = arith.constant dense<0.000000e+00> : vector<144x32xf32>
    %148 = tpu.matmul %147, %2, %cst_58 {dimension_numbers = #tpu.dot_dimension_numbers<[1], [0], [0], [1], [0, 0, 1, 1], [], []>} : vector<144x16xbf16>, vector<16x32xbf16>, vector<144x32xf32> -> vector<144x32xf32>
    %149 = tpu.concatenate %1, %1, %1, %1, %1, %1, %1, %1, %1 in 0 : vector<16x32xf32>, vector<16x32xf32>, vector<16x32xf32>, vector<16x32xf32>, vector<16x32xf32>, vector<16x32xf32>, vector<16x32xf32>, vector<16x32xf32>, vector<16x32xf32> -> vector<144x32xf32>
    %150 = arith.subf %149, %148 : vector<144x32xf32>
    %151 = arith.truncf %150 : vector<144x32xf32> to vector<144x32xbf16>
    %c0_59 = arith.constant 0 : index
    %c0_60 = arith.constant 0 : index
    %c0_61 = arith.constant 0 : index
    %152 = vector.load %arg6[%c0_59, %c0_60, %c0_61] : memref<1x144x32xbf16, #tpu.memory_space<vmem>>, vector<1x144x32xbf16>
    %153 = vector.shape_cast %152 : vector<1x144x32xbf16> to vector<144x32xbf16>
    %154 = vector.shape_cast %151 : vector<144x32xbf16> to vector<1x144x32xbf16>
    tpu.vector_store %arg6[%c0_59, %c0_60, %c0_61], %154 {strides = array<i32>} : memref<1x144x32xbf16, #tpu.memory_space<vmem>>, vector<1x144x32xbf16>,
    %cst_62 = arith.constant dense<0.000000e+00> : vector<32xf32>
    %155 = vector.multi_reduction <add>, %1, %cst_62 [0] : vector<16x32xf32> to vector<32xf32>
    %156 = vector.shape_cast %155 : vector<32xf32> to vector<1x32xf32>
    %cst_63 = arith.constant 6.250000e-02 : f32
    %157 = vector.broadcast %cst_63 : f32 to vector<1x32xf32>
    %158 = arith.mulf %156, %157 : vector<1x32xf32>
    %159 = arith.mulf %1, %1 : vector<16x32xf32>
    %cst_64 = arith.constant dense<0.000000e+00> : vector<32xf32>
    %160 = vector.multi_reduction <add>, %159, %cst_64 [0] : vector<16x32xf32> to vector<32xf32>
    %161 = vector.shape_cast %160 : vector<32xf32> to vector<1x32xf32>
    %cst_65 = arith.constant 6.250000e-02 : f32
    %162 = vector.broadcast %cst_65 : f32 to vector<1x32xf32>
    %163 = arith.mulf %161, %162 : vector<1x32xf32>
    %164 = arith.mulf %158, %158 : vector<1x32xf32>
    %165 = arith.subf %163, %164 : vector<1x32xf32>
    %cst_66 = arith.constant dense<0.000000e+00> : vector<32xf32>
    %166 = vector.multi_reduction <add>, %150, %cst_66 [0] : vector<144x32xf32> to vector<32xf32>
    %167 = vector.shape_cast %166 : vector<32xf32> to vector<1x32xf32>
    %cst_67 = arith.constant 0.0069444445 : f32
    %168 = vector.broadcast %cst_67 : f32 to vector<1x32xf32>
    %169 = arith.mulf %167, %168 : vector<1x32xf32>
    %170 = arith.mulf %150, %150 : vector<144x32xf32>
    %cst_68 = arith.constant dense<0.000000e+00> : vector<32xf32>
    %171 = vector.multi_reduction <add>, %170, %cst_68 [0] : vector<144x32xf32> to vector<32xf32>
    %172 = vector.shape_cast %171 : vector<32xf32> to vector<1x32xf32>
    %cst_69 = arith.constant 0.0069444445 : f32
    %173 = vector.broadcast %cst_69 : f32 to vector<1x32xf32>
    %174 = arith.mulf %172, %173 : vector<1x32xf32>
    %175 = arith.mulf %169, %169 : vector<1x32xf32>
    %176 = arith.subf %174, %175 : vector<1x32xf32>
    %c0_70 = arith.constant 0 : index
    %c0_71 = arith.constant 0 : index
    %177 = vector.load %arg4[%c0_70, %c0_71] : memref<1x64xf32, #tpu.memory_space<vmem>>, vector<1x64xf32>
    %c0_72 = arith.constant 0 : index
    %c0_73 = arith.constant 0 : index
    %178 = vector.load %arg2[%c0_72, %c0_73] : memref<32x64xbf16, #tpu.memory_space<vmem>>, vector<32x64xbf16>
    %cst_74 = arith.constant dense<0.000000e+00> : vector<16x64xf32>
    %179 = tpu.matmul %2, %178, %cst_74 {dimension_numbers = #tpu.dot_dimension_numbers<[1], [0], [0], [1], [0, 0, 1, 1], [], []>} : vector<16x32xbf16>, vector<32x64xbf16>, vector<16x64xf32> -> vector<16x64xf32>
    %180 = vector.broadcast %177 : vector<1x64xf32> to vector<16x64xf32>
    %181 = arith.addf %179, %180 : vector<16x64xf32>
    %182 = arith.truncf %150 : vector<144x32xf32> to vector<144x32xbf16>
    %183 = vector.extract_strided_slice %182 {offsets = [0, 0], sizes = [16, 32], strides = [1, 1]} : vector<144x32xbf16> to vector<16x32xbf16>
    %184 = vector.extract_strided_slice %182 {offsets = [16, 0], sizes = [16, 32], strides = [1, 1]} : vector<144x32xbf16> to vector<16x32xbf16>
    %185 = vector.extract_strided_slice %182 {offsets = [32, 0], sizes = [16, 32], strides = [1, 1]} : vector<144x32xbf16> to vector<16x32xbf16>
    %186 = tpu.concatenate %183, %184, %185 in 1 : vector<16x32xbf16>, vector<16x32xbf16>, vector<16x32xbf16> -> vector<16x96xbf16>
    %187 = vector.extract_strided_slice %182 {offsets = [48, 0], sizes = [16, 32], strides = [1, 1]} : vector<144x32xbf16> to vector<16x32xbf16>
    %188 = vector.extract_strided_slice %182 {offsets = [64, 0], sizes = [16, 32], strides = [1, 1]} : vector<144x32xbf16> to vector<16x32xbf16>
    %189 = vector.extract_strided_slice %182 {offsets = [80, 0], sizes = [16, 32], strides = [1, 1]} : vector<144x32xbf16> to vector<16x32xbf16>
    %190 = tpu.concatenate %187, %188, %189 in 1 : vector<16x32xbf16>, vector<16x32xbf16>, vector<16x32xbf16> -> vector<16x96xbf16>
    %191 = vector.extract_strided_slice %182 {offsets = [96, 0], sizes = [16, 32], strides = [1, 1]} : vector<144x32xbf16> to vector<16x32xbf16>
    %192 = vector.extract_strided_slice %182 {offsets = [112, 0], sizes = [16, 32], strides = [1, 1]} : vector<144x32xbf16> to vector<16x32xbf16>
    %193 = vector.extract_strided_slice %182 {offsets = [128, 0], sizes = [16, 32], strides = [1, 1]} : vector<144x32xbf16> to vector<16x32xbf16>
    %194 = tpu.concatenate %191, %192, %193 in 1 : vector<16x32xbf16>, vector<16x32xbf16>, vector<16x32xbf16> -> vector<16x96xbf16>
    %195 = tpu.concatenate %186, %190, %194 in 0 : vector<16x96xbf16>, vector<16x96xbf16>, vector<16x96xbf16> -> vector<48x96xbf16>
    %c0_75 = arith.constant 0 : index
    %c0_76 = arith.constant 0 : index
    %196 = vector.load %arg3[%c0_75, %c0_76] : memref<96x64xbf16, #tpu.memory_space<vmem>>, vector<96x64xbf16>
    %cst_77 = arith.constant dense<0.000000e+00> : vector<48x64xf32>
    %197 = tpu.matmul %195, %196, %cst_77 {dimension_numbers = #tpu.dot_dimension_numbers<[1], [0], [0], [1], [0, 0, 1, 1], [], []>} : vector<48x96xbf16>, vector<96x64xbf16>, vector<48x64xf32> -> vector<48x64xf32>
    %198 = tpu.concatenate %181, %181, %181 in 0 : vector<16x64xf32>, vector<16x64xf32>, vector<16x64xf32> -> vector<48x64xf32>
    %199 = arith.addf %197, %198 : vector<48x64xf32>
    %200 = arith.truncf %199 : vector<48x64xf32> to vector<48x64xbf16>
    %c0_78 = arith.constant 0 : index
    %c0_79 = arith.constant 0 : index
    %c0_80 = arith.constant 0 : index
    %201 = vector.load %arg5[%c0_78, %c0_79, %c0_80] : memref<1x48x64xbf16, #tpu.memory_space<vmem>>, vector<1x48x64xbf16>
    %202 = vector.shape_cast %201 : vector<1x48x64xbf16> to vector<48x64xbf16>
    %203 = vector.shape_cast %200 : vector<48x64xbf16> to vector<1x48x64xbf16>
    tpu.vector_store %arg5[%c0_78, %c0_79, %c0_80], %203 {strides = array<i32>} : memref<1x48x64xbf16, #tpu.memory_space<vmem>>, vector<1x48x64xbf16>,
    %cst_81 = arith.constant dense<0.000000e+00> : vector<64xf32>
    %204 = vector.multi_reduction <add>, %199, %cst_81 [0] : vector<48x64xf32> to vector<64xf32>
    %205 = vector.shape_cast %204 : vector<64xf32> to vector<1x64xf32>
    %206 = arith.mulf %199, %199 : vector<48x64xf32>
    %cst_82 = arith.constant dense<0.000000e+00> : vector<64xf32>
    %207 = vector.multi_reduction <add>, %206, %cst_82 [0] : vector<48x64xf32> to vector<64xf32>
    %208 = vector.shape_cast %207 : vector<64xf32> to vector<1x64xf32>
    %209 = tpu.concatenate %205, %208, %158, %165, %169, %176 in 1 : vector<1x64xf32>, vector<1x64xf32>, vector<1x32xf32>, vector<1x32xf32>, vector<1x32xf32>, vector<1x32xf32> -> vector<1x256xf32>
    %c0_83 = arith.constant 0 : index
    %c0_84 = arith.constant 0 : index
    %c0_85 = arith.constant 0 : index
    %210 = vector.load %arg7[%c0_83, %c0_84, %c0_85] : memref<1x1x256xf32, #tpu.memory_space<vmem>>, vector<1x1x256xf32>
    %211 = vector.shape_cast %210 : vector<1x1x256xf32> to vector<1x256xf32>
    %212 = vector.shape_cast %209 : vector<1x256xf32> to vector<1x1x256xf32>
    tpu.vector_store %arg7[%c0_83, %c0_84, %c0_85], %212 {strides = array<i32>} : memref<1x1x256xf32, #tpu.memory_space<vmem>>, vector<1x1x256xf32>,
    return
  }
  func.func @transform_0(%arg0: i32) -> (i32, i32, i32) {
    %c0_i32 = arith.constant 0 : i32
    %c0_i32_0 = arith.constant 0 : i32
    %c0_i32_1 = arith.constant 0 : i32
    return %arg0, %c0_i32, %c0_i32_0 : i32, i32, i32
  }
  func.func @transform_1(%arg0: i32) -> (i32, i32) {
    %c0_i32 = arith.constant 0 : i32
    %c0_i32_0 = arith.constant 0 : i32
    %c0_i32_1 = arith.constant 0 : i32
    return %c0_i32, %c0_i32_0 : i32, i32
  }
  func.func @transform_2(%arg0: i32) -> (i32, i32) {
    %c0_i32 = arith.constant 0 : i32
    %c0_i32_0 = arith.constant 0 : i32
    %c0_i32_1 = arith.constant 0 : i32
    return %c0_i32, %c0_i32_0 : i32, i32
  }
  func.func @transform_3(%arg0: i32) -> (i32, i32) {
    %c0_i32 = arith.constant 0 : i32
    %c0_i32_0 = arith.constant 0 : i32
    %c0_i32_1 = arith.constant 0 : i32
    return %c0_i32, %c0_i32_0 : i32, i32
  }
  func.func @transform_4(%arg0: i32) -> (i32, i32, i32) {
    %c0_i32 = arith.constant 0 : i32
    %c0_i32_0 = arith.constant 0 : i32
    %c0_i32_1 = arith.constant 0 : i32
    return %arg0, %c0_i32, %c0_i32_0 : i32, i32, i32
  }
  func.func @transform_5(%arg0: i32) -> (i32, i32, i32) {
    %c0_i32 = arith.constant 0 : i32
    %c0_i32_0 = arith.constant 0 : i32
    %c0_i32_1 = arith.constant 0 : i32
    return %arg0, %c0_i32, %c0_i32_0 : i32, i32, i32
  }
  func.func @transform_6(%arg0: i32) -> (i32, i32, i32) {
    %c0_i32 = arith.constant 0 : i32
    %c0_i32_0 = arith.constant 0 : i32
    %c0_i32_1 = arith.constant 0 : i32
    return %arg0, %c0_i32, %c0_i32_0 : i32, i32, i32
  }
}

module attributes {stable_mosaic.version = 11 : i64} {
  func.func @_kB_mlp1_cv2_kernel(%arg0: i32, %arg1: memref<1x16x32xf32, #tpu.memory_space<vmem>>, %arg2: memref<1x144x32xbf16, #tpu.memory_space<vmem>>, %arg3: memref<1x48x64xbf16, #tpu.memory_space<vmem>>, %arg4: memref<1x1x64xf32, #tpu.memory_space<vmem>>, %arg5: memref<1x1x64xf32, #tpu.memory_space<vmem>>, %arg6: memref<1x64xf32, #tpu.memory_space<vmem>>, %arg7: memref<1x64xf32, #tpu.memory_space<vmem>>, %arg8: memref<32x64xbf16, #tpu.memory_space<vmem>>, %arg9: memref<32x64xbf16, #tpu.memory_space<vmem>>, %arg10: memref<1x64xf32, #tpu.memory_space<vmem>>, %arg11: memref<192x64xbf16, #tpu.memory_space<vmem>>, %arg12: memref<1x64xf32, #tpu.memory_space<vmem>>, %arg13: memref<1x16x64xbf16, #tpu.memory_space<vmem>>, %arg14: memref<1x16x64xbf16, #tpu.memory_space<vmem>>, %arg15: memref<1x1x256xf32, #tpu.memory_space<vmem>>) attributes {dimension_semantics = [#tpu.dimension_semantics<parallel>], iteration_bounds = array<i64: 2>, scalar_prefetch = 0 : i64, scratch_operands = 0 : i64, tpu.core_type = #tpu.core_type<tc>, window_params = [{transform_indices = @transform_0, window_bounds = array<i64: 1, 16, 32>}, {transform_indices = @transform_1, window_bounds = array<i64: 1, 144, 32>}, {transform_indices = @transform_2, window_bounds = array<i64: 1, 48, 64>}, {transform_indices = @transform_3, window_bounds = array<i64: 1, 1, 64>}, {transform_indices = @transform_4, window_bounds = array<i64: 1, 1, 64>}, {pipeline_mode = #tpu.pipeline_mode<synchronous>, transform_indices = @transform_5, window_bounds = array<i64: 1, 64>}, {pipeline_mode = #tpu.pipeline_mode<synchronous>, transform_indices = @transform_6, window_bounds = array<i64: 1, 64>}, {pipeline_mode = #tpu.pipeline_mode<synchronous>, transform_indices = @transform_7, window_bounds = array<i64: 32, 64>}, {pipeline_mode = #tpu.pipeline_mode<synchronous>, transform_indices = @transform_8, window_bounds = array<i64: 32, 64>}, {pipeline_mode = #tpu.pipeline_mode<synchronous>, transform_indices = @transform_9, window_bounds = array<i64: 1, 64>}, {pipeline_mode = #tpu.pipeline_mode<synchronous>, transform_indices = @transform_10, window_bounds = array<i64: 192, 64>}, {pipeline_mode = #tpu.pipeline_mode<synchronous>, transform_indices = @transform_11, window_bounds = array<i64: 1, 64>}, {transform_indices = @transform_12, window_bounds = array<i64: 1, 16, 64>}, {transform_indices = @transform_13, window_bounds = array<i64: 1, 16, 64>}, {transform_indices = @transform_14, window_bounds = array<i64: 1, 1, 256>}]} {
    %c0 = arith.constant 0 : index
    %c0_0 = arith.constant 0 : index
    %c0_1 = arith.constant 0 : index
    %0 = vector.load %arg1[%c0, %c0_0, %c0_1] : memref<1x16x32xf32, #tpu.memory_space<vmem>>, vector<1x16x32xf32>
    %1 = vector.shape_cast %0 : vector<1x16x32xf32> to vector<16x32xf32>
    %c0_2 = arith.constant 0 : index
    %c0_3 = arith.constant 0 : index
    %c0_4 = arith.constant 0 : index
    %2 = vector.load %arg2[%c0_2, %c0_3, %c0_4] : memref<1x144x32xbf16, #tpu.memory_space<vmem>>, vector<1x144x32xbf16>
    %3 = vector.shape_cast %2 : vector<1x144x32xbf16> to vector<144x32xbf16>
    %4 = arith.extf %3 : vector<144x32xbf16> to vector<144x32xf32>
    %c0_5 = arith.constant 0 : index
    %c0_6 = arith.constant 0 : index
    %c0_7 = arith.constant 0 : index
    %5 = vector.load %arg4[%c0_5, %c0_6, %c0_7] : memref<1x1x64xf32, #tpu.memory_space<vmem>>, vector<1x1x64xf32>
    %6 = vector.shape_cast %5 : vector<1x1x64xf32> to vector<1x64xf32>
    %c0_8 = arith.constant 0 : index
    %c0_9 = arith.constant 0 : index
    %c0_10 = arith.constant 0 : index
    %7 = vector.load %arg5[%c0_8, %c0_9, %c0_10] : memref<1x1x64xf32, #tpu.memory_space<vmem>>, vector<1x1x64xf32>
    %8 = vector.shape_cast %7 : vector<1x1x64xf32> to vector<1x64xf32>
    %9 = vector.extract_strided_slice %6 {offsets = [0, 0], sizes = [1, 32], strides = [1, 1]} : vector<1x64xf32> to vector<1x32xf32>
    %10 = vector.extract_strided_slice %6 {offsets = [0, 32], sizes = [1, 32], strides = [1, 1]} : vector<1x64xf32> to vector<1x32xf32>
    %11 = vector.extract_strided_slice %8 {offsets = [0, 0], sizes = [1, 32], strides = [1, 1]} : vector<1x64xf32> to vector<1x32xf32>
    %12 = vector.extract_strided_slice %8 {offsets = [0, 32], sizes = [1, 32], strides = [1, 1]} : vector<1x64xf32> to vector<1x32xf32>
    %13 = vector.broadcast %9 : vector<1x32xf32> to vector<16x32xf32>
    %14 = arith.mulf %1, %13 : vector<16x32xf32>
    %15 = vector.broadcast %11 : vector<1x32xf32> to vector<16x32xf32>
    %16 = arith.addf %14, %15 : vector<16x32xf32>
    %cst = arith.constant 0.000000e+00 : f32
    %17 = vector.broadcast %cst : f32 to vector<16x32xf32>
    %18 = arith.maximumf %16, %17 : vector<16x32xf32>
    %19 = arith.truncf %18 : vector<16x32xf32> to vector<16x32xbf16>
    %c0_11 = arith.constant 0 : index
    %c0_12 = arith.constant 0 : index
    %20 = vector.load %arg8[%c0_11, %c0_12] : memref<32x64xbf16, #tpu.memory_space<vmem>>, vector<32x64xbf16>
    %cst_13 = arith.constant dense<0.000000e+00> : vector<16x64xf32>
    %21 = tpu.matmul %19, %20, %cst_13 {dimension_numbers = #tpu.dot_dimension_numbers<[1], [0], [0], [1], [0, 0, 1, 1], [], []>} : vector<16x32xbf16>, vector<32x64xbf16>, vector<16x64xf32> -> vector<16x64xf32>
    %c0_14 = arith.constant 0 : index
    %c0_15 = arith.constant 0 : index
    %22 = vector.load %arg10[%c0_14, %c0_15] : memref<1x64xf32, #tpu.memory_space<vmem>>, vector<1x64xf32>
    %23 = vector.broadcast %22 : vector<1x64xf32> to vector<16x64xf32>
    %24 = arith.addf %21, %23 : vector<16x64xf32>
    %25 = vector.broadcast %10 : vector<1x32xf32> to vector<144x32xf32>
    %26 = arith.mulf %4, %25 : vector<144x32xf32>
    %27 = vector.broadcast %12 : vector<1x32xf32> to vector<144x32xf32>
    %28 = arith.addf %26, %27 : vector<144x32xf32>
    %cst_16 = arith.constant 0.000000e+00 : f32
    %29 = vector.broadcast %cst_16 : f32 to vector<144x32xf32>
    %30 = arith.maximumf %28, %29 : vector<144x32xf32>
    %31 = arith.truncf %30 : vector<144x32xf32> to vector<144x32xbf16>
    %c0_17 = arith.constant 0 : index
    %c0_18 = arith.constant 0 : index
    %32 = vector.load %arg9[%c0_17, %c0_18] : memref<32x64xbf16, #tpu.memory_space<vmem>>, vector<32x64xbf16>
    %cst_19 = arith.constant dense<0.000000e+00> : vector<144x64xf32>
    %33 = tpu.matmul %31, %32, %cst_19 {dimension_numbers = #tpu.dot_dimension_numbers<[1], [0], [0], [1], [0, 0, 1, 1], [], []>} : vector<144x32xbf16>, vector<32x64xbf16>, vector<144x64xf32> -> vector<144x64xf32>
    %34 = vector.extract_strided_slice %33 {offsets = [0, 0], sizes = [16, 64], strides = [1, 1]} : vector<144x64xf32> to vector<16x64xf32>
    %35 = vector.extract_strided_slice %33 {offsets = [16, 0], sizes = [16, 64], strides = [1, 1]} : vector<144x64xf32> to vector<16x64xf32>
    %36 = arith.maximumf %34, %35 : vector<16x64xf32>
    %37 = vector.extract_strided_slice %33 {offsets = [32, 0], sizes = [16, 64], strides = [1, 1]} : vector<144x64xf32> to vector<16x64xf32>
    %38 = arith.maximumf %36, %37 : vector<16x64xf32>
    %39 = vector.extract_strided_slice %33 {offsets = [48, 0], sizes = [16, 64], strides = [1, 1]} : vector<144x64xf32> to vector<16x64xf32>
    %40 = arith.maximumf %38, %39 : vector<16x64xf32>
    %41 = vector.extract_strided_slice %33 {offsets = [64, 0], sizes = [16, 64], strides = [1, 1]} : vector<144x64xf32> to vector<16x64xf32>
    %42 = arith.maximumf %40, %41 : vector<16x64xf32>
    %43 = vector.extract_strided_slice %33 {offsets = [80, 0], sizes = [16, 64], strides = [1, 1]} : vector<144x64xf32> to vector<16x64xf32>
    %44 = arith.maximumf %42, %43 : vector<16x64xf32>
    %45 = vector.extract_strided_slice %33 {offsets = [96, 0], sizes = [16, 64], strides = [1, 1]} : vector<144x64xf32> to vector<16x64xf32>
    %46 = arith.maximumf %44, %45 : vector<16x64xf32>
    %47 = vector.extract_strided_slice %33 {offsets = [112, 0], sizes = [16, 64], strides = [1, 1]} : vector<144x64xf32> to vector<16x64xf32>
    %48 = arith.maximumf %46, %47 : vector<16x64xf32>
    %49 = vector.extract_strided_slice %33 {offsets = [128, 0], sizes = [16, 64], strides = [1, 1]} : vector<144x64xf32> to vector<16x64xf32>
    %50 = arith.maximumf %48, %49 : vector<16x64xf32>
    %51 = arith.addf %24, %50 : vector<16x64xf32>
    %52 = arith.truncf %51 : vector<16x64xf32> to vector<16x64xbf16>
    %c0_20 = arith.constant 0 : index
    %c0_21 = arith.constant 0 : index
    %c0_22 = arith.constant 0 : index
    %53 = vector.load %arg13[%c0_20, %c0_21, %c0_22] : memref<1x16x64xbf16, #tpu.memory_space<vmem>>, vector<1x16x64xbf16>
    %54 = vector.shape_cast %53 : vector<1x16x64xbf16> to vector<16x64xbf16>
    %55 = vector.shape_cast %52 : vector<16x64xbf16> to vector<1x16x64xbf16>
    tpu.vector_store %arg13[%c0_20, %c0_21, %c0_22], %55 {strides = array<i32>} : memref<1x16x64xbf16, #tpu.memory_space<vmem>>, vector<1x16x64xbf16>,
    %cst_23 = arith.constant dense<0.000000e+00> : vector<64xf32>
    %56 = vector.multi_reduction <add>, %51, %cst_23 [0] : vector<16x64xf32> to vector<64xf32>
    %57 = vector.shape_cast %56 : vector<64xf32> to vector<1x64xf32>
    %cst_24 = arith.constant 6.250000e-02 : f32
    %58 = vector.broadcast %cst_24 : f32 to vector<1x64xf32>
    %59 = arith.mulf %57, %58 : vector<1x64xf32>
    %60 = arith.mulf %51, %51 : vector<16x64xf32>
    %cst_25 = arith.constant dense<0.000000e+00> : vector<64xf32>
    %61 = vector.multi_reduction <add>, %60, %cst_25 [0] : vector<16x64xf32> to vector<64xf32>
    %62 = vector.shape_cast %61 : vector<64xf32> to vector<1x64xf32>
    %cst_26 = arith.constant 6.250000e-02 : f32
    %63 = vector.broadcast %cst_26 : f32 to vector<1x64xf32>
    %64 = arith.mulf %62, %63 : vector<1x64xf32>
    %65 = arith.mulf %59, %59 : vector<1x64xf32>
    %66 = arith.subf %64, %65 : vector<1x64xf32>
    %c0_27 = arith.constant 0 : index
    %c0_28 = arith.constant 0 : index
    %c0_29 = arith.constant 0 : index
    %67 = vector.load %arg3[%c0_27, %c0_28, %c0_29] : memref<1x48x64xbf16, #tpu.memory_space<vmem>>, vector<1x48x64xbf16>
    %68 = vector.shape_cast %67 : vector<1x48x64xbf16> to vector<48x64xbf16>
    %69 = arith.extf %68 : vector<48x64xbf16> to vector<48x64xf32>
    %c0_30 = arith.constant 0 : index
    %c0_31 = arith.constant 0 : index
    %70 = vector.load %arg6[%c0_30, %c0_31] : memref<1x64xf32, #tpu.memory_space<vmem>>, vector<1x64xf32>
    %71 = vector.broadcast %70 : vector<1x64xf32> to vector<48x64xf32>
    %72 = arith.mulf %69, %71 : vector<48x64xf32>
    %c0_32 = arith.constant 0 : index
    %c0_33 = arith.constant 0 : index
    %73 = vector.load %arg7[%c0_32, %c0_33] : memref<1x64xf32, #tpu.memory_space<vmem>>, vector<1x64xf32>
    %74 = vector.broadcast %73 : vector<1x64xf32> to vector<48x64xf32>
    %75 = arith.addf %72, %74 : vector<48x64xf32>
    %cst_34 = arith.constant 0.000000e+00 : f32
    %76 = vector.broadcast %cst_34 : f32 to vector<48x64xf32>
    %77 = arith.maximumf %75, %76 : vector<48x64xf32>
    %78 = vector.extract_strided_slice %77 {offsets = [0, 0], sizes = [16, 64], strides = [1, 1]} : vector<48x64xf32> to vector<16x64xf32>
    %79 = vector.extract_strided_slice %77 {offsets = [16, 0], sizes = [16, 64], strides = [1, 1]} : vector<48x64xf32> to vector<16x64xf32>
    %80 = vector.extract_strided_slice %77 {offsets = [32, 0], sizes = [16, 64], strides = [1, 1]} : vector<48x64xf32> to vector<16x64xf32>
    %81 = tpu.concatenate %78, %79, %80 in 1 : vector<16x64xf32>, vector<16x64xf32>, vector<16x64xf32> -> vector<16x192xf32>
    %82 = arith.truncf %81 : vector<16x192xf32> to vector<16x192xbf16>
    %c0_35 = arith.constant 0 : index
    %c0_36 = arith.constant 0 : index
    %83 = vector.load %arg11[%c0_35, %c0_36] : memref<192x64xbf16, #tpu.memory_space<vmem>>, vector<192x64xbf16>
    %cst_37 = arith.constant dense<0.000000e+00> : vector<16x64xf32>
    %84 = tpu.matmul %82, %83, %cst_37 {dimension_numbers = #tpu.dot_dimension_numbers<[1], [0], [0], [1], [0, 0, 1, 1], [], []>} : vector<16x192xbf16>, vector<192x64xbf16>, vector<16x64xf32> -> vector<16x64xf32>
    %c0_38 = arith.constant 0 : index
    %c0_39 = arith.constant 0 : index
    %85 = vector.load %arg12[%c0_38, %c0_39] : memref<1x64xf32, #tpu.memory_space<vmem>>, vector<1x64xf32>
    %86 = vector.broadcast %85 : vector<1x64xf32> to vector<16x64xf32>
    %87 = arith.addf %84, %86 : vector<16x64xf32>
    %88 = arith.truncf %87 : vector<16x64xf32> to vector<16x64xbf16>
    %c0_40 = arith.constant 0 : index
    %c0_41 = arith.constant 0 : index
    %c0_42 = arith.constant 0 : index
    %89 = vector.load %arg14[%c0_40, %c0_41, %c0_42] : memref<1x16x64xbf16, #tpu.memory_space<vmem>>, vector<1x16x64xbf16>
    %90 = vector.shape_cast %89 : vector<1x16x64xbf16> to vector<16x64xbf16>
    %91 = vector.shape_cast %88 : vector<16x64xbf16> to vector<1x16x64xbf16>
    tpu.vector_store %arg14[%c0_40, %c0_41, %c0_42], %91 {strides = array<i32>} : memref<1x16x64xbf16, #tpu.memory_space<vmem>>, vector<1x16x64xbf16>,
    %cst_43 = arith.constant dense<0.000000e+00> : vector<64xf32>
    %92 = vector.multi_reduction <add>, %87, %cst_43 [0] : vector<16x64xf32> to vector<64xf32>
    %93 = vector.shape_cast %92 : vector<64xf32> to vector<1x64xf32>
    %94 = arith.mulf %87, %87 : vector<16x64xf32>
    %cst_44 = arith.constant dense<0.000000e+00> : vector<64xf32>
    %95 = vector.multi_reduction <add>, %94, %cst_44 [0] : vector<16x64xf32> to vector<64xf32>
    %96 = vector.shape_cast %95 : vector<64xf32> to vector<1x64xf32>
    %97 = tpu.concatenate %59, %66, %93, %96 in 1 : vector<1x64xf32>, vector<1x64xf32>, vector<1x64xf32>, vector<1x64xf32> -> vector<1x256xf32>
    %c0_45 = arith.constant 0 : index
    %c0_46 = arith.constant 0 : index
    %c0_47 = arith.constant 0 : index
    %98 = vector.load %arg15[%c0_45, %c0_46, %c0_47] : memref<1x1x256xf32, #tpu.memory_space<vmem>>, vector<1x1x256xf32>
    %99 = vector.shape_cast %98 : vector<1x1x256xf32> to vector<1x256xf32>
    %100 = vector.shape_cast %97 : vector<1x256xf32> to vector<1x1x256xf32>
    tpu.vector_store %arg15[%c0_45, %c0_46, %c0_47], %100 {strides = array<i32>} : memref<1x1x256xf32, #tpu.memory_space<vmem>>, vector<1x1x256xf32>,
    return
  }
  func.func @transform_0(%arg0: i32) -> (i32, i32, i32) {
    %c0_i32 = arith.constant 0 : i32
    %c0_i32_0 = arith.constant 0 : i32
    %c0_i32_1 = arith.constant 0 : i32
    return %arg0, %c0_i32, %c0_i32_0 : i32, i32, i32
  }
  func.func @transform_1(%arg0: i32) -> (i32, i32, i32) {
    %c0_i32 = arith.constant 0 : i32
    %c0_i32_0 = arith.constant 0 : i32
    %c0_i32_1 = arith.constant 0 : i32
    return %arg0, %c0_i32, %c0_i32_0 : i32, i32, i32
  }
  func.func @transform_2(%arg0: i32) -> (i32, i32, i32) {
    %c0_i32 = arith.constant 0 : i32
    %c0_i32_0 = arith.constant 0 : i32
    %c0_i32_1 = arith.constant 0 : i32
    return %arg0, %c0_i32, %c0_i32_0 : i32, i32, i32
  }
  func.func @transform_3(%arg0: i32) -> (i32, i32, i32) {
    %c0_i32 = arith.constant 0 : i32
    %c0_i32_0 = arith.constant 0 : i32
    %c0_i32_1 = arith.constant 0 : i32
    return %arg0, %c0_i32, %c0_i32_0 : i32, i32, i32
  }
  func.func @transform_4(%arg0: i32) -> (i32, i32, i32) {
    %c0_i32 = arith.constant 0 : i32
    %c0_i32_0 = arith.constant 0 : i32
    %c0_i32_1 = arith.constant 0 : i32
    return %arg0, %c0_i32, %c0_i32_0 : i32, i32, i32
  }
  func.func @transform_5(%arg0: i32) -> (i32, i32) {
    %c0_i32 = arith.constant 0 : i32
    %c0_i32_0 = arith.constant 0 : i32
    %c0_i32_1 = arith.constant 0 : i32
    return %c0_i32, %c0_i32_0 : i32, i32
  }
  func.func @transform_6(%arg0: i32) -> (i32, i32) {
    %c0_i32 = arith.constant 0 : i32
    %c0_i32_0 = arith.constant 0 : i32
    %c0_i32_1 = arith.constant 0 : i32
    return %c0_i32, %c0_i32_0 : i32, i32
  }
  func.func @transform_7(%arg0: i32) -> (i32, i32) {
    %c0_i32 = arith.constant 0 : i32
    %c0_i32_0 = arith.constant 0 : i32
    %c0_i32_1 = arith.constant 0 : i32
    return %c0_i32, %c0_i32_0 : i32, i32
  }
  func.func @transform_8(%arg0: i32) -> (i32, i32) {
    %c0_i32 = arith.constant 0 : i32
    %c0_i32_0 = arith.constant 0 : i32
    %c0_i32_1 = arith.constant 0 : i32
    return %c0_i32, %c0_i32_0 : i32, i32
  }
  func.func @transform_9(%arg0: i32) -> (i32, i32) {
    %c0_i32 = arith.constant 0 : i32
    %c0_i32_0 = arith.constant 0 : i32
    %c0_i32_1 = arith.constant 0 : i32
    return %c0_i32, %c0_i32_0 : i32, i32
  }
  func.func @transform_10(%arg0: i32) -> (i32, i32) {
    %c0_i32 = arith.constant 0 : i32
    %c0_i32_0 = arith.constant 0 : i32
    %c0_i32_1 = arith.constant 0 : i32
    return %c0_i32, %c0_i32_0 : i32, i32
  }
  func.func @transform_11(%arg0: i32) -> (i32, i32) {
    %c0_i32 = arith.constant 0 : i32
    %c0_i32_0 = arith.constant 0 : i32
    %c0_i32_1 = arith.constant 0 : i32
    return %c0_i32, %c0_i32_0 : i32, i32
  }
  func.func @transform_12(%arg0: i32) -> (i32, i32, i32) {
    %c0_i32 = arith.constant 0 : i32
    %c0_i32_0 = arith.constant 0 : i32
    %c0_i32_1 = arith.constant 0 : i32
    return %arg0, %c0_i32, %c0_i32_0 : i32, i32, i32
  }
  func.func @transform_13(%arg0: i32) -> (i32, i32, i32) {
    %c0_i32 = arith.constant 0 : i32
    %c0_i32_0 = arith.constant 0 : i32
    %c0_i32_1 = arith.constant 0 : i32
    return %arg0, %c0_i32, %c0_i32_0 : i32, i32, i32
  }
  func.func @transform_14(%arg0: i32) -> (i32, i32, i32) {
    %c0_i32 = arith.constant 0 : i32
    %c0_i32_0 = arith.constant 0 : i32
    %c0_i32_1 = arith.constant 0 : i32
    return %arg0, %c0_i32, %c0_i32_0 : i32, i32, i32
  }
}

module attributes {stable_mosaic.version = 11 : i64} {
  func.func @_kC_change2_a2stats_kernel(%arg0: i32, %arg1: memref<1x16x64xbf16, #tpu.memory_space<vmem>>, %arg2: memref<1x16x64xbf16, #tpu.memory_space<vmem>>, %arg3: memref<1x1x64xf32, #tpu.memory_space<vmem>>, %arg4: memref<1x1x64xf32, #tpu.memory_space<vmem>>, %arg5: memref<1x64xf32, #tpu.memory_space<vmem>>, %arg6: memref<1x64xf32, #tpu.memory_space<vmem>>, %arg7: memref<64x32xbf16, #tpu.memory_space<vmem>>, %arg8: memref<1x32xf32, #tpu.memory_space<vmem>>, %arg9: memref<1x16x32xbf16, #tpu.memory_space<vmem>>, %arg10: memref<1x1x128xf32, #tpu.memory_space<vmem>>) attributes {dimension_semantics = [#tpu.dimension_semantics<parallel>], iteration_bounds = array<i64: 2>, scalar_prefetch = 0 : i64, scratch_operands = 0 : i64, tpu.core_type = #tpu.core_type<tc>, window_params = [{transform_indices = @transform_0, window_bounds = array<i64: 1, 16, 64>}, {transform_indices = @transform_1, window_bounds = array<i64: 1, 16, 64>}, {transform_indices = @transform_2, window_bounds = array<i64: 1, 1, 64>}, {transform_indices = @transform_3, window_bounds = array<i64: 1, 1, 64>}, {pipeline_mode = #tpu.pipeline_mode<synchronous>, transform_indices = @transform_4, window_bounds = array<i64: 1, 64>}, {pipeline_mode = #tpu.pipeline_mode<synchronous>, transform_indices = @transform_5, window_bounds = array<i64: 1, 64>}, {pipeline_mode = #tpu.pipeline_mode<synchronous>, transform_indices = @transform_6, window_bounds = array<i64: 64, 32>}, {pipeline_mode = #tpu.pipeline_mode<synchronous>, transform_indices = @transform_7, window_bounds = array<i64: 1, 32>}, {transform_indices = @transform_8, window_bounds = array<i64: 1, 16, 32>}, {transform_indices = @transform_9, window_bounds = array<i64: 1, 1, 128>}]} {
    %c0 = arith.constant 0 : index
    %c0_0 = arith.constant 0 : index
    %c0_1 = arith.constant 0 : index
    %0 = vector.load %arg1[%c0, %c0_0, %c0_1] : memref<1x16x64xbf16, #tpu.memory_space<vmem>>, vector<1x16x64xbf16>
    %1 = vector.shape_cast %0 : vector<1x16x64xbf16> to vector<16x64xbf16>
    %2 = arith.extf %1 : vector<16x64xbf16> to vector<16x64xf32>
    %c0_2 = arith.constant 0 : index
    %c0_3 = arith.constant 0 : index
    %c0_4 = arith.constant 0 : index
    %3 = vector.load %arg3[%c0_2, %c0_3, %c0_4] : memref<1x1x64xf32, #tpu.memory_space<vmem>>, vector<1x1x64xf32>
    %4 = vector.shape_cast %3 : vector<1x1x64xf32> to vector<1x64xf32>
    %5 = vector.broadcast %4 : vector<1x64xf32> to vector<16x64xf32>
    %6 = arith.mulf %2, %5 : vector<16x64xf32>
    %c0_5 = arith.constant 0 : index
    %c0_6 = arith.constant 0 : index
    %c0_7 = arith.constant 0 : index
    %7 = vector.load %arg4[%c0_5, %c0_6, %c0_7] : memref<1x1x64xf32, #tpu.memory_space<vmem>>, vector<1x1x64xf32>
    %8 = vector.shape_cast %7 : vector<1x1x64xf32> to vector<1x64xf32>
    %9 = vector.broadcast %8 : vector<1x64xf32> to vector<16x64xf32>
    %10 = arith.addf %6, %9 : vector<16x64xf32>
    %cst = arith.constant 0.000000e+00 : f32
    %11 = vector.broadcast %cst : f32 to vector<16x64xf32>
    %12 = arith.maximumf %10, %11 : vector<16x64xf32>
    %13 = arith.truncf %12 : vector<16x64xf32> to vector<16x64xbf16>
    %c0_8 = arith.constant 0 : index
    %c0_9 = arith.constant 0 : index
    %14 = vector.load %arg7[%c0_8, %c0_9] : memref<64x32xbf16, #tpu.memory_space<vmem>>, vector<64x32xbf16>
    %cst_10 = arith.constant dense<0.000000e+00> : vector<16x32xf32>
    %15 = tpu.matmul %13, %14, %cst_10 {dimension_numbers = #tpu.dot_dimension_numbers<[1], [0], [0], [1], [0, 0, 1, 1], [], []>} : vector<16x64xbf16>, vector<64x32xbf16>, vector<16x32xf32> -> vector<16x32xf32>
    %c0_11 = arith.constant 0 : index
    %c0_12 = arith.constant 0 : index
    %16 = vector.load %arg8[%c0_11, %c0_12] : memref<1x32xf32, #tpu.memory_space<vmem>>, vector<1x32xf32>
    %17 = vector.broadcast %16 : vector<1x32xf32> to vector<16x32xf32>
    %18 = arith.addf %15, %17 : vector<16x32xf32>
    %19 = arith.truncf %18 : vector<16x32xf32> to vector<16x32xbf16>
    %c0_13 = arith.constant 0 : index
    %c0_14 = arith.constant 0 : index
    %c0_15 = arith.constant 0 : index
    %20 = vector.load %arg9[%c0_13, %c0_14, %c0_15] : memref<1x16x32xbf16, #tpu.memory_space<vmem>>, vector<1x16x32xbf16>
    %21 = vector.shape_cast %20 : vector<1x16x32xbf16> to vector<16x32xbf16>
    %22 = vector.shape_cast %19 : vector<16x32xbf16> to vector<1x16x32xbf16>
    tpu.vector_store %arg9[%c0_13, %c0_14, %c0_15], %22 {strides = array<i32>} : memref<1x16x32xbf16, #tpu.memory_space<vmem>>, vector<1x16x32xbf16>,
    %c0_16 = arith.constant 0 : index
    %c0_17 = arith.constant 0 : index
    %c0_18 = arith.constant 0 : index
    %23 = vector.load %arg2[%c0_16, %c0_17, %c0_18] : memref<1x16x64xbf16, #tpu.memory_space<vmem>>, vector<1x16x64xbf16>
    %24 = vector.shape_cast %23 : vector<1x16x64xbf16> to vector<16x64xbf16>
    %25 = arith.extf %24 : vector<16x64xbf16> to vector<16x64xf32>
    %c0_19 = arith.constant 0 : index
    %c0_20 = arith.constant 0 : index
    %26 = vector.load %arg5[%c0_19, %c0_20] : memref<1x64xf32, #tpu.memory_space<vmem>>, vector<1x64xf32>
    %27 = vector.broadcast %26 : vector<1x64xf32> to vector<16x64xf32>
    %28 = arith.mulf %25, %27 : vector<16x64xf32>
    %c0_21 = arith.constant 0 : index
    %c0_22 = arith.constant 0 : index
    %29 = vector.load %arg6[%c0_21, %c0_22] : memref<1x64xf32, #tpu.memory_space<vmem>>, vector<1x64xf32>
    %30 = vector.broadcast %29 : vector<1x64xf32> to vector<16x64xf32>
    %31 = arith.addf %28, %30 : vector<16x64xf32>
    %cst_23 = arith.constant 0.000000e+00 : f32
    %32 = vector.broadcast %cst_23 : f32 to vector<16x64xf32>
    %33 = arith.maximumf %31, %32 : vector<16x64xf32>
    %cst_24 = arith.constant dense<0.000000e+00> : vector<64xf32>
    %34 = vector.multi_reduction <add>, %33, %cst_24 [0] : vector<16x64xf32> to vector<64xf32>
    %35 = vector.shape_cast %34 : vector<64xf32> to vector<1x64xf32>
    %cst_25 = arith.constant 6.250000e-02 : f32
    %36 = vector.broadcast %cst_25 : f32 to vector<1x64xf32>
    %37 = arith.mulf %35, %36 : vector<1x64xf32>
    %38 = arith.mulf %33, %33 : vector<16x64xf32>
    %cst_26 = arith.constant dense<0.000000e+00> : vector<64xf32>
    %39 = vector.multi_reduction <add>, %38, %cst_26 [0] : vector<16x64xf32> to vector<64xf32>
    %40 = vector.shape_cast %39 : vector<64xf32> to vector<1x64xf32>
    %cst_27 = arith.constant 6.250000e-02 : f32
    %41 = vector.broadcast %cst_27 : f32 to vector<1x64xf32>
    %42 = arith.mulf %40, %41 : vector<1x64xf32>
    %43 = arith.mulf %37, %37 : vector<1x64xf32>
    %44 = arith.subf %42, %43 : vector<1x64xf32>
    %45 = tpu.concatenate %37, %44 in 1 : vector<1x64xf32>, vector<1x64xf32> -> vector<1x128xf32>
    %c0_28 = arith.constant 0 : index
    %c0_29 = arith.constant 0 : index
    %c0_30 = arith.constant 0 : index
    %46 = vector.load %arg10[%c0_28, %c0_29, %c0_30] : memref<1x1x128xf32, #tpu.memory_space<vmem>>, vector<1x1x128xf32>
    %47 = vector.shape_cast %46 : vector<1x1x128xf32> to vector<1x128xf32>
    %48 = vector.shape_cast %45 : vector<1x128xf32> to vector<1x1x128xf32>
    tpu.vector_store %arg10[%c0_28, %c0_29, %c0_30], %48 {strides = array<i32>} : memref<1x1x128xf32, #tpu.memory_space<vmem>>, vector<1x1x128xf32>,
    return
  }
  func.func @transform_0(%arg0: i32) -> (i32, i32, i32) {
    %c0_i32 = arith.constant 0 : i32
    %c0_i32_0 = arith.constant 0 : i32
    %c0_i32_1 = arith.constant 0 : i32
    return %arg0, %c0_i32, %c0_i32_0 : i32, i32, i32
  }
  func.func @transform_1(%arg0: i32) -> (i32, i32, i32) {
    %c0_i32 = arith.constant 0 : i32
    %c0_i32_0 = arith.constant 0 : i32
    %c0_i32_1 = arith.constant 0 : i32
    return %arg0, %c0_i32, %c0_i32_0 : i32, i32, i32
  }
  func.func @transform_2(%arg0: i32) -> (i32, i32, i32) {
    %c0_i32 = arith.constant 0 : i32
    %c0_i32_0 = arith.constant 0 : i32
    %c0_i32_1 = arith.constant 0 : i32
    return %arg0, %c0_i32, %c0_i32_0 : i32, i32, i32
  }
  func.func @transform_3(%arg0: i32) -> (i32, i32, i32) {
    %c0_i32 = arith.constant 0 : i32
    %c0_i32_0 = arith.constant 0 : i32
    %c0_i32_1 = arith.constant 0 : i32
    return %arg0, %c0_i32, %c0_i32_0 : i32, i32, i32
  }
  func.func @transform_4(%arg0: i32) -> (i32, i32) {
    %c0_i32 = arith.constant 0 : i32
    %c0_i32_0 = arith.constant 0 : i32
    %c0_i32_1 = arith.constant 0 : i32
    return %c0_i32, %c0_i32_0 : i32, i32
  }
  func.func @transform_5(%arg0: i32) -> (i32, i32) {
    %c0_i32 = arith.constant 0 : i32
    %c0_i32_0 = arith.constant 0 : i32
    %c0_i32_1 = arith.constant 0 : i32
    return %c0_i32, %c0_i32_0 : i32, i32
  }
  func.func @transform_6(%arg0: i32) -> (i32, i32) {
    %c0_i32 = arith.constant 0 : i32
    %c0_i32_0 = arith.constant 0 : i32
    %c0_i32_1 = arith.constant 0 : i32
    return %c0_i32, %c0_i32_0 : i32, i32
  }
  func.func @transform_7(%arg0: i32) -> (i32, i32) {
    %c0_i32 = arith.constant 0 : i32
    %c0_i32_0 = arith.constant 0 : i32
    %c0_i32_1 = arith.constant 0 : i32
    return %c0_i32, %c0_i32_0 : i32, i32
  }
  func.func @transform_8(%arg0: i32) -> (i32, i32, i32) {
    %c0_i32 = arith.constant 0 : i32
    %c0_i32_0 = arith.constant 0 : i32
    %c0_i32_1 = arith.constant 0 : i32
    return %arg0, %c0_i32, %c0_i32_0 : i32, i32, i32
  }
  func.func @transform_9(%arg0: i32) -> (i32, i32, i32) {
    %c0_i32 = arith.constant 0 : i32
    %c0_i32_0 = arith.constant 0 : i32
    %c0_i32_1 = arith.constant 0 : i32
    return %arg0, %c0_i32, %c0_i32_0 : i32, i32, i32
  }
}

module attributes {stable_mosaic.version = 11 : i64} {
  func.func @_kD_change1_aff1_kernel(%arg0: i32, %arg1: memref<1x16x64xbf16, #tpu.memory_space<vmem>>, %arg2: memref<1x16x32xbf16, #tpu.memory_space<vmem>>, %arg3: memref<1x64xf32, #tpu.memory_space<vmem>>, %arg4: memref<1x64xf32, #tpu.memory_space<vmem>>, %arg5: memref<1x1x64xf32, #tpu.memory_space<vmem>>, %arg6: memref<1x1x64xf32, #tpu.memory_space<vmem>>, %arg7: memref<64x32xbf16, #tpu.memory_space<vmem>>, %arg8: memref<1x32xf32, #tpu.memory_space<vmem>>, %arg9: memref<32x8xbf16, #tpu.memory_space<vmem>>, %arg10: memref<1x8xf32, #tpu.memory_space<vmem>>, %arg11: memref<1x16x32xbf16, #tpu.memory_space<vmem>>, %arg12: memref<1x1x48xf32, #tpu.memory_space<vmem>>) attributes {dimension_semantics = [#tpu.dimension_semantics<parallel>], iteration_bounds = array<i64: 2>, scalar_prefetch = 0 : i64, scratch_operands = 0 : i64, tpu.core_type = #tpu.core_type<tc>, window_params = [{transform_indices = @transform_0, window_bounds = array<i64: 1, 16, 64>}, {transform_indices = @transform_1, window_bounds = array<i64: 1, 16, 32>}, {pipeline_mode = #tpu.pipeline_mode<synchronous>, transform_indices = @transform_2, window_bounds = array<i64: 1, 64>}, {pipeline_mode = #tpu.pipeline_mode<synchronous>, transform_indices = @transform_3, window_bounds = array<i64: 1, 64>}, {transform_indices = @transform_4, window_bounds = array<i64: 1, 1, 64>}, {transform_indices = @transform_5, window_bounds = array<i64: 1, 1, 64>}, {pipeline_mode = #tpu.pipeline_mode<synchronous>, transform_indices = @transform_6, window_bounds = array<i64: 64, 32>}, {pipeline_mode = #tpu.pipeline_mode<synchronous>, transform_indices = @transform_7, window_bounds = array<i64: 1, 32>}, {pipeline_mode = #tpu.pipeline_mode<synchronous>, transform_indices = @transform_8, window_bounds = array<i64: 32, 8>}, {pipeline_mode = #tpu.pipeline_mode<synchronous>, transform_indices = @transform_9, window_bounds = array<i64: 1, 8>}, {transform_indices = @transform_10, window_bounds = array<i64: 1, 16, 32>}, {transform_indices = @transform_11, window_bounds = array<i64: 1, 1, 48>}]} {
    %c0 = arith.constant 0 : index
    %c0_0 = arith.constant 0 : index
    %c0_1 = arith.constant 0 : index
    %0 = vector.load %arg1[%c0, %c0_0, %c0_1] : memref<1x16x64xbf16, #tpu.memory_space<vmem>>, vector<1x16x64xbf16>
    %1 = vector.shape_cast %0 : vector<1x16x64xbf16> to vector<16x64xbf16>
    %2 = arith.extf %1 : vector<16x64xbf16> to vector<16x64xf32>
    %c0_2 = arith.constant 0 : index
    %c0_3 = arith.constant 0 : index
    %3 = vector.load %arg3[%c0_2, %c0_3] : memref<1x64xf32, #tpu.memory_space<vmem>>, vector<1x64xf32>
    %4 = vector.broadcast %3 : vector<1x64xf32> to vector<16x64xf32>
    %5 = arith.mulf %2, %4 : vector<16x64xf32>
    %c0_4 = arith.constant 0 : index
    %c0_5 = arith.constant 0 : index
    %6 = vector.load %arg4[%c0_4, %c0_5] : memref<1x64xf32, #tpu.memory_space<vmem>>, vector<1x64xf32>
    %7 = vector.broadcast %6 : vector<1x64xf32> to vector<16x64xf32>
    %8 = arith.addf %5, %7 : vector<16x64xf32>
    %cst = arith.constant 0.000000e+00 : f32
    %9 = vector.broadcast %cst : f32 to vector<16x64xf32>
    %10 = arith.maximumf %8, %9 : vector<16x64xf32>
    %c0_6 = arith.constant 0 : index
    %c0_7 = arith.constant 0 : index
    %c0_8 = arith.constant 0 : index
    %11 = vector.load %arg5[%c0_6, %c0_7, %c0_8] : memref<1x1x64xf32, #tpu.memory_space<vmem>>, vector<1x1x64xf32>
    %12 = vector.shape_cast %11 : vector<1x1x64xf32> to vector<1x64xf32>
    %13 = vector.broadcast %12 : vector<1x64xf32> to vector<16x64xf32>
    %14 = arith.mulf %10, %13 : vector<16x64xf32>
    %c0_9 = arith.constant 0 : index
    %c0_10 = arith.constant 0 : index
    %c0_11 = arith.constant 0 : index
    %15 = vector.load %arg6[%c0_9, %c0_10, %c0_11] : memref<1x1x64xf32, #tpu.memory_space<vmem>>, vector<1x1x64xf32>
    %16 = vector.shape_cast %15 : vector<1x1x64xf32> to vector<1x64xf32>
    %17 = vector.broadcast %16 : vector<1x64xf32> to vector<16x64xf32>
    %18 = arith.addf %14, %17 : vector<16x64xf32>
    %cst_12 = arith.constant 0.000000e+00 : f32
    %19 = vector.broadcast %cst_12 : f32 to vector<16x64xf32>
    %20 = arith.maximumf %18, %19 : vector<16x64xf32>
    %21 = arith.truncf %20 : vector<16x64xf32> to vector<16x64xbf16>
    %c0_13 = arith.constant 0 : index
    %c0_14 = arith.constant 0 : index
    %22 = vector.load %arg7[%c0_13, %c0_14] : memref<64x32xbf16, #tpu.memory_space<vmem>>, vector<64x32xbf16>
    %cst_15 = arith.constant dense<0.000000e+00> : vector<16x32xf32>
    %23 = tpu.matmul %21, %22, %cst_15 {dimension_numbers = #tpu.dot_dimension_numbers<[1], [0], [0], [1], [0, 0, 1, 1], [], []>} : vector<16x64xbf16>, vector<64x32xbf16>, vector<16x32xf32> -> vector<16x32xf32>
    %c0_16 = arith.constant 0 : index
    %c0_17 = arith.constant 0 : index
    %24 = vector.load %arg8[%c0_16, %c0_17] : memref<1x32xf32, #tpu.memory_space<vmem>>, vector<1x32xf32>
    %25 = vector.broadcast %24 : vector<1x32xf32> to vector<16x32xf32>
    %26 = arith.addf %23, %25 : vector<16x32xf32>
    %27 = arith.truncf %26 : vector<16x32xf32> to vector<16x32xbf16>
    %c0_18 = arith.constant 0 : index
    %c0_19 = arith.constant 0 : index
    %c0_20 = arith.constant 0 : index
    %28 = vector.load %arg11[%c0_18, %c0_19, %c0_20] : memref<1x16x32xbf16, #tpu.memory_space<vmem>>, vector<1x16x32xbf16>
    %29 = vector.shape_cast %28 : vector<1x16x32xbf16> to vector<16x32xbf16>
    %30 = vector.shape_cast %27 : vector<16x32xbf16> to vector<1x16x32xbf16>
    tpu.vector_store %arg11[%c0_18, %c0_19, %c0_20], %30 {strides = array<i32>} : memref<1x16x32xbf16, #tpu.memory_space<vmem>>, vector<1x16x32xbf16>,
    %c0_21 = arith.constant 0 : index
    %c0_22 = arith.constant 0 : index
    %c0_23 = arith.constant 0 : index
    %31 = vector.load %arg2[%c0_21, %c0_22, %c0_23] : memref<1x16x32xbf16, #tpu.memory_space<vmem>>, vector<1x16x32xbf16>
    %32 = vector.shape_cast %31 : vector<1x16x32xbf16> to vector<16x32xbf16>
    %33 = arith.extf %32 : vector<16x32xbf16> to vector<16x32xf32>
    %34 = arith.addf %33, %26 : vector<16x32xf32>
    %cst_24 = arith.constant dense<0.000000e+00> : vector<32xf32>
    %35 = vector.multi_reduction <add>, %34, %cst_24 [0] : vector<16x32xf32> to vector<32xf32>
    %36 = vector.shape_cast %35 : vector<32xf32> to vector<1x32xf32>
    %cst_25 = arith.constant 6.250000e-02 : f32
    %37 = vector.broadcast %cst_25 : f32 to vector<1x32xf32>
    %38 = arith.mulf %36, %37 : vector<1x32xf32>
    %39 = arith.truncf %34 : vector<16x32xf32> to vector<16x32xbf16>
    %c0_26 = arith.constant 0 : index
    %c0_27 = arith.constant 0 : index
    %40 = vector.load %arg9[%c0_26, %c0_27] : memref<32x8xbf16, #tpu.memory_space<vmem>>, vector<32x8xbf16>
    %cst_28 = arith.constant dense<0.000000e+00> : vector<16x8xf32>
    %41 = tpu.matmul %39, %40, %cst_28 {dimension_numbers = #tpu.dot_dimension_numbers<[1], [0], [0], [1], [0, 0, 1, 1], [], []>} : vector<16x32xbf16>, vector<32x8xbf16>, vector<16x8xf32> -> vector<16x8xf32>
    %c0_29 = arith.constant 0 : index
    %c0_30 = arith.constant 0 : index
    %42 = vector.load %arg10[%c0_29, %c0_30] : memref<1x8xf32, #tpu.memory_space<vmem>>, vector<1x8xf32>
    %43 = vector.broadcast %42 : vector<1x8xf32> to vector<16x8xf32>
    %44 = arith.addf %41, %43 : vector<16x8xf32>
    %cst_31 = arith.constant dense<0.000000e+00> : vector<8xf32>
    %45 = vector.multi_reduction <add>, %44, %cst_31 [0] : vector<16x8xf32> to vector<8xf32>
    %46 = vector.shape_cast %45 : vector<8xf32> to vector<1x8xf32>
    %47 = arith.mulf %44, %44 : vector<16x8xf32>
    %cst_32 = arith.constant dense<0.000000e+00> : vector<8xf32>
    %48 = vector.multi_reduction <add>, %47, %cst_32 [0] : vector<16x8xf32> to vector<8xf32>
    %49 = vector.shape_cast %48 : vector<8xf32> to vector<1x8xf32>
    %50 = tpu.concatenate %38, %46, %49 in 1 : vector<1x32xf32>, vector<1x8xf32>, vector<1x8xf32> -> vector<1x48xf32>
    %c0_33 = arith.constant 0 : index
    %c0_34 = arith.constant 0 : index
    %c0_35 = arith.constant 0 : index
    %51 = vector.load %arg12[%c0_33, %c0_34, %c0_35] : memref<1x1x48xf32, #tpu.memory_space<vmem>>, vector<1x1x48xf32>
    %52 = vector.shape_cast %51 : vector<1x1x48xf32> to vector<1x48xf32>
    %53 = vector.shape_cast %50 : vector<1x48xf32> to vector<1x1x48xf32>
    tpu.vector_store %arg12[%c0_33, %c0_34, %c0_35], %53 {strides = array<i32>} : memref<1x1x48xf32, #tpu.memory_space<vmem>>, vector<1x1x48xf32>,
    return
  }
  func.func @transform_0(%arg0: i32) -> (i32, i32, i32) {
    %c0_i32 = arith.constant 0 : i32
    %c0_i32_0 = arith.constant 0 : i32
    %c0_i32_1 = arith.constant 0 : i32
    return %arg0, %c0_i32, %c0_i32_0 : i32, i32, i32
  }
  func.func @transform_1(%arg0: i32) -> (i32, i32, i32) {
    %c0_i32 = arith.constant 0 : i32
    %c0_i32_0 = arith.constant 0 : i32
    %c0_i32_1 = arith.constant 0 : i32
    return %arg0, %c0_i32, %c0_i32_0 : i32, i32, i32
  }
  func.func @transform_2(%arg0: i32) -> (i32, i32) {
    %c0_i32 = arith.constant 0 : i32
    %c0_i32_0 = arith.constant 0 : i32
    %c0_i32_1 = arith.constant 0 : i32
    return %c0_i32, %c0_i32_0 : i32, i32
  }
  func.func @transform_3(%arg0: i32) -> (i32, i32) {
    %c0_i32 = arith.constant 0 : i32
    %c0_i32_0 = arith.constant 0 : i32
    %c0_i32_1 = arith.constant 0 : i32
    return %c0_i32, %c0_i32_0 : i32, i32
  }
  func.func @transform_4(%arg0: i32) -> (i32, i32, i32) {
    %c0_i32 = arith.constant 0 : i32
    %c0_i32_0 = arith.constant 0 : i32
    %c0_i32_1 = arith.constant 0 : i32
    return %arg0, %c0_i32, %c0_i32_0 : i32, i32, i32
  }
  func.func @transform_5(%arg0: i32) -> (i32, i32, i32) {
    %c0_i32 = arith.constant 0 : i32
    %c0_i32_0 = arith.constant 0 : i32
    %c0_i32_1 = arith.constant 0 : i32
    return %arg0, %c0_i32, %c0_i32_0 : i32, i32, i32
  }
  func.func @transform_6(%arg0: i32) -> (i32, i32) {
    %c0_i32 = arith.constant 0 : i32
    %c0_i32_0 = arith.constant 0 : i32
    %c0_i32_1 = arith.constant 0 : i32
    return %c0_i32, %c0_i32_0 : i32, i32
  }
  func.func @transform_7(%arg0: i32) -> (i32, i32) {
    %c0_i32 = arith.constant 0 : i32
    %c0_i32_0 = arith.constant 0 : i32
    %c0_i32_1 = arith.constant 0 : i32
    return %c0_i32, %c0_i32_0 : i32, i32
  }
  func.func @transform_8(%arg0: i32) -> (i32, i32) {
    %c0_i32 = arith.constant 0 : i32
    %c0_i32_0 = arith.constant 0 : i32
    %c0_i32_1 = arith.constant 0 : i32
    return %c0_i32, %c0_i32_0 : i32, i32
  }
  func.func @transform_9(%arg0: i32) -> (i32, i32) {
    %c0_i32 = arith.constant 0 : i32
    %c0_i32_0 = arith.constant 0 : i32
    %c0_i32_1 = arith.constant 0 : i32
    return %c0_i32, %c0_i32_0 : i32, i32
  }
  func.func @transform_10(%arg0: i32) -> (i32, i32, i32) {
    %c0_i32 = arith.constant 0 : i32
    %c0_i32_0 = arith.constant 0 : i32
    %c0_i32_1 = arith.constant 0 : i32
    return %arg0, %c0_i32, %c0_i32_0 : i32, i32, i32
  }
  func.func @transform_11(%arg0: i32) -> (i32, i32, i32) {
    %c0_i32 = arith.constant 0 : i32
    %c0_i32_0 = arith.constant 0 : i32
    %c0_i32_1 = arith.constant 0 : i32
    return %arg0, %c0_i32, %c0_i32_0 : i32, i32, i32
  }
}

module attributes {stable_mosaic.version = 11 : i64} {
  func.func @_kF_aff_local2_kernel(%arg0: i32, %arg1: memref<1x16x32xbf16, #tpu.memory_space<vmem>>, %arg2: memref<1x16x32xbf16, #tpu.memory_space<vmem>>, %arg3: memref<1x8xf32, #tpu.memory_space<vmem>>, %arg4: memref<1x8xf32, #tpu.memory_space<vmem>>, %arg5: memref<32x8xbf16, #tpu.memory_space<vmem>>, %arg6: memref<1x8xf32, #tpu.memory_space<vmem>>, %arg7: memref<8x32xbf16, #tpu.memory_space<vmem>>, %arg8: memref<1x32xf32, #tpu.memory_space<vmem>>, %arg9: memref<1x16x32xbf16, #tpu.memory_space<vmem>>, %arg10: memref<1x1x64xf32, #tpu.memory_space<vmem>>) attributes {dimension_semantics = [#tpu.dimension_semantics<parallel>], iteration_bounds = array<i64: 2>, scalar_prefetch = 0 : i64, scratch_operands = 0 : i64, tpu.core_type = #tpu.core_type<tc>, window_params = [{transform_indices = @transform_0, window_bounds = array<i64: 1, 16, 32>}, {transform_indices = @transform_1, window_bounds = array<i64: 1, 16, 32>}, {pipeline_mode = #tpu.pipeline_mode<synchronous>, transform_indices = @transform_2, window_bounds = array<i64: 1, 8>}, {pipeline_mode = #tpu.pipeline_mode<synchronous>, transform_indices = @transform_3, window_bounds = array<i64: 1, 8>}, {pipeline_mode = #tpu.pipeline_mode<synchronous>, transform_indices = @transform_4, window_bounds = array<i64: 32, 8>}, {pipeline_mode = #tpu.pipeline_mode<synchronous>, transform_indices = @transform_5, window_bounds = array<i64: 1, 8>}, {pipeline_mode = #tpu.pipeline_mode<synchronous>, transform_indices = @transform_6, window_bounds = array<i64: 8, 32>}, {pipeline_mode = #tpu.pipeline_mode<synchronous>, transform_indices = @transform_7, window_bounds = array<i64: 1, 32>}, {transform_indices = @transform_8, window_bounds = array<i64: 1, 16, 32>}, {transform_indices = @transform_9, window_bounds = array<i64: 1, 1, 64>}]} {
    %c0 = arith.constant 0 : index
    %c0_0 = arith.constant 0 : index
    %c0_1 = arith.constant 0 : index
    %0 = vector.load %arg1[%c0, %c0_0, %c0_1] : memref<1x16x32xbf16, #tpu.memory_space<vmem>>, vector<1x16x32xbf16>
    %1 = vector.shape_cast %0 : vector<1x16x32xbf16> to vector<16x32xbf16>
    %2 = arith.extf %1 : vector<16x32xbf16> to vector<16x32xf32>
    %c0_2 = arith.constant 0 : index
    %c0_3 = arith.constant 0 : index
    %c0_4 = arith.constant 0 : index
    %3 = vector.load %arg2[%c0_2, %c0_3, %c0_4] : memref<1x16x32xbf16, #tpu.memory_space<vmem>>, vector<1x16x32xbf16>
    %4 = vector.shape_cast %3 : vector<1x16x32xbf16> to vector<16x32xbf16>
    %5 = arith.extf %4 : vector<16x32xbf16> to vector<16x32xf32>
    %6 = arith.addf %2, %5 : vector<16x32xf32>
    %7 = arith.truncf %6 : vector<16x32xf32> to vector<16x32xbf16>
    %c0_5 = arith.constant 0 : index
    %c0_6 = arith.constant 0 : index
    %8 = vector.load %arg5[%c0_5, %c0_6] : memref<32x8xbf16, #tpu.memory_space<vmem>>, vector<32x8xbf16>
    %cst = arith.constant dense<0.000000e+00> : vector<16x8xf32>
    %9 = tpu.matmul %7, %8, %cst {dimension_numbers = #tpu.dot_dimension_numbers<[1], [0], [0], [1], [0, 0, 1, 1], [], []>} : vector<16x32xbf16>, vector<32x8xbf16>, vector<16x8xf32> -> vector<16x8xf32>
    %c0_7 = arith.constant 0 : index
    %c0_8 = arith.constant 0 : index
    %10 = vector.load %arg6[%c0_7, %c0_8] : memref<1x8xf32, #tpu.memory_space<vmem>>, vector<1x8xf32>
    %11 = vector.broadcast %10 : vector<1x8xf32> to vector<16x8xf32>
    %12 = arith.addf %9, %11 : vector<16x8xf32>
    %c0_9 = arith.constant 0 : index
    %c0_10 = arith.constant 0 : index
    %13 = vector.load %arg3[%c0_9, %c0_10] : memref<1x8xf32, #tpu.memory_space<vmem>>, vector<1x8xf32>
    %14 = vector.broadcast %13 : vector<1x8xf32> to vector<16x8xf32>
    %15 = arith.mulf %12, %14 : vector<16x8xf32>
    %c0_11 = arith.constant 0 : index
    %c0_12 = arith.constant 0 : index
    %16 = vector.load %arg4[%c0_11, %c0_12] : memref<1x8xf32, #tpu.memory_space<vmem>>, vector<1x8xf32>
    %17 = vector.broadcast %16 : vector<1x8xf32> to vector<16x8xf32>
    %18 = arith.addf %15, %17 : vector<16x8xf32>
    %cst_13 = arith.constant 0.000000e+00 : f32
    %19 = vector.broadcast %cst_13 : f32 to vector<16x8xf32>
    %20 = arith.maximumf %18, %19 : vector<16x8xf32>
    %21 = arith.truncf %20 : vector<16x8xf32> to vector<16x8xbf16>
    %c0_14 = arith.constant 0 : index
    %c0_15 = arith.constant 0 : index
    %22 = vector.load %arg7[%c0_14, %c0_15] : memref<8x32xbf16, #tpu.memory_space<vmem>>, vector<8x32xbf16>
    %cst_16 = arith.constant dense<0.000000e+00> : vector<16x32xf32>
    %23 = tpu.matmul %21, %22, %cst_16 {dimension_numbers = #tpu.dot_dimension_numbers<[1], [0], [0], [1], [0, 0, 1, 1], [], []>} : vector<16x8xbf16>, vector<8x32xbf16>, vector<16x32xf32> -> vector<16x32xf32>
    %c0_17 = arith.constant 0 : index
    %c0_18 = arith.constant 0 : index
    %24 = vector.load %arg8[%c0_17, %c0_18] : memref<1x32xf32, #tpu.memory_space<vmem>>, vector<1x32xf32>
    %25 = vector.broadcast %24 : vector<1x32xf32> to vector<16x32xf32>
    %26 = arith.addf %23, %25 : vector<16x32xf32>
    %27 = arith.truncf %26 : vector<16x32xf32> to vector<16x32xbf16>
    %c0_19 = arith.constant 0 : index
    %c0_20 = arith.constant 0 : index
    %c0_21 = arith.constant 0 : index
    %28 = vector.load %arg9[%c0_19, %c0_20, %c0_21] : memref<1x16x32xbf16, #tpu.memory_space<vmem>>, vector<1x16x32xbf16>
    %29 = vector.shape_cast %28 : vector<1x16x32xbf16> to vector<16x32xbf16>
    %30 = vector.shape_cast %27 : vector<16x32xbf16> to vector<1x16x32xbf16>
    tpu.vector_store %arg9[%c0_19, %c0_20, %c0_21], %30 {strides = array<i32>} : memref<1x16x32xbf16, #tpu.memory_space<vmem>>, vector<1x16x32xbf16>,
    %cst_22 = arith.constant dense<0.000000e+00> : vector<32xf32>
    %31 = vector.multi_reduction <add>, %26, %cst_22 [0] : vector<16x32xf32> to vector<32xf32>
    %32 = vector.shape_cast %31 : vector<32xf32> to vector<1x32xf32>
    %33 = arith.mulf %26, %26 : vector<16x32xf32>
    %cst_23 = arith.constant dense<0.000000e+00> : vector<32xf32>
    %34 = vector.multi_reduction <add>, %33, %cst_23 [0] : vector<16x32xf32> to vector<32xf32>
    %35 = vector.shape_cast %34 : vector<32xf32> to vector<1x32xf32>
    %36 = tpu.concatenate %32, %35 in 1 : vector<1x32xf32>, vector<1x32xf32> -> vector<1x64xf32>
    %c0_24 = arith.constant 0 : index
    %c0_25 = arith.constant 0 : index
    %c0_26 = arith.constant 0 : index
    %37 = vector.load %arg10[%c0_24, %c0_25, %c0_26] : memref<1x1x64xf32, #tpu.memory_space<vmem>>, vector<1x1x64xf32>
    %38 = vector.shape_cast %37 : vector<1x1x64xf32> to vector<1x64xf32>
    %39 = vector.shape_cast %36 : vector<1x64xf32> to vector<1x1x64xf32>
    tpu.vector_store %arg10[%c0_24, %c0_25, %c0_26], %39 {strides = array<i32>} : memref<1x1x64xf32, #tpu.memory_space<vmem>>, vector<1x1x64xf32>,
    return
  }
  func.func @transform_0(%arg0: i32) -> (i32, i32, i32) {
    %c0_i32 = arith.constant 0 : i32
    %c0_i32_0 = arith.constant 0 : i32
    %c0_i32_1 = arith.constant 0 : i32
    return %arg0, %c0_i32, %c0_i32_0 : i32, i32, i32
  }
  func.func @transform_1(%arg0: i32) -> (i32, i32, i32) {
    %c0_i32 = arith.constant 0 : i32
    %c0_i32_0 = arith.constant 0 : i32
    %c0_i32_1 = arith.constant 0 : i32
    return %arg0, %c0_i32, %c0_i32_0 : i32, i32, i32
  }
  func.func @transform_2(%arg0: i32) -> (i32, i32) {
    %c0_i32 = arith.constant 0 : i32
    %c0_i32_0 = arith.constant 0 : i32
    %c0_i32_1 = arith.constant 0 : i32
    return %c0_i32, %c0_i32_0 : i32, i32
  }
  func.func @transform_3(%arg0: i32) -> (i32, i32) {
    %c0_i32 = arith.constant 0 : i32
    %c0_i32_0 = arith.constant 0 : i32
    %c0_i32_1 = arith.constant 0 : i32
    return %c0_i32, %c0_i32_0 : i32, i32
  }
  func.func @transform_4(%arg0: i32) -> (i32, i32) {
    %c0_i32 = arith.constant 0 : i32
    %c0_i32_0 = arith.constant 0 : i32
    %c0_i32_1 = arith.constant 0 : i32
    return %c0_i32, %c0_i32_0 : i32, i32
  }
  func.func @transform_5(%arg0: i32) -> (i32, i32) {
    %c0_i32 = arith.constant 0 : i32
    %c0_i32_0 = arith.constant 0 : i32
    %c0_i32_1 = arith.constant 0 : i32
    return %c0_i32, %c0_i32_0 : i32, i32
  }
  func.func @transform_6(%arg0: i32) -> (i32, i32) {
    %c0_i32 = arith.constant 0 : i32
    %c0_i32_0 = arith.constant 0 : i32
    %c0_i32_1 = arith.constant 0 : i32
    return %c0_i32, %c0_i32_0 : i32, i32
  }
  func.func @transform_7(%arg0: i32) -> (i32, i32) {
    %c0_i32 = arith.constant 0 : i32
    %c0_i32_0 = arith.constant 0 : i32
    %c0_i32_1 = arith.constant 0 : i32
    return %c0_i32, %c0_i32_0 : i32, i32
  }
  func.func @transform_8(%arg0: i32) -> (i32, i32, i32) {
    %c0_i32 = arith.constant 0 : i32
    %c0_i32_0 = arith.constant 0 : i32
    %c0_i32_1 = arith.constant 0 : i32
    return %arg0, %c0_i32, %c0_i32_0 : i32, i32, i32
  }
  func.func @transform_9(%arg0: i32) -> (i32, i32, i32) {
    %c0_i32 = arith.constant 0 : i32
    %c0_i32_0 = arith.constant 0 : i32
    %c0_i32_1 = arith.constant 0 : i32
    return %arg0, %c0_i32, %c0_i32_0 : i32, i32, i32
  }
}

module attributes {stable_mosaic.version = 11 : i64} {
  func.func @_kG_aff_fuse_kernel(%arg0: i32, %arg1: memref<1x16x32xbf16, #tpu.memory_space<vmem>>, %arg2: memref<1x16x32xbf16, #tpu.memory_space<vmem>>, %arg3: memref<1x16x32xbf16, #tpu.memory_space<vmem>>, %arg4: memref<1x1x32xf32, #tpu.memory_space<vmem>>, %arg5: memref<1x32xf32, #tpu.memory_space<vmem>>, %arg6: memref<1x32xf32, #tpu.memory_space<vmem>>, %arg7: memref<1x16x32xf32, #tpu.memory_space<vmem>>) attributes {dimension_semantics = [#tpu.dimension_semantics<parallel>], iteration_bounds = array<i64: 2>, scalar_prefetch = 0 : i64, scratch_operands = 0 : i64, tpu.core_type = #tpu.core_type<tc>, window_params = [{transform_indices = @transform_0, window_bounds = array<i64: 1, 16, 32>}, {transform_indices = @transform_1, window_bounds = array<i64: 1, 16, 32>}, {transform_indices = @transform_2, window_bounds = array<i64: 1, 16, 32>}, {transform_indices = @transform_3, window_bounds = array<i64: 1, 1, 32>}, {pipeline_mode = #tpu.pipeline_mode<synchronous>, transform_indices = @transform_4, window_bounds = array<i64: 1, 32>}, {pipeline_mode = #tpu.pipeline_mode<synchronous>, transform_indices = @transform_5, window_bounds = array<i64: 1, 32>}, {transform_indices = @transform_6, window_bounds = array<i64: 1, 16, 32>}]} {
    %c0 = arith.constant 0 : index
    %c0_0 = arith.constant 0 : index
    %c0_1 = arith.constant 0 : index
    %0 = vector.load %arg1[%c0, %c0_0, %c0_1] : memref<1x16x32xbf16, #tpu.memory_space<vmem>>, vector<1x16x32xbf16>
    %1 = vector.shape_cast %0 : vector<1x16x32xbf16> to vector<16x32xbf16>
    %2 = arith.extf %1 : vector<16x32xbf16> to vector<16x32xf32>
    %c0_2 = arith.constant 0 : index
    %c0_3 = arith.constant 0 : index
    %c0_4 = arith.constant 0 : index
    %3 = vector.load %arg2[%c0_2, %c0_3, %c0_4] : memref<1x16x32xbf16, #tpu.memory_space<vmem>>, vector<1x16x32xbf16>
    %4 = vector.shape_cast %3 : vector<1x16x32xbf16> to vector<16x32xbf16>
    %5 = arith.extf %4 : vector<16x32xbf16> to vector<16x32xf32>
    %c0_5 = arith.constant 0 : index
    %c0_6 = arith.constant 0 : index
    %c0_7 = arith.constant 0 : index
    %6 = vector.load %arg3[%c0_5, %c0_6, %c0_7] : memref<1x16x32xbf16, #tpu.memory_space<vmem>>, vector<1x16x32xbf16>
    %7 = vector.shape_cast %6 : vector<1x16x32xbf16> to vector<16x32xbf16>
    %8 = arith.extf %7 : vector<16x32xbf16> to vector<16x32xf32>
    %c0_8 = arith.constant 0 : index
    %c0_9 = arith.constant 0 : index
    %9 = vector.load %arg5[%c0_8, %c0_9] : memref<1x32xf32, #tpu.memory_space<vmem>>, vector<1x32xf32>
    %10 = vector.broadcast %9 : vector<1x32xf32> to vector<16x32xf32>
    %11 = arith.mulf %8, %10 : vector<16x32xf32>
    %c0_10 = arith.constant 0 : index
    %c0_11 = arith.constant 0 : index
    %12 = vector.load %arg6[%c0_10, %c0_11] : memref<1x32xf32, #tpu.memory_space<vmem>>, vector<1x32xf32>
    %13 = vector.broadcast %12 : vector<1x32xf32> to vector<16x32xf32>
    %14 = arith.addf %11, %13 : vector<16x32xf32>
    %c0_12 = arith.constant 0 : index
    %c0_13 = arith.constant 0 : index
    %c0_14 = arith.constant 0 : index
    %15 = vector.load %arg4[%c0_12, %c0_13, %c0_14] : memref<1x1x32xf32, #tpu.memory_space<vmem>>, vector<1x1x32xf32>
    %16 = vector.shape_cast %15 : vector<1x1x32xf32> to vector<1x32xf32>
    %17 = vector.broadcast %16 : vector<1x32xf32> to vector<16x32xf32>
    %18 = arith.addf %14, %17 : vector<16x32xf32>
    %19 = arith.negf %18 : vector<16x32xf32>
    %20 = math.exp %19 : vector<16x32xf32>
    %cst = arith.constant 1.000000e+00 : f32
    %21 = vector.broadcast %cst : f32 to vector<16x32xf32>
    %22 = arith.addf %21, %20 : vector<16x32xf32>
    %23 = arith.divf %21, %22 : vector<16x32xf32>
    %cst_15 = arith.constant 2.000000e+00 : f32
    %24 = vector.broadcast %cst_15 : f32 to vector<16x32xf32>
    %25 = arith.mulf %24, %2 : vector<16x32xf32>
    %26 = arith.mulf %25, %23 : vector<16x32xf32>
    %cst_16 = arith.constant 2.000000e+00 : f32
    %27 = vector.broadcast %cst_16 : f32 to vector<16x32xf32>
    %28 = arith.mulf %27, %5 : vector<16x32xf32>
    %cst_17 = arith.constant 1.000000e+00 : f32
    %29 = vector.broadcast %cst_17 : f32 to vector<16x32xf32>
    %30 = arith.subf %29, %23 : vector<16x32xf32>
    %31 = arith.mulf %28, %30 : vector<16x32xf32>
    %32 = arith.addf %26, %31 : vector<16x32xf32>
    %c0_18 = arith.constant 0 : index
    %c0_19 = arith.constant 0 : index
    %c0_20 = arith.constant 0 : index
    %33 = vector.load %arg7[%c0_18, %c0_19, %c0_20] : memref<1x16x32xf32, #tpu.memory_space<vmem>>, vector<1x16x32xf32>
    %34 = vector.shape_cast %33 : vector<1x16x32xf32> to vector<16x32xf32>
    %35 = vector.shape_cast %32 : vector<16x32xf32> to vector<1x16x32xf32>
    tpu.vector_store %arg7[%c0_18, %c0_19, %c0_20], %35 {strides = array<i32>} : memref<1x16x32xf32, #tpu.memory_space<vmem>>, vector<1x16x32xf32>,
    return
  }
  func.func @transform_0(%arg0: i32) -> (i32, i32, i32) {
    %c0_i32 = arith.constant 0 : i32
    %c0_i32_0 = arith.constant 0 : i32
    %c0_i32_1 = arith.constant 0 : i32
    return %arg0, %c0_i32, %c0_i32_0 : i32, i32, i32
  }
  func.func @transform_1(%arg0: i32) -> (i32, i32, i32) {
    %c0_i32 = arith.constant 0 : i32
    %c0_i32_0 = arith.constant 0 : i32
    %c0_i32_1 = arith.constant 0 : i32
    return %arg0, %c0_i32, %c0_i32_0 : i32, i32, i32
  }
  func.func @transform_2(%arg0: i32) -> (i32, i32, i32) {
    %c0_i32 = arith.constant 0 : i32
    %c0_i32_0 = arith.constant 0 : i32
    %c0_i32_1 = arith.constant 0 : i32
    return %arg0, %c0_i32, %c0_i32_0 : i32, i32, i32
  }
  func.func @transform_3(%arg0: i32) -> (i32, i32, i32) {
    %c0_i32 = arith.constant 0 : i32
    %c0_i32_0 = arith.constant 0 : i32
    %c0_i32_1 = arith.constant 0 : i32
    return %arg0, %c0_i32, %c0_i32_0 : i32, i32, i32
  }
  func.func @transform_4(%arg0: i32) -> (i32, i32) {
    %c0_i32 = arith.constant 0 : i32
    %c0_i32_0 = arith.constant 0 : i32
    %c0_i32_1 = arith.constant 0 : i32
    return %c0_i32, %c0_i32_0 : i32, i32
  }
  func.func @transform_5(%arg0: i32) -> (i32, i32) {
    %c0_i32 = arith.constant 0 : i32
    %c0_i32_0 = arith.constant 0 : i32
    %c0_i32_1 = arith.constant 0 : i32
    return %c0_i32, %c0_i32_0 : i32, i32
  }
  func.func @transform_6(%arg0: i32) -> (i32, i32, i32) {
    %c0_i32 = arith.constant 0 : i32
    %c0_i32_0 = arith.constant 0 : i32
    %c0_i32_1 = arith.constant 0 : i32
    return %arg0, %c0_i32, %c0_i32_0 : i32, i32, i32
  }
}

module attributes {stable_mosaic.version = 11 : i64} {
  func.func @_kE_aff_global_kernel(%arg0: memref<2x32xf32, #tpu.memory_space<vmem>>, %arg1: memref<32x8xbf16, #tpu.memory_space<vmem>>, %arg2: memref<1x8xf32, #tpu.memory_space<vmem>>, %arg3: memref<1x8xf32, #tpu.memory_space<vmem>>, %arg4: memref<1x8xf32, #tpu.memory_space<vmem>>, %arg5: memref<8x32xbf16, #tpu.memory_space<vmem>>, %arg6: memref<1x32xf32, #tpu.memory_space<vmem>>, %arg7: memref<1x32xf32, #tpu.memory_space<vmem>>, %arg8: memref<1x32xf32, #tpu.memory_space<vmem>>, %arg9: memref<2x32xf32, #tpu.memory_space<vmem>>) attributes {dimension_semantics = [], scalar_prefetch = 0 : i64, scratch_operands = 0 : i64, tpu.core_type = #tpu.core_type<tc>} {
    %c0 = arith.constant 0 : index
    %c0_0 = arith.constant 0 : index
    %0 = vector.load %arg0[%c0, %c0_0] : memref<2x32xf32, #tpu.memory_space<vmem>>, vector<2x32xf32>
    %1 = arith.truncf %0 : vector<2x32xf32> to vector<2x32xbf16>
    %c0_1 = arith.constant 0 : index
    %c0_2 = arith.constant 0 : index
    %2 = vector.load %arg1[%c0_1, %c0_2] : memref<32x8xbf16, #tpu.memory_space<vmem>>, vector<32x8xbf16>
    %cst = arith.constant dense<0.000000e+00> : vector<2x8xf32>
    %3 = tpu.matmul %1, %2, %cst {dimension_numbers = #tpu.dot_dimension_numbers<[1], [0], [0], [1], [0, 0, 1, 1], [], []>} : vector<2x32xbf16>, vector<32x8xbf16>, vector<2x8xf32> -> vector<2x8xf32>
    %c0_3 = arith.constant 0 : index
    %c0_4 = arith.constant 0 : index
    %4 = vector.load %arg2[%c0_3, %c0_4] : memref<1x8xf32, #tpu.memory_space<vmem>>, vector<1x8xf32>
    %5 = vector.broadcast %4 : vector<1x8xf32> to vector<2x8xf32>
    %6 = arith.addf %3, %5 : vector<2x8xf32>
    %cst_5 = arith.constant dense<0.000000e+00> : vector<8xf32>
    %7 = vector.multi_reduction <add>, %6, %cst_5 [0] : vector<2x8xf32> to vector<8xf32>
    %8 = vector.shape_cast %7 : vector<8xf32> to vector<1x8xf32>
    %cst_6 = arith.constant 2.000000e+00 : f32
    %9 = vector.broadcast %cst_6 : f32 to vector<1x8xf32>
    %10 = arith.divf %8, %9 : vector<1x8xf32>
    %11 = arith.mulf %6, %6 : vector<2x8xf32>
    %cst_7 = arith.constant dense<0.000000e+00> : vector<8xf32>
    %12 = vector.multi_reduction <add>, %11, %cst_7 [0] : vector<2x8xf32> to vector<8xf32>
    %13 = vector.shape_cast %12 : vector<8xf32> to vector<1x8xf32>
    %cst_8 = arith.constant 2.000000e+00 : f32
    %14 = vector.broadcast %cst_8 : f32 to vector<1x8xf32>
    %15 = arith.divf %13, %14 : vector<1x8xf32>
    %16 = arith.mulf %10, %10 : vector<1x8xf32>
    %17 = arith.subf %15, %16 : vector<1x8xf32>
    %cst_9 = arith.constant 0.000000e+00 : f32
    %18 = vector.broadcast %cst_9 : f32 to vector<1x8xf32>
    %19 = arith.maximumf %17, %18 : vector<1x8xf32>
    %20 = vector.broadcast %10 : vector<1x8xf32> to vector<2x8xf32>
    %21 = arith.subf %6, %20 : vector<2x8xf32>
    %cst_10 = arith.constant 9.99999974E-6 : f32
    %22 = vector.broadcast %cst_10 : f32 to vector<1x8xf32>
    %23 = arith.addf %19, %22 : vector<1x8xf32>
    %24 = math.rsqrt %23 : vector<1x8xf32>
    %25 = vector.broadcast %24 : vector<1x8xf32> to vector<2x8xf32>
    %26 = arith.mulf %21, %25 : vector<2x8xf32>
    %c0_11 = arith.constant 0 : index
    %c0_12 = arith.constant 0 : index
    %27 = vector.load %arg3[%c0_11, %c0_12] : memref<1x8xf32, #tpu.memory_space<vmem>>, vector<1x8xf32>
    %28 = vector.broadcast %27 : vector<1x8xf32> to vector<2x8xf32>
    %29 = arith.mulf %26, %28 : vector<2x8xf32>
    %c0_13 = arith.constant 0 : index
    %c0_14 = arith.constant 0 : index
    %30 = vector.load %arg4[%c0_13, %c0_14] : memref<1x8xf32, #tpu.memory_space<vmem>>, vector<1x8xf32>
    %31 = vector.broadcast %30 : vector<1x8xf32> to vector<2x8xf32>
    %32 = arith.addf %29, %31 : vector<2x8xf32>
    %cst_15 = arith.constant 0.000000e+00 : f32
    %33 = vector.broadcast %cst_15 : f32 to vector<2x8xf32>
    %34 = arith.maximumf %32, %33 : vector<2x8xf32>
    %35 = arith.truncf %34 : vector<2x8xf32> to vector<2x8xbf16>
    %c0_16 = arith.constant 0 : index
    %c0_17 = arith.constant 0 : index
    %36 = vector.load %arg5[%c0_16, %c0_17] : memref<8x32xbf16, #tpu.memory_space<vmem>>, vector<8x32xbf16>
    %cst_18 = arith.constant dense<0.000000e+00> : vector<2x32xf32>
    %37 = tpu.matmul %35, %36, %cst_18 {dimension_numbers = #tpu.dot_dimension_numbers<[1], [0], [0], [1], [0, 0, 1, 1], [], []>} : vector<2x8xbf16>, vector<8x32xbf16>, vector<2x32xf32> -> vector<2x32xf32>
    %c0_19 = arith.constant 0 : index
    %c0_20 = arith.constant 0 : index
    %38 = vector.load %arg6[%c0_19, %c0_20] : memref<1x32xf32, #tpu.memory_space<vmem>>, vector<1x32xf32>
    %39 = vector.broadcast %38 : vector<1x32xf32> to vector<2x32xf32>
    %40 = arith.addf %37, %39 : vector<2x32xf32>
    %cst_21 = arith.constant dense<0.000000e+00> : vector<32xf32>
    %41 = vector.multi_reduction <add>, %40, %cst_21 [0] : vector<2x32xf32> to vector<32xf32>
    %42 = vector.shape_cast %41 : vector<32xf32> to vector<1x32xf32>
    %cst_22 = arith.constant 2.000000e+00 : f32
    %43 = vector.broadcast %cst_22 : f32 to vector<1x32xf32>
    %44 = arith.divf %42, %43 : vector<1x32xf32>
    %45 = arith.mulf %40, %40 : vector<2x32xf32>
    %cst_23 = arith.constant dense<0.000000e+00> : vector<32xf32>
    %46 = vector.multi_reduction <add>, %45, %cst_23 [0] : vector<2x32xf32> to vector<32xf32>
    %47 = vector.shape_cast %46 : vector<32xf32> to vector<1x32xf32>
    %cst_24 = arith.constant 2.000000e+00 : f32
    %48 = vector.broadcast %cst_24 : f32 to vector<1x32xf32>
    %49 = arith.divf %47, %48 : vector<1x32xf32>
    %50 = arith.mulf %44, %44 : vector<1x32xf32>
    %51 = arith.subf %49, %50 : vector<1x32xf32>
    %cst_25 = arith.constant 0.000000e+00 : f32
    %52 = vector.broadcast %cst_25 : f32 to vector<1x32xf32>
    %53 = arith.maximumf %51, %52 : vector<1x32xf32>
    %54 = vector.broadcast %44 : vector<1x32xf32> to vector<2x32xf32>
    %55 = arith.subf %40, %54 : vector<2x32xf32>
    %cst_26 = arith.constant 9.99999974E-6 : f32
    %56 = vector.broadcast %cst_26 : f32 to vector<1x32xf32>
    %57 = arith.addf %53, %56 : vector<1x32xf32>
    %58 = math.rsqrt %57 : vector<1x32xf32>
    %59 = vector.broadcast %58 : vector<1x32xf32> to vector<2x32xf32>
    %60 = arith.mulf %55, %59 : vector<2x32xf32>
    %c0_27 = arith.constant 0 : index
    %c0_28 = arith.constant 0 : index
    %61 = vector.load %arg7[%c0_27, %c0_28] : memref<1x32xf32, #tpu.memory_space<vmem>>, vector<1x32xf32>
    %62 = vector.broadcast %61 : vector<1x32xf32> to vector<2x32xf32>
    %63 = arith.mulf %60, %62 : vector<2x32xf32>
    %c0_29 = arith.constant 0 : index
    %c0_30 = arith.constant 0 : index
    %64 = vector.load %arg8[%c0_29, %c0_30] : memref<1x32xf32, #tpu.memory_space<vmem>>, vector<1x32xf32>
    %65 = vector.broadcast %64 : vector<1x32xf32> to vector<2x32xf32>
    %66 = arith.addf %63, %65 : vector<2x32xf32>
    %c0_31 = arith.constant 0 : index
    %c0_32 = arith.constant 0 : index
    %67 = vector.load %arg9[%c0_31, %c0_32] : memref<2x32xf32, #tpu.memory_space<vmem>>, vector<2x32xf32>
    tpu.vector_store %arg9[%c0_31, %c0_32], %66 {strides = array<i32>} : memref<2x32xf32, #tpu.memory_space<vmem>>, vector<2x32xf32>,
    return
  }
}

</mosaic_0001>

<llo_original>
// kernel: gca_forward.10
$region0: #{gca_forward.10}
  #allocation0 [shape = 'u32[]', space=smem, size = 0x4, offset = 0x4, fixed_abs, tag = 'smem constant byte address 0x4 - core index']
  #allocation1 [shape = 'u32[144,128]{1,0:T(1,128)}', space=vmem, size = 0x12000, scoped, tag = 'internal scratch']
  %s0 = inlined_call_operand.vmem [shape: bf16[2,16,64], index: 0, kind: input, shape index: {}]
  %s1 = inlined_call_operand.vmem [shape: bf16[2,16,32], index: 1, kind: input, shape index: {}]
  %s2 = inlined_call_operand.vmem [shape: f32[1,64], index: 2, kind: input, shape index: {}]
  %s3 = inlined_call_operand.vmem [shape: f32[1,64], index: 3, kind: input, shape index: {}]
  %s4 = inlined_call_operand.vmem [shape: f32[2,1,64], index: 4, kind: input, shape index: {}]
  %s5 = inlined_call_operand.vmem [shape: f32[2,1,64], index: 5, kind: input, shape index: {}]
  %s6 = inlined_call_operand.vmem [shape: bf16[64,32], index: 6, kind: input, shape index: {}]
  %s7 = inlined_call_operand.vmem [shape: f32[1,32], index: 7, kind: input, shape index: {}]
  %s8 = inlined_call_operand.vmem [shape: bf16[32,8], index: 8, kind: input, shape index: {}]
  %s9 = inlined_call_operand.vmem [shape: f32[1,8], index: 9, kind: input, shape index: {}]
  %s10 = inlined_call_operand.vmem [shape: bf16[2,16,32], index: 10, kind: output, shape index: {0}]
  %s11 = inlined_call_operand.vmem [shape: f32[2,1,48], index: 11, kind: output, shape index: {1}]
  %12 = xla_tuple %s10, %s11
  %s13 = sld [smem:[#allocation0]]
  $region81: #{gca_forward.10} parent=0
    _
  %s15 = ssub.s32 1, %s13
  %s16 = scalar_select 0, %s15, %s13
  loop: start=0, step=1, limit=4
  $region2: #{gca_forward.10} parent=0 // loop_pre_header
    _
  $region3: #{gca_forward.10} parent=0 // loop_header
    %s18 = sphi 0, %s22
    %p19 = scmp.ge.s32.totalorder %s18, 4
    %s28 = sphi 0, %s30
    %s31 = sphi 0, %s28
    %s32 = sphi 0, %s31
    %s48 = sphi 0, %s32
    %s54 = sphi 0, %s56
    %s57 = sphi 0, %s54
    %s58 = sphi 0, %s57
    %s74 = sphi 0, %s58
    %s78 = sphi 0, %s78
    %s80 = sphi 0, %s78
    %s81 = sphi 0, %s80
    %s95 = sphi 0, %s81
    %s99 = sphi 0, %s99
    %s101 = sphi 0, %s99
    %s102 = sphi 0, %s101
    %s116 = sphi 0, %s102
    %s122 = sphi 0, %s124
    %s125 = sphi 0, %s122
    %s126 = sphi 0, %s125
    %s142 = sphi 0, %s126
    %s148 = sphi 0, %s150
    %s151 = sphi 0, %s148
    %s152 = sphi 0, %s151
    %s168 = sphi 0, %s152
    %s172 = sphi 0, %s172
    %s174 = sphi 0, %s172
    %s175 = sphi 0, %s174
    %s189 = sphi 0, %s175
    %s193 = sphi 0, %s193
    %s195 = sphi 0, %s193
    %s196 = sphi 0, %s195
    %s210 = sphi 0, %s196
    %s214 = sphi 0, %s214
    %s216 = sphi 0, %s214
    %s217 = sphi 0, %s216
    %s231 = sphi 0, %s217
    %s235 = sphi 0, %s235
    %s237 = sphi 0, %s235
    %s238 = sphi 0, %s237
    %s252 = sphi 0, %s238
    %s258 = sphi 0, %s260
    %s261 = sphi 0, %s258
    %s262 = sphi 0, %s261
    %s278 = sphi 0, %s262
    %s284 = sphi 0, %s286
    %s287 = sphi 0, %s284
    %s288 = sphi 0, %s287
    %s304 = sphi 0, %s288
  $region4: #{gca_forward.10} parent=0 // loop_header_branch
    %21 = sbr.rel (%p19) target = $region8
  $region5: #{gca_forward.10} parent=0 // loop_body
    %s23 = ssub.s32 %s18, 1
    %s24 = ssub.s32 %s18, 2
    %s25 = sadd.s32 %s18, 1
    %s26 = ssub.s32 %s18, %s25
    %p27 = scmp.eq.s32.totalorder %s26, 0
    %s29 = sadd.s32 %s28, 1
    %s30 = scalar_select %p27, %s28, %s29
    %p33 = pneg %p27
    %p34 = scmp.eq.s32.totalorder %s18, 1
    %p35 = por %p33, %p34
    %p36 = scmp.ne.s32.totalorder %s28, %s31
    %p37 = scmp.eq.s32.totalorder %s18, 0
    %p38 = por %p36, %p37
    %p39 = scmp.ne.s32.totalorder %s28, %s31
    %p40 = scmp.eq.s32.totalorder %s23, 1
    %p41 = por %p39, %p40
    %p42 = scmp.ne.s32.totalorder %s31, %s32
    %p43 = scmp.eq.s32.totalorder %s23, 0
    %p44 = por %p42, %p43
    %p45 = scmp.ne.s32.totalorder %s31, %s32
    %p46 = scmp.eq.s32.totalorder %s24, 1
    %p47 = por %p45, %p46
    %p49 = scmp.ne.s32.totalorder %s32, %s48
    %p50 = scmp.eq.s32.totalorder %s24, 0
    %p51 = por %p49, %p50
    %s52 = ssub.s32 %s18, %s25
    %p53 = scmp.eq.s32.totalorder %s52, 0
    %s55 = sadd.s32 %s54, 1
    %s56 = scalar_select %p53, %s54, %s55
    %p59 = pneg %p53
    %p60 = scmp.eq.s32.totalorder %s18, 1
    %p61 = por %p59, %p60
    %p62 = scmp.ne.s32.totalorder %s54, %s57
    %p63 = scmp.eq.s32.totalorder %s18, 0
    %p64 = por %p62, %p63
    %p65 = scmp.ne.s32.totalorder %s54, %s57
    %p66 = scmp.eq.s32.totalorder %s23, 1
    %p67 = por %p65, %p66
    %p68 = scmp.ne.s32.totalorder %s57, %s58
    %p69 = scmp.eq.s32.totalorder %s23, 0
    %p70 = por %p68, %p69
    %p71 = scmp.ne.s32.totalorder %s57, %s58
    %p72 = scmp.eq.s32.totalorder %s24, 1
    %p73 = por %p71, %p72
    %p75 = scmp.ne.s32.totalorder %s58, %s74
    %p76 = scmp.eq.s32.totalorder %s24, 0
    %p77 = por %p75, %p76
    %s79 = sadd.s32 %s78, 1
    %p82 = scmp.eq.s32.totalorder %s18, 1
    %p83 = scmp.ne.s32.totalorder %s78, %s80
    %p84 = scmp.eq.s32.totalorder %s18, 0
    %p85 = por %p83, %p84
    %p86 = scmp.ne.s32.totalorder %s78, %s80
    %p87 = scmp.eq.s32.totalorder %s23, 1
    %p88 = por %p86, %p87
    %p89 = scmp.ne.s32.totalorder %s80, %s81
    %p90 = scmp.eq.s32.totalorder %s23, 0
    %p91 = por %p89, %p90
    %p92 = scmp.ne.s32.totalorder %s80, %s81
    %p93 = scmp.eq.s32.totalorder %s24, 1
    %p94 = por %p92, %p93
    %p96 = scmp.ne.s32.totalorder %s81, %s95
    %p97 = scmp.eq.s32.totalorder %s24, 0
    %p98 = por %p96, %p97
    %s100 = sadd.s32 %s99, 1
    %p103 = scmp.eq.s32.totalorder %s18, 1
    %p104 = scmp.ne.s32.totalorder %s99, %s101
    %p105 = scmp.eq.s32.totalorder %s18, 0
    %p106 = por %p104, %p105
    %p107 = scmp.ne.s32.totalorder %s99, %s101
    %p108 = scmp.eq.s32.totalorder %s23, 1
    %p109 = por %p107, %p108
    %p110 = scmp.ne.s32.totalorder %s101, %s102
    %p111 = scmp.eq.s32.totalorder %s23, 0
    %p112 = por %p110, %p111
    %p113 = scmp.ne.s32.totalorder %s101, %s102
    %p114 = scmp.eq.s32.totalorder %s24, 1
    %p115 = por %p113, %p114
    %p117 = scmp.ne.s32.totalorder %s102, %s116
    %p118 = scmp.eq.s32.totalorder %s24, 0
    %p119 = por %p117, %p118
    %s120 = ssub.s32 %s18, %s25
    %p121 = scmp.eq.s32.totalorder %s120, 0
    %s123 = sadd.s32 %s122, 1
    %s124 = scalar_select %p121, %s122, %s123
    %p127 = pneg %p121
    %p128 = scmp.eq.s32.totalorder %s18, 1
    %p129 = por %p127, %p128
    %p130 = scmp.ne.s32.totalorder %s122, %s125
    %p131 = scmp.eq.s32.totalorder %s18, 0
    %p132 = por %p130, %p131
    %p133 = scmp.ne.s32.totalorder %s122, %s125
    %p134 = scmp.eq.s32.totalorder %s23, 1
    %p135 = por %p133, %p134
    %p136 = scmp.ne.s32.totalorder %s125, %s126
    %p137 = scmp.eq.s32.totalorder %s23, 0
    %p138 = por %p136, %p137
    %p139 = scmp.ne.s32.totalorder %s125, %s126
    %p140 = scmp.eq.s32.totalorder %s24, 1
    %p141 = por %p139, %p140
    %p143 = scmp.ne.s32.totalorder %s126, %s142
    %p144 = scmp.eq.s32.totalorder %s24, 0
    %p145 = por %p143, %p144
    %s146 = ssub.s32 %s18, %s25
    %p147 = scmp.eq.s32.totalorder %s146, 0
    %s149 = sadd.s32 %s148, 1
    %s150 = scalar_select %p147, %s148, %s149
    %p153 = pneg %p147
    %p154 = scmp.eq.s32.totalorder %s18, 1
    %p155 = por %p153, %p154
    %p156 = scmp.ne.s32.totalorder %s148, %s151
    %p157 = scmp.eq.s32.totalorder %s18, 0
    %p158 = por %p156, %p157
    %p159 = scmp.ne.s32.totalorder %s148, %s151
    %p160 = scmp.eq.s32.totalorder %s23, 1
    %p161 = por %p159, %p160
    %p162 = scmp.ne.s32.totalorder %s151, %s152
    %p163 = scmp.eq.s32.totalorder %s23, 0
    %p164 = por %p162, %p163
    %p165 = scmp.ne.s32.totalorder %s151, %s152
    %p166 = scmp.eq.s32.totalorder %s24, 1
    %p167 = por %p165, %p166
    %p169 = scmp.ne.s32.totalorder %s152, %s168
    %p170 = scmp.eq.s32.totalorder %s24, 0
    %p171 = por %p169, %p170
    %s173 = sadd.s32 %s172, 1
    %p176 = scmp.eq.s32.totalorder %s18, 1
    %p177 = scmp.ne.s32.totalorder %s172, %s174
    %p178 = scmp.eq.s32.totalorder %s18, 0
    %p179 = por %p177, %p178
    %p180 = scmp.ne.s32.totalorder %s172, %s174
    %p181 = scmp.eq.s32.totalorder %s23, 1
    %p182 = por %p180, %p181
    %p183 = scmp.ne.s32.totalorder %s174, %s175
    %p184 = scmp.eq.s32.totalorder %s23, 0
    %p185 = por %p183, %p184
    %p186 = scmp.ne.s32.totalorder %s174, %s175
    %p187 = scmp.eq.s32.totalorder %s24, 1
    %p188 = por %p186, %p187
    %p190 = scmp.ne.s32.totalorder %s175, %s189
    %p191 = scmp.eq.s32.totalorder %s24, 0
    %p192 = por %p190, %p191
    %s194 = sadd.s32 %s193, 1
    %p197 = scmp.eq.s32.totalorder %s18, 1
    %p198 = scmp.ne.s32.totalorder %s193, %s195
    %p199 = scmp.eq.s32.totalorder %s18, 0
    %p200 = por %p198, %p199
    %p201 = scmp.ne.s32.totalorder %s193, %s195
    %p202 = scmp.eq.s32.totalorder %s23, 1
    %p203 = por %p201, %p202
    %p204 = scmp.ne.s32.totalorder %s195, %s196
    %p205 = scmp.eq.s32.totalorder %s23, 0
    %p206 = por %p204, %p205
    %p207 = scmp.ne.s32.totalorder %s195, %s196
    %p208 = scmp.eq.s32.totalorder %s24, 1
    %p209 = por %p207, %p208
    %p211 = scmp.ne.s32.totalorder %s196, %s210
    %p212 = scmp.eq.s32.totalorder %s24, 0
    %p213 = por %p211, %p212
    %s215 = sadd.s32 %s214, 1
    %p218 = scmp.eq.s32.totalorder %s18, 1
    %p219 = scmp.ne.s32.totalorder %s214, %s216
    %p220 = scmp.eq.s32.totalorder %s18, 0
    %p221 = por %p219, %p220
    %p222 = scmp.ne.s32.totalorder %s214, %s216
    %p223 = scmp.eq.s32.totalorder %s23, 1
    %p224 = por %p222, %p223
    %p225 = scmp.ne.s32.totalorder %s216, %s217
    %p226 = scmp.eq.s32.totalorder %s23, 0
    %p227 = por %p225, %p226
    %p228 = scmp.ne.s32.totalorder %s216, %s217
    %p229 = scmp.eq.s32.totalorder %s24, 1
    %p230 = por %p228, %p229
    %p232 = scmp.ne.s32.totalorder %s217, %s231
    %p233 = scmp.eq.s32.totalorder %s24, 0
    %p234 = por %p232, %p233
    %s236 = sadd.s32 %s235, 1
    %p239 = scmp.eq.s32.totalorder %s18, 1
    %p240 = scmp.ne.s32.totalorder %s235, %s237
    %p241 = scmp.eq.s32.totalorder %s18, 0
    %p242 = por %p240, %p241
    %p243 = scmp.ne.s32.totalorder %s235, %s237
    %p244 = scmp.eq.s32.totalorder %s23, 1
    %p245 = por %p243, %p244
    %p246 = scmp.ne.s32.totalorder %s237, %s238
    %p247 = scmp.eq.s32.totalorder %s23, 0
    %p248 = por %p246, %p247
    %p249 = scmp.ne.s32.totalorder %s237, %s238
    %p250 = scmp.eq.s32.totalorder %s24, 1
    %p251 = por %p249, %p250
    %p253 = scmp.ne.s32.totalorder %s238, %s252
    %p254 = scmp.eq.s32.totalorder %s24, 0
    %p255 = por %p253, %p254
    %s256 = ssub.s32 %s18, %s25
    %p257 = scmp.eq.s32.totalorder %s256, 0
    %s259 = sadd.s32 %s258, 1
    %s260 = scalar_select %p257, %s258, %s259
    %p263 = pneg %p257
    %p264 = scmp.eq.s32.totalorder %s18, 1
    %p265 = por %p263, %p264
    %p266 = scmp.ne.s32.totalorder %s258, %s261
    %p267 = scmp.eq.s32.totalorder %s18, 0
    %p268 = por %p266, %p267
    %p269 = scmp.ne.s32.totalorder %s258, %s261
    %p270 = scmp.eq.s32.totalorder %s23, 1
    %p271 = por %p269, %p270
    %p272 = scmp.ne.s32.totalorder %s261, %s262
    %p273 = scmp.eq.s32.totalorder %s23, 0
    %p274 = por %p272, %p273
    %p275 = scmp.ne.s32.totalorder %s261, %s262
    %p276 = scmp.eq.s32.totalorder %s24, 1
    %p277 = por %p275, %p276
    %p279 = scmp.ne.s32.totalorder %s262, %s278
    %p280 = scmp.eq.s32.totalorder %s24, 0
    %p281 = por %p279, %p280
    %s282 = ssub.s32 %s18, %s25
    %p283 = scmp.eq.s32.totalorder %s282, 0
    %s285 = sadd.s32 %s284, 1
    %s286 = scalar_select %p283, %s284, %s285
    %p289 = pneg %p283
    %p290 = scmp.eq.s32.totalorder %s18, 1
    %p291 = por %p289, %p290
    %p292 = scmp.ne.s32.totalorder %s284, %s287
    %p293 = scmp.eq.s32.totalorder %s18, 0
    %p294 = por %p292, %p293
    %p295 = scmp.ne.s32.totalorder %s284, %s287
    %p296 = scmp.eq.s32.totalorder %s23, 1
    %p297 = por %p295, %p296
    %p298 = scmp.ne.s32.totalorder %s287, %s288
    %p299 = scmp.eq.s32.totalorder %s23, 0
    %p300 = por %p298, %p299
    %p301 = scmp.ne.s32.totalorder %s287, %s288
    %p302 = scmp.eq.s32.totalorder %s24, 1
    %p303 = por %p301, %p302
    %p305 = scmp.ne.s32.totalorder %s288, %s304
    %p306 = scmp.eq.s32.totalorder %s24, 0
    %p307 = por %p305, %p306
    %p308 = scmp.le.s32.totalorder 1, %s18
    %p309 = scmp.lt.s32.totalorder %s18, 3
    %p310 = pnand %p308, %p309
    %p311 = pneg %p310
    // Predicated region
    $region9: #{gca_forward.10} parent=5 // pred_check
      _
    $region10: #{gca_forward.10} parent=5 // pred_check_branch
      %313 = sbr.rel (%p310) target = $region12
    $region11: #{gca_forward.10} parent=5 // pred_region
      %s314 = ssub.s32 %s18, 1
      // Predicated region
      $region13: #{gca_forward.10} parent=11 // pred_check
        %p315 = pneg %p91
      $region14: #{gca_forward.10} parent=11 // pred_check_branch
        %317 = sbr.rel (%p315) target = $region16
      $region15: #{gca_forward.10} parent=11 // pred_region
        _
      $region16: #{gca_forward.10} parent=11 // pred_fallthru
        _
      // Predicated region
      $region17: #{gca_forward.10} parent=11 // pred_check
        %p318 = pneg %p112
      $region18: #{gca_forward.10} parent=11 // pred_check_branch
        %320 = sbr.rel (%p318) target = $region20
      $region19: #{gca_forward.10} parent=11 // pred_region
        _
      $region20: #{gca_forward.10} parent=11 // pred_fallthru
        _
      // Predicated region
      $region21: #{gca_forward.10} parent=11 // pred_check
        %p321 = pneg %p185
      $region22: #{gca_forward.10} parent=11 // pred_check_branch
        %323 = sbr.rel (%p321) target = $region24
      $region23: #{gca_forward.10} parent=11 // pred_region
        _
      $region24: #{gca_forward.10} parent=11 // pred_fallthru
        _
      // Predicated region
      $region25: #{gca_forward.10} parent=11 // pred_check
        %p324 = pneg %p206
      $region26: #{gca_forward.10} parent=11 // pred_check_branch
        %326 = sbr.rel (%p324) target = $region28
      $region27: #{gca_forward.10} parent=11 // pred_region
        _
      $region28: #{gca_forward.10} parent=11 // pred_fallthru
        _
      // Predicated region
      $region29: #{gca_forward.10} parent=11 // pred_check
        %p327 = pneg %p227
      $region30: #{gca_forward.10} parent=11 // pred_check_branch
        %329 = sbr.rel (%p327) target = $region32
      $region31: #{gca_forward.10} parent=11 // pred_region
        _
      $region32: #{gca_forward.10} parent=11 // pred_fallthru
        _
      // Predicated region
      $region33: #{gca_forward.10} parent=11 // pred_check
        %p330 = pneg %p248
      $region34: #{gca_forward.10} parent=11 // pred_check_branch
        %332 = sbr.rel (%p330) target = $region36
      $region35: #{gca_forward.10} parent=11 // pred_region
        _
      $region36: #{gca_forward.10} parent=11 // pred_fallthru
        _
    $region12: #{gca_forward.10} parent=5 // pred_fallthru
      _
    %p333 = scmp.lt.s32.totalorder %s18, 2
    // Predicated region
    $region37: #{gca_forward.10} parent=5 // pred_check
      %p334 = pneg %p333
    $region38: #{gca_forward.10} parent=5 // pred_check_branch
      %336 = sbr.rel (%p334) target = $region40
    $region39: #{gca_forward.10} parent=5 // pred_region
      // Predicated region
      $region41: #{gca_forward.10} parent=39 // pred_check
        %p337 = pneg %p38
      $region42: #{gca_forward.10} parent=39 // pred_check_branch
        %339 = sbr.rel (%p337) target = $region44
      $region43: #{gca_forward.10} parent=39 // pred_region
        %p340 = scmp.lt.s32.totalorder %s18, 1
        %s341 = scalar_select %p340, %s18, 1
        %s342 = smul.addr %s341, 2
        %s343 = smul.addr %s342, 4
        %s344 = scalar_lea.vmem %s0, %s343
      $region44: #{gca_forward.10} parent=39 // pred_fallthru
        _
      // Predicated region
      $region45: #{gca_forward.10} parent=39 // pred_check
        %p345 = pneg %p64
      $region46: #{gca_forward.10} parent=39 // pred_check_branch
        %347 = sbr.rel (%p345) target = $region48
      $region47: #{gca_forward.10} parent=39 // pred_region
        %p348 = scmp.lt.s32.totalorder %s18, 1
        %s349 = scalar_select %p348, %s18, 1
        %s350 = smul.addr %s349, 2
        %s351 = smul.addr %s350, 4
        %s352 = scalar_lea.vmem %s1, %s351
      $region48: #{gca_forward.10} parent=39 // pred_fallthru
        _
      // Predicated region
      $region49: #{gca_forward.10} parent=39 // pred_check
        %p353 = pneg %p132
      $region50: #{gca_forward.10} parent=39 // pred_check_branch
        %355 = sbr.rel (%p353) target = $region52
      $region51: #{gca_forward.10} parent=39 // pred_region
        %p356 = scmp.lt.s32.totalorder %s18, 1
        %s357 = scalar_select %p356, %s18, 1
        %s358 = scalar_lea.vmem %s4, %s357
      $region52: #{gca_forward.10} parent=39 // pred_fallthru
        _
      // Predicated region
      $region53: #{gca_forward.10} parent=39 // pred_check
        %p359 = pneg %p158
      $region54: #{gca_forward.10} parent=39 // pred_check_branch
        %361 = sbr.rel (%p359) target = $region56
      $region55: #{gca_forward.10} parent=39 // pred_region
        %p362 = scmp.lt.s32.totalorder %s18, 1
        %s363 = scalar_select %p362, %s18, 1
        %s364 = scalar_lea.vmem %s5, %s363
      $region56: #{gca_forward.10} parent=39 // pred_fallthru
        _
    $region40: #{gca_forward.10} parent=5 // pred_fallthru
      _
    %p365 = scmp.le.s32.totalorder 1, %s18
    %p366 = scmp.lt.s32.totalorder %s18, 3
    %p367 = pnand %p365, %p366
    %p368 = pneg %p367
    // Predicated region
    $region57: #{gca_forward.10} parent=5 // pred_check
      _
    $region58: #{gca_forward.10} parent=5 // pred_check_branch
      %370 = sbr.rel (%p367) target = $region60
    $region59: #{gca_forward.10} parent=5 // pred_region
      %s371 = ssub.s32 %s18, 1
      %p372 = scmp.lt.s32.totalorder %s23, 1
      %s373 = scalar_select %p372, %s23, 1
      %s374 = smul.addr %s373, 2
      %s375 = smul.addr %s374, 4
      %s376 = scalar_lea.vmem %s0, %s375
      %p377 = pneg %p44
      %p378 = pneg %p41
      %p379 = scmp.lt.s32.totalorder %s23, 1
      %s380 = scalar_select %p379, %s23, 1
      %s381 = smul.addr %s380, 2
      %s382 = smul.addr %s381, 4
      %s383 = scalar_lea.vmem %s1, %s382
      %p384 = pneg %p70
      %p385 = pneg %p67
      %p386 = pneg %p91
      %p387 = pneg %p88
      %p388 = pneg %p112
      %p389 = pneg %p109
      %p390 = scmp.lt.s32.totalorder %s23, 1
      %s391 = scalar_select %p390, %s23, 1
      %s392 = scalar_lea.vmem %s4, %s391
      %p393 = pneg %p138
      %p394 = pneg %p135
      %p395 = scmp.lt.s32.totalorder %s23, 1
      %s396 = scalar_select %p395, %s23, 1
      %s397 = scalar_lea.vmem %s5, %s396
      %p398 = pneg %p164
      %p399 = pneg %p161
      %p400 = pneg %p185
      %p401 = pneg %p182
      %p402 = pneg %p206
      %p403 = pneg %p203
      %p404 = pneg %p227
      %p405 = pneg %p224
      %p406 = pneg %p248
      %p407 = pneg %p245
      %p408 = pneg %p274
      %p409 = pneg %p271
      %p410 = scmp.lt.s32.totalorder %s23, 1
      %s411 = scalar_select %p410, %s23, 1
      %s412 = smul.addr %s411, 2
      %s413 = smul.addr %s412, 4
      %s414 = scalar_lea.vmem %s10, %s413
      %p415 = pneg %p300
      %p416 = pneg %p297
      %p417 = scmp.lt.s32.totalorder %s23, 1
      %s418 = scalar_select %p417, %s23, 1
      %s419 = scalar_lea.vmem %s11, %s418
      %p420 = scmp.lt.s32.totalorder %s23, 1
      %s421 = scalar_select %p420, %s23, 1
      %s422 = smul.addr %s421, 2
      %s423 = smul.addr %s422, 4
      %s424 = scalar_lea.vmem %s0, %s423
      %p425 = scmp.lt.s32.totalorder %s23, 1
      %s426 = scalar_select %p425, %s23, 1
      %s427 = smul.addr %s426, 2
      %s428 = smul.addr %s427, 4
      %s429 = scalar_lea.vmem %s1, %s428
      %p430 = scmp.lt.s32.totalorder %s23, 1
      %s431 = scalar_select %p430, %s23, 1
      %s432 = scalar_lea.vmem %s4, %s431
      %p433 = scmp.lt.s32.totalorder %s23, 1
      %s434 = scalar_select %p433, %s23, 1
      %s435 = scalar_lea.vmem %s5, %s434
      %p436 = scmp.lt.s32.totalorder %s23, 1
      %s437 = scalar_select %p436, %s23, 1
      %s438 = smul.addr %s437, 2
      %s439 = smul.addr %s438, 4
      %s440 = scalar_lea.vmem %s10, %s439
      %p441 = scmp.lt.s32.totalorder %s23, 1
      %s442 = scalar_select %p441, %s23, 1
      %s443 = scalar_lea.vmem %s11, %s442
      %v445 = vld [vmem:[%s424] sm:$0xf]
      %v446 = vld [vmem:[%s424 + $0x4] sm:$0xf]
      %v447 = vunpack.c.l.bf16 %v445
      %v448 = vunpack.c.l.bf16 %v446
      %v449 = vld [vmem:[%s2] sm:$0x1]
      %v451 = vlaneseq
      %v452 = vshrl.u32 %v451, 7
      %v453 = vsub.s32 0, %v452
      %v454 = vrot.slane %v449, %v453
      %v456 = vmul.f32 %v447, %v454
      %v457 = vmul.f32 %v448, %v454
      %v458 = vld [vmem:[%s3] sm:$0x1]
      %v460 = vlaneseq
      %v461 = vshrl.u32 %v460, 7
      %v462 = vsub.s32 0, %v461
      %v463 = vrot.slane %v458, %v462
      %v465 = vadd.f32 %v456, %v463
      %v466 = vadd.f32 %v457, %v463
      %v467 = vmax.f32 %v465, 0.0
      %v468 = vmax.f32 %v466, 0.0
      %v469 = vld [vmem:[%s432] sm:$0x1]
      %v471 = vlaneseq
      %v472 = vshrl.u32 %v471, 7
      %v473 = vsub.s32 0, %v472
      %v474 = vrot.slane %v469, %v473
      %v476 = vmul.f32 %v467, %v474
      %v477 = vmul.f32 %v468, %v474
      %v478 = vld [vmem:[%s435] sm:$0x1]
      %v480 = vlaneseq
      %v481 = vshrl.u32 %v480, 7
      %v482 = vsub.s32 0, %v481
      %v483 = vrot.slane %v478, %v482
      %v485 = vadd.f32 %v476, %v483
      %v486 = vadd.f32 %v477, %v483
      %v487 = vmax.f32 %v485, 0.0
      %v488 = vmax.f32 %v486, 0.0
      %v489 = vpack.c.bf16 %v488, %v487
      %v490 = vld [vmem:[%s6] sm:$0xf]
      %v491 = vld [vmem:[%s6 + $0x4] sm:$0xf]
      %v492 = vld [vmem:[%s6 + $0x8] sm:$0xf]
      %v493 = vld [vmem:[%s6 + $0xc] sm:$0xf]
      %v494 = vld [vmem:[%s6 + $0x10] sm:$0xf]
      %v495 = vld [vmem:[%s6 + $0x14] sm:$0xf]
      %v496 = vld [vmem:[%s6 + $0x18] sm:$0xf]
      %v497 = vld [vmem:[%s6 + $0x1c] sm:$0xf]
      %v498 = vld [vmem:[%s7] sm:$0x1]
      %v500 = vlaneseq
      %v501 = vshrl.u32 %v500, 7
      %v502 = vsub.s32 0, %v501
      %v503 = vrot.slane %v498, %v502
      %v513 = vunpack.c.l.b16 %v490
      %v514 = vunpack.c.l.b16 %v491
      %v515 = vunpack.c.l.b16 %v492
      %v516 = vunpack.c.l.b16 %v493
      %v517 = vunpack.c.l.b16 %v494
      %v518 = vunpack.c.l.b16 %v495
      %v519 = vunpack.c.l.b16 %v496
      %v520 = vunpack.c.l.b16 %v497
      %v521 = vpack.c.b16 %v514, %v513
      %v522 = vpack.c.b16 %v516, %v515
      %v523 = vpack.c.b16 %v518, %v517
      %v524 = vpack.c.b16 %v520, %v519
      %vm529 = vcmask 523264
      %v531 = vsel %vm529, %v489, 0
      %533 = vmatprep.subr.bf16.mxu0 0
      %534 = vmatpush1.bf16.msra.mxu0 %v521
      %535 = vmatprep.subr.bf16.mxu0 0
      %536 = vmatpush1.bf16.msra.mxu0 %v522
      %537 = vmatprep.subr.bf16.mxu0 0
      %538 = vmatpush1.bf16.msra.mxu0 %v523
      %539 = vmatprep.subr.bf16.mxu0 0
      %540 = vmatpush1.bf16.msra.mxu0 %v524
      %541 = vmatprep.subr.bf16.mxu0 0
      %542 = vmatpush1.bf16.msra.mxu0 0
      %543 = vmatprep.subr.bf16.mxu0 0
      %544 = vmatpush1.bf16.msra.mxu0 0
      %545 = vmatprep.subr.bf16.mxu0 0
      %546 = vmatpush1.bf16.msra.mxu0 0
      %547 = vmatprep.subr.bf16.mxu0 0
      %548 = vmatpush1.bf16.msra.mxu0 0
      %549 = vmatprep.subr.bf16.mxu0 0
      %550 = vmatpush1.bf16.msra.mxu0 0
      %551 = vmatprep.subr.bf16.mxu0 0
      %552 = vmatpush1.bf16.msra.mxu0 0
      %553 = vmatprep.subr.bf16.mxu0 0
      %554 = vmatpush1.bf16.msra.mxu0 0
      %555 = vmatprep.subr.bf16.mxu0 0
      %556 = vmatpush1.bf16.msra.mxu0 0
      %557 = vmatprep.subr.bf16.mxu0 0
      %558 = vmatpush1.bf16.msra.mxu0 0
      %559 = vmatprep.subr.bf16.mxu0 0
      %560 = vmatpush1.bf16.msra.mxu0 0
      %561 = vmatprep.subr.bf16.mxu0 0
      %562 = vmatpush1.bf16.msra.mxu0 0
      %563 = vmatprep.subr.bf16.mxu0 0
      %564 = vmatpush1.bf16.msra.mxu0 0
      %565 = vmatprep.mubr.bf16.mxu0 0
      %566 = vmatmul.mubr.bf16.gmra.mrb[0].mxu0 %v531
      %v567 = vpop.f32.mrb[0].mxu0
      %v568 = vadd.f32 %v503, %v567
      %v569 = vpop.f32.mrb[0].mxu0
      %v570 = vpop.f32.mrb[0].mxu0
      %v571 = vadd.f32 %v503, %v570
      %v572 = vpop.f32.mrb[0].mxu0
      %573 = vdwg.mxu0
      %v574 = vpack.c.bf16 %v571, %v568
      %v576 = vunpack.c.l.b16 %v574
      %v577 = vunpack.c.h.b16 %v574
      %v578 = vpack.c.b16 %v576, %v576
      %v579 = vpack.c.b16 %v577, %v577
      %vm582 = vcmask 257024
      %583 = vst.msk [vmem:[%s440] sm:$0xf] %vm582, %v578
      %584 = vst.msk [vmem:[%s440 + $0x4] sm:$0xf] %vm582, %v579
      %v585 = vld [vmem:[%s429] sm:$0xf]
      %v586 = vld [vmem:[%s429 + $0x4] sm:$0xf]
      %v587 = vunpack.c.l.bf16 %v585
      %v588 = vunpack.c.l.bf16 %v586
      %v589 = vadd.f32 %v587, %v568
      %v590 = vadd.f32 %v588, %v571
      %vm591 = vcmask 261120
      %v592 = vsel %vm591, %v589, 0.0
      %v593 = vsel %vm591, %v590, 0.0
      %v594 = vadd.f32 %v592, %v593
      %v595 = vrot.slane %v594, 4
      %v596 = vadd.f32 %v594, %v595
      %v597 = vrot.slane %v596, 2
      %v598 = vadd.f32 %v596, %v597
      %v599 = vrot.slane %v598, 1
      %v600 = vadd.f32 %v598, %v599
      %v601 = vmul.f32 %v600, 0.0625
      %v602 = vpack.c.bf16 %v590, %v589
      %v603 = vld [vmem:[%s8] sm:$0xf]
      %v604 = vld [vmem:[%s8 + $0x4] sm:$0xf]
      %v605 = vld [vmem:[%s8 + $0x8] sm:$0xf]
      %v606 = vld [vmem:[%s8 + $0xc] sm:$0xf]
      %v607 = vld [vmem:[%s9] sm:$0x1]
      %v609 = vlaneseq
      %v610 = vshrl.u32 %v609, 7
      %v611 = vsub.s32 0, %v610
      %v612 = vrot.slane %v607, %v611
      %v618 = vunpack.c.l.b16 %v603
      %v619 = vunpack.c.l.b16 %v604
      %v620 = vunpack.c.l.b16 %v605
      %v621 = vunpack.c.l.b16 %v606
      %v622 = vpack.c.b16 %v619, %v618
      %v623 = vpack.c.b16 %v621, %v620
      %v627 = vsel %vm591, %v602, 0
      %629 = vmatprep.subr.bf16.mxu0 0
      %630 = vmatpush1.bf16.msra.mxu0 %v622
      %631 = vmatprep.subr.bf16.mxu0 0
      %632 = vmatpush1.bf16.msra.mxu0 %v623
      %633 = vmatprep.subr.bf16.mxu0 0
      %634 = vmatpush1.bf16.msra.mxu0 0
      %635 = vmatprep.subr.bf16.mxu0 0
      %636 = vmatpush1.bf16.msra.mxu0 0
      %637 = vmatprep.subr.bf16.mxu0 0
      %638 = vmatpush1.bf16.msra.mxu0 0
      %639 = vmatprep.subr.bf16.mxu0 0
      %640 = vmatpush1.bf16.msra.mxu0 0
      %641 = vmatprep.subr.bf16.mxu0 0
      %642 = vmatpush1.bf16.msra.mxu0 0
      %643 = vmatprep.subr.bf16.mxu0 0
      %644 = vmatpush1.bf16.msra.mxu0 0
      %645 = vmatprep.subr.bf16.mxu0 0
      %646 = vmatpush1.bf16.msra.mxu0 0
      %647 = vmatprep.subr.bf16.mxu0 0
      %648 = vmatpush1.bf16.msra.mxu0 0
      %649 = vmatprep.subr.bf16.mxu0 0
      %650 = vmatpush1.bf16.msra.mxu0 0
      %651 = vmatprep.subr.bf16.mxu0 0
      %652 = vmatpush1.bf16.msra.mxu0 0
      %653 = vmatprep.subr.bf16.mxu0 0
      %654 = vmatpush1.bf16.msra.mxu0 0
      %655 = vmatprep.subr.bf16.mxu0 0
      %656 = vmatpush1.bf16.msra.mxu0 0
      %657 = vmatprep.subr.bf16.mxu0 0
      %658 = vmatpush1.bf16.msra.mxu0 0
      %659 = vmatprep.subr.bf16.mxu0 0
      %660 = vmatpush1.bf16.msra.mxu0 0
      %661 = vmatprep.mubr.bf16.mxu0 0
      %662 = vmatmul.mubr.bf16.gmra.mrb[0].mxu0 %v627
      %v663 = vpop.f32.mrb[0].mxu0
      %v664 = vadd.f32 %v612, %v663
      %v665 = vpop.f32.mrb[0].mxu0
      %v666 = vpop.f32.mrb[0].mxu0
      %v667 = vadd.f32 %v612, %v666
      %v668 = vpop.f32.mrb[0].mxu0
      %669 = vdwg.mxu0
      %vm670 = vcmask 64512
      %v671 = vsel %vm670, %v664, 0.0
      %v672 = vsel %vm670, %v667, 0.0
      %v673 = vadd.f32 %v671, %v672
      %v674 = vrot.slane %v673, 4
      %v675 = vadd.f32 %v673, %v674
      %v676 = vrot.slane %v675, 2
      %v677 = vadd.f32 %v675, %v676
      %v678 = vrot.slane %v677, 1
      %v679 = vadd.f32 %v677, %v678
      %v680 = vmul.f32 %v664, %v664
      %v681 = vmul.f32 %v667, %v667
      %v682 = vsel %vm670, %v680, 0.0
      %v683 = vsel %vm670, %v681, 0.0
      %v684 = vadd.f32 %v682, %v683
      %v685 = vrot.slane %v684, 4
      %v686 = vadd.f32 %v684, %v685
      %v687 = vrot.slane %v686, 2
      %v688 = vadd.f32 %v686, %v687
      %v689 = vrot.slane %v688, 1
      %v690 = vadd.f32 %v688, %v689
      %692 = vrot.lane.b32.xlu0 %v679, 32
      %v693 = vpop.permute.xlu0 %692
      %696 = vrot.lane.b32.xlu0 %v690, 40
      %v697 = vpop.permute.xlu0 %696
      %v699 = vsel %vm591, %v601, %v693
      %vm700 = vcmask 326656
      %v701 = vsel %vm700, %v699, %v697
      %vm702 = vcmask 385024
      %703 = vst.msk [vmem:[%s443] sm:$0x1] %vm702, %v701
      %p704 = scmp.lt.s32.totalorder %s23, 1
      %s705 = scalar_select %p704, %s23, 1
      %s706 = smul.addr %s705, 2
      %s707 = smul.addr %s706, 4
      %s708 = scalar_lea.vmem %s10, %s707
      %p709 = scmp.lt.s32.totalorder %s23, 1
      %s710 = scalar_select %p709, %s23, 1
      %s711 = scalar_lea.vmem %s11, %s710
      // Predicated region
      $region61: #{gca_forward.10} parent=59 // pred_check
        %p712 = pneg %p271
      $region62: #{gca_forward.10} parent=59 // pred_check_branch
        %714 = sbr.rel (%p712) target = $region64
      $region63: #{gca_forward.10} parent=59 // pred_region
        _
      $region64: #{gca_forward.10} parent=59 // pred_fallthru
        _
      // Predicated region
      $region65: #{gca_forward.10} parent=59 // pred_check
        %p715 = pneg %p297
      $region66: #{gca_forward.10} parent=59 // pred_check_branch
        %717 = sbr.rel (%p715) target = $region68
      $region67: #{gca_forward.10} parent=59 // pred_region
        _
      $region68: #{gca_forward.10} parent=59 // pred_fallthru
        _
    $region60: #{gca_forward.10} parent=5 // pred_fallthru
      _
    %p718 = scmp.le.s32.totalorder 2, %s18
    // Predicated region
    $region69: #{gca_forward.10} parent=5 // pred_check
      %p719 = pneg %p718
    $region70: #{gca_forward.10} parent=5 // pred_check_branch
      %721 = sbr.rel (%p719) target = $region72
    $region71: #{gca_forward.10} parent=5 // pred_region
      %s722 = ssub.s32 %s18, 2
      // Predicated region
      $region73: #{gca_forward.10} parent=71 // pred_check
        %p723 = pneg %p277
      $region74: #{gca_forward.10} parent=71 // pred_check_branch
        %725 = sbr.rel (%p723) target = $region76
      $region75: #{gca_forward.10} parent=71 // pred_region
        %p726 = scmp.lt.s32.totalorder %s24, 1
        %s727 = scalar_select %p726, %s24, 1
        %s728 = smul.addr %s727, 2
        %s729 = smul.addr %s728, 4
        %s730 = scalar_lea.vmem %s10, %s729
      $region76: #{gca_forward.10} parent=71 // pred_fallthru
        _
      // Predicated region
      $region77: #{gca_forward.10} parent=71 // pred_check
        %p731 = pneg %p303
      $region78: #{gca_forward.10} parent=71 // pred_check_branch
        %733 = sbr.rel (%p731) target = $region80
      $region79: #{gca_forward.10} parent=71 // pred_region
        %p734 = scmp.lt.s32.totalorder %s24, 1
        %s735 = scalar_select %p734, %s24, 1
        %s736 = scalar_lea.vmem %s11, %s735
      $region80: #{gca_forward.10} parent=71 // pred_fallthru
        _
    $region72: #{gca_forward.10} parent=5 // pred_fallthru
      _
  $region6: #{gca_forward.10} parent=0 // loop_footer
    %s22 = sadd.s32 1, %s18
  $region7: #{gca_forward.10} parent=0 // loop_footer_branch
    %17 = sbr.rel target = $region3
  $region8: #{gca_forward.10} parent=0 // loop_exit
    _

// kernel: gca_forward.9
$region0: #{gca_forward.9}
  #allocation0 [shape = 'u32[]', space=smem, size = 0x4, offset = 0x4, fixed_abs, tag = 'smem constant byte address 0x4 - core index']
  #allocation1 [shape = 'u32[144,128]{1,0:T(1,128)}', space=vmem, size = 0x12000, scoped, tag = 'internal scratch']
  %s0 = inlined_call_operand.vmem [shape: bf16[2,16,64], index: 0, kind: input, shape index: {}]
  %s1 = inlined_call_operand.vmem [shape: bf16[2,16,64], index: 1, kind: input, shape index: {}]
  %s2 = inlined_call_operand.vmem [shape: f32[2,1,64], index: 2, kind: input, shape index: {}]
  %s3 = inlined_call_operand.vmem [shape: f32[2,1,64], index: 3, kind: input, shape index: {}]
  %s4 = inlined_call_operand.vmem [shape: f32[1,64], index: 4, kind: input, shape index: {}]
  %s5 = inlined_call_operand.vmem [shape: f32[1,64], index: 5, kind: input, shape index: {}]
  %s6 = inlined_call_operand.vmem [shape: bf16[64,32], index: 6, kind: input, shape index: {}]
  %s7 = inlined_call_operand.vmem [shape: f32[1,32], index: 7, kind: input, shape index: {}]
  %s8 = inlined_call_operand.vmem [shape: bf16[2,16,32], index: 8, kind: output, shape index: {0}]
  %s9 = inlined_call_operand.vmem [shape: f32[2,1,128], index: 9, kind: output, shape index: {1}]
  %10 = xla_tuple %s8, %s9
  %s11 = sld [smem:[#allocation0]]
  $region73: #{gca_forward.9} parent=0
    _
  %s13 = ssub.s32 1, %s11
  %s14 = scalar_select 0, %s13, %s11
  loop: start=0, step=1, limit=4
  $region2: #{gca_forward.9} parent=0 // loop_pre_header
    _
  $region3: #{gca_forward.9} parent=0 // loop_header
    %s16 = sphi 0, %s20
    %p17 = scmp.ge.s32.totalorder %s16, 4
    %s26 = sphi 0, %s28
    %s29 = sphi 0, %s26
    %s30 = sphi 0, %s29
    %s46 = sphi 0, %s30
    %s52 = sphi 0, %s54
    %s55 = sphi 0, %s52
    %s56 = sphi 0, %s55
    %s72 = sphi 0, %s56
    %s78 = sphi 0, %s80
    %s81 = sphi 0, %s78
    %s82 = sphi 0, %s81
    %s98 = sphi 0, %s82
    %s104 = sphi 0, %s106
    %s107 = sphi 0, %s104
    %s108 = sphi 0, %s107
    %s124 = sphi 0, %s108
    %s128 = sphi 0, %s128
    %s130 = sphi 0, %s128
    %s131 = sphi 0, %s130
    %s145 = sphi 0, %s131
    %s149 = sphi 0, %s149
    %s151 = sphi 0, %s149
    %s152 = sphi 0, %s151
    %s166 = sphi 0, %s152
    %s170 = sphi 0, %s170
    %s172 = sphi 0, %s170
    %s173 = sphi 0, %s172
    %s187 = sphi 0, %s173
    %s191 = sphi 0, %s191
    %s193 = sphi 0, %s191
    %s194 = sphi 0, %s193
    %s208 = sphi 0, %s194
    %s214 = sphi 0, %s216
    %s217 = sphi 0, %s214
    %s218 = sphi 0, %s217
    %s234 = sphi 0, %s218
    %s240 = sphi 0, %s242
    %s243 = sphi 0, %s240
    %s244 = sphi 0, %s243
    %s260 = sphi 0, %s244
  $region4: #{gca_forward.9} parent=0 // loop_header_branch
    %19 = sbr.rel (%p17) target = $region8
  $region5: #{gca_forward.9} parent=0 // loop_body
    %s21 = ssub.s32 %s16, 1
    %s22 = ssub.s32 %s16, 2
    %s23 = sadd.s32 %s16, 1
    %s24 = ssub.s32 %s16, %s23
    %p25 = scmp.eq.s32.totalorder %s24, 0
    %s27 = sadd.s32 %s26, 1
    %s28 = scalar_select %p25, %s26, %s27
    %p31 = pneg %p25
    %p32 = scmp.eq.s32.totalorder %s16, 1
    %p33 = por %p31, %p32
    %p34 = scmp.ne.s32.totalorder %s26, %s29
    %p35 = scmp.eq.s32.totalorder %s16, 0
    %p36 = por %p34, %p35
    %p37 = scmp.ne.s32.totalorder %s26, %s29
    %p38 = scmp.eq.s32.totalorder %s21, 1
    %p39 = por %p37, %p38
    %p40 = scmp.ne.s32.totalorder %s29, %s30
    %p41 = scmp.eq.s32.totalorder %s21, 0
    %p42 = por %p40, %p41
    %p43 = scmp.ne.s32.totalorder %s29, %s30
    %p44 = scmp.eq.s32.totalorder %s22, 1
    %p45 = por %p43, %p44
    %p47 = scmp.ne.s32.totalorder %s30, %s46
    %p48 = scmp.eq.s32.totalorder %s22, 0
    %p49 = por %p47, %p48
    %s50 = ssub.s32 %s16, %s23
    %p51 = scmp.eq.s32.totalorder %s50, 0
    %s53 = sadd.s32 %s52, 1
    %s54 = scalar_select %p51, %s52, %s53
    %p57 = pneg %p51
    %p58 = scmp.eq.s32.totalorder %s16, 1
    %p59 = por %p57, %p58
    %p60 = scmp.ne.s32.totalorder %s52, %s55
    %p61 = scmp.eq.s32.totalorder %s16, 0
    %p62 = por %p60, %p61
    %p63 = scmp.ne.s32.totalorder %s52, %s55
    %p64 = scmp.eq.s32.totalorder %s21, 1
    %p65 = por %p63, %p64
    %p66 = scmp.ne.s32.totalorder %s55, %s56
    %p67 = scmp.eq.s32.totalorder %s21, 0
    %p68 = por %p66, %p67
    %p69 = scmp.ne.s32.totalorder %s55, %s56
    %p70 = scmp.eq.s32.totalorder %s22, 1
    %p71 = por %p69, %p70
    %p73 = scmp.ne.s32.totalorder %s56, %s72
    %p74 = scmp.eq.s32.totalorder %s22, 0
    %p75 = por %p73, %p74
    %s76 = ssub.s32 %s16, %s23
    %p77 = scmp.eq.s32.totalorder %s76, 0
    %s79 = sadd.s32 %s78, 1
    %s80 = scalar_select %p77, %s78, %s79
    %p83 = pneg %p77
    %p84 = scmp.eq.s32.totalorder %s16, 1
    %p85 = por %p83, %p84
    %p86 = scmp.ne.s32.totalorder %s78, %s81
    %p87 = scmp.eq.s32.totalorder %s16, 0
    %p88 = por %p86, %p87
    %p89 = scmp.ne.s32.totalorder %s78, %s81
    %p90 = scmp.eq.s32.totalorder %s21, 1
    %p91 = por %p89, %p90
    %p92 = scmp.ne.s32.totalorder %s81, %s82
    %p93 = scmp.eq.s32.totalorder %s21, 0
    %p94 = por %p92, %p93
    %p95 = scmp.ne.s32.totalorder %s81, %s82
    %p96 = scmp.eq.s32.totalorder %s22, 1
    %p97 = por %p95, %p96
    %p99 = scmp.ne.s32.totalorder %s82, %s98
    %p100 = scmp.eq.s32.totalorder %s22, 0
    %p101 = por %p99, %p100
    %s102 = ssub.s32 %s16, %s23
    %p103 = scmp.eq.s32.totalorder %s102, 0
    %s105 = sadd.s32 %s104, 1
    %s106 = scalar_select %p103, %s104, %s105
    %p109 = pneg %p103
    %p110 = scmp.eq.s32.totalorder %s16, 1
    %p111 = por %p109, %p110
    %p112 = scmp.ne.s32.totalorder %s104, %s107
    %p113 = scmp.eq.s32.totalorder %s16, 0
    %p114 = por %p112, %p113
    %p115 = scmp.ne.s32.totalorder %s104, %s107
    %p116 = scmp.eq.s32.totalorder %s21, 1
    %p117 = por %p115, %p116
    %p118 = scmp.ne.s32.totalorder %s107, %s108
    %p119 = scmp.eq.s32.totalorder %s21, 0
    %p120 = por %p118, %p119
    %p121 = scmp.ne.s32.totalorder %s107, %s108
    %p122 = scmp.eq.s32.totalorder %s22, 1
    %p123 = por %p121, %p122
    %p125 = scmp.ne.s32.totalorder %s108, %s124
    %p126 = scmp.eq.s32.totalorder %s22, 0
    %p127 = por %p125, %p126
    %s129 = sadd.s32 %s128, 1
    %p132 = scmp.eq.s32.totalorder %s16, 1
    %p133 = scmp.ne.s32.totalorder %s128, %s130
    %p134 = scmp.eq.s32.totalorder %s16, 0
    %p135 = por %p133, %p134
    %p136 = scmp.ne.s32.totalorder %s128, %s130
    %p137 = scmp.eq.s32.totalorder %s21, 1
    %p138 = por %p136, %p137
    %p139 = scmp.ne.s32.totalorder %s130, %s131
    %p140 = scmp.eq.s32.totalorder %s21, 0
    %p141 = por %p139, %p140
    %p142 = scmp.ne.s32.totalorder %s130, %s131
    %p143 = scmp.eq.s32.totalorder %s22, 1
    %p144 = por %p142, %p143
    %p146 = scmp.ne.s32.totalorder %s131, %s145
    %p147 = scmp.eq.s32.totalorder %s22, 0
    %p148 = por %p146, %p147
    %s150 = sadd.s32 %s149, 1
    %p153 = scmp.eq.s32.totalorder %s16, 1
    %p154 = scmp.ne.s32.totalorder %s149, %s151
    %p155 = scmp.eq.s32.totalorder %s16, 0
    %p156 = por %p154, %p155
    %p157 = scmp.ne.s32.totalorder %s149, %s151
    %p158 = scmp.eq.s32.totalorder %s21, 1
    %p159 = por %p157, %p158
    %p160 = scmp.ne.s32.totalorder %s151, %s152
    %p161 = scmp.eq.s32.totalorder %s21, 0
    %p162 = por %p160, %p161
    %p163 = scmp.ne.s32.totalorder %s151, %s152
    %p164 = scmp.eq.s32.totalorder %s22, 1
    %p165 = por %p163, %p164
    %p167 = scmp.ne.s32.totalorder %s152, %s166
    %p168 = scmp.eq.s32.totalorder %s22, 0
    %p169 = por %p167, %p168
    %s171 = sadd.s32 %s170, 1
    %p174 = scmp.eq.s32.totalorder %s16, 1
    %p175 = scmp.ne.s32.totalorder %s170, %s172
    %p176 = scmp.eq.s32.totalorder %s16, 0
    %p177 = por %p175, %p176
    %p178 = scmp.ne.s32.totalorder %s170, %s172
    %p179 = scmp.eq.s32.totalorder %s21, 1
    %p180 = por %p178, %p179
    %p181 = scmp.ne.s32.totalorder %s172, %s173
    %p182 = scmp.eq.s32.totalorder %s21, 0
    %p183 = por %p181, %p182
    %p184 = scmp.ne.s32.totalorder %s172, %s173
    %p185 = scmp.eq.s32.totalorder %s22, 1
    %p186 = por %p184, %p185
    %p188 = scmp.ne.s32.totalorder %s173, %s187
    %p189 = scmp.eq.s32.totalorder %s22, 0
    %p190 = por %p188, %p189
    %s192 = sadd.s32 %s191, 1
    %p195 = scmp.eq.s32.totalorder %s16, 1
    %p196 = scmp.ne.s32.totalorder %s191, %s193
    %p197 = scmp.eq.s32.totalorder %s16, 0
    %p198 = por %p196, %p197
    %p199 = scmp.ne.s32.totalorder %s191, %s193
    %p200 = scmp.eq.s32.totalorder %s21, 1
    %p201 = por %p199, %p200
    %p202 = scmp.ne.s32.totalorder %s193, %s194
    %p203 = scmp.eq.s32.totalorder %s21, 0
    %p204 = por %p202, %p203
    %p205 = scmp.ne.s32.totalorder %s193, %s194
    %p206 = scmp.eq.s32.totalorder %s22, 1
    %p207 = por %p205, %p206
    %p209 = scmp.ne.s32.totalorder %s194, %s208
    %p210 = scmp.eq.s32.totalorder %s22, 0
    %p211 = por %p209, %p210
    %s212 = ssub.s32 %s16, %s23
    %p213 = scmp.eq.s32.totalorder %s212, 0
    %s215 = sadd.s32 %s214, 1
    %s216 = scalar_select %p213, %s214, %s215
    %p219 = pneg %p213
    %p220 = scmp.eq.s32.totalorder %s16, 1
    %p221 = por %p219, %p220
    %p222 = scmp.ne.s32.totalorder %s214, %s217
    %p223 = scmp.eq.s32.totalorder %s16, 0
    %p224 = por %p222, %p223
    %p225 = scmp.ne.s32.totalorder %s214, %s217
    %p226 = scmp.eq.s32.totalorder %s21, 1
    %p227 = por %p225, %p226
    %p228 = scmp.ne.s32.totalorder %s217, %s218
    %p229 = scmp.eq.s32.totalorder %s21, 0
    %p230 = por %p228, %p229
    %p231 = scmp.ne.s32.totalorder %s217, %s218
    %p232 = scmp.eq.s32.totalorder %s22, 1
    %p233 = por %p231, %p232
    %p235 = scmp.ne.s32.totalorder %s218, %s234
    %p236 = scmp.eq.s32.totalorder %s22, 0
    %p237 = por %p235, %p236
    %s238 = ssub.s32 %s16, %s23
    %p239 = scmp.eq.s32.totalorder %s238, 0
    %s241 = sadd.s32 %s240, 1
    %s242 = scalar_select %p239, %s240, %s241
    %p245 = pneg %p239
    %p246 = scmp.eq.s32.totalorder %s16, 1
    %p247 = por %p245, %p246
    %p248 = scmp.ne.s32.totalorder %s240, %s243
    %p249 = scmp.eq.s32.totalorder %s16, 0
    %p250 = por %p248, %p249
    %p251 = scmp.ne.s32.totalorder %s240, %s243
    %p252 = scmp.eq.s32.totalorder %s21, 1
    %p253 = por %p251, %p252
    %p254 = scmp.ne.s32.totalorder %s243, %s244
    %p255 = scmp.eq.s32.totalorder %s21, 0
    %p256 = por %p254, %p255
    %p257 = scmp.ne.s32.totalorder %s243, %s244
    %p258 = scmp.eq.s32.totalorder %s22, 1
    %p259 = por %p257, %p258
    %p261 = scmp.ne.s32.totalorder %s244, %s260
    %p262 = scmp.eq.s32.totalorder %s22, 0
    %p263 = por %p261, %p262
    %p264 = scmp.le.s32.totalorder 1, %s16
    %p265 = scmp.lt.s32.totalorder %s16, 3
    %p266 = pnand %p264, %p265
    %p267 = pneg %p266
    // Predicated region
    $region9: #{gca_forward.9} parent=5 // pred_check
      _
    $region10: #{gca_forward.9} parent=5 // pred_check_branch
      %269 = sbr.rel (%p266) target = $region12
    $region11: #{gca_forward.9} parent=5 // pred_region
      %s270 = ssub.s32 %s16, 1
      // Predicated region
      $region13: #{gca_forward.9} parent=11 // pred_check
        %p271 = pneg %p141
      $region14: #{gca_forward.9} parent=11 // pred_check_branch
        %273 = sbr.rel (%p271) target = $region16
      $region15: #{gca_forward.9} parent=11 // pred_region
        _
      $region16: #{gca_forward.9} parent=11 // pred_fallthru
        _
      // Predicated region
      $region17: #{gca_forward.9} parent=11 // pred_check
        %p274 = pneg %p162
      $region18: #{gca_forward.9} parent=11 // pred_check_branch
        %276 = sbr.rel (%p274) target = $region20
      $region19: #{gca_forward.9} parent=11 // pred_region
        _
      $region20: #{gca_forward.9} parent=11 // pred_fallthru
        _
      // Predicated region
      $region21: #{gca_forward.9} parent=11 // pred_check
        %p277 = pneg %p183
      $region22: #{gca_forward.9} parent=11 // pred_check_branch
        %279 = sbr.rel (%p277) target = $region24
      $region23: #{gca_forward.9} parent=11 // pred_region
        _
      $region24: #{gca_forward.9} parent=11 // pred_fallthru
        _
      // Predicated region
      $region25: #{gca_forward.9} parent=11 // pred_check
        %p280 = pneg %p204
      $region26: #{gca_forward.9} parent=11 // pred_check_branch
        %282 = sbr.rel (%p280) target = $region28
      $region27: #{gca_forward.9} parent=11 // pred_region
        _
      $region28: #{gca_forward.9} parent=11 // pred_fallthru
        _
    $region12: #{gca_forward.9} parent=5 // pred_fallthru
      _
    %p283 = scmp.lt.s32.totalorder %s16, 2
    // Predicated region
    $region29: #{gca_forward.9} parent=5 // pred_check
      %p284 = pneg %p283
    $region30: #{gca_forward.9} parent=5 // pred_check_branch
      %286 = sbr.rel (%p284) target = $region32
    $region31: #{gca_forward.9} parent=5 // pred_region
      // Predicated region
      $region33: #{gca_forward.9} parent=31 // pred_check
        %p287 = pneg %p36
      $region34: #{gca_forward.9} parent=31 // pred_check_branch
        %289 = sbr.rel (%p287) target = $region36
      $region35: #{gca_forward.9} parent=31 // pred_region
        %p290 = scmp.lt.s32.totalorder %s16, 1
        %s291 = scalar_select %p290, %s16, 1
        %s292 = smul.addr %s291, 2
        %s293 = smul.addr %s292, 4
        %s294 = scalar_lea.vmem %s0, %s293
      $region36: #{gca_forward.9} parent=31 // pred_fallthru
        _
      // Predicated region
      $region37: #{gca_forward.9} parent=31 // pred_check
        %p295 = pneg %p62
      $region38: #{gca_forward.9} parent=31 // pred_check_branch
        %297 = sbr.rel (%p295) target = $region40
      $region39: #{gca_forward.9} parent=31 // pred_region
        %p298 = scmp.lt.s32.totalorder %s16, 1
        %s299 = scalar_select %p298, %s16, 1
        %s300 = smul.addr %s299, 2
        %s301 = smul.addr %s300, 4
        %s302 = scalar_lea.vmem %s1, %s301
      $region40: #{gca_forward.9} parent=31 // pred_fallthru
        _
      // Predicated region
      $region41: #{gca_forward.9} parent=31 // pred_check
        %p303 = pneg %p88
      $region42: #{gca_forward.9} parent=31 // pred_check_branch
        %305 = sbr.rel (%p303) target = $region44
      $region43: #{gca_forward.9} parent=31 // pred_region
        %p306 = scmp.lt.s32.totalorder %s16, 1
        %s307 = scalar_select %p306, %s16, 1
        %s308 = scalar_lea.vmem %s2, %s307
      $region44: #{gca_forward.9} parent=31 // pred_fallthru
        _
      // Predicated region
      $region45: #{gca_forward.9} parent=31 // pred_check
        %p309 = pneg %p114
      $region46: #{gca_forward.9} parent=31 // pred_check_branch
        %311 = sbr.rel (%p309) target = $region48
      $region47: #{gca_forward.9} parent=31 // pred_region
        %p312 = scmp.lt.s32.totalorder %s16, 1
        %s313 = scalar_select %p312, %s16, 1
        %s314 = scalar_lea.vmem %s3, %s313
      $region48: #{gca_forward.9} parent=31 // pred_fallthru
        _
    $region32: #{gca_forward.9} parent=5 // pred_fallthru
      _
    %p315 = scmp.le.s32.totalorder 1, %s16
    %p316 = scmp.lt.s32.totalorder %s16, 3
    %p317 = pnand %p315, %p316
    %p318 = pneg %p317
    // Predicated region
    $region49: #{gca_forward.9} parent=5 // pred_check
      _
    $region50: #{gca_forward.9} parent=5 // pred_check_branch
      %320 = sbr.rel (%p317) target = $region52
    $region51: #{gca_forward.9} parent=5 // pred_region
      %s321 = ssub.s32 %s16, 1
      %p322 = scmp.lt.s32.totalorder %s21, 1
      %s323 = scalar_select %p322, %s21, 1
      %s324 = smul.addr %s323, 2
      %s325 = smul.addr %s324, 4
      %s326 = scalar_lea.vmem %s0, %s325
      %p327 = pneg %p42
      %p328 = pneg %p39
      %p329 = scmp.lt.s32.totalorder %s21, 1
      %s330 = scalar_select %p329, %s21, 1
      %s331 = smul.addr %s330, 2
      %s332 = smul.addr %s331, 4
      %s333 = scalar_lea.vmem %s1, %s332
      %p334 = pneg %p68
      %p335 = pneg %p65
      %p336 = scmp.lt.s32.totalorder %s21, 1
      %s337 = scalar_select %p336, %s21, 1
      %s338 = scalar_lea.vmem %s2, %s337
      %p339 = pneg %p94
      %p340 = pneg %p91
      %p341 = scmp.lt.s32.totalorder %s21, 1
      %s342 = scalar_select %p341, %s21, 1
      %s343 = scalar_lea.vmem %s3, %s342
      %p344 = pneg %p120
      %p345 = pneg %p117
      %p346 = pneg %p141
      %p347 = pneg %p138
      %p348 = pneg %p162
      %p349 = pneg %p159
      %p350 = pneg %p183
      %p351 = pneg %p180
      %p352 = pneg %p204
      %p353 = pneg %p201
      %p354 = pneg %p230
      %p355 = pneg %p227
      %p356 = scmp.lt.s32.totalorder %s21, 1
      %s357 = scalar_select %p356, %s21, 1
      %s358 = smul.addr %s357, 2
      %s359 = smul.addr %s358, 4
      %s360 = scalar_lea.vmem %s8, %s359
      %p361 = pneg %p256
      %p362 = pneg %p253
      %p363 = scmp.lt.s32.totalorder %s21, 1
      %s364 = scalar_select %p363, %s21, 1
      %s365 = scalar_lea.vmem %s9, %s364
      %p366 = scmp.lt.s32.totalorder %s21, 1
      %s367 = scalar_select %p366, %s21, 1
      %s368 = smul.addr %s367, 2
      %s369 = smul.addr %s368, 4
      %s370 = scalar_lea.vmem %s0, %s369
      %p371 = scmp.lt.s32.totalorder %s21, 1
      %s372 = scalar_select %p371, %s21, 1
      %s373 = smul.addr %s372, 2
      %s374 = smul.addr %s373, 4
      %s375 = scalar_lea.vmem %s1, %s374
      %p376 = scmp.lt.s32.totalorder %s21, 1
      %s377 = scalar_select %p376, %s21, 1
      %s378 = scalar_lea.vmem %s2, %s377
      %p379 = scmp.lt.s32.totalorder %s21, 1
      %s380 = scalar_select %p379, %s21, 1
      %s381 = scalar_lea.vmem %s3, %s380
      %p382 = scmp.lt.s32.totalorder %s21, 1
      %s383 = scalar_select %p382, %s21, 1
      %s384 = smul.addr %s383, 2
      %s385 = smul.addr %s384, 4
      %s386 = scalar_lea.vmem %s8, %s385
      %p387 = scmp.lt.s32.totalorder %s21, 1
      %s388 = scalar_select %p387, %s21, 1
      %s389 = scalar_lea.vmem %s9, %s388
      %v391 = vld [vmem:[%s370] sm:$0xf]
      %v392 = vld [vmem:[%s370 + $0x4] sm:$0xf]
      %v393 = vunpack.c.l.bf16 %v391
      %v394 = vunpack.c.l.bf16 %v392
      %v395 = vld [vmem:[%s378] sm:$0x1]
      %v397 = vlaneseq
      %v398 = vshrl.u32 %v397, 7
      %v399 = vsub.s32 0, %v398
      %v400 = vrot.slane %v395, %v399
      %v402 = vmul.f32 %v393, %v400
      %v403 = vmul.f32 %v394, %v400
      %v404 = vld [vmem:[%s381] sm:$0x1]
      %v406 = vlaneseq
      %v407 = vshrl.u32 %v406, 7
      %v408 = vsub.s32 0, %v407
      %v409 = vrot.slane %v404, %v408
      %v411 = vadd.f32 %v402, %v409
      %v412 = vadd.f32 %v403, %v409
      %v413 = vmax.f32 %v411, 0.0
      %v414 = vmax.f32 %v412, 0.0
      %v415 = vpack.c.bf16 %v414, %v413
      %v416 = vld [vmem:[%s6] sm:$0xf]
      %v417 = vld [vmem:[%s6 + $0x4] sm:$0xf]
      %v418 = vld [vmem:[%s6 + $0x8] sm:$0xf]
      %v419 = vld [vmem:[%s6 + $0xc] sm:$0xf]
      %v420 = vld [vmem:[%s6 + $0x10] sm:$0xf]
      %v421 = vld [vmem:[%s6 + $0x14] sm:$0xf]
      %v422 = vld [vmem:[%s6 + $0x18] sm:$0xf]
      %v423 = vld [vmem:[%s6 + $0x1c] sm:$0xf]
      %v424 = vld [vmem:[%s7] sm:$0x1]
      %v426 = vlaneseq
      %v427 = vshrl.u32 %v426, 7
      %v428 = vsub.s32 0, %v427
      %v429 = vrot.slane %v424, %v428
      %v439 = vunpack.c.l.b16 %v416
      %v440 = vunpack.c.l.b16 %v417
      %v441 = vunpack.c.l.b16 %v418
      %v442 = vunpack.c.l.b16 %v419
      %v443 = vunpack.c.l.b16 %v420
      %v444 = vunpack.c.l.b16 %v421
      %v445 = vunpack.c.l.b16 %v422
      %v446 = vunpack.c.l.b16 %v423
      %v447 = vpack.c.b16 %v440, %v439
      %v448 = vpack.c.b16 %v442, %v441
      %v449 = vpack.c.b16 %v444, %v443
      %v450 = vpack.c.b16 %v446, %v445
      %vm455 = vcmask 523264
      %v457 = vsel %vm455, %v415, 0
      %459 = vmatprep.subr.bf16.mxu0 0
      %460 = vmatpush1.bf16.msra.mxu0 %v447
      %461 = vmatprep.subr.bf16.mxu0 0
      %462 = vmatpush1.bf16.msra.mxu0 %v448
      %463 = vmatprep.subr.bf16.mxu0 0
      %464 = vmatpush1.bf16.msra.mxu0 %v449
      %465 = vmatprep.subr.bf16.mxu0 0
      %466 = vmatpush1.bf16.msra.mxu0 %v450
      %467 = vmatprep.subr.bf16.mxu0 0
      %468 = vmatpush1.bf16.msra.mxu0 0
      %469 = vmatprep.subr.bf16.mxu0 0
      %470 = vmatpush1.bf16.msra.mxu0 0
      %471 = vmatprep.subr.bf16.mxu0 0
      %472 = vmatpush1.bf16.msra.mxu0 0
      %473 = vmatprep.subr.bf16.mxu0 0
      %474 = vmatpush1.bf16.msra.mxu0 0
      %475 = vmatprep.subr.bf16.mxu0 0
      %476 = vmatpush1.bf16.msra.mxu0 0
      %477 = vmatprep.subr.bf16.mxu0 0
      %478 = vmatpush1.bf16.msra.mxu0 0
      %479 = vmatprep.subr.bf16.mxu0 0
      %480 = vmatpush1.bf16.msra.mxu0 0
      %481 = vmatprep.subr.bf16.mxu0 0
      %482 = vmatpush1.bf16.msra.mxu0 0
      %483 = vmatprep.subr.bf16.mxu0 0
      %484 = vmatpush1.bf16.msra.mxu0 0
      %485 = vmatprep.subr.bf16.mxu0 0
      %486 = vmatpush1.bf16.msra.mxu0 0
      %487 = vmatprep.subr.bf16.mxu0 0
      %488 = vmatpush1.bf16.msra.mxu0 0
      %489 = vmatprep.subr.bf16.mxu0 0
      %490 = vmatpush1.bf16.msra.mxu0 0
      %491 = vmatprep.mubr.bf16.mxu0 0
      %492 = vmatmul.mubr.bf16.gmra.mrb[0].mxu0 %v457
      %v493 = vpop.f32.mrb[0].mxu0
      %v494 = vadd.f32 %v429, %v493
      %v495 = vpop.f32.mrb[0].mxu0
      %v496 = vpop.f32.mrb[0].mxu0
      %v497 = vadd.f32 %v429, %v496
      %v498 = vpop.f32.mrb[0].mxu0
      %499 = vdwg.mxu0
      %v500 = vpack.c.bf16 %v497, %v494
      %v502 = vunpack.c.l.b16 %v500
      %v503 = vunpack.c.h.b16 %v500
      %v504 = vpack.c.b16 %v502, %v502
      %v505 = vpack.c.b16 %v503, %v503
      %vm508 = vcmask 257024
      %509 = vst.msk [vmem:[%s386] sm:$0xf] %vm508, %v504
      %510 = vst.msk [vmem:[%s386 + $0x4] sm:$0xf] %vm508, %v505
      %v511 = vld [vmem:[%s375] sm:$0xf]
      %v512 = vld [vmem:[%s375 + $0x4] sm:$0xf]
      %v513 = vunpack.c.l.bf16 %v511
      %v514 = vunpack.c.l.bf16 %v512
      %v515 = vld [vmem:[%s4] sm:$0x1]
      %v517 = vlaneseq
      %v518 = vshrl.u32 %v517, 7
      %v519 = vsub.s32 0, %v518
      %v520 = vrot.slane %v515, %v519
      %v522 = vmul.f32 %v513, %v520
      %v523 = vmul.f32 %v514, %v520
      %v524 = vld [vmem:[%s5] sm:$0x1]
      %v526 = vlaneseq
      %v527 = vshrl.u32 %v526, 7
      %v528 = vsub.s32 0, %v527
      %v529 = vrot.slane %v524, %v528
      %v531 = vadd.f32 %v522, %v529
      %v532 = vadd.f32 %v523, %v529
      %v533 = vmax.f32 %v531, 0.0
      %v534 = vmax.f32 %v532, 0.0
      %v535 = vsel %vm455, %v533, 0.0
      %v536 = vsel %vm455, %v534, 0.0
      %v537 = vadd.f32 %v535, %v536
      %v538 = vrot.slane %v537, 4
      %v539 = vadd.f32 %v537, %v538
      %v540 = vrot.slane %v539, 2
      %v541 = vadd.f32 %v539, %v540
      %v542 = vrot.slane %v541, 1
      %v543 = vadd.f32 %v541, %v542
      %v544 = vmul.f32 %v543, 0.0625
      %v545 = vmul.f32 %v533, %v533
      %v546 = vmul.f32 %v534, %v534
      %v547 = vsel %vm455, %v545, 0.0
      %v548 = vsel %vm455, %v546, 0.0
      %v549 = vadd.f32 %v547, %v548
      %v550 = vrot.slane %v549, 4
      %v551 = vadd.f32 %v549, %v550
      %v552 = vrot.slane %v551, 2
      %v553 = vadd.f32 %v551, %v552
      %v554 = vrot.slane %v553, 1
      %v555 = vadd.f32 %v553, %v554
      %v556 = vmul.f32 %v555, 0.0625
      %v557 = vmul.f32 %v544, %v544
      %v558 = vsub.f32 %v556, %v557
      %560 = vrot.lane.b32.xlu0 %v558, 64
      %v561 = vpop.permute.xlu0 %560
      %v563 = vsel %vm455, %v544, %v561
      %564 = vst [vmem:[%s389] sm:$0x1] %v563
      %p565 = scmp.lt.s32.totalorder %s21, 1
      %s566 = scalar_select %p565, %s21, 1
      %s567 = smul.addr %s566, 2
      %s568 = smul.addr %s567, 4
      %s569 = scalar_lea.vmem %s8, %s568
      %p570 = scmp.lt.s32.totalorder %s21, 1
      %s571 = scalar_select %p570, %s21, 1
      %s572 = scalar_lea.vmem %s9, %s571
      // Predicated region
      $region53: #{gca_forward.9} parent=51 // pred_check
        %p573 = pneg %p227
      $region54: #{gca_forward.9} parent=51 // pred_check_branch
        %575 = sbr.rel (%p573) target = $region56
      $region55: #{gca_forward.9} parent=51 // pred_region
        _
      $region56: #{gca_forward.9} parent=51 // pred_fallthru
        _
      // Predicated region
      $region57: #{gca_forward.9} parent=51 // pred_check
        %p576 = pneg %p253
      $region58: #{gca_forward.9} parent=51 // pred_check_branch
        %578 = sbr.rel (%p576) target = $region60
      $region59: #{gca_forward.9} parent=51 // pred_region
        _
      $region60: #{gca_forward.9} parent=51 // pred_fallthru
        _
    $region52: #{gca_forward.9} parent=5 // pred_fallthru
      _
    %p579 = scmp.le.s32.totalorder 2, %s16
    // Predicated region
    $region61: #{gca_forward.9} parent=5 // pred_check
      %p580 = pneg %p579
    $region62: #{gca_forward.9} parent=5 // pred_check_branch
      %582 = sbr.rel (%p580) target = $region64
    $region63: #{gca_forward.9} parent=5 // pred_region
      %s583 = ssub.s32 %s16, 2
      // Predicated region
      $region65: #{gca_forward.9} parent=63 // pred_check
        %p584 = pneg %p233
      $region66: #{gca_forward.9} parent=63 // pred_check_branch
        %586 = sbr.rel (%p584) target = $region68
      $region67: #{gca_forward.9} parent=63 // pred_region
        %p587 = scmp.lt.s32.totalorder %s22, 1
        %s588 = scalar_select %p587, %s22, 1
        %s589 = smul.addr %s588, 2
        %s590 = smul.addr %s589, 4
        %s591 = scalar_lea.vmem %s8, %s590
      $region68: #{gca_forward.9} parent=63 // pred_fallthru
        _
      // Predicated region
      $region69: #{gca_forward.9} parent=63 // pred_check
        %p592 = pneg %p259
      $region70: #{gca_forward.9} parent=63 // pred_check_branch
        %594 = sbr.rel (%p592) target = $region72
      $region71: #{gca_forward.9} parent=63 // pred_region
        %p595 = scmp.lt.s32.totalorder %s22, 1
        %s596 = scalar_select %p595, %s22, 1
        %s597 = scalar_lea.vmem %s9, %s596
      $region72: #{gca_forward.9} parent=63 // pred_fallthru
        _
    $region64: #{gca_forward.9} parent=5 // pred_fallthru
      _
  $region6: #{gca_forward.9} parent=0 // loop_footer
    %s20 = sadd.s32 1, %s16
  $region7: #{gca_forward.9} parent=0 // loop_footer_branch
    %15 = sbr.rel target = $region3
  $region8: #{gca_forward.9} parent=0 // loop_exit
    _

// kernel: gca_forward.7
$region0: #{gca_forward.7}
  #allocation0 [shape = 'u32[]', space=smem, size = 0x4, offset = 0x4, fixed_abs, tag = 'smem constant byte address 0x4 - core index']
  #allocation1 [shape = 'u32[144,128]{1,0:T(1,128)}', space=vmem, size = 0x12000, scoped, tag = 'internal scratch']
  %s0 = inlined_call_operand.vmem [shape: f32[2,16,32], index: 0, kind: input, shape index: {}]
  %s1 = inlined_call_operand.vmem [shape: bf16[32,64], index: 1, kind: input, shape index: {}]
  %s2 = inlined_call_operand.vmem [shape: bf16[96,64], index: 2, kind: input, shape index: {}]
  %s3 = inlined_call_operand.vmem [shape: f32[1,64], index: 3, kind: input, shape index: {}]
  %s4 = inlined_call_operand.vmem [shape: bf16[2,48,64], index: 4, kind: output, shape index: {0}]
  %s5 = inlined_call_operand.vmem [shape: bf16[2,144,32], index: 5, kind: output, shape index: {1}]
  %s6 = inlined_call_operand.vmem [shape: f32[2,1,256], index: 6, kind: output, shape index: {2}]
  %7 = xla_tuple %s4, %s5, %s6
  %s8 = sld [smem:[#allocation0]]
  $region65: #{gca_forward.7} parent=0
    _
  %s10 = ssub.s32 1, %s8
  %s11 = scalar_select 0, %s10, %s8
  loop: start=0, step=1, limit=4
  $region2: #{gca_forward.7} parent=0 // loop_pre_header
    _
  $region3: #{gca_forward.7} parent=0 // loop_header
    %s13 = sphi 0, %s17
    %p14 = scmp.ge.s32.totalorder %s13, 4
    %s23 = sphi 0, %s25
    %s26 = sphi 0, %s23
    %s27 = sphi 0, %s26
    %s43 = sphi 0, %s27
    %s47 = sphi 0, %s47
    %s49 = sphi 0, %s47
    %s50 = sphi 0, %s49
    %s64 = sphi 0, %s50
    %s68 = sphi 0, %s68
    %s70 = sphi 0, %s68
    %s71 = sphi 0, %s70
    %s85 = sphi 0, %s71
    %s89 = sphi 0, %s89
    %s91 = sphi 0, %s89
    %s92 = sphi 0, %s91
    %s106 = sphi 0, %s92
    %s112 = sphi 0, %s114
    %s115 = sphi 0, %s112
    %s116 = sphi 0, %s115
    %s132 = sphi 0, %s116
    %s138 = sphi 0, %s140
    %s141 = sphi 0, %s138
    %s142 = sphi 0, %s141
    %s158 = sphi 0, %s142
    %s164 = sphi 0, %s166
    %s167 = sphi 0, %s164
    %s168 = sphi 0, %s167
    %s184 = sphi 0, %s168
  $region4: #{gca_forward.7} parent=0 // loop_header_branch
    %16 = sbr.rel (%p14) target = $region8
  $region5: #{gca_forward.7} parent=0 // loop_body
    %s18 = ssub.s32 %s13, 1
    %s19 = ssub.s32 %s13, 2
    %s20 = sadd.s32 %s13, 1
    %s21 = ssub.s32 %s13, %s20
    %p22 = scmp.eq.s32.totalorder %s21, 0
    %s24 = sadd.s32 %s23, 1
    %s25 = scalar_select %p22, %s23, %s24
    %p28 = pneg %p22
    %p29 = scmp.eq.s32.totalorder %s13, 1
    %p30 = por %p28, %p29
    %p31 = scmp.ne.s32.totalorder %s23, %s26
    %p32 = scmp.eq.s32.totalorder %s13, 0
    %p33 = por %p31, %p32
    %p34 = scmp.ne.s32.totalorder %s23, %s26
    %p35 = scmp.eq.s32.totalorder %s18, 1
    %p36 = por %p34, %p35
    %p37 = scmp.ne.s32.totalorder %s26, %s27
    %p38 = scmp.eq.s32.totalorder %s18, 0
    %p39 = por %p37, %p38
    %p40 = scmp.ne.s32.totalorder %s26, %s27
    %p41 = scmp.eq.s32.totalorder %s19, 1
    %p42 = por %p40, %p41
    %p44 = scmp.ne.s32.totalorder %s27, %s43
    %p45 = scmp.eq.s32.totalorder %s19, 0
    %p46 = por %p44, %p45
    %s48 = sadd.s32 %s47, 1
    %p51 = scmp.eq.s32.totalorder %s13, 1
    %p52 = scmp.ne.s32.totalorder %s47, %s49
    %p53 = scmp.eq.s32.totalorder %s13, 0
    %p54 = por %p52, %p53
    %p55 = scmp.ne.s32.totalorder %s47, %s49
    %p56 = scmp.eq.s32.totalorder %s18, 1
    %p57 = por %p55, %p56
    %p58 = scmp.ne.s32.totalorder %s49, %s50
    %p59 = scmp.eq.s32.totalorder %s18, 0
    %p60 = por %p58, %p59
    %p61 = scmp.ne.s32.totalorder %s49, %s50
    %p62 = scmp.eq.s32.totalorder %s19, 1
    %p63 = por %p61, %p62
    %p65 = scmp.ne.s32.totalorder %s50, %s64
    %p66 = scmp.eq.s32.totalorder %s19, 0
    %p67 = por %p65, %p66
    %s69 = sadd.s32 %s68, 1
    %p72 = scmp.eq.s32.totalorder %s13, 1
    %p73 = scmp.ne.s32.totalorder %s68, %s70
    %p74 = scmp.eq.s32.totalorder %s13, 0
    %p75 = por %p73, %p74
    %p76 = scmp.ne.s32.totalorder %s68, %s70
    %p77 = scmp.eq.s32.totalorder %s18, 1
    %p78 = por %p76, %p77
    %p79 = scmp.ne.s32.totalorder %s70, %s71
    %p80 = scmp.eq.s32.totalorder %s18, 0
    %p81 = por %p79, %p80
    %p82 = scmp.ne.s32.totalorder %s70, %s71
    %p83 = scmp.eq.s32.totalorder %s19, 1
    %p84 = por %p82, %p83
    %p86 = scmp.ne.s32.totalorder %s71, %s85
    %p87 = scmp.eq.s32.totalorder %s19, 0
    %p88 = por %p86, %p87
    %s90 = sadd.s32 %s89, 1
    %p93 = scmp.eq.s32.totalorder %s13, 1
    %p94 = scmp.ne.s32.totalorder %s89, %s91
    %p95 = scmp.eq.s32.totalorder %s13, 0
    %p96 = por %p94, %p95
    %p97 = scmp.ne.s32.totalorder %s89, %s91
    %p98 = scmp.eq.s32.totalorder %s18, 1
    %p99 = por %p97, %p98
    %p100 = scmp.ne.s32.totalorder %s91, %s92
    %p101 = scmp.eq.s32.totalorder %s18, 0
    %p102 = por %p100, %p101
    %p103 = scmp.ne.s32.totalorder %s91, %s92
    %p104 = scmp.eq.s32.totalorder %s19, 1
    %p105 = por %p103, %p104
    %p107 = scmp.ne.s32.totalorder %s92, %s106
    %p108 = scmp.eq.s32.totalorder %s19, 0
    %p109 = por %p107, %p108
    %s110 = ssub.s32 %s13, %s20
    %p111 = scmp.eq.s32.totalorder %s110, 0
    %s113 = sadd.s32 %s112, 1
    %s114 = scalar_select %p111, %s112, %s113
    %p117 = pneg %p111
    %p118 = scmp.eq.s32.totalorder %s13, 1
    %p119 = por %p117, %p118
    %p120 = scmp.ne.s32.totalorder %s112, %s115
    %p121 = scmp.eq.s32.totalorder %s13, 0
    %p122 = por %p120, %p121
    %p123 = scmp.ne.s32.totalorder %s112, %s115
    %p124 = scmp.eq.s32.totalorder %s18, 1
    %p125 = por %p123, %p124
    %p126 = scmp.ne.s32.totalorder %s115, %s116
    %p127 = scmp.eq.s32.totalorder %s18, 0
    %p128 = por %p126, %p127
    %p129 = scmp.ne.s32.totalorder %s115, %s116
    %p130 = scmp.eq.s32.totalorder %s19, 1
    %p131 = por %p129, %p130
    %p133 = scmp.ne.s32.totalorder %s116, %s132
    %p134 = scmp.eq.s32.totalorder %s19, 0
    %p135 = por %p133, %p134
    %s136 = ssub.s32 %s13, %s20
    %p137 = scmp.eq.s32.totalorder %s136, 0
    %s139 = sadd.s32 %s138, 1
    %s140 = scalar_select %p137, %s138, %s139
    %p143 = pneg %p137
    %p144 = scmp.eq.s32.totalorder %s13, 1
    %p145 = por %p143, %p144
    %p146 = scmp.ne.s32.totalorder %s138, %s141
    %p147 = scmp.eq.s32.totalorder %s13, 0
    %p148 = por %p146, %p147
    %p149 = scmp.ne.s32.totalorder %s138, %s141
    %p150 = scmp.eq.s32.totalorder %s18, 1
    %p151 = por %p149, %p150
    %p152 = scmp.ne.s32.totalorder %s141, %s142
    %p153 = scmp.eq.s32.totalorder %s18, 0
    %p154 = por %p152, %p153
    %p155 = scmp.ne.s32.totalorder %s141, %s142
    %p156 = scmp.eq.s32.totalorder %s19, 1
    %p157 = por %p155, %p156
    %p159 = scmp.ne.s32.totalorder %s142, %s158
    %p160 = scmp.eq.s32.totalorder %s19, 0
    %p161 = por %p159, %p160
    %s162 = ssub.s32 %s13, %s20
    %p163 = scmp.eq.s32.totalorder %s162, 0
    %s165 = sadd.s32 %s164, 1
    %s166 = scalar_select %p163, %s164, %s165
    %p169 = pneg %p163
    %p170 = scmp.eq.s32.totalorder %s13, 1
    %p171 = por %p169, %p170
    %p172 = scmp.ne.s32.totalorder %s164, %s167
    %p173 = scmp.eq.s32.totalorder %s13, 0
    %p174 = por %p172, %p173
    %p175 = scmp.ne.s32.totalorder %s164, %s167
    %p176 = scmp.eq.s32.totalorder %s18, 1
    %p177 = por %p175, %p176
    %p178 = scmp.ne.s32.totalorder %s167, %s168
    %p179 = scmp.eq.s32.totalorder %s18, 0
    %p180 = por %p178, %p179
    %p181 = scmp.ne.s32.totalorder %s167, %s168
    %p182 = scmp.eq.s32.totalorder %s19, 1
    %p183 = por %p181, %p182
    %p185 = scmp.ne.s32.totalorder %s168, %s184
    %p186 = scmp.eq.s32.totalorder %s19, 0
    %p187 = por %p185, %p186
    %p188 = scmp.le.s32.totalorder 1, %s13
    %p189 = scmp.lt.s32.totalorder %s13, 3
    %p190 = pnand %p188, %p189
    %p191 = pneg %p190
    // Predicated region
    $region9: #{gca_forward.7} parent=5 // pred_check
      _
    $region10: #{gca_forward.7} parent=5 // pred_check_branch
      %193 = sbr.rel (%p190) target = $region12
    $region11: #{gca_forward.7} parent=5 // pred_region
      %s194 = ssub.s32 %s13, 1
      // Predicated region
      $region13: #{gca_forward.7} parent=11 // pred_check
        %p195 = pneg %p60
      $region14: #{gca_forward.7} parent=11 // pred_check_branch
        %197 = sbr.rel (%p195) target = $region16
      $region15: #{gca_forward.7} parent=11 // pred_region
        _
      $region16: #{gca_forward.7} parent=11 // pred_fallthru
        _
      // Predicated region
      $region17: #{gca_forward.7} parent=11 // pred_check
        %p198 = pneg %p81
      $region18: #{gca_forward.7} parent=11 // pred_check_branch
        %200 = sbr.rel (%p198) target = $region20
      $region19: #{gca_forward.7} parent=11 // pred_region
        _
      $region20: #{gca_forward.7} parent=11 // pred_fallthru
        _
      // Predicated region
      $region21: #{gca_forward.7} parent=11 // pred_check
        %p201 = pneg %p102
      $region22: #{gca_forward.7} parent=11 // pred_check_branch
        %203 = sbr.rel (%p201) target = $region24
      $region23: #{gca_forward.7} parent=11 // pred_region
        _
      $region24: #{gca_forward.7} parent=11 // pred_fallthru
        _
    $region12: #{gca_forward.7} parent=5 // pred_fallthru
      _
    %p204 = scmp.lt.s32.totalorder %s13, 2
    // Predicated region
    $region25: #{gca_forward.7} parent=5 // pred_check
      %p205 = pneg %p204
    $region26: #{gca_forward.7} parent=5 // pred_check_branch
      %207 = sbr.rel (%p205) target = $region28
    $region27: #{gca_forward.7} parent=5 // pred_region
      // Predicated region
      $region29: #{gca_forward.7} parent=27 // pred_check
        %p208 = pneg %p33
      $region30: #{gca_forward.7} parent=27 // pred_check_branch
        %210 = sbr.rel (%p208) target = $region32
      $region31: #{gca_forward.7} parent=27 // pred_region
        %p211 = scmp.lt.s32.totalorder %s13, 1
        %s212 = scalar_select %p211, %s13, 1
        %s213 = smul.addr %s212, 2
        %s214 = smul.addr %s213, 8
        %s215 = scalar_lea.vmem %s0, %s214
      $region32: #{gca_forward.7} parent=27 // pred_fallthru
        _
    $region28: #{gca_forward.7} parent=5 // pred_fallthru
      _
    %p216 = scmp.le.s32.totalorder 1, %s13
    %p217 = scmp.lt.s32.totalorder %s13, 3
    %p218 = pnand %p216, %p217
    %p219 = pneg %p218
    // Predicated region
    $region33: #{gca_forward.7} parent=5 // pred_check
      _
    $region34: #{gca_forward.7} parent=5 // pred_check_branch
      %221 = sbr.rel (%p218) target = $region36
    $region35: #{gca_forward.7} parent=5 // pred_region
      %s222 = ssub.s32 %s13, 1
      %p223 = scmp.lt.s32.totalorder %s18, 1
      %s224 = scalar_select %p223, %s18, 1
      %s225 = smul.addr %s224, 2
      %s226 = smul.addr %s225, 8
      %s227 = scalar_lea.vmem %s0, %s226
      %p228 = pneg %p39
      %p229 = pneg %p36
      %p230 = pneg %p60
      %p231 = pneg %p57
      %p232 = pneg %p81
      %p233 = pneg %p78
      %p234 = pneg %p102
      %p235 = pneg %p99
      %p236 = pneg %p128
      %p237 = pneg %p125
      %p238 = scmp.lt.s32.totalorder %s18, 1
      %s239 = scalar_select %p238, %s18, 1
      %s240 = smul.addr %s239, 6
      %s241 = smul.addr %s240, 4
      %s242 = scalar_lea.vmem %s4, %s241
      %p243 = pneg %p154
      %p244 = pneg %p151
      %p245 = scmp.lt.s32.totalorder %s18, 1
      %s246 = scalar_select %p245, %s18, 1
      %s247 = smul.addr %s246, 18
      %s248 = smul.addr %s247, 4
      %s249 = scalar_lea.vmem %s5, %s248
      %p250 = pneg %p180
      %p251 = pneg %p177
      %p252 = scmp.lt.s32.totalorder %s18, 1
      %s253 = scalar_select %p252, %s18, 1
      %s254 = smul.addr %s253, 2
      %s255 = scalar_lea.vmem %s6, %s254
      %p256 = scmp.lt.s32.totalorder %s18, 1
      %s257 = scalar_select %p256, %s18, 1
      %s258 = smul.addr %s257, 2
      %s259 = smul.addr %s258, 8
      %s260 = scalar_lea.vmem %s0, %s259
      %p261 = scmp.lt.s32.totalorder %s18, 1
      %s262 = scalar_select %p261, %s18, 1
      %s263 = smul.addr %s262, 6
      %s264 = smul.addr %s263, 4
      %s265 = scalar_lea.vmem %s4, %s264
      %p266 = scmp.lt.s32.totalorder %s18, 1
      %s267 = scalar_select %p266, %s18, 1
      %s268 = smul.addr %s267, 18
      %s269 = smul.addr %s268, 4
      %s270 = scalar_lea.vmem %s5, %s269
      %p271 = scmp.lt.s32.totalorder %s18, 1
      %s272 = scalar_select %p271, %s18, 1
      %s273 = smul.addr %s272, 2
      %s274 = scalar_lea.vmem %s6, %s273
      %v276 = vld [vmem:[%s260] sm:$0xff]
      %v277 = vld [vmem:[%s260 + $0x8] sm:$0xff]
      %v278 = vpack.c.bf16 %v277, %v276
      %vm279 = vcmask 261120
      %v281 = vsel %vm279, %v276, 0
      %v284 = vsel %vm279, %v277, 0
      %286 = vmatprep.subr.mxu0 0.0
      %287 = vmatpush1.xpose.msra.mxu0 %v281
      %288 = vmatprep.subr.mxu0 0.0
      %289 = vmatpush1.xpose.msra.mxu0 %v284
      %290 = vmatprep.subr.mxu0 0.0
      %291 = vmatpush1.xpose.msra.mxu0 0.0
      %292 = vmatprep.subr.mxu0 0.0
      %293 = vmatpush1.xpose.msra.mxu0 0.0
      %294 = vmatprep.subr.mxu0 0.0
      %295 = vmatpush1.xpose.msra.mxu0 0.0
      %296 = vmatprep.subr.mxu0 0.0
      %297 = vmatpush1.xpose.msra.mxu0 0.0
      %298 = vmatprep.subr.mxu0 0.0
      %299 = vmatpush1.xpose.msra.mxu0 0.0
      %300 = vmatprep.subr.mxu0 0.0
      %301 = vmatpush1.xpose.msra.mxu0 0.0
      %302 = vmatprep.subr.mxu0 0.0
      %303 = vmatpush1.xpose.msra.mxu0 0.0
      %304 = vmatprep.subr.mxu0 0.0
      %305 = vmatpush1.xpose.msra.mxu0 0.0
      %306 = vmatprep.subr.mxu0 0.0
      %307 = vmatpush1.xpose.msra.mxu0 0.0
      %308 = vmatprep.subr.mxu0 0.0
      %309 = vmatpush1.xpose.msra.mxu0 0.0
      %310 = vmatprep.subr.mxu0 0.0
      %311 = vmatpush1.xpose.msra.mxu0 0.0
      %312 = vmatprep.subr.mxu0 0.0
      %313 = vmatpush1.xpose.msra.mxu0 0.0
      %314 = vmatprep.subr.mxu0 0.0
      %315 = vmatpush1.xpose.msra.mxu0 0.0
      %316 = vmatprep.subr.mxu0 0.0
      %317 = vmatpush1.xpose.msra.mxu0 0.0
      %318 = vmatprep.subr.mxu0 0.0
      %319 = vmatpush1.xpose.msra.mxu0 0.0
      %320 = vmatprep.subr.mxu0 0.0
      %321 = vmatpush1.xpose.msra.mxu0 0.0
      %322 = vmatprep.subr.mxu0 0.0
      %323 = vmatpush1.xpose.msra.mxu0 0.0
      %324 = vmatprep.subr.mxu0 0.0
      %325 = vmatpush1.xpose.msra.mxu0 0.0
      %326 = vmatprep.subr.mxu0 0.0
      %327 = vmatpush1.xpose.msra.mxu0 0.0
      %328 = vmatprep.subr.mxu0 0.0
      %329 = vmatpush1.xpose.msra.mxu0 0.0
      %330 = vmatprep.subr.mxu0 0.0
      %331 = vmatpush1.xpose.msra.mxu0 0.0
      %332 = vmatprep.subr.mxu0 0.0
      %333 = vmatpush1.xpose.msra.mxu0 0.0
      %334 = vmatprep.subr.mxu0 0.0
      %335 = vmatpush1.xpose.msra.mxu0 0.0
      %336 = vmatprep.subr.mxu0 0.0
      %337 = vmatpush1.xpose.msra.mxu0 0.0
      %338 = vmatprep.subr.mxu0 0.0
      %339 = vmatpush1.xpose.msra.mxu0 0.0
      %340 = vmatprep.subr.mxu0 0.0
      %341 = vmatpush1.xpose.msra.mxu0 0.0
      %342 = vmatprep.subr.mxu0 0.0
      %343 = vmatpush1.xpose.msra.mxu0 0.0
      %344 = vmatprep.subr.mxu0 0.0
      %345 = vmatpush1.xpose.msra.mxu0 0.0
      %346 = vmatprep.subr.mxu0 0.0
      %347 = vmatpush1.xpose.msra.mxu0 0.0
      %348 = vmatprep.subr.mxu0 0.0
      %349 = vmatpush1.xpose.msra.mxu0 0.0
      %350 = vmatprep.mubr.f32.mxu0 0.0
      %351 = vmatmul.mubr.f32.gmra.mrb[0].mxu0 %v281
      %v352 = vpop.f32.mrb[0].mxu0
      %v353 = vadd.f32 0.0, %v352
      %v354 = vpop.f32.mrb[0].mxu0
      %355 = vmatprep.mubr.f32.mxu0 0.0
      %356 = vmatmul.mubr.f32.gmra.mrb[0].mxu0 %v284
      %v357 = vpop.f32.mrb[0].mxu0
      %v358 = vadd.f32 0.0, %v357
      %v359 = vpop.f32.mrb[0].mxu0
      %360 = vdwg.mxu0
      %v361 = vmul.f32 %v276, %v276
      %v362 = vmul.f32 %v277, %v277
      %v364 = vsel %vm279, 1.0, 0
      %v367 = vsel %vm279, %v361, 0
      %v370 = vsel %vm279, %v362, 0
      %372 = vmatprep.subr.mxu0 0.0
      %373 = vmatpush1.xpose.msra.mxu0 %v367
      %374 = vmatprep.subr.mxu0 0.0
      %375 = vmatpush1.xpose.msra.mxu0 %v370
      %376 = vmatprep.subr.mxu0 0.0
      %377 = vmatpush1.xpose.msra.mxu0 0.0
      %378 = vmatprep.subr.mxu0 0.0
      %379 = vmatpush1.xpose.msra.mxu0 0.0
      %380 = vmatprep.subr.mxu0 0.0
      %381 = vmatpush1.xpose.msra.mxu0 0.0
      %382 = vmatprep.subr.mxu0 0.0
      %383 = vmatpush1.xpose.msra.mxu0 0.0
      %384 = vmatprep.subr.mxu0 0.0
      %385 = vmatpush1.xpose.msra.mxu0 0.0
      %386 = vmatprep.subr.mxu0 0.0
      %387 = vmatpush1.xpose.msra.mxu0 0.0
      %388 = vmatprep.subr.mxu0 0.0
      %389 = vmatpush1.xpose.msra.mxu0 0.0
      %390 = vmatprep.subr.mxu0 0.0
      %391 = vmatpush1.xpose.msra.mxu0 0.0
      %392 = vmatprep.subr.mxu0 0.0
      %393 = vmatpush1.xpose.msra.mxu0 0.0
      %394 = vmatprep.subr.mxu0 0.0
      %395 = vmatpush1.xpose.msra.mxu0 0.0
      %396 = vmatprep.subr.mxu0 0.0
      %397 = vmatpush1.xpose.msra.mxu0 0.0
      %398 = vmatprep.subr.mxu0 0.0
      %399 = vmatpush1.xpose.msra.mxu0 0.0
      %400 = vmatprep.subr.mxu0 0.0
      %401 = vmatpush1.xpose.msra.mxu0 0.0
      %402 = vmatprep.subr.mxu0 0.0
      %403 = vmatpush1.xpose.msra.mxu0 0.0
      %404 = vmatprep.subr.mxu0 0.0
      %405 = vmatpush1.xpose.msra.mxu0 0.0
      %406 = vmatprep.subr.mxu0 0.0
      %407 = vmatpush1.xpose.msra.mxu0 0.0
      %408 = vmatprep.subr.mxu0 0.0
      %409 = vmatpush1.xpose.msra.mxu0 0.0
      %410 = vmatprep.subr.mxu0 0.0
      %411 = vmatpush1.xpose.msra.mxu0 0.0
      %412 = vmatprep.subr.mxu0 0.0
      %413 = vmatpush1.xpose.msra.mxu0 0.0
      %414 = vmatprep.subr.mxu0 0.0
      %415 = vmatpush1.xpose.msra.mxu0 0.0
      %416 = vmatprep.subr.mxu0 0.0
      %417 = vmatpush1.xpose.msra.mxu0 0.0
      %418 = vmatprep.subr.mxu0 0.0
      %419 = vmatpush1.xpose.msra.mxu0 0.0
      %420 = vmatprep.subr.mxu0 0.0
      %421 = vmatpush1.xpose.msra.mxu0 0.0
      %422 = vmatprep.subr.mxu0 0.0
      %423 = vmatpush1.xpose.msra.mxu0 0.0
      %424 = vmatprep.subr.mxu0 0.0
      %425 = vmatpush1.xpose.msra.mxu0 0.0
      %426 = vmatprep.subr.mxu0 0.0
      %427 = vmatpush1.xpose.msra.mxu0 0.0
      %428 = vmatprep.subr.mxu0 0.0
      %429 = vmatpush1.xpose.msra.mxu0 0.0
      %430 = vmatprep.subr.mxu0 0.0
      %431 = vmatpush1.xpose.msra.mxu0 0.0
      %432 = vmatprep.subr.mxu0 0.0
      %433 = vmatpush1.xpose.msra.mxu0 0.0
      %434 = vmatprep.subr.mxu0 0.0
      %435 = vmatpush1.xpose.msra.mxu0 0.0
      %436 = vmatprep.mubr.f32.mxu0 0.0
      %437 = vmatmul.mubr.f32.gmra.mrb[0].mxu0 %v364
      %v438 = vpop.f32.mrb[0].mxu0
      %v439 = vadd.f32 0.0, %v438
      %v440 = vpop.f32.mrb[0].mxu0
      %441 = vdwg.mxu0
      %v442 = vmul.f32 %v353, 2.0
      %v443 = vmul.f32 %v358, 2.0
      %v444 = vlaneseq
      %v445 = vshrl.u32 %v444, 7
      %v446 = vsub.s32 0, %v445
      %v447 = vrot.slane %v439, %v446
      %v448 = vsub.f32 %v442, %v447
      %v449 = vsub.f32 %v443, %v447
      %v450 = vlaneseq
      %v451 = vand.u32 %v450, 127
      %v452 = vcvt.s32.f32 %v451
      %vm453 = vcmask 130048
      %v454 = vsel %vm453, %v448, -inf
      %455 = vmax.xlane.f32.xlu0 %v454
      %v456 = vpop.xlane.xlu0 %455
      %v457 = vsel %vm453, %v449, -inf
      %458 = vmax.xlane.f32.xlu0 %v457
      %v459 = vpop.xlane.xlu0 %458
      %vm460 = vcmp.ge.f32.partialorder %v448, %v456
      %vm461 = vcmp.ge.f32.partialorder %v449, %v459
      %v462 = vsel %vm460, %v452, 16.0
      %v463 = vsel %vm461, %v452, 16.0
      %v464 = vsel %vm453, %v462, inf
      %465 = vmin.xlane.f32.xlu0 %v464
      %v466 = vpop.xlane.xlu0 %465
      %v467 = vsel %vm453, %v463, inf
      %468 = vmin.xlane.f32.xlu0 %v467
      %v469 = vpop.xlane.xlu0 %468
      %vm470 = vcmp.eq.f32.partialorder %v452, %v466
      %vm471 = vcmp.eq.f32.partialorder %v452, %v469
      %v472 = vsel %vm470, 1.0, 0.0
      %v473 = vsel %vm471, 1.0, 0.0
      %v474 = vsel %vm470, -1e+30, %v448
      %v475 = vsel %vm471, -1e+30, %v449
      %v476 = vsel %vm453, %v474, -inf
      %477 = vmax.xlane.f32.xlu0 %v476
      %v478 = vpop.xlane.xlu0 %477
      %v479 = vsel %vm453, %v475, -inf
      %480 = vmax.xlane.f32.xlu0 %v479
      %v481 = vpop.xlane.xlu0 %480
      %vm482 = vcmp.ge.f32.partialorder %v474, %v478
      %vm483 = vcmp.ge.f32.partialorder %v475, %v481
      %v484 = vsel %vm482, %v452, 16.0
      %v485 = vsel %vm483, %v452, 16.0
      %v486 = vsel %vm453, %v484, inf
      %487 = vmin.xlane.f32.xlu0 %v486
      %v488 = vpop.xlane.xlu0 %487
      %v489 = vsel %vm453, %v485, inf
      %490 = vmin.xlane.f32.xlu0 %v489
      %v491 = vpop.xlane.xlu0 %490
      %vm492 = vcmp.eq.f32.partialorder %v452, %v488
      %vm493 = vcmp.eq.f32.partialorder %v452, %v491
      %v494 = vsel %vm492, 1.0, 0.0
      %v495 = vsel %vm493, 1.0, 0.0
      %v496 = vsel %vm492, -1e+30, %v474
      %v497 = vsel %vm493, -1e+30, %v475
      %v498 = vsel %vm453, %v496, -inf
      %499 = vmax.xlane.f32.xlu0 %v498
      %v500 = vpop.xlane.xlu0 %499
      %v501 = vsel %vm453, %v497, -inf
      %502 = vmax.xlane.f32.xlu0 %v501
      %v503 = vpop.xlane.xlu0 %502
      %vm504 = vcmp.ge.f32.partialorder %v496, %v500
      %vm505 = vcmp.ge.f32.partialorder %v497, %v503
      %v506 = vsel %vm504, %v452, 16.0
      %v507 = vsel %vm505, %v452, 16.0
      %v508 = vsel %vm453, %v506, inf
      %509 = vmin.xlane.f32.xlu0 %v508
      %v510 = vpop.xlane.xlu0 %509
      %v511 = vsel %vm453, %v507, inf
      %512 = vmin.xlane.f32.xlu0 %v511
      %v513 = vpop.xlane.xlu0 %512
      %vm514 = vcmp.eq.f32.partialorder %v452, %v510
      %vm515 = vcmp.eq.f32.partialorder %v452, %v513
      %v516 = vsel %vm514, 1.0, 0.0
      %v517 = vsel %vm515, 1.0, 0.0
      %v518 = vsel %vm514, -1e+30, %v496
      %v519 = vsel %vm515, -1e+30, %v497
      %v520 = vsel %vm453, %v518, -inf
      %521 = vmax.xlane.f32.xlu0 %v520
      %v522 = vpop.xlane.xlu0 %521
      %v523 = vsel %vm453, %v519, -inf
      %524 = vmax.xlane.f32.xlu0 %v523
      %v525 = vpop.xlane.xlu0 %524
      %vm526 = vcmp.ge.f32.partialorder %v518, %v522
      %vm527 = vcmp.ge.f32.partialorder %v519, %v525
      %v528 = vsel %vm526, %v452, 16.0
      %v529 = vsel %vm527, %v452, 16.0
      %v530 = vsel %vm453, %v528, inf
      %531 = vmin.xlane.f32.xlu0 %v530
      %v532 = vpop.xlane.xlu0 %531
      %v533 = vsel %vm453, %v529, inf
      %534 = vmin.xlane.f32.xlu0 %v533
      %v535 = vpop.xlane.xlu0 %534
      %vm536 = vcmp.eq.f32.partialorder %v452, %v532
      %vm537 = vcmp.eq.f32.partialorder %v452, %v535
      %v538 = vsel %vm536, 1.0, 0.0
      %v539 = vsel %vm537, 1.0, 0.0
      %v540 = vsel %vm536, -1e+30, %v518
      %v541 = vsel %vm537, -1e+30, %v519
      %v542 = vsel %vm453, %v540, -inf
      %543 = vmax.xlane.f32.xlu0 %v542
      %v544 = vpop.xlane.xlu0 %543
      %v545 = vsel %vm453, %v541, -inf
      %546 = vmax.xlane.f32.xlu0 %v545
      %v547 = vpop.xlane.xlu0 %546
      %vm548 = vcmp.ge.f32.partialorder %v540, %v544
      %vm549 = vcmp.ge.f32.partialorder %v541, %v547
      %v550 = vsel %vm548, %v452, 16.0
      %v551 = vsel %vm549, %v452, 16.0
      %v552 = vsel %vm453, %v550, inf
      %553 = vmin.xlane.f32.xlu0 %v552
      %v554 = vpop.xlane.xlu0 %553
      %v555 = vsel %vm453, %v551, inf
      %556 = vmin.xlane.f32.xlu0 %v555
      %v557 = vpop.xlane.xlu0 %556
      %vm558 = vcmp.eq.f32.partialorder %v452, %v554
      %vm559 = vcmp.eq.f32.partialorder %v452, %v557
      %v560 = vsel %vm558, 1.0, 0.0
      %v561 = vsel %vm559, 1.0, 0.0
      %v562 = vsel %vm558, -1e+30, %v540
      %v563 = vsel %vm559, -1e+30, %v541
      %v564 = vsel %vm453, %v562, -inf
      %565 = vmax.xlane.f32.xlu0 %v564
      %v566 = vpop.xlane.xlu0 %565
      %v567 = vsel %vm453, %v563, -inf
      %568 = vmax.xlane.f32.xlu0 %v567
      %v569 = vpop.xlane.xlu0 %568
      %vm570 = vcmp.ge.f32.partialorder %v562, %v566
      %vm571 = vcmp.ge.f32.partialorder %v563, %v569
      %v572 = vsel %vm570, %v452, 16.0
      %v573 = vsel %vm571, %v452, 16.0
      %v574 = vsel %vm453, %v572, inf
      %575 = vmin.xlane.f32.xlu0 %v574
      %v576 = vpop.xlane.xlu0 %575
      %v577 = vsel %vm453, %v573, inf
      %578 = vmin.xlane.f32.xlu0 %v577
      %v579 = vpop.xlane.xlu0 %578
      %vm580 = vcmp.eq.f32.partialorder %v452, %v576
      %vm581 = vcmp.eq.f32.partialorder %v452, %v579
      %v582 = vsel %vm580, 1.0, 0.0
      %v583 = vsel %vm581, 1.0, 0.0
      %v584 = vsel %vm580, -1e+30, %v562
      %v585 = vsel %vm581, -1e+30, %v563
      %v586 = vsel %vm453, %v584, -inf
      %587 = vmax.xlane.f32.xlu0 %v586
      %v588 = vpop.xlane.xlu0 %587
      %v589 = vsel %vm453, %v585, -inf
      %590 = vmax.xlane.f32.xlu0 %v589
      %v591 = vpop.xlane.xlu0 %590
      %vm592 = vcmp.ge.f32.partialorder %v584, %v588
      %vm593 = vcmp.ge.f32.partialorder %v585, %v591
      %v594 = vsel %vm592, %v452, 16.0
      %v595 = vsel %vm593, %v452, 16.0
      %v596 = vsel %vm453, %v594, inf
      %597 = vmin.xlane.f32.xlu0 %v596
      %v598 = vpop.xlane.xlu0 %597
      %v599 = vsel %vm453, %v595, inf
      %600 = vmin.xlane.f32.xlu0 %v599
      %v601 = vpop.xlane.xlu0 %600
      %vm602 = vcmp.eq.f32.partialorder %v452, %v598
      %vm603 = vcmp.eq.f32.partialorder %v452, %v601
      %v604 = vsel %vm602, 1.0, 0.0
      %v605 = vsel %vm603, 1.0, 0.0
      %v606 = vsel %vm602, -1e+30, %v584
      %v607 = vsel %vm603, -1e+30, %v585
      %v608 = vsel %vm453, %v606, -inf
      %609 = vmax.xlane.f32.xlu0 %v608
      %v610 = vpop.xlane.xlu0 %609
      %v611 = vsel %vm453, %v607, -inf
      %612 = vmax.xlane.f32.xlu0 %v611
      %v613 = vpop.xlane.xlu0 %612
      %vm614 = vcmp.ge.f32.partialorder %v606, %v610
      %vm615 = vcmp.ge.f32.partialorder %v607, %v613
      %v616 = vsel %vm614, %v452, 16.0
      %v617 = vsel %vm615, %v452, 16.0
      %v618 = vsel %vm453, %v616, inf
      %619 = vmin.xlane.f32.xlu0 %v618
      %v620 = vpop.xlane.xlu0 %619
      %v621 = vsel %vm453, %v617, inf
      %622 = vmin.xlane.f32.xlu0 %v621
      %v623 = vpop.xlane.xlu0 %622
      %vm624 = vcmp.eq.f32.partialorder %v452, %v620
      %vm625 = vcmp.eq.f32.partialorder %v452, %v623
      %v626 = vsel %vm624, 1.0, 0.0
      %v627 = vsel %vm625, 1.0, 0.0
      %v628 = vsel %vm624, -1e+30, %v606
      %v629 = vsel %vm625, -1e+30, %v607
      %v630 = vsel %vm453, %v628, -inf
      %631 = vmax.xlane.f32.xlu0 %v630
      %v632 = vpop.xlane.xlu0 %631
      %v633 = vsel %vm453, %v629, -inf
      %634 = vmax.xlane.f32.xlu0 %v633
      %v635 = vpop.xlane.xlu0 %634
      %vm636 = vcmp.ge.f32.partialorder %v628, %v632
      %vm637 = vcmp.ge.f32.partialorder %v629, %v635
      %v638 = vsel %vm636, %v452, 16.0
      %v639 = vsel %vm637, %v452, 16.0
      %v640 = vsel %vm453, %v638, inf
      %641 = vmin.xlane.f32.xlu0 %v640
      %v642 = vpop.xlane.xlu0 %641
      %v643 = vsel %vm453, %v639, inf
      %644 = vmin.xlane.f32.xlu0 %v643
      %v645 = vpop.xlane.xlu0 %644
      %vm646 = vcmp.eq.f32.partialorder %v452, %v642
      %vm647 = vcmp.eq.f32.partialorder %v452, %v645
      %v648 = vsel %vm646, 1.0, 0.0
      %v649 = vsel %vm647, 1.0, 0.0
      %v650 = vpack.c.bf16 %v473, %v472
      %v651 = vpack.c.bf16 %v495, %v494
      %v652 = vpack.c.bf16 %v517, %v516
      %v653 = vpack.c.bf16 %v539, %v538
      %v654 = vpack.c.bf16 %v561, %v560
      %v655 = vpack.c.bf16 %v583, %v582
      %v656 = vpack.c.bf16 %v605, %v604
      %v657 = vpack.c.bf16 %v627, %v626
      %v658 = vpack.c.bf16 %v649, %v648
      %v660 = vsel %vm453, %v650, 0
      %v663 = vsel %vm453, %v651, 0
      %v666 = vsel %vm453, %v652, 0
      %v669 = vsel %vm453, %v653, 0
      %v672 = vsel %vm453, %v654, 0
      %v675 = vsel %vm453, %v655, 0
      %v678 = vsel %vm453, %v656, 0
      %v681 = vsel %vm453, %v657, 0
      %v684 = vsel %vm453, %v658, 0
      %686 = vmatprep.subr.bf16.mxu0 0
      %687 = vmatpush1.bf16.msra.mxu0 %v278
      %688 = vmatprep.subr.bf16.mxu0 0
      %689 = vmatpush1.bf16.msra.mxu0 0
      %690 = vmatprep.subr.bf16.mxu0 0
      %691 = vmatpush1.bf16.msra.mxu0 0
      %692 = vmatprep.subr.bf16.mxu0 0
      %693 = vmatpush1.bf16.msra.mxu0 0
      %694 = vmatprep.subr.bf16.mxu0 0
      %695 = vmatpush1.bf16.msra.mxu0 0
      %696 = vmatprep.subr.bf16.mxu0 0
      %697 = vmatpush1.bf16.msra.mxu0 0
      %698 = vmatprep.subr.bf16.mxu0 0
      %699 = vmatpush1.bf16.msra.mxu0 0
      %700 = vmatprep.subr.bf16.mxu0 0
      %701 = vmatpush1.bf16.msra.mxu0 0
      %702 = vmatprep.subr.bf16.mxu0 0
      %703 = vmatpush1.bf16.msra.mxu0 0
      %704 = vmatprep.subr.bf16.mxu0 0
      %705 = vmatpush1.bf16.msra.mxu0 0
      %706 = vmatprep.subr.bf16.mxu0 0
      %707 = vmatpush1.bf16.msra.mxu0 0
      %708 = vmatprep.subr.bf16.mxu0 0
      %709 = vmatpush1.bf16.msra.mxu0 0
      %710 = vmatprep.subr.bf16.mxu0 0
      %711 = vmatpush1.bf16.msra.mxu0 0
      %712 = vmatprep.subr.bf16.mxu0 0
      %713 = vmatpush1.bf16.msra.mxu0 0
      %714 = vmatprep.subr.bf16.mxu0 0
      %715 = vmatpush1.bf16.msra.mxu0 0
      %716 = vmatprep.subr.bf16.mxu0 0
      %717 = vmatpush1.bf16.msra.mxu0 0
      %718 = vmatprep.mubr.bf16.mxu0 0
      %719 = vmatmul.mubr.bf16.gmra.mrb[0].mxu0 %v660
      %v720 = vpop.f32.mrb[0].mxu0
      %v721 = vadd.f32 0.0, %v720
      %v722 = vpop.f32.mrb[0].mxu0
      %v723 = vpop.f32.mrb[0].mxu0
      %v724 = vadd.f32 0.0, %v723
      %v725 = vpop.f32.mrb[0].mxu0
      %726 = vmatprep.mubr.bf16.mxu0 0
      %727 = vmatmul.mubr.bf16.gmra.mrb[0].mxu0 %v663
      %v728 = vpop.f32.mrb[0].mxu0
      %v729 = vadd.f32 0.0, %v728
      %v730 = vpop.f32.mrb[0].mxu0
      %v731 = vpop.f32.mrb[0].mxu0
      %v732 = vadd.f32 0.0, %v731
      %v733 = vpop.f32.mrb[0].mxu0
      %734 = vmatprep.mubr.bf16.mxu0 0
      %735 = vmatmul.mubr.bf16.gmra.mrb[0].mxu0 %v666
      %v736 = vpop.f32.mrb[0].mxu0
      %v737 = vadd.f32 0.0, %v736
      %v738 = vpop.f32.mrb[0].mxu0
      %v739 = vpop.f32.mrb[0].mxu0
      %v740 = vadd.f32 0.0, %v739
      %v741 = vpop.f32.mrb[0].mxu0
      %742 = vmatprep.mubr.bf16.mxu0 0
      %743 = vmatmul.mubr.bf16.gmra.mrb[0].mxu0 %v669
      %v744 = vpop.f32.mrb[0].mxu0
      %v745 = vadd.f32 0.0, %v744
      %v746 = vpop.f32.mrb[0].mxu0
      %v747 = vpop.f32.mrb[0].mxu0
      %v748 = vadd.f32 0.0, %v747
      %v749 = vpop.f32.mrb[0].mxu0
      %750 = vmatprep.mubr.bf16.mxu0 0
      %751 = vmatmul.mubr.bf16.gmra.mrb[0].mxu0 %v672
      %v752 = vpop.f32.mrb[0].mxu0
      %v753 = vadd.f32 0.0, %v752
      %v754 = vpop.f32.mrb[0].mxu0
      %v755 = vpop.f32.mrb[0].mxu0
      %v756 = vadd.f32 0.0, %v755
      %v757 = vpop.f32.mrb[0].mxu0
      %758 = vmatprep.mubr.bf16.mxu0 0
      %759 = vmatmul.mubr.bf16.gmra.mrb[0].mxu0 %v675
      %v760 = vpop.f32.mrb[0].mxu0
      %v761 = vadd.f32 0.0, %v760
      %v762 = vpop.f32.mrb[0].mxu0
      %v763 = vpop.f32.mrb[0].mxu0
      %v764 = vadd.f32 0.0, %v763
      %v765 = vpop.f32.mrb[0].mxu0
      %766 = vmatprep.mubr.bf16.mxu0 0
      %767 = vmatmul.mubr.bf16.gmra.mrb[0].mxu0 %v678
      %v768 = vpop.f32.mrb[0].mxu0
      %v769 = vadd.f32 0.0, %v768
      %v770 = vpop.f32.mrb[0].mxu0
      %v771 = vpop.f32.mrb[0].mxu0
      %v772 = vadd.f32 0.0, %v771
      %v773 = vpop.f32.mrb[0].mxu0
      %774 = vmatprep.mubr.bf16.mxu0 0
      %775 = vmatmul.mubr.bf16.gmra.mrb[0].mxu0 %v681
      %v776 = vpop.f32.mrb[0].mxu0
      %v777 = vadd.f32 0.0, %v776
      %v778 = vpop.f32.mrb[0].mxu0
      %v779 = vpop.f32.mrb[0].mxu0
      %v780 = vadd.f32 0.0, %v779
      %v781 = vpop.f32.mrb[0].mxu0
      %782 = vmatprep.mubr.bf16.mxu0 0
      %783 = vmatmul.mubr.bf16.gmra.mrb[0].mxu0 %v684
      %v784 = vpop.f32.mrb[0].mxu0
      %v785 = vadd.f32 0.0, %v784
      %v786 = vpop.f32.mrb[0].mxu0
      %v787 = vpop.f32.mrb[0].mxu0
      %v788 = vadd.f32 0.0, %v787
      %v789 = vpop.f32.mrb[0].mxu0
      %790 = vdwg.mxu0
      %v791 = vsub.f32 %v276, %v721
      %v792 = vsub.f32 %v277, %v724
      %v793 = vsub.f32 %v276, %v729
      %v794 = vsub.f32 %v277, %v732
      %v795 = vsub.f32 %v276, %v737
      %v796 = vsub.f32 %v277, %v740
      %v797 = vsub.f32 %v276, %v745
      %v798 = vsub.f32 %v277, %v748
      %v799 = vsub.f32 %v276, %v753
      %v800 = vsub.f32 %v277, %v756
      %v801 = vsub.f32 %v276, %v761
      %v802 = vsub.f32 %v277, %v764
      %v803 = vsub.f32 %v276, %v769
      %v804 = vsub.f32 %v277, %v772
      %v805 = vsub.f32 %v276, %v777
      %v806 = vsub.f32 %v277, %v780
      %v807 = vsub.f32 %v276, %v785
      %v808 = vsub.f32 %v277, %v788
      %v809 = vpack.c.bf16 %v792, %v791
      %v810 = vpack.c.bf16 %v794, %v793
      %v811 = vpack.c.bf16 %v796, %v795
      %v812 = vpack.c.bf16 %v798, %v797
      %v813 = vpack.c.bf16 %v800, %v799
      %v814 = vpack.c.bf16 %v802, %v801
      %v815 = vpack.c.bf16 %v804, %v803
      %v816 = vpack.c.bf16 %v806, %v805
      %v817 = vpack.c.bf16 %v808, %v807
      %v827 = vunpack.c.l.b16 %v809
      %v828 = vunpack.c.h.b16 %v809
      %v829 = vunpack.c.l.b16 %v810
      %v830 = vunpack.c.h.b16 %v810
      %v831 = vunpack.c.l.b16 %v811
      %v832 = vunpack.c.h.b16 %v811
      %v833 = vunpack.c.l.b16 %v812
      %v834 = vunpack.c.h.b16 %v812
      %v835 = vunpack.c.l.b16 %v813
      %v836 = vunpack.c.h.b16 %v813
      %v837 = vunpack.c.l.b16 %v814
      %v838 = vunpack.c.h.b16 %v814
      %v839 = vunpack.c.l.b16 %v815
      %v840 = vunpack.c.h.b16 %v815
      %v841 = vunpack.c.l.b16 %v816
      %v842 = vunpack.c.h.b16 %v816
      %v843 = vunpack.c.l.b16 %v817
      %v844 = vunpack.c.h.b16 %v817
      %v845 = vpack.c.b16 %v827, %v827
      %v846 = vpack.c.b16 %v828, %v828
      %v847 = vpack.c.b16 %v829, %v829
      %v848 = vpack.c.b16 %v830, %v830
      %v849 = vpack.c.b16 %v831, %v831
      %v850 = vpack.c.b16 %v832, %v832
      %v851 = vpack.c.b16 %v833, %v833
      %v852 = vpack.c.b16 %v834, %v834
      %v853 = vpack.c.b16 %v835, %v835
      %v854 = vpack.c.b16 %v836, %v836
      %v855 = vpack.c.b16 %v837, %v837
      %v856 = vpack.c.b16 %v838, %v838
      %v857 = vpack.c.b16 %v839, %v839
      %v858 = vpack.c.b16 %v840, %v840
      %v859 = vpack.c.b16 %v841, %v841
      %v860 = vpack.c.b16 %v842, %v842
      %v861 = vpack.c.b16 %v843, %v843
      %v862 = vpack.c.b16 %v844, %v844
      %vm881 = vcmask 257024
      %882 = vst.msk [vmem:[%s270] sm:$0xf] %vm881, %v845
      %883 = vst.msk [vmem:[%s270 + $0x4] sm:$0xf] %vm881, %v846
      %884 = vst.msk [vmem:[%s270 + $0x8] sm:$0xf] %vm881, %v847
      %885 = vst.msk [vmem:[%s270 + $0xc] sm:$0xf] %vm881, %v848
      %886 = vst.msk [vmem:[%s270 + $0x10] sm:$0xf] %vm881, %v849
      %887 = vst.msk [vmem:[%s270 + $0x14] sm:$0xf] %vm881, %v850
      %888 = vst.msk [vmem:[%s270 + $0x18] sm:$0xf] %vm881, %v851
      %889 = vst.msk [vmem:[%s270 + $0x1c] sm:$0xf] %vm881, %v852
      %890 = vst.msk [vmem:[%s270 + $0x20] sm:$0xf] %vm881, %v853
      %891 = vst.msk [vmem:[%s270 + $0x24] sm:$0xf] %vm881, %v854
      %892 = vst.msk [vmem:[%s270 + $0x28] sm:$0xf] %vm881, %v855
      %893 = vst.msk [vmem:[%s270 + $0x2c] sm:$0xf] %vm881, %v856
      %894 = vst.msk [vmem:[%s270 + $0x30] sm:$0xf] %vm881, %v857
      %895 = vst.msk [vmem:[%s270 + $0x34] sm:$0xf] %vm881, %v858
      %896 = vst.msk [vmem:[%s270 + $0x38] sm:$0xf] %vm881, %v859
      %897 = vst.msk [vmem:[%s270 + $0x3c] sm:$0xf] %vm881, %v860
      %898 = vst.msk [vmem:[%s270 + $0x40] sm:$0xf] %vm881, %v861
      %899 = vst.msk [vmem:[%s270 + $0x44] sm:$0xf] %vm881, %v862
      %v900 = vsel %vm279, %v276, 0.0
      %v901 = vsel %vm279, %v277, 0.0
      %v902 = vadd.f32 %v900, %v901
      %v903 = vrot.slane %v902, 4
      %v904 = vadd.f32 %v902, %v903
      %v905 = vrot.slane %v904, 2
      %v906 = vadd.f32 %v904, %v905
      %v907 = vrot.slane %v906, 1
      %v908 = vadd.f32 %v906, %v907
      %v909 = vmul.f32 %v908, 0.0625
      %v910 = vsel %vm279, %v361, 0.0
      %v911 = vsel %vm279, %v362, 0.0
      %v912 = vadd.f32 %v910, %v911
      %v913 = vrot.slane %v912, 4
      %v914 = vadd.f32 %v912, %v913
      %v915 = vrot.slane %v914, 2
      %v916 = vadd.f32 %v914, %v915
      %v917 = vrot.slane %v916, 1
      %v918 = vadd.f32 %v916, %v917
      %v919 = vmul.f32 %v918, 0.0625
      %v920 = vmul.f32 %v909, %v909
      %v921 = vsub.f32 %v919, %v920
      %v922 = vsel %vm279, %v791, 0.0
      %v923 = vsel %vm279, %v792, 0.0
      %v924 = vadd.f32 %v922, %v923
      %v925 = vsel %vm279, %v793, 0.0
      %v926 = vadd.f32 %v924, %v925
      %v927 = vsel %vm279, %v794, 0.0
      %v928 = vadd.f32 %v926, %v927
      %v929 = vsel %vm279, %v795, 0.0
      %v930 = vadd.f32 %v928, %v929
      %v931 = vsel %vm279, %v796, 0.0
      %v932 = vadd.f32 %v930, %v931
      %v933 = vsel %vm279, %v797, 0.0
      %v934 = vadd.f32 %v932, %v933
      %v935 = vsel %vm279, %v798, 0.0
      %v936 = vadd.f32 %v934, %v935
      %v937 = vsel %vm279, %v799, 0.0
      %v938 = vadd.f32 %v936, %v937
      %v939 = vsel %vm279, %v800, 0.0
      %v940 = vadd.f32 %v938, %v939
      %v941 = vsel %vm279, %v801, 0.0
      %v942 = vadd.f32 %v940, %v941
      %v943 = vsel %vm279, %v802, 0.0
      %v944 = vadd.f32 %v942, %v943
      %v945 = vsel %vm279, %v803, 0.0
      %v946 = vadd.f32 %v944, %v945
      %v947 = vsel %vm279, %v804, 0.0
      %v948 = vadd.f32 %v946, %v947
      %v949 = vsel %vm279, %v805, 0.0
      %v950 = vadd.f32 %v948, %v949
      %v951 = vsel %vm279, %v806, 0.0
      %v952 = vadd.f32 %v950, %v951
      %v953 = vsel %vm279, %v807, 0.0
      %v954 = vadd.f32 %v952, %v953
      %v955 = vsel %vm279, %v808, 0.0
      %v956 = vadd.f32 %v954, %v955
      %v957 = vrot.slane %v956, 4
      %v958 = vadd.f32 %v956, %v957
      %v959 = vrot.slane %v958, 2
      %v960 = vadd.f32 %v958, %v959
      %v961 = vrot.slane %v960, 1
      %v962 = vadd.f32 %v960, %v961
      %v963 = vmul.f32 %v962, 0.0069444445
      %v964 = vmul.f32 %v791, %v791
      %v965 = vmul.f32 %v792, %v792
      %v966 = vmul.f32 %v793, %v793
      %v967 = vmul.f32 %v794, %v794
      %v968 = vmul.f32 %v795, %v795
      %v969 = vmul.f32 %v796, %v796
      %v970 = vmul.f32 %v797, %v797
      %v971 = vmul.f32 %v798, %v798
      %v972 = vmul.f32 %v799, %v799
      %v973 = vmul.f32 %v800, %v800
      %v974 = vmul.f32 %v801, %v801
      %v975 = vmul.f32 %v802, %v802
      %v976 = vmul.f32 %v803, %v803
      %v977 = vmul.f32 %v804, %v804
      %v978 = vmul.f32 %v805, %v805
      %v979 = vmul.f32 %v806, %v806
      %v980 = vmul.f32 %v807, %v807
      %v981 = vmul.f32 %v808, %v808
      %v982 = vsel %vm279, %v964, 0.0
      %v983 = vsel %vm279, %v965, 0.0
      %v984 = vadd.f32 %v982, %v983
      %v985 = vsel %vm279, %v966, 0.0
      %v986 = vadd.f32 %v984, %v985
      %v987 = vsel %vm279, %v967, 0.0
      %v988 = vadd.f32 %v986, %v987
      %v989 = vsel %vm279, %v968, 0.0
      %v990 = vadd.f32 %v988, %v989
      %v991 = vsel %vm279, %v969, 0.0
      %v992 = vadd.f32 %v990, %v991
      %v993 = vsel %vm279, %v970, 0.0
      %v994 = vadd.f32 %v992, %v993
      %v995 = vsel %vm279, %v971, 0.0
      %v996 = vadd.f32 %v994, %v995
      %v997 = vsel %vm279, %v972, 0.0
      %v998 = vadd.f32 %v996, %v997
      %v999 = vsel %vm279, %v973, 0.0
      %v1000 = vadd.f32 %v998, %v999
      %v1001 = vsel %vm279, %v974, 0.0
      %v1002 = vadd.f32 %v1000, %v1001
      %v1003 = vsel %vm279, %v975, 0.0
      %v1004 = vadd.f32 %v1002, %v1003
      %v1005 = vsel %vm279, %v976, 0.0
      %v1006 = vadd.f32 %v1004, %v1005
      %v1007 = vsel %vm279, %v977, 0.0
      %v1008 = vadd.f32 %v1006, %v1007
      %v1009 = vsel %vm279, %v978, 0.0
      %v1010 = vadd.f32 %v1008, %v1009
      %v1011 = vsel %vm279, %v979, 0.0
      %v1012 = vadd.f32 %v1010, %v1011
      %v1013 = vsel %vm279, %v980, 0.0
      %v1014 = vadd.f32 %v1012, %v1013
      %v1015 = vsel %vm279, %v981, 0.0
      %v1016 = vadd.f32 %v1014, %v1015
      %v1017 = vrot.slane %v1016, 4
      %v1018 = vadd.f32 %v1016, %v1017
      %v1019 = vrot.slane %v1018, 2
      %v1020 = vadd.f32 %v1018, %v1019
      %v1021 = vrot.slane %v1020, 1
      %v1022 = vadd.f32 %v1020, %v1021
      %v1023 = vmul.f32 %v1022, 0.0069444445
      %v1024 = vmul.f32 %v963, %v963
      %v1025 = vsub.f32 %v1023, %v1024
      %v1026 = vld [vmem:[%s3] sm:$0x1]
      %v1027 = vld [vmem:[%s1] sm:$0xf]
      %v1028 = vld [vmem:[%s1 + $0x4] sm:$0xf]
      %v1029 = vld [vmem:[%s1 + $0x8] sm:$0xf]
      %v1030 = vld [vmem:[%s1 + $0xc] sm:$0xf]
      %v1032 = vlaneseq
      %v1033 = vshrl.u32 %v1032, 7
      %v1034 = vsub.s32 0, %v1033
      %v1035 = vrot.slane %v1026, %v1034
      %v1041 = vunpack.c.l.b16 %v1027
      %v1042 = vunpack.c.l.b16 %v1028
      %v1043 = vunpack.c.l.b16 %v1029
      %v1044 = vunpack.c.l.b16 %v1030
      %v1045 = vpack.c.b16 %v1042, %v1041
      %v1046 = vpack.c.b16 %v1044, %v1043
      %v1050 = vsel %vm279, %v278, 0
      %1052 = vmatprep.subr.bf16.mxu0 0
      %1053 = vmatpush1.bf16.msra.mxu0 %v1045
      %1054 = vmatprep.subr.bf16.mxu0 0
      %1055 = vmatpush1.bf16.msra.mxu0 %v1046
      %1056 = vmatprep.subr.bf16.mxu0 0
      %1057 = vmatpush1.bf16.msra.mxu0 0
      %1058 = vmatprep.subr.bf16.mxu0 0
      %1059 = vmatpush1.bf16.msra.mxu0 0
      %1060 = vmatprep.subr.bf16.mxu0 0
      %1061 = vmatpush1.bf16.msra.mxu0 0
      %1062 = vmatprep.subr.bf16.mxu0 0
      %1063 = vmatpush1.bf16.msra.mxu0 0
      %1064 = vmatprep.subr.bf16.mxu0 0
      %1065 = vmatpush1.bf16.msra.mxu0 0
      %1066 = vmatprep.subr.bf16.mxu0 0
      %1067 = vmatpush1.bf16.msra.mxu0 0
      %1068 = vmatprep.subr.bf16.mxu0 0
      %1069 = vmatpush1.bf16.msra.mxu0 0
      %1070 = vmatprep.subr.bf16.mxu0 0
      %1071 = vmatpush1.bf16.msra.mxu0 0
      %1072 = vmatprep.subr.bf16.mxu0 0
      %1073 = vmatpush1.bf16.msra.mxu0 0
      %1074 = vmatprep.subr.bf16.mxu0 0
      %1075 = vmatpush1.bf16.msra.mxu0 0
      %1076 = vmatprep.subr.bf16.mxu0 0
      %1077 = vmatpush1.bf16.msra.mxu0 0
      %1078 = vmatprep.subr.bf16.mxu0 0
      %1079 = vmatpush1.bf16.msra.mxu0 0
      %1080 = vmatprep.subr.bf16.mxu0 0
      %1081 = vmatpush1.bf16.msra.mxu0 0
      %1082 = vmatprep.subr.bf16.mxu0 0
      %1083 = vmatpush1.bf16.msra.mxu0 0
      %1084 = vmatprep.mubr.bf16.mxu0 0
      %1085 = vmatmul.mubr.bf16.gmra.mrb[0].mxu0 %v1050
      %v1086 = vpop.f32.mrb[0].mxu0
      %v1087 = vadd.f32 %v1035, %v1086
      %v1088 = vpop.f32.mrb[0].mxu0
      %v1089 = vpop.f32.mrb[0].mxu0
      %v1090 = vadd.f32 %v1035, %v1089
      %v1091 = vpop.f32.mrb[0].mxu0
      %1092 = vdwg.mxu0
      %1093 = vrot.lane.b32.xlu0 %v810, 32
      %v1094 = vpop.permute.xlu0 %1093
      %1095 = vrot.lane.b32.xlu0 %v811, 64
      %v1096 = vpop.permute.xlu0 %1095
      %v1099 = vsel %vm279, %v809, %v1094
      %vm1100 = vcmask 523264
      %v1102 = vsel %vm1100, %v1099, %v1096
      %1103 = vrot.lane.b32.xlu0 %v813, 32
      %v1104 = vpop.permute.xlu0 %1103
      %1105 = vrot.lane.b32.xlu0 %v814, 64
      %v1106 = vpop.permute.xlu0 %1105
      %v1109 = vsel %vm279, %v812, %v1104
      %v1111 = vsel %vm1100, %v1109, %v1106
      %1112 = vrot.lane.b32.xlu0 %v816, 32
      %v1113 = vpop.permute.xlu0 %1112
      %1114 = vrot.lane.b32.xlu0 %v817, 64
      %v1115 = vpop.permute.xlu0 %1114
      %v1118 = vsel %vm279, %v815, %v1113
      %v1120 = vsel %vm1100, %v1118, %v1115
      %v1121 = vld [vmem:[%s2] sm:$0xf]
      %v1122 = vld [vmem:[%s2 + $0x4] sm:$0xf]
      %v1123 = vld [vmem:[%s2 + $0x8] sm:$0xf]
      %v1124 = vld [vmem:[%s2 + $0xc] sm:$0xf]
      %v1125 = vld [vmem:[%s2 + $0x10] sm:$0xf]
      %v1126 = vld [vmem:[%s2 + $0x14] sm:$0xf]
      %v1127 = vld [vmem:[%s2 + $0x18] sm:$0xf]
      %v1128 = vld [vmem:[%s2 + $0x1c] sm:$0xf]
      %v1129 = vld [vmem:[%s2 + $0x20] sm:$0xf]
      %v1130 = vld [vmem:[%s2 + $0x24] sm:$0xf]
      %v1131 = vld [vmem:[%s2 + $0x28] sm:$0xf]
      %v1132 = vld [vmem:[%s2 + $0x2c] sm:$0xf]
      %v1145 = vunpack.c.l.b16 %v1121
      %v1146 = vunpack.c.l.b16 %v1122
      %v1147 = vunpack.c.l.b16 %v1123
      %v1148 = vunpack.c.l.b16 %v1124
      %v1149 = vunpack.c.l.b16 %v1125
      %v1150 = vunpack.c.l.b16 %v1126
      %v1151 = vunpack.c.l.b16 %v1127
      %v1152 = vunpack.c.l.b16 %v1128
      %v1153 = vunpack.c.l.b16 %v1129
      %v1154 = vunpack.c.l.b16 %v1130
      %v1155 = vunpack.c.l.b16 %v1131
      %v1156 = vunpack.c.l.b16 %v1132
      %v1157 = vpack.c.b16 %v1146, %v1145
      %v1158 = vpack.c.b16 %v1148, %v1147
      %v1159 = vpack.c.b16 %v1150, %v1149
      %v1160 = vpack.c.b16 %v1152, %v1151
      %v1161 = vpack.c.b16 %v1154, %v1153
      %v1162 = vpack.c.b16 %v1156, %v1155
      %vm1169 = vcmask 785408
      %v1170 = vsel %vm1169, %v1102, 0
      %v1172 = vsel %vm1169, %v1111, 0
      %v1174 = vsel %vm1169, %v1120, 0
      %1176 = vmatprep.subr.bf16.mxu0 0
      %1177 = vmatpush1.bf16.msra.mxu0 %v1157
      %1178 = vmatprep.subr.bf16.mxu0 0
      %1179 = vmatpush1.bf16.msra.mxu0 %v1158
      %1180 = vmatprep.subr.bf16.mxu0 0
      %1181 = vmatpush1.bf16.msra.mxu0 %v1159
      %1182 = vmatprep.subr.bf16.mxu0 0
      %1183 = vmatpush1.bf16.msra.mxu0 %v1160
      %1184 = vmatprep.subr.bf16.mxu0 0
      %1185 = vmatpush1.bf16.msra.mxu0 %v1161
      %1186 = vmatprep.subr.bf16.mxu0 0
      %1187 = vmatpush1.bf16.msra.mxu0 %v1162
      %1188 = vmatprep.subr.bf16.mxu0 0
      %1189 = vmatpush1.bf16.msra.mxu0 0
      %1190 = vmatprep.subr.bf16.mxu0 0
      %1191 = vmatpush1.bf16.msra.mxu0 0
      %1192 = vmatprep.subr.bf16.mxu0 0
      %1193 = vmatpush1.bf16.msra.mxu0 0
      %1194 = vmatprep.subr.bf16.mxu0 0
      %1195 = vmatpush1.bf16.msra.mxu0 0
      %1196 = vmatprep.subr.bf16.mxu0 0
      %1197 = vmatpush1.bf16.msra.mxu0 0
      %1198 = vmatprep.subr.bf16.mxu0 0
      %1199 = vmatpush1.bf16.msra.mxu0 0
      %1200 = vmatprep.subr.bf16.mxu0 0
      %1201 = vmatpush1.bf16.msra.mxu0 0
      %1202 = vmatprep.subr.bf16.mxu0 0
      %1203 = vmatpush1.bf16.msra.mxu0 0
      %1204 = vmatprep.subr.bf16.mxu0 0
      %1205 = vmatpush1.bf16.msra.mxu0 0
      %1206 = vmatprep.subr.bf16.mxu0 0
      %1207 = vmatpush1.bf16.msra.mxu0 0
      %1208 = vmatprep.mubr.bf16.mxu0 0
      %1209 = vmatmul.mubr.bf16.gmra.mrb[0].mxu0 %v1170
      %v1210 = vpop.f32.mrb[0].mxu0
      %v1211 = vadd.f32 %v1087, %v1210
      %v1212 = vpop.f32.mrb[0].mxu0
      %v1213 = vpop.f32.mrb[0].mxu0
      %v1214 = vadd.f32 %v1090, %v1213
      %v1215 = vpop.f32.mrb[0].mxu0
      %1216 = vmatprep.mubr.bf16.mxu0 0
      %1217 = vmatmul.mubr.bf16.gmra.mrb[0].mxu0 %v1172
      %v1218 = vpop.f32.mrb[0].mxu0
      %v1219 = vadd.f32 %v1087, %v1218
      %v1220 = vpop.f32.mrb[0].mxu0
      %v1221 = vpop.f32.mrb[0].mxu0
      %v1222 = vadd.f32 %v1090, %v1221
      %v1223 = vpop.f32.mrb[0].mxu0
      %1224 = vmatprep.mubr.bf16.mxu0 0
      %1225 = vmatmul.mubr.bf16.gmra.mrb[0].mxu0 %v1174
      %v1226 = vpop.f32.mrb[0].mxu0
      %v1227 = vadd.f32 %v1087, %v1226
      %v1228 = vpop.f32.mrb[0].mxu0
      %v1229 = vpop.f32.mrb[0].mxu0
      %v1230 = vadd.f32 %v1090, %v1229
      %v1231 = vpop.f32.mrb[0].mxu0
      %1232 = vdwg.mxu0
      %v1233 = vpack.c.bf16 %v1214, %v1211
      %v1234 = vpack.c.bf16 %v1222, %v1219
      %v1235 = vpack.c.bf16 %v1230, %v1227
      %v1239 = vunpack.c.l.b16 %v1233
      %v1240 = vunpack.c.h.b16 %v1233
      %v1241 = vunpack.c.l.b16 %v1234
      %v1242 = vunpack.c.h.b16 %v1234
      %v1243 = vunpack.c.l.b16 %v1235
      %v1244 = vunpack.c.h.b16 %v1235
      %v1245 = vpack.c.b16 %v1239, %v1239
      %v1246 = vpack.c.b16 %v1240, %v1240
      %v1247 = vpack.c.b16 %v1241, %v1241
      %v1248 = vpack.c.b16 %v1242, %v1242
      %v1249 = vpack.c.b16 %v1243, %v1243
      %v1250 = vpack.c.b16 %v1244, %v1244
      %vm1257 = vcmask 519168
      %1258 = vst.msk [vmem:[%s265] sm:$0xf] %vm1257, %v1245
      %1259 = vst.msk [vmem:[%s265 + $0x4] sm:$0xf] %vm1257, %v1246
      %1260 = vst.msk [vmem:[%s265 + $0x8] sm:$0xf] %vm1257, %v1247
      %1261 = vst.msk [vmem:[%s265 + $0xc] sm:$0xf] %vm1257, %v1248
      %1262 = vst.msk [vmem:[%s265 + $0x10] sm:$0xf] %vm1257, %v1249
      %1263 = vst.msk [vmem:[%s265 + $0x14] sm:$0xf] %vm1257, %v1250
      %v1264 = vsel %vm1100, %v1211, 0.0
      %v1265 = vsel %vm1100, %v1214, 0.0
      %v1266 = vadd.f32 %v1264, %v1265
      %v1267 = vsel %vm1100, %v1219, 0.0
      %v1268 = vadd.f32 %v1266, %v1267
      %v1269 = vsel %vm1100, %v1222, 0.0
      %v1270 = vadd.f32 %v1268, %v1269
      %v1271 = vsel %vm1100, %v1227, 0.0
      %v1272 = vadd.f32 %v1270, %v1271
      %v1273 = vsel %vm1100, %v1230, 0.0
      %v1274 = vadd.f32 %v1272, %v1273
      %v1275 = vrot.slane %v1274, 4
      %v1276 = vadd.f32 %v1274, %v1275
      %v1277 = vrot.slane %v1276, 2
      %v1278 = vadd.f32 %v1276, %v1277
      %v1279 = vrot.slane %v1278, 1
      %v1280 = vadd.f32 %v1278, %v1279
      %v1281 = vmul.f32 %v1211, %v1211
      %v1282 = vmul.f32 %v1214, %v1214
      %v1283 = vmul.f32 %v1219, %v1219
      %v1284 = vmul.f32 %v1222, %v1222
      %v1285 = vmul.f32 %v1227, %v1227
      %v1286 = vmul.f32 %v1230, %v1230
      %v1287 = vsel %vm1100, %v1281, 0.0
      %v1288 = vsel %vm1100, %v1282, 0.0
      %v1289 = vadd.f32 %v1287, %v1288
      %v1290 = vsel %vm1100, %v1283, 0.0
      %v1291 = vadd.f32 %v1289, %v1290
      %v1292 = vsel %vm1100, %v1284, 0.0
      %v1293 = vadd.f32 %v1291, %v1292
      %v1294 = vsel %vm1100, %v1285, 0.0
      %v1295 = vadd.f32 %v1293, %v1294
      %v1296 = vsel %vm1100, %v1286, 0.0
      %v1297 = vadd.f32 %v1295, %v1296
      %v1298 = vrot.slane %v1297, 4
      %v1299 = vadd.f32 %v1297, %v1298
      %v1300 = vrot.slane %v1299, 2
      %v1301 = vadd.f32 %v1299, %v1300
      %v1302 = vrot.slane %v1301, 1
      %v1303 = vadd.f32 %v1301, %v1302
      %1305 = vrot.lane.b32.xlu0 %v1303, 64
      %v1306 = vpop.permute.xlu0 %1305
      %1309 = vrot.lane.b32.xlu0 %v921, 32
      %v1310 = vpop.permute.xlu0 %1309
      %1313 = vrot.lane.b32.xlu0 %v963, 64
      %v1314 = vpop.permute.xlu0 %1313
      %1317 = vrot.lane.b32.xlu0 %v1025, 96
      %v1318 = vpop.permute.xlu0 %1317
      %v1320 = vsel %vm1100, %v1280, %v1306
      %v1321 = vsel %vm279, %v909, %v1310
      %v1322 = vsel %vm1100, %v1321, %v1314
      %v1323 = vsel %vm1169, %v1322, %v1318
      %v1326 = vcombine.low %v1320, %v1323
      %v1328 = vunpack.c.l.s4 1966171168
      %v1329 = vunpack.c.0.s8 %v1328
      %v1330 = vlaneseq
      %v1331 = vshrl.u32 %v1330, 7
      %v1332 = vsub.s32 %v1329, %v1331
      %v1333 = vrot.slane %v1326, %v1332
      %v1335 = vunpack.c.l.s4 1966171168
      %v1336 = vunpack.c.0.s8 %v1335
      %v1337 = vlaneseq
      %v1338 = vshrl.u32 %v1337, 7
      %v1339 = vsub.s32 %v1336, %v1338
      %v1340 = vrot.slane %v1333, %v1339
      %v1342 = vlaneseq
      %vm1343 = vcmp.ge.s32.totalorder %v1342, 0
      %vm1344 = vcmp.lt.s32.totalorder %v1342, 256
      %vm1345 = vmand %vm1343, %vm1344
      %1346 = vst.msk [vmem:[%s274] sm:$0x3] %vm1345, %v1340
      %p1347 = scmp.lt.s32.totalorder %s18, 1
      %s1348 = scalar_select %p1347, %s18, 1
      %s1349 = smul.addr %s1348, 6
      %s1350 = smul.addr %s1349, 4
      %s1351 = scalar_lea.vmem %s4, %s1350
      %p1352 = scmp.lt.s32.totalorder %s18, 1
      %s1353 = scalar_select %p1352, %s18, 1
      %s1354 = smul.addr %s1353, 18
      %s1355 = smul.addr %s1354, 4
      %s1356 = scalar_lea.vmem %s5, %s1355
      %p1357 = scmp.lt.s32.totalorder %s18, 1
      %s1358 = scalar_select %p1357, %s18, 1
      %s1359 = smul.addr %s1358, 2
      %s1360 = scalar_lea.vmem %s6, %s1359
      // Predicated region
      $region37: #{gca_forward.7} parent=35 // pred_check
        %p1361 = pneg %p125
      $region38: #{gca_forward.7} parent=35 // pred_check_branch
        %1363 = sbr.rel (%p1361) target = $region40
      $region39: #{gca_forward.7} parent=35 // pred_region
        _
      $region40: #{gca_forward.7} parent=35 // pred_fallthru
        _
      // Predicated region
      $region41: #{gca_forward.7} parent=35 // pred_check
        %p1364 = pneg %p151
      $region42: #{gca_forward.7} parent=35 // pred_check_branch
        %1366 = sbr.rel (%p1364) target = $region44
      $region43: #{gca_forward.7} parent=35 // pred_region
        _
      $region44: #{gca_forward.7} parent=35 // pred_fallthru
        _
      // Predicated region
      $region45: #{gca_forward.7} parent=35 // pred_check
        %p1367 = pneg %p177
      $region46: #{gca_forward.7} parent=35 // pred_check_branch
        %1369 = sbr.rel (%p1367) target = $region48
      $region47: #{gca_forward.7} parent=35 // pred_region
        _
      $region48: #{gca_forward.7} parent=35 // pred_fallthru
        _
    $region36: #{gca_forward.7} parent=5 // pred_fallthru
      _
    %p1370 = scmp.le.s32.totalorder 2, %s13
    // Predicated region
    $region49: #{gca_forward.7} parent=5 // pred_check
      %p1371 = pneg %p1370
    $region50: #{gca_forward.7} parent=5 // pred_check_branch
      %1373 = sbr.rel (%p1371) target = $region52
    $region51: #{gca_forward.7} parent=5 // pred_region
      %s1374 = ssub.s32 %s13, 2
      // Predicated region
      $region53: #{gca_forward.7} parent=51 // pred_check
        %p1375 = pneg %p131
      $region54: #{gca_forward.7} parent=51 // pred_check_branch
        %1377 = sbr.rel (%p1375) target = $region56
      $region55: #{gca_forward.7} parent=51 // pred_region
        %p1378 = scmp.lt.s32.totalorder %s19, 1
        %s1379 = scalar_select %p1378, %s19, 1
        %s1380 = smul.addr %s1379, 6
        %s1381 = smul.addr %s1380, 4
        %s1382 = scalar_lea.vmem %s4, %s1381
      $region56: #{gca_forward.7} parent=51 // pred_fallthru
        _
      // Predicated region
      $region57: #{gca_forward.7} parent=51 // pred_check
        %p1383 = pneg %p157
      $region58: #{gca_forward.7} parent=51 // pred_check_branch
        %1385 = sbr.rel (%p1383) target = $region60
      $region59: #{gca_forward.7} parent=51 // pred_region
        %p1386 = scmp.lt.s32.totalorder %s19, 1
        %s1387 = scalar_select %p1386, %s19, 1
        %s1388 = smul.addr %s1387, 18
        %s1389 = smul.addr %s1388, 4
        %s1390 = scalar_lea.vmem %s5, %s1389
      $region60: #{gca_forward.7} parent=51 // pred_fallthru
        _
      // Predicated region
      $region61: #{gca_forward.7} parent=51 // pred_check
        %p1391 = pneg %p183
      $region62: #{gca_forward.7} parent=51 // pred_check_branch
        %1393 = sbr.rel (%p1391) target = $region64
      $region63: #{gca_forward.7} parent=51 // pred_region
        %p1394 = scmp.lt.s32.totalorder %s19, 1
        %s1395 = scalar_select %p1394, %s19, 1
        %s1396 = smul.addr %s1395, 2
        %s1397 = scalar_lea.vmem %s6, %s1396
      $region64: #{gca_forward.7} parent=51 // pred_fallthru
        _
    $region52: #{gca_forward.7} parent=5 // pred_fallthru
      _
  $region6: #{gca_forward.7} parent=0 // loop_footer
    %s17 = sadd.s32 1, %s13
  $region7: #{gca_forward.7} parent=0 // loop_footer_branch
    %12 = sbr.rel target = $region3
  $region8: #{gca_forward.7} parent=0 // loop_exit
    _

// kernel: gca_forward.8
$region0: #{gca_forward.8}
  #allocation0 [shape = 'u32[]', space=smem, size = 0x4, offset = 0x4, fixed_abs, tag = 'smem constant byte address 0x4 - core index']
  #allocation1 [shape = 'u32[144,128]{1,0:T(1,128)}', space=vmem, size = 0x12000, scoped, tag = 'internal scratch']
  %s0 = inlined_call_operand.vmem [shape: f32[2,16,32], index: 0, kind: input, shape index: {}]
  %s1 = inlined_call_operand.vmem [shape: bf16[2,144,32], index: 1, kind: input, shape index: {}]
  %s2 = inlined_call_operand.vmem [shape: bf16[2,48,64], index: 2, kind: input, shape index: {}]
  %s3 = inlined_call_operand.vmem [shape: f32[2,1,64], index: 3, kind: input, shape index: {}]
  %s4 = inlined_call_operand.vmem [shape: f32[2,1,64], index: 4, kind: input, shape index: {}]
  %s5 = inlined_call_operand.vmem [shape: f32[1,64], index: 5, kind: input, shape index: {}]
  %s6 = inlined_call_operand.vmem [shape: f32[1,64], index: 6, kind: input, shape index: {}]
  %s7 = inlined_call_operand.vmem [shape: bf16[32,64], index: 7, kind: input, shape index: {}]
  %s8 = inlined_call_operand.vmem [shape: bf16[32,64], index: 8, kind: input, shape index: {}]
  %s9 = inlined_call_operand.vmem [shape: f32[1,64], index: 9, kind: input, shape index: {}]
  %s10 = inlined_call_operand.vmem [shape: bf16[192,64], index: 10, kind: input, shape index: {}]
  %s11 = inlined_call_operand.vmem [shape: f32[1,64], index: 11, kind: input, shape index: {}]
  %s12 = inlined_call_operand.vmem [shape: bf16[2,16,64], index: 12, kind: output, shape index: {0}]
  %s13 = inlined_call_operand.vmem [shape: bf16[2,16,64], index: 13, kind: output, shape index: {1}]
  %s14 = inlined_call_operand.vmem [shape: f32[2,1,256], index: 14, kind: output, shape index: {2}]
  %15 = xla_tuple %s12, %s13, %s14
  %s16 = sld [smem:[#allocation0]]
  $region97: #{gca_forward.8} parent=0
    _
  %s18 = ssub.s32 1, %s16
  %s19 = scalar_select 0, %s18, %s16
  loop: start=0, step=1, limit=4
  $region2: #{gca_forward.8} parent=0 // loop_pre_header
    _
  $region3: #{gca_forward.8} parent=0 // loop_header
    %s21 = sphi 0, %s25
    %p22 = scmp.ge.s32.totalorder %s21, 4
    %s31 = sphi 0, %s33
    %s34 = sphi 0, %s31
    %s35 = sphi 0, %s34
    %s51 = sphi 0, %s35
    %s57 = sphi 0, %s59
    %s60 = sphi 0, %s57
    %s61 = sphi 0, %s60
    %s77 = sphi 0, %s61
    %s83 = sphi 0, %s85
    %s86 = sphi 0, %s83
    %s87 = sphi 0, %s86
    %s103 = sphi 0, %s87
    %s109 = sphi 0, %s111
    %s112 = sphi 0, %s109
    %s113 = sphi 0, %s112
    %s129 = sphi 0, %s113
    %s135 = sphi 0, %s137
    %s138 = sphi 0, %s135
    %s139 = sphi 0, %s138
    %s155 = sphi 0, %s139
    %s159 = sphi 0, %s159
    %s161 = sphi 0, %s159
    %s162 = sphi 0, %s161
    %s176 = sphi 0, %s162
    %s180 = sphi 0, %s180
    %s182 = sphi 0, %s180
    %s183 = sphi 0, %s182
    %s197 = sphi 0, %s183
    %s201 = sphi 0, %s201
    %s203 = sphi 0, %s201
    %s204 = sphi 0, %s203
    %s218 = sphi 0, %s204
    %s222 = sphi 0, %s222
    %s224 = sphi 0, %s222
    %s225 = sphi 0, %s224
    %s239 = sphi 0, %s225
    %s243 = sphi 0, %s243
    %s245 = sphi 0, %s243
    %s246 = sphi 0, %s245
    %s260 = sphi 0, %s246
    %s264 = sphi 0, %s264
    %s266 = sphi 0, %s264
    %s267 = sphi 0, %s266
    %s281 = sphi 0, %s267
    %s285 = sphi 0, %s285
    %s287 = sphi 0, %s285
    %s288 = sphi 0, %s287
    %s302 = sphi 0, %s288
    %s308 = sphi 0, %s310
    %s311 = sphi 0, %s308
    %s312 = sphi 0, %s311
    %s328 = sphi 0, %s312
    %s334 = sphi 0, %s336
    %s337 = sphi 0, %s334
    %s338 = sphi 0, %s337
    %s354 = sphi 0, %s338
    %s360 = sphi 0, %s362
    %s363 = sphi 0, %s360
    %s364 = sphi 0, %s363
    %s380 = sphi 0, %s364
  $region4: #{gca_forward.8} parent=0 // loop_header_branch
    %24 = sbr.rel (%p22) target = $region8
  $region5: #{gca_forward.8} parent=0 // loop_body
    %s26 = ssub.s32 %s21, 1
    %s27 = ssub.s32 %s21, 2
    %s28 = sadd.s32 %s21, 1
    %s29 = ssub.s32 %s21, %s28
    %p30 = scmp.eq.s32.totalorder %s29, 0
    %s32 = sadd.s32 %s31, 1
    %s33 = scalar_select %p30, %s31, %s32
    %p36 = pneg %p30
    %p37 = scmp.eq.s32.totalorder %s21, 1
    %p38 = por %p36, %p37
    %p39 = scmp.ne.s32.totalorder %s31, %s34
    %p40 = scmp.eq.s32.totalorder %s21, 0
    %p41 = por %p39, %p40
    %p42 = scmp.ne.s32.totalorder %s31, %s34
    %p43 = scmp.eq.s32.totalorder %s26, 1
    %p44 = por %p42, %p43
    %p45 = scmp.ne.s32.totalorder %s34, %s35
    %p46 = scmp.eq.s32.totalorder %s26, 0
    %p47 = por %p45, %p46
    %p48 = scmp.ne.s32.totalorder %s34, %s35
    %p49 = scmp.eq.s32.totalorder %s27, 1
    %p50 = por %p48, %p49
    %p52 = scmp.ne.s32.totalorder %s35, %s51
    %p53 = scmp.eq.s32.totalorder %s27, 0
    %p54 = por %p52, %p53
    %s55 = ssub.s32 %s21, %s28
    %p56 = scmp.eq.s32.totalorder %s55, 0
    %s58 = sadd.s32 %s57, 1
    %s59 = scalar_select %p56, %s57, %s58
    %p62 = pneg %p56
    %p63 = scmp.eq.s32.totalorder %s21, 1
    %p64 = por %p62, %p63
    %p65 = scmp.ne.s32.totalorder %s57, %s60
    %p66 = scmp.eq.s32.totalorder %s21, 0
    %p67 = por %p65, %p66
    %p68 = scmp.ne.s32.totalorder %s57, %s60
    %p69 = scmp.eq.s32.totalorder %s26, 1
    %p70 = por %p68, %p69
    %p71 = scmp.ne.s32.totalorder %s60, %s61
    %p72 = scmp.eq.s32.totalorder %s26, 0
    %p73 = por %p71, %p72
    %p74 = scmp.ne.s32.totalorder %s60, %s61
    %p75 = scmp.eq.s32.totalorder %s27, 1
    %p76 = por %p74, %p75
    %p78 = scmp.ne.s32.totalorder %s61, %s77
    %p79 = scmp.eq.s32.totalorder %s27, 0
    %p80 = por %p78, %p79
    %s81 = ssub.s32 %s21, %s28
    %p82 = scmp.eq.s32.totalorder %s81, 0
    %s84 = sadd.s32 %s83, 1
    %s85 = scalar_select %p82, %s83, %s84
    %p88 = pneg %p82
    %p89 = scmp.eq.s32.totalorder %s21, 1
    %p90 = por %p88, %p89
    %p91 = scmp.ne.s32.totalorder %s83, %s86
    %p92 = scmp.eq.s32.totalorder %s21, 0
    %p93 = por %p91, %p92
    %p94 = scmp.ne.s32.totalorder %s83, %s86
    %p95 = scmp.eq.s32.totalorder %s26, 1
    %p96 = por %p94, %p95
    %p97 = scmp.ne.s32.totalorder %s86, %s87
    %p98 = scmp.eq.s32.totalorder %s26, 0
    %p99 = por %p97, %p98
    %p100 = scmp.ne.s32.totalorder %s86, %s87
    %p101 = scmp.eq.s32.totalorder %s27, 1
    %p102 = por %p100, %p101
    %p104 = scmp.ne.s32.totalorder %s87, %s103
    %p105 = scmp.eq.s32.totalorder %s27, 0
    %p106 = por %p104, %p105
    %s107 = ssub.s32 %s21, %s28
    %p108 = scmp.eq.s32.totalorder %s107, 0
    %s110 = sadd.s32 %s109, 1
    %s111 = scalar_select %p108, %s109, %s110
    %p114 = pneg %p108
    %p115 = scmp.eq.s32.totalorder %s21, 1
    %p116 = por %p114, %p115
    %p117 = scmp.ne.s32.totalorder %s109, %s112
    %p118 = scmp.eq.s32.totalorder %s21, 0
    %p119 = por %p117, %p118
    %p120 = scmp.ne.s32.totalorder %s109, %s112
    %p121 = scmp.eq.s32.totalorder %s26, 1
    %p122 = por %p120, %p121
    %p123 = scmp.ne.s32.totalorder %s112, %s113
    %p124 = scmp.eq.s32.totalorder %s26, 0
    %p125 = por %p123, %p124
    %p126 = scmp.ne.s32.totalorder %s112, %s113
    %p127 = scmp.eq.s32.totalorder %s27, 1
    %p128 = por %p126, %p127
    %p130 = scmp.ne.s32.totalorder %s113, %s129
    %p131 = scmp.eq.s32.totalorder %s27, 0
    %p132 = por %p130, %p131
    %s133 = ssub.s32 %s21, %s28
    %p134 = scmp.eq.s32.totalorder %s133, 0
    %s136 = sadd.s32 %s135, 1
    %s137 = scalar_select %p134, %s135, %s136
    %p140 = pneg %p134
    %p141 = scmp.eq.s32.totalorder %s21, 1
    %p142 = por %p140, %p141
    %p143 = scmp.ne.s32.totalorder %s135, %s138
    %p144 = scmp.eq.s32.totalorder %s21, 0
    %p145 = por %p143, %p144
    %p146 = scmp.ne.s32.totalorder %s135, %s138
    %p147 = scmp.eq.s32.totalorder %s26, 1
    %p148 = por %p146, %p147
    %p149 = scmp.ne.s32.totalorder %s138, %s139
    %p150 = scmp.eq.s32.totalorder %s26, 0
    %p151 = por %p149, %p150
    %p152 = scmp.ne.s32.totalorder %s138, %s139
    %p153 = scmp.eq.s32.totalorder %s27, 1
    %p154 = por %p152, %p153
    %p156 = scmp.ne.s32.totalorder %s139, %s155
    %p157 = scmp.eq.s32.totalorder %s27, 0
    %p158 = por %p156, %p157
    %s160 = sadd.s32 %s159, 1
    %p163 = scmp.eq.s32.totalorder %s21, 1
    %p164 = scmp.ne.s32.totalorder %s159, %s161
    %p165 = scmp.eq.s32.totalorder %s21, 0
    %p166 = por %p164, %p165
    %p167 = scmp.ne.s32.totalorder %s159, %s161
    %p168 = scmp.eq.s32.totalorder %s26, 1
    %p169 = por %p167, %p168
    %p170 = scmp.ne.s32.totalorder %s161, %s162
    %p171 = scmp.eq.s32.totalorder %s26, 0
    %p172 = por %p170, %p171
    %p173 = scmp.ne.s32.totalorder %s161, %s162
    %p174 = scmp.eq.s32.totalorder %s27, 1
    %p175 = por %p173, %p174
    %p177 = scmp.ne.s32.totalorder %s162, %s176
    %p178 = scmp.eq.s32.totalorder %s27, 0
    %p179 = por %p177, %p178
    %s181 = sadd.s32 %s180, 1
    %p184 = scmp.eq.s32.totalorder %s21, 1
    %p185 = scmp.ne.s32.totalorder %s180, %s182
    %p186 = scmp.eq.s32.totalorder %s21, 0
    %p187 = por %p185, %p186
    %p188 = scmp.ne.s32.totalorder %s180, %s182
    %p189 = scmp.eq.s32.totalorder %s26, 1
    %p190 = por %p188, %p189
    %p191 = scmp.ne.s32.totalorder %s182, %s183
    %p192 = scmp.eq.s32.totalorder %s26, 0
    %p193 = por %p191, %p192
    %p194 = scmp.ne.s32.totalorder %s182, %s183
    %p195 = scmp.eq.s32.totalorder %s27, 1
    %p196 = por %p194, %p195
    %p198 = scmp.ne.s32.totalorder %s183, %s197
    %p199 = scmp.eq.s32.totalorder %s27, 0
    %p200 = por %p198, %p199
    %s202 = sadd.s32 %s201, 1
    %p205 = scmp.eq.s32.totalorder %s21, 1
    %p206 = scmp.ne.s32.totalorder %s201, %s203
    %p207 = scmp.eq.s32.totalorder %s21, 0
    %p208 = por %p206, %p207
    %p209 = scmp.ne.s32.totalorder %s201, %s203
    %p210 = scmp.eq.s32.totalorder %s26, 1
    %p211 = por %p209, %p210
    %p212 = scmp.ne.s32.totalorder %s203, %s204
    %p213 = scmp.eq.s32.totalorder %s26, 0
    %p214 = por %p212, %p213
    %p215 = scmp.ne.s32.totalorder %s203, %s204
    %p216 = scmp.eq.s32.totalorder %s27, 1
    %p217 = por %p215, %p216
    %p219 = scmp.ne.s32.totalorder %s204, %s218
    %p220 = scmp.eq.s32.totalorder %s27, 0
    %p221 = por %p219, %p220
    %s223 = sadd.s32 %s222, 1
    %p226 = scmp.eq.s32.totalorder %s21, 1
    %p227 = scmp.ne.s32.totalorder %s222, %s224
    %p228 = scmp.eq.s32.totalorder %s21, 0
    %p229 = por %p227, %p228
    %p230 = scmp.ne.s32.totalorder %s222, %s224
    %p231 = scmp.eq.s32.totalorder %s26, 1
    %p232 = por %p230, %p231
    %p233 = scmp.ne.s32.totalorder %s224, %s225
    %p234 = scmp.eq.s32.totalorder %s26, 0
    %p235 = por %p233, %p234
    %p236 = scmp.ne.s32.totalorder %s224, %s225
    %p237 = scmp.eq.s32.totalorder %s27, 1
    %p238 = por %p236, %p237
    %p240 = scmp.ne.s32.totalorder %s225, %s239
    %p241 = scmp.eq.s32.totalorder %s27, 0
    %p242 = por %p240, %p241
    %s244 = sadd.s32 %s243, 1
    %p247 = scmp.eq.s32.totalorder %s21, 1
    %p248 = scmp.ne.s32.totalorder %s243, %s245
    %p249 = scmp.eq.s32.totalorder %s21, 0
    %p250 = por %p248, %p249
    %p251 = scmp.ne.s32.totalorder %s243, %s245
    %p252 = scmp.eq.s32.totalorder %s26, 1
    %p253 = por %p251, %p252
    %p254 = scmp.ne.s32.totalorder %s245, %s246
    %p255 = scmp.eq.s32.totalorder %s26, 0
    %p256 = por %p254, %p255
    %p257 = scmp.ne.s32.totalorder %s245, %s246
    %p258 = scmp.eq.s32.totalorder %s27, 1
    %p259 = por %p257, %p258
    %p261 = scmp.ne.s32.totalorder %s246, %s260
    %p262 = scmp.eq.s32.totalorder %s27, 0
    %p263 = por %p261, %p262
    %s265 = sadd.s32 %s264, 1
    %p268 = scmp.eq.s32.totalorder %s21, 1
    %p269 = scmp.ne.s32.totalorder %s264, %s266
    %p270 = scmp.eq.s32.totalorder %s21, 0
    %p271 = por %p269, %p270
    %p272 = scmp.ne.s32.totalorder %s264, %s266
    %p273 = scmp.eq.s32.totalorder %s26, 1
    %p274 = por %p272, %p273
    %p275 = scmp.ne.s32.totalorder %s266, %s267
    %p276 = scmp.eq.s32.totalorder %s26, 0
    %p277 = por %p275, %p276
    %p278 = scmp.ne.s32.totalorder %s266, %s267
    %p279 = scmp.eq.s32.totalorder %s27, 1
    %p280 = por %p278, %p279
    %p282 = scmp.ne.s32.totalorder %s267, %s281
    %p283 = scmp.eq.s32.totalorder %s27, 0
    %p284 = por %p282, %p283
    %s286 = sadd.s32 %s285, 1
    %p289 = scmp.eq.s32.totalorder %s21, 1
    %p290 = scmp.ne.s32.totalorder %s285, %s287
    %p291 = scmp.eq.s32.totalorder %s21, 0
    %p292 = por %p290, %p291
    %p293 = scmp.ne.s32.totalorder %s285, %s287
    %p294 = scmp.eq.s32.totalorder %s26, 1
    %p295 = por %p293, %p294
    %p296 = scmp.ne.s32.totalorder %s287, %s288
    %p297 = scmp.eq.s32.totalorder %s26, 0
    %p298 = por %p296, %p297
    %p299 = scmp.ne.s32.totalorder %s287, %s288
    %p300 = scmp.eq.s32.totalorder %s27, 1
    %p301 = por %p299, %p300
    %p303 = scmp.ne.s32.totalorder %s288, %s302
    %p304 = scmp.eq.s32.totalorder %s27, 0
    %p305 = por %p303, %p304
    %s306 = ssub.s32 %s21, %s28
    %p307 = scmp.eq.s32.totalorder %s306, 0
    %s309 = sadd.s32 %s308, 1
    %s310 = scalar_select %p307, %s308, %s309
    %p313 = pneg %p307
    %p314 = scmp.eq.s32.totalorder %s21, 1
    %p315 = por %p313, %p314
    %p316 = scmp.ne.s32.totalorder %s308, %s311
    %p317 = scmp.eq.s32.totalorder %s21, 0
    %p318 = por %p316, %p317
    %p319 = scmp.ne.s32.totalorder %s308, %s311
    %p320 = scmp.eq.s32.totalorder %s26, 1
    %p321 = por %p319, %p320
    %p322 = scmp.ne.s32.totalorder %s311, %s312
    %p323 = scmp.eq.s32.totalorder %s26, 0
    %p324 = por %p322, %p323
    %p325 = scmp.ne.s32.totalorder %s311, %s312
    %p326 = scmp.eq.s32.totalorder %s27, 1
    %p327 = por %p325, %p326
    %p329 = scmp.ne.s32.totalorder %s312, %s328
    %p330 = scmp.eq.s32.totalorder %s27, 0
    %p331 = por %p329, %p330
    %s332 = ssub.s32 %s21, %s28
    %p333 = scmp.eq.s32.totalorder %s332, 0
    %s335 = sadd.s32 %s334, 1
    %s336 = scalar_select %p333, %s334, %s335
    %p339 = pneg %p333
    %p340 = scmp.eq.s32.totalorder %s21, 1
    %p341 = por %p339, %p340
    %p342 = scmp.ne.s32.totalorder %s334, %s337
    %p343 = scmp.eq.s32.totalorder %s21, 0
    %p344 = por %p342, %p343
    %p345 = scmp.ne.s32.totalorder %s334, %s337
    %p346 = scmp.eq.s32.totalorder %s26, 1
    %p347 = por %p345, %p346
    %p348 = scmp.ne.s32.totalorder %s337, %s338
    %p349 = scmp.eq.s32.totalorder %s26, 0
    %p350 = por %p348, %p349
    %p351 = scmp.ne.s32.totalorder %s337, %s338
    %p352 = scmp.eq.s32.totalorder %s27, 1
    %p353 = por %p351, %p352
    %p355 = scmp.ne.s32.totalorder %s338, %s354
    %p356 = scmp.eq.s32.totalorder %s27, 0
    %p357 = por %p355, %p356
    %s358 = ssub.s32 %s21, %s28
    %p359 = scmp.eq.s32.totalorder %s358, 0
    %s361 = sadd.s32 %s360, 1
    %s362 = scalar_select %p359, %s360, %s361
    %p365 = pneg %p359
    %p366 = scmp.eq.s32.totalorder %s21, 1
    %p367 = por %p365, %p366
    %p368 = scmp.ne.s32.totalorder %s360, %s363
    %p369 = scmp.eq.s32.totalorder %s21, 0
    %p370 = por %p368, %p369
    %p371 = scmp.ne.s32.totalorder %s360, %s363
    %p372 = scmp.eq.s32.totalorder %s26, 1
    %p373 = por %p371, %p372
    %p374 = scmp.ne.s32.totalorder %s363, %s364
    %p375 = scmp.eq.s32.totalorder %s26, 0
    %p376 = por %p374, %p375
    %p377 = scmp.ne.s32.totalorder %s363, %s364
    %p378 = scmp.eq.s32.totalorder %s27, 1
    %p379 = por %p377, %p378
    %p381 = scmp.ne.s32.totalorder %s364, %s380
    %p382 = scmp.eq.s32.totalorder %s27, 0
    %p383 = por %p381, %p382
    %p384 = scmp.le.s32.totalorder 1, %s21
    %p385 = scmp.lt.s32.totalorder %s21, 3
    %p386 = pnand %p384, %p385
    %p387 = pneg %p386
    // Predicated region
    $region9: #{gca_forward.8} parent=5 // pred_check
      _
    $region10: #{gca_forward.8} parent=5 // pred_check_branch
      %389 = sbr.rel (%p386) target = $region12
    $region11: #{gca_forward.8} parent=5 // pred_region
      %s390 = ssub.s32 %s21, 1
      // Predicated region
      $region13: #{gca_forward.8} parent=11 // pred_check
        %p391 = pneg %p172
      $region14: #{gca_forward.8} parent=11 // pred_check_branch
        %393 = sbr.rel (%p391) target = $region16
      $region15: #{gca_forward.8} parent=11 // pred_region
        _
      $region16: #{gca_forward.8} parent=11 // pred_fallthru
        _
      // Predicated region
      $region17: #{gca_forward.8} parent=11 // pred_check
        %p394 = pneg %p193
      $region18: #{gca_forward.8} parent=11 // pred_check_branch
        %396 = sbr.rel (%p394) target = $region20
      $region19: #{gca_forward.8} parent=11 // pred_region
        _
      $region20: #{gca_forward.8} parent=11 // pred_fallthru
        _
      // Predicated region
      $region21: #{gca_forward.8} parent=11 // pred_check
        %p397 = pneg %p214
      $region22: #{gca_forward.8} parent=11 // pred_check_branch
        %399 = sbr.rel (%p397) target = $region24
      $region23: #{gca_forward.8} parent=11 // pred_region
        _
      $region24: #{gca_forward.8} parent=11 // pred_fallthru
        _
      // Predicated region
      $region25: #{gca_forward.8} parent=11 // pred_check
        %p400 = pneg %p235
      $region26: #{gca_forward.8} parent=11 // pred_check_branch
        %402 = sbr.rel (%p400) target = $region28
      $region27: #{gca_forward.8} parent=11 // pred_region
        _
      $region28: #{gca_forward.8} parent=11 // pred_fallthru
        _
      // Predicated region
      $region29: #{gca_forward.8} parent=11 // pred_check
        %p403 = pneg %p256
      $region30: #{gca_forward.8} parent=11 // pred_check_branch
        %405 = sbr.rel (%p403) target = $region32
      $region31: #{gca_forward.8} parent=11 // pred_region
        _
      $region32: #{gca_forward.8} parent=11 // pred_fallthru
        _
      // Predicated region
      $region33: #{gca_forward.8} parent=11 // pred_check
        %p406 = pneg %p277
      $region34: #{gca_forward.8} parent=11 // pred_check_branch
        %408 = sbr.rel (%p406) target = $region36
      $region35: #{gca_forward.8} parent=11 // pred_region
        _
      $region36: #{gca_forward.8} parent=11 // pred_fallthru
        _
      // Predicated region
      $region37: #{gca_forward.8} parent=11 // pred_check
        %p409 = pneg %p298
      $region38: #{gca_forward.8} parent=11 // pred_check_branch
        %411 = sbr.rel (%p409) target = $region40
      $region39: #{gca_forward.8} parent=11 // pred_region
        _
      $region40: #{gca_forward.8} parent=11 // pred_fallthru
        _
    $region12: #{gca_forward.8} parent=5 // pred_fallthru
      _
    %p412 = scmp.lt.s32.totalorder %s21, 2
    // Predicated region
    $region41: #{gca_forward.8} parent=5 // pred_check
      %p413 = pneg %p412
    $region42: #{gca_forward.8} parent=5 // pred_check_branch
      %415 = sbr.rel (%p413) target = $region44
    $region43: #{gca_forward.8} parent=5 // pred_region
      // Predicated region
      $region45: #{gca_forward.8} parent=43 // pred_check
        %p416 = pneg %p41
      $region46: #{gca_forward.8} parent=43 // pred_check_branch
        %418 = sbr.rel (%p416) target = $region48
      $region47: #{gca_forward.8} parent=43 // pred_region
        %p419 = scmp.lt.s32.totalorder %s21, 1
        %s420 = scalar_select %p419, %s21, 1
        %s421 = smul.addr %s420, 2
        %s422 = smul.addr %s421, 8
        %s423 = scalar_lea.vmem %s0, %s422
      $region48: #{gca_forward.8} parent=43 // pred_fallthru
        _
      // Predicated region
      $region49: #{gca_forward.8} parent=43 // pred_check
        %p424 = pneg %p67
      $region50: #{gca_forward.8} parent=43 // pred_check_branch
        %426 = sbr.rel (%p424) target = $region52
      $region51: #{gca_forward.8} parent=43 // pred_region
        %p427 = scmp.lt.s32.totalorder %s21, 1
        %s428 = scalar_select %p427, %s21, 1
        %s429 = smul.addr %s428, 18
        %s430 = smul.addr %s429, 4
        %s431 = scalar_lea.vmem %s1, %s430
      $region52: #{gca_forward.8} parent=43 // pred_fallthru
        _
      // Predicated region
      $region53: #{gca_forward.8} parent=43 // pred_check
        %p432 = pneg %p93
      $region54: #{gca_forward.8} parent=43 // pred_check_branch
        %434 = sbr.rel (%p432) target = $region56
      $region55: #{gca_forward.8} parent=43 // pred_region
        %p435 = scmp.lt.s32.totalorder %s21, 1
        %s436 = scalar_select %p435, %s21, 1
        %s437 = smul.addr %s436, 6
        %s438 = smul.addr %s437, 4
        %s439 = scalar_lea.vmem %s2, %s438
      $region56: #{gca_forward.8} parent=43 // pred_fallthru
        _
      // Predicated region
      $region57: #{gca_forward.8} parent=43 // pred_check
        %p440 = pneg %p119
      $region58: #{gca_forward.8} parent=43 // pred_check_branch
        %442 = sbr.rel (%p440) target = $region60
      $region59: #{gca_forward.8} parent=43 // pred_region
        %p443 = scmp.lt.s32.totalorder %s21, 1
        %s444 = scalar_select %p443, %s21, 1
        %s445 = scalar_lea.vmem %s3, %s444
      $region60: #{gca_forward.8} parent=43 // pred_fallthru
        _
      // Predicated region
      $region61: #{gca_forward.8} parent=43 // pred_check
        %p446 = pneg %p145
      $region62: #{gca_forward.8} parent=43 // pred_check_branch
        %448 = sbr.rel (%p446) target = $region64
      $region63: #{gca_forward.8} parent=43 // pred_region
        %p449 = scmp.lt.s32.totalorder %s21, 1
        %s450 = scalar_select %p449, %s21, 1
        %s451 = scalar_lea.vmem %s4, %s450
      $region64: #{gca_forward.8} parent=43 // pred_fallthru
        _
    $region44: #{gca_forward.8} parent=5 // pred_fallthru
      _
    %p452 = scmp.le.s32.totalorder 1, %s21
    %p453 = scmp.lt.s32.totalorder %s21, 3
    %p454 = pnand %p452, %p453
    %p455 = pneg %p454
    // Predicated region
    $region65: #{gca_forward.8} parent=5 // pred_check
      _
    $region66: #{gca_forward.8} parent=5 // pred_check_branch
      %457 = sbr.rel (%p454) target = $region68
    $region67: #{gca_forward.8} parent=5 // pred_region
      %s458 = ssub.s32 %s21, 1
      %p459 = scmp.lt.s32.totalorder %s26, 1
      %s460 = scalar_select %p459, %s26, 1
      %s461 = smul.addr %s460, 2
      %s462 = smul.addr %s461, 8
      %s463 = scalar_lea.vmem %s0, %s462
      %p464 = pneg %p47
      %p465 = pneg %p44
      %p466 = scmp.lt.s32.totalorder %s26, 1
      %s467 = scalar_select %p466, %s26, 1
      %s468 = smul.addr %s467, 18
      %s469 = smul.addr %s468, 4
      %s470 = scalar_lea.vmem %s1, %s469
      %p471 = pneg %p73
      %p472 = pneg %p70
      %p473 = scmp.lt.s32.totalorder %s26, 1
      %s474 = scalar_select %p473, %s26, 1
      %s475 = smul.addr %s474, 6
      %s476 = smul.addr %s475, 4
      %s477 = scalar_lea.vmem %s2, %s476
      %p478 = pneg %p99
      %p479 = pneg %p96
      %p480 = scmp.lt.s32.totalorder %s26, 1
      %s481 = scalar_select %p480, %s26, 1
      %s482 = scalar_lea.vmem %s3, %s481
      %p483 = pneg %p125
      %p484 = pneg %p122
      %p485 = scmp.lt.s32.totalorder %s26, 1
      %s486 = scalar_select %p485, %s26, 1
      %s487 = scalar_lea.vmem %s4, %s486
      %p488 = pneg %p151
      %p489 = pneg %p148
      %p490 = pneg %p172
      %p491 = pneg %p169
      %p492 = pneg %p193
      %p493 = pneg %p190
      %p494 = pneg %p214
      %p495 = pneg %p211
      %p496 = pneg %p235
      %p497 = pneg %p232
      %p498 = pneg %p256
      %p499 = pneg %p253
      %p500 = pneg %p277
      %p501 = pneg %p274
      %p502 = pneg %p298
      %p503 = pneg %p295
      %p504 = pneg %p324
      %p505 = pneg %p321
      %p506 = scmp.lt.s32.totalorder %s26, 1
      %s507 = scalar_select %p506, %s26, 1
      %s508 = smul.addr %s507, 2
      %s509 = smul.addr %s508, 4
      %s510 = scalar_lea.vmem %s12, %s509
      %p511 = pneg %p350
      %p512 = pneg %p347
      %p513 = scmp.lt.s32.totalorder %s26, 1
      %s514 = scalar_select %p513, %s26, 1
      %s515 = smul.addr %s514, 2
      %s516 = smul.addr %s515, 4
      %s517 = scalar_lea.vmem %s13, %s516
      %p518 = pneg %p376
      %p519 = pneg %p373
      %p520 = scmp.lt.s32.totalorder %s26, 1
      %s521 = scalar_select %p520, %s26, 1
      %s522 = smul.addr %s521, 2
      %s523 = scalar_lea.vmem %s14, %s522
      %p524 = scmp.lt.s32.totalorder %s26, 1
      %s525 = scalar_select %p524, %s26, 1
      %s526 = smul.addr %s525, 2
      %s527 = smul.addr %s526, 8
      %s528 = scalar_lea.vmem %s0, %s527
      %p529 = scmp.lt.s32.totalorder %s26, 1
      %s530 = scalar_select %p529, %s26, 1
      %s531 = smul.addr %s530, 18
      %s532 = smul.addr %s531, 4
      %s533 = scalar_lea.vmem %s1, %s532
      %p534 = scmp.lt.s32.totalorder %s26, 1
      %s535 = scalar_select %p534, %s26, 1
      %s536 = smul.addr %s535, 6
      %s537 = smul.addr %s536, 4
      %s538 = scalar_lea.vmem %s2, %s537
      %p539 = scmp.lt.s32.totalorder %s26, 1
      %s540 = scalar_select %p539, %s26, 1
      %s541 = scalar_lea.vmem %s3, %s540
      %p542 = scmp.lt.s32.totalorder %s26, 1
      %s543 = scalar_select %p542, %s26, 1
      %s544 = scalar_lea.vmem %s4, %s543
      %p545 = scmp.lt.s32.totalorder %s26, 1
      %s546 = scalar_select %p545, %s26, 1
      %s547 = smul.addr %s546, 2
      %s548 = smul.addr %s547, 4
      %s549 = scalar_lea.vmem %s12, %s548
      %p550 = scmp.lt.s32.totalorder %s26, 1
      %s551 = scalar_select %p550, %s26, 1
      %s552 = smul.addr %s551, 2
      %s553 = smul.addr %s552, 4
      %s554 = scalar_lea.vmem %s13, %s553
      %p555 = scmp.lt.s32.totalorder %s26, 1
      %s556 = scalar_select %p555, %s26, 1
      %s557 = smul.addr %s556, 2
      %s558 = scalar_lea.vmem %s14, %s557
      %v560 = vld [vmem:[%s528] sm:$0xff]
      %v561 = vld [vmem:[%s528 + $0x8] sm:$0xff]
      %v562 = vld [vmem:[%s533] sm:$0xf]
      %v563 = vld [vmem:[%s533 + $0x4] sm:$0xf]
      %v564 = vld [vmem:[%s533 + $0x8] sm:$0xf]
      %v565 = vld [vmem:[%s533 + $0xc] sm:$0xf]
      %v566 = vld [vmem:[%s533 + $0x10] sm:$0xf]
      %v567 = vld [vmem:[%s533 + $0x14] sm:$0xf]
      %v568 = vld [vmem:[%s533 + $0x18] sm:$0xf]
      %v569 = vld [vmem:[%s533 + $0x1c] sm:$0xf]
      %v570 = vld [vmem:[%s533 + $0x20] sm:$0xf]
      %v571 = vld [vmem:[%s533 + $0x24] sm:$0xf]
      %v572 = vld [vmem:[%s533 + $0x28] sm:$0xf]
      %v573 = vld [vmem:[%s533 + $0x2c] sm:$0xf]
      %v574 = vld [vmem:[%s533 + $0x30] sm:$0xf]
      %v575 = vld [vmem:[%s533 + $0x34] sm:$0xf]
      %v576 = vld [vmem:[%s533 + $0x38] sm:$0xf]
      %v577 = vld [vmem:[%s533 + $0x3c] sm:$0xf]
      %v578 = vld [vmem:[%s533 + $0x40] sm:$0xf]
      %v579 = vld [vmem:[%s533 + $0x44] sm:$0xf]
      %v580 = vunpack.c.l.bf16 %v562
      %v581 = vunpack.c.l.bf16 %v563
      %v582 = vunpack.c.l.bf16 %v564
      %v583 = vunpack.c.l.bf16 %v565
      %v584 = vunpack.c.l.bf16 %v566
      %v585 = vunpack.c.l.bf16 %v567
      %v586 = vunpack.c.l.bf16 %v568
      %v587 = vunpack.c.l.bf16 %v569
      %v588 = vunpack.c.l.bf16 %v570
      %v589 = vunpack.c.l.bf16 %v571
      %v590 = vunpack.c.l.bf16 %v572
      %v591 = vunpack.c.l.bf16 %v573
      %v592 = vunpack.c.l.bf16 %v574
      %v593 = vunpack.c.l.bf16 %v575
      %v594 = vunpack.c.l.bf16 %v576
      %v595 = vunpack.c.l.bf16 %v577
      %v596 = vunpack.c.l.bf16 %v578
      %v597 = vunpack.c.l.bf16 %v579
      %v598 = vld [vmem:[%s541] sm:$0x1]
      %v599 = vld [vmem:[%s544] sm:$0x1]
      %v601 = vlaneseq
      %v602 = vshrl.u32 %v601, 7
      %v603 = vsub.s32 0, %v602
      %v604 = vrot.slane %v598, %v603
      %v606 = vmul.f32 %v560, %v604
      %v607 = vmul.f32 %v561, %v604
      %v609 = vlaneseq
      %v610 = vshrl.u32 %v609, 7
      %v611 = vsub.s32 0, %v610
      %v612 = vrot.slane %v599, %v611
      %v614 = vadd.f32 %v606, %v612
      %v615 = vadd.f32 %v607, %v612
      %v616 = vmax.f32 %v614, 0.0
      %v617 = vmax.f32 %v615, 0.0
      %v618 = vpack.c.bf16 %v617, %v616
      %v619 = vld [vmem:[%s7] sm:$0xf]
      %v620 = vld [vmem:[%s7 + $0x4] sm:$0xf]
      %v621 = vld [vmem:[%s7 + $0x8] sm:$0xf]
      %v622 = vld [vmem:[%s7 + $0xc] sm:$0xf]
      %v623 = vld [vmem:[%s9] sm:$0x1]
      %v625 = vlaneseq
      %v626 = vshrl.u32 %v625, 7
      %v627 = vsub.s32 0, %v626
      %v628 = vrot.slane %v623, %v627
      %v634 = vunpack.c.l.b16 %v619
      %v635 = vunpack.c.l.b16 %v620
      %v636 = vunpack.c.l.b16 %v621
      %v637 = vunpack.c.l.b16 %v622
      %v638 = vpack.c.b16 %v635, %v634
      %v639 = vpack.c.b16 %v637, %v636
      %vm642 = vcmask 261120
      %v644 = vsel %vm642, %v618, 0
      %646 = vmatprep.subr.bf16.mxu0 0
      %647 = vmatpush1.bf16.msra.mxu0 %v638
      %648 = vmatprep.subr.bf16.mxu0 0
      %649 = vmatpush1.bf16.msra.mxu0 %v639
      %650 = vmatprep.subr.bf16.mxu0 0
      %651 = vmatpush1.bf16.msra.mxu0 0
      %652 = vmatprep.subr.bf16.mxu0 0
      %653 = vmatpush1.bf16.msra.mxu0 0
      %654 = vmatprep.subr.bf16.mxu0 0
      %655 = vmatpush1.bf16.msra.mxu0 0
      %656 = vmatprep.subr.bf16.mxu0 0
      %657 = vmatpush1.bf16.msra.mxu0 0
      %658 = vmatprep.subr.bf16.mxu0 0
      %659 = vmatpush1.bf16.msra.mxu0 0
      %660 = vmatprep.subr.bf16.mxu0 0
      %661 = vmatpush1.bf16.msra.mxu0 0
      %662 = vmatprep.subr.bf16.mxu0 0
      %663 = vmatpush1.bf16.msra.mxu0 0
      %664 = vmatprep.subr.bf16.mxu0 0
      %665 = vmatpush1.bf16.msra.mxu0 0
      %666 = vmatprep.subr.bf16.mxu0 0
      %667 = vmatpush1.bf16.msra.mxu0 0
      %668 = vmatprep.subr.bf16.mxu0 0
      %669 = vmatpush1.bf16.msra.mxu0 0
      %670 = vmatprep.subr.bf16.mxu0 0
      %671 = vmatpush1.bf16.msra.mxu0 0
      %672 = vmatprep.subr.bf16.mxu0 0
      %673 = vmatpush1.bf16.msra.mxu0 0
      %674 = vmatprep.subr.bf16.mxu0 0
      %675 = vmatpush1.bf16.msra.mxu0 0
      %676 = vmatprep.subr.bf16.mxu0 0
      %677 = vmatpush1.bf16.msra.mxu0 0
      %678 = vmatprep.mubr.bf16.mxu0 0
      %679 = vmatmul.mubr.bf16.gmra.mrb[0].mxu0 %v644
      %v680 = vpop.f32.mrb[0].mxu0
      %v681 = vadd.f32 %v628, %v680
      %v682 = vpop.f32.mrb[0].mxu0
      %v683 = vpop.f32.mrb[0].mxu0
      %v684 = vadd.f32 %v628, %v683
      %v685 = vpop.f32.mrb[0].mxu0
      %686 = vdwg.mxu0
      %687 = vrot.lane.b32.xlu0 %v604, 96
      %v688 = vpop.permute.xlu0 %687
      %v690 = vmul.f32 %v580, %v688
      %v691 = vmul.f32 %v581, %v688
      %v692 = vmul.f32 %v582, %v688
      %v693 = vmul.f32 %v583, %v688
      %v694 = vmul.f32 %v584, %v688
      %v695 = vmul.f32 %v585, %v688
      %v696 = vmul.f32 %v586, %v688
      %v697 = vmul.f32 %v587, %v688
      %v698 = vmul.f32 %v588, %v688
      %v699 = vmul.f32 %v589, %v688
      %v700 = vmul.f32 %v590, %v688
      %v701 = vmul.f32 %v591, %v688
      %v702 = vmul.f32 %v592, %v688
      %v703 = vmul.f32 %v593, %v688
      %v704 = vmul.f32 %v594, %v688
      %v705 = vmul.f32 %v595, %v688
      %v706 = vmul.f32 %v596, %v688
      %v707 = vmul.f32 %v597, %v688
      %708 = vrot.lane.b32.xlu0 %v612, 96
      %v709 = vpop.permute.xlu0 %708
      %v711 = vadd.f32 %v690, %v709
      %v712 = vadd.f32 %v691, %v709
      %v713 = vadd.f32 %v692, %v709
      %v714 = vadd.f32 %v693, %v709
      %v715 = vadd.f32 %v694, %v709
      %v716 = vadd.f32 %v695, %v709
      %v717 = vadd.f32 %v696, %v709
      %v718 = vadd.f32 %v697, %v709
      %v719 = vadd.f32 %v698, %v709
      %v720 = vadd.f32 %v699, %v709
      %v721 = vadd.f32 %v700, %v709
      %v722 = vadd.f32 %v701, %v709
      %v723 = vadd.f32 %v702, %v709
      %v724 = vadd.f32 %v703, %v709
      %v725 = vadd.f32 %v704, %v709
      %v726 = vadd.f32 %v705, %v709
      %v727 = vadd.f32 %v706, %v709
      %v728 = vadd.f32 %v707, %v709
      %v729 = vmax.f32 %v711, 0.0
      %v730 = vmax.f32 %v712, 0.0
      %v731 = vmax.f32 %v713, 0.0
      %v732 = vmax.f32 %v714, 0.0
      %v733 = vmax.f32 %v715, 0.0
      %v734 = vmax.f32 %v716, 0.0
      %v735 = vmax.f32 %v717, 0.0
      %v736 = vmax.f32 %v718, 0.0
      %v737 = vmax.f32 %v719, 0.0
      %v738 = vmax.f32 %v720, 0.0
      %v739 = vmax.f32 %v721, 0.0
      %v740 = vmax.f32 %v722, 0.0
      %v741 = vmax.f32 %v723, 0.0
      %v742 = vmax.f32 %v724, 0.0
      %v743 = vmax.f32 %v725, 0.0
      %v744 = vmax.f32 %v726, 0.0
      %v745 = vmax.f32 %v727, 0.0
      %v746 = vmax.f32 %v728, 0.0
      %v747 = vpack.c.bf16 %v730, %v729
      %v748 = vpack.c.bf16 %v732, %v731
      %v749 = vpack.c.bf16 %v734, %v733
      %v750 = vpack.c.bf16 %v736, %v735
      %v751 = vpack.c.bf16 %v738, %v737
      %v752 = vpack.c.bf16 %v740, %v739
      %v753 = vpack.c.bf16 %v742, %v741
      %v754 = vpack.c.bf16 %v744, %v743
      %v755 = vpack.c.bf16 %v746, %v745
      %v756 = vld [vmem:[%s8] sm:$0xf]
      %v757 = vld [vmem:[%s8 + $0x4] sm:$0xf]
      %v758 = vld [vmem:[%s8 + $0x8] sm:$0xf]
      %v759 = vld [vmem:[%s8 + $0xc] sm:$0xf]
      %v764 = vunpack.c.l.b16 %v756
      %v765 = vunpack.c.l.b16 %v757
      %v766 = vunpack.c.l.b16 %v758
      %v767 = vunpack.c.l.b16 %v759
      %v768 = vpack.c.b16 %v765, %v764
      %v769 = vpack.c.b16 %v767, %v766
      %v773 = vsel %vm642, %v747, 0
      %v776 = vsel %vm642, %v748, 0
      %v779 = vsel %vm642, %v749, 0
      %v782 = vsel %vm642, %v750, 0
      %v785 = vsel %vm642, %v751, 0
      %v788 = vsel %vm642, %v752, 0
      %v791 = vsel %vm642, %v753, 0
      %v794 = vsel %vm642, %v754, 0
      %v797 = vsel %vm642, %v755, 0
      %799 = vmatprep.subr.bf16.mxu0 0
      %800 = vmatpush1.bf16.msra.mxu0 %v768
      %801 = vmatprep.subr.bf16.mxu0 0
      %802 = vmatpush1.bf16.msra.mxu0 %v769
      %803 = vmatprep.subr.bf16.mxu0 0
      %804 = vmatpush1.bf16.msra.mxu0 0
      %805 = vmatprep.subr.bf16.mxu0 0
      %806 = vmatpush1.bf16.msra.mxu0 0
      %807 = vmatprep.subr.bf16.mxu0 0
      %808 = vmatpush1.bf16.msra.mxu0 0
      %809 = vmatprep.subr.bf16.mxu0 0
      %810 = vmatpush1.bf16.msra.mxu0 0
      %811 = vmatprep.subr.bf16.mxu0 0
      %812 = vmatpush1.bf16.msra.mxu0 0
      %813 = vmatprep.subr.bf16.mxu0 0
      %814 = vmatpush1.bf16.msra.mxu0 0
      %815 = vmatprep.subr.bf16.mxu0 0
      %816 = vmatpush1.bf16.msra.mxu0 0
      %817 = vmatprep.subr.bf16.mxu0 0
      %818 = vmatpush1.bf16.msra.mxu0 0
      %819 = vmatprep.subr.bf16.mxu0 0
      %820 = vmatpush1.bf16.msra.mxu0 0
      %821 = vmatprep.subr.bf16.mxu0 0
      %822 = vmatpush1.bf16.msra.mxu0 0
      %823 = vmatprep.subr.bf16.mxu0 0
      %824 = vmatpush1.bf16.msra.mxu0 0
      %825 = vmatprep.subr.bf16.mxu0 0
      %826 = vmatpush1.bf16.msra.mxu0 0
      %827 = vmatprep.subr.bf16.mxu0 0
      %828 = vmatpush1.bf16.msra.mxu0 0
      %829 = vmatprep.subr.bf16.mxu0 0
      %830 = vmatpush1.bf16.msra.mxu0 0
      %831 = vmatprep.mubr.bf16.mxu0 0
      %832 = vmatmul.mubr.bf16.gmra.mrb[0].mxu0 %v773
      %v833 = vpop.f32.mrb[0].mxu0
      %v834 = vadd.f32 0.0, %v833
      %v835 = vpop.f32.mrb[0].mxu0
      %v836 = vpop.f32.mrb[0].mxu0
      %v837 = vadd.f32 0.0, %v836
      %v838 = vpop.f32.mrb[0].mxu0
      %839 = vmatprep.mubr.bf16.mxu0 0
      %840 = vmatmul.mubr.bf16.gmra.mrb[0].mxu0 %v776
      %v841 = vpop.f32.mrb[0].mxu0
      %v842 = vadd.f32 0.0, %v841
      %v843 = vpop.f32.mrb[0].mxu0
      %v844 = vpop.f32.mrb[0].mxu0
      %v845 = vadd.f32 0.0, %v844
      %v846 = vpop.f32.mrb[0].mxu0
      %847 = vmatprep.mubr.bf16.mxu0 0
      %848 = vmatmul.mubr.bf16.gmra.mrb[0].mxu0 %v779
      %v849 = vpop.f32.mrb[0].mxu0
      %v850 = vadd.f32 0.0, %v849
      %v851 = vpop.f32.mrb[0].mxu0
      %v852 = vpop.f32.mrb[0].mxu0
      %v853 = vadd.f32 0.0, %v852
      %v854 = vpop.f32.mrb[0].mxu0
      %855 = vmatprep.mubr.bf16.mxu0 0
      %856 = vmatmul.mubr.bf16.gmra.mrb[0].mxu0 %v782
      %v857 = vpop.f32.mrb[0].mxu0
      %v858 = vadd.f32 0.0, %v857
      %v859 = vpop.f32.mrb[0].mxu0
      %v860 = vpop.f32.mrb[0].mxu0
      %v861 = vadd.f32 0.0, %v860
      %v862 = vpop.f32.mrb[0].mxu0
      %863 = vmatprep.mubr.bf16.mxu0 0
      %864 = vmatmul.mubr.bf16.gmra.mrb[0].mxu0 %v785
      %v865 = vpop.f32.mrb[0].mxu0
      %v866 = vadd.f32 0.0, %v865
      %v867 = vpop.f32.mrb[0].mxu0
      %v868 = vpop.f32.mrb[0].mxu0
      %v869 = vadd.f32 0.0, %v868
      %v870 = vpop.f32.mrb[0].mxu0
      %871 = vmatprep.mubr.bf16.mxu0 0
      %872 = vmatmul.mubr.bf16.gmra.mrb[0].mxu0 %v788
      %v873 = vpop.f32.mrb[0].mxu0
      %v874 = vadd.f32 0.0, %v873
      %v875 = vpop.f32.mrb[0].mxu0
      %v876 = vpop.f32.mrb[0].mxu0
      %v877 = vadd.f32 0.0, %v876
      %v878 = vpop.f32.mrb[0].mxu0
      %879 = vmatprep.mubr.bf16.mxu0 0
      %880 = vmatmul.mubr.bf16.gmra.mrb[0].mxu0 %v791
      %v881 = vpop.f32.mrb[0].mxu0
      %v882 = vadd.f32 0.0, %v881
      %v883 = vpop.f32.mrb[0].mxu0
      %v884 = vpop.f32.mrb[0].mxu0
      %v885 = vadd.f32 0.0, %v884
      %v886 = vpop.f32.mrb[0].mxu0
      %887 = vmatprep.mubr.bf16.mxu0 0
      %888 = vmatmul.mubr.bf16.gmra.mrb[0].mxu0 %v794
      %v889 = vpop.f32.mrb[0].mxu0
      %v890 = vadd.f32 0.0, %v889
      %v891 = vpop.f32.mrb[0].mxu0
      %v892 = vpop.f32.mrb[0].mxu0
      %v893 = vadd.f32 0.0, %v892
      %v894 = vpop.f32.mrb[0].mxu0
      %895 = vmatprep.mubr.bf16.mxu0 0
      %896 = vmatmul.mubr.bf16.gmra.mrb[0].mxu0 %v797
      %v897 = vpop.f32.mrb[0].mxu0
      %v898 = vadd.f32 0.0, %v897
      %v899 = vpop.f32.mrb[0].mxu0
      %v900 = vpop.f32.mrb[0].mxu0
      %v901 = vadd.f32 0.0, %v900
      %v902 = vpop.f32.mrb[0].mxu0
      %903 = vdwg.mxu0
      %v904 = vmax.f32 %v834, %v842
      %v905 = vmax.f32 %v837, %v845
      %v906 = vmax.f32 %v904, %v850
      %v907 = vmax.f32 %v905, %v853
      %v908 = vmax.f32 %v906, %v858
      %v909 = vmax.f32 %v907, %v861
      %v910 = vmax.f32 %v908, %v866
      %v911 = vmax.f32 %v909, %v869
      %v912 = vmax.f32 %v910, %v874
      %v913 = vmax.f32 %v911, %v877
      %v914 = vmax.f32 %v912, %v882
      %v915 = vmax.f32 %v913, %v885
      %v916 = vmax.f32 %v914, %v890
      %v917 = vmax.f32 %v915, %v893
      %v918 = vmax.f32 %v916, %v898
      %v919 = vmax.f32 %v917, %v901
      %v920 = vadd.f32 %v681, %v918
      %v921 = vadd.f32 %v684, %v919
      %v922 = vpack.c.bf16 %v921, %v920
      %v924 = vunpack.c.l.b16 %v922
      %v925 = vunpack.c.h.b16 %v922
      %v926 = vpack.c.b16 %v924, %v924
      %v927 = vpack.c.b16 %v925, %v925
      %vm930 = vcmask 519168
      %931 = vst.msk [vmem:[%s549] sm:$0xf] %vm930, %v926
      %932 = vst.msk [vmem:[%s549 + $0x4] sm:$0xf] %vm930, %v927
      %vm933 = vcmask 523264
      %v934 = vsel %vm933, %v920, 0.0
      %v935 = vsel %vm933, %v921, 0.0
      %v936 = vadd.f32 %v934, %v935
      %v937 = vrot.slane %v936, 4
      %v938 = vadd.f32 %v936, %v937
      %v939 = vrot.slane %v938, 2
      %v940 = vadd.f32 %v938, %v939
      %v941 = vrot.slane %v940, 1
      %v942 = vadd.f32 %v940, %v941
      %v943 = vmul.f32 %v942, 0.0625
      %v944 = vmul.f32 %v920, %v920
      %v945 = vmul.f32 %v921, %v921
      %v946 = vsel %vm933, %v944, 0.0
      %v947 = vsel %vm933, %v945, 0.0
      %v948 = vadd.f32 %v946, %v947
      %v949 = vrot.slane %v948, 4
      %v950 = vadd.f32 %v948, %v949
      %v951 = vrot.slane %v950, 2
      %v952 = vadd.f32 %v950, %v951
      %v953 = vrot.slane %v952, 1
      %v954 = vadd.f32 %v952, %v953
      %v955 = vmul.f32 %v954, 0.0625
      %v956 = vmul.f32 %v943, %v943
      %v957 = vsub.f32 %v955, %v956
      %v958 = vld [vmem:[%s538] sm:$0xf]
      %v959 = vld [vmem:[%s538 + $0x4] sm:$0xf]
      %v960 = vld [vmem:[%s538 + $0x8] sm:$0xf]
      %v961 = vld [vmem:[%s538 + $0xc] sm:$0xf]
      %v962 = vld [vmem:[%s538 + $0x10] sm:$0xf]
      %v963 = vld [vmem:[%s538 + $0x14] sm:$0xf]
      %v964 = vunpack.c.l.bf16 %v958
      %v965 = vunpack.c.l.bf16 %v959
      %v966 = vunpack.c.l.bf16 %v960
      %v967 = vunpack.c.l.bf16 %v961
      %v968 = vunpack.c.l.bf16 %v962
      %v969 = vunpack.c.l.bf16 %v963
      %v970 = vld [vmem:[%s5] sm:$0x1]
      %v972 = vlaneseq
      %v973 = vshrl.u32 %v972, 7
      %v974 = vsub.s32 0, %v973
      %v975 = vrot.slane %v970, %v974
      %v977 = vmul.f32 %v964, %v975
      %v978 = vmul.f32 %v965, %v975
      %v979 = vmul.f32 %v966, %v975
      %v980 = vmul.f32 %v967, %v975
      %v981 = vmul.f32 %v968, %v975
      %v982 = vmul.f32 %v969, %v975
      %v983 = vld [vmem:[%s6] sm:$0x1]
      %v985 = vlaneseq
      %v986 = vshrl.u32 %v985, 7
      %v987 = vsub.s32 0, %v986
      %v988 = vrot.slane %v983, %v987
      %v990 = vadd.f32 %v977, %v988
      %v991 = vadd.f32 %v978, %v988
      %v992 = vadd.f32 %v979, %v988
      %v993 = vadd.f32 %v980, %v988
      %v994 = vadd.f32 %v981, %v988
      %v995 = vadd.f32 %v982, %v988
      %v996 = vmax.f32 %v990, 0.0
      %v997 = vmax.f32 %v991, 0.0
      %v998 = vmax.f32 %v992, 0.0
      %v999 = vmax.f32 %v993, 0.0
      %v1000 = vmax.f32 %v994, 0.0
      %v1001 = vmax.f32 %v995, 0.0
      %1004 = vrot.lane.b32.xlu0 %v998, 64
      %v1005 = vpop.permute.xlu0 %1004
      %1006 = vrot.lane.b32.xlu0 %v999, 64
      %v1007 = vpop.permute.xlu0 %1006
      %v1010 = vsel %vm933, %v996, %v1005
      %v1011 = vsel %vm933, %v997, %v1007
      %v1012 = vpack.c.bf16 %v1011, %v1010
      %v1013 = vpack.c.bf16 %v1001, %v1000
      %v1014 = vld [vmem:[%s10] sm:$0xf]
      %v1015 = vld [vmem:[%s10 + $0x4] sm:$0xf]
      %v1016 = vld [vmem:[%s10 + $0x8] sm:$0xf]
      %v1017 = vld [vmem:[%s10 + $0xc] sm:$0xf]
      %v1018 = vld [vmem:[%s10 + $0x10] sm:$0xf]
      %v1019 = vld [vmem:[%s10 + $0x14] sm:$0xf]
      %v1020 = vld [vmem:[%s10 + $0x18] sm:$0xf]
      %v1021 = vld [vmem:[%s10 + $0x1c] sm:$0xf]
      %v1022 = vld [vmem:[%s10 + $0x20] sm:$0xf]
      %v1023 = vld [vmem:[%s10 + $0x24] sm:$0xf]
      %v1024 = vld [vmem:[%s10 + $0x28] sm:$0xf]
      %v1025 = vld [vmem:[%s10 + $0x2c] sm:$0xf]
      %v1026 = vld [vmem:[%s10 + $0x30] sm:$0xf]
      %v1027 = vld [vmem:[%s10 + $0x34] sm:$0xf]
      %v1028 = vld [vmem:[%s10 + $0x38] sm:$0xf]
      %v1029 = vld [vmem:[%s10 + $0x3c] sm:$0xf]
      %v1030 = vld [vmem:[%s10 + $0x40] sm:$0xf]
      %v1031 = vld [vmem:[%s10 + $0x44] sm:$0xf]
      %v1032 = vld [vmem:[%s10 + $0x48] sm:$0xf]
      %v1033 = vld [vmem:[%s10 + $0x4c] sm:$0xf]
      %v1034 = vld [vmem:[%s10 + $0x50] sm:$0xf]
      %v1035 = vld [vmem:[%s10 + $0x54] sm:$0xf]
      %v1036 = vld [vmem:[%s10 + $0x58] sm:$0xf]
      %v1037 = vld [vmem:[%s10 + $0x5c] sm:$0xf]
      %v1038 = vld [vmem:[%s11] sm:$0x1]
      %v1040 = vlaneseq
      %v1041 = vshrl.u32 %v1040, 7
      %v1042 = vsub.s32 0, %v1041
      %v1043 = vrot.slane %v1038, %v1042
      %v1069 = vunpack.c.l.b16 %v1014
      %v1070 = vunpack.c.l.b16 %v1015
      %v1071 = vunpack.c.l.b16 %v1016
      %v1072 = vunpack.c.l.b16 %v1017
      %v1073 = vunpack.c.l.b16 %v1018
      %v1074 = vunpack.c.l.b16 %v1019
      %v1075 = vunpack.c.l.b16 %v1020
      %v1076 = vunpack.c.l.b16 %v1021
      %v1077 = vunpack.c.l.b16 %v1022
      %v1078 = vunpack.c.l.b16 %v1023
      %v1079 = vunpack.c.l.b16 %v1024
      %v1080 = vunpack.c.l.b16 %v1025
      %v1081 = vunpack.c.l.b16 %v1026
      %v1082 = vunpack.c.l.b16 %v1027
      %v1083 = vunpack.c.l.b16 %v1028
      %v1084 = vunpack.c.l.b16 %v1029
      %v1085 = vunpack.c.l.b16 %v1030
      %v1086 = vunpack.c.l.b16 %v1031
      %v1087 = vunpack.c.l.b16 %v1032
      %v1088 = vunpack.c.l.b16 %v1033
      %v1089 = vunpack.c.l.b16 %v1034
      %v1090 = vunpack.c.l.b16 %v1035
      %v1091 = vunpack.c.l.b16 %v1036
      %v1092 = vunpack.c.l.b16 %v1037
      %v1093 = vpack.c.b16 %v1070, %v1069
      %v1094 = vpack.c.b16 %v1072, %v1071
      %v1095 = vpack.c.b16 %v1074, %v1073
      %v1096 = vpack.c.b16 %v1076, %v1075
      %v1097 = vpack.c.b16 %v1078, %v1077
      %v1098 = vpack.c.b16 %v1080, %v1079
      %v1099 = vpack.c.b16 %v1082, %v1081
      %v1100 = vpack.c.b16 %v1084, %v1083
      %v1101 = vpack.c.b16 %v1086, %v1085
      %v1102 = vpack.c.b16 %v1088, %v1087
      %v1103 = vpack.c.b16 %v1090, %v1089
      %v1104 = vpack.c.b16 %v1092, %v1091
      %v1118 = vsel %vm933, %v1013, 0
      %1120 = vmatprep.subr.bf16.mxu0 0
      %1121 = vmatpush1.bf16.msra.mxu0 %v1093
      %1122 = vmatprep.subr.bf16.mxu0 0
      %1123 = vmatpush1.bf16.msra.mxu0 %v1094
      %1124 = vmatprep.subr.bf16.mxu0 0
      %1125 = vmatpush1.bf16.msra.mxu0 %v1095
      %1126 = vmatprep.subr.bf16.mxu0 0
      %1127 = vmatpush1.bf16.msra.mxu0 %v1096
      %1128 = vmatprep.subr.bf16.mxu0 0
      %1129 = vmatpush1.bf16.msra.mxu0 %v1097
      %1130 = vmatprep.subr.bf16.mxu0 0
      %1131 = vmatpush1.bf16.msra.mxu0 %v1098
      %1132 = vmatprep.subr.bf16.mxu0 0
      %1133 = vmatpush1.bf16.msra.mxu0 %v1099
      %1134 = vmatprep.subr.bf16.mxu0 0
      %1135 = vmatpush1.bf16.msra.mxu0 %v1100
      %1136 = vmatprep.subr.bf16.mxu0 0
      %1137 = vmatpush1.bf16.msra.mxu0 %v1101
      %1138 = vmatprep.subr.bf16.mxu0 0
      %1139 = vmatpush1.bf16.msra.mxu0 %v1102
      %1140 = vmatprep.subr.bf16.mxu0 0
      %1141 = vmatpush1.bf16.msra.mxu0 %v1103
      %1142 = vmatprep.subr.bf16.mxu0 0
      %1143 = vmatpush1.bf16.msra.mxu0 %v1104
      %1144 = vmatprep.subr.bf16.mxu0 0
      %1145 = vmatpush1.bf16.msra.mxu0 0
      %1146 = vmatprep.subr.bf16.mxu0 0
      %1147 = vmatpush1.bf16.msra.mxu0 0
      %1148 = vmatprep.subr.bf16.mxu0 0
      %1149 = vmatpush1.bf16.msra.mxu0 0
      %1150 = vmatprep.subr.bf16.mxu0 0
      %1151 = vmatpush1.bf16.msra.mxu0 0
      %1152 = vmatprep.mubr.bf16.mxu0 %v1118
      %1153 = vmatmul.mubr.bf16.gmra.mrb[0].mxu0 %v1012
      %v1154 = vpop.f32.mrb[0].mxu0
      %v1155 = vadd.f32 %v1043, %v1154
      %v1156 = vpop.f32.mrb[0].mxu0
      %v1157 = vpop.f32.mrb[0].mxu0
      %v1158 = vadd.f32 %v1043, %v1157
      %v1159 = vpop.f32.mrb[0].mxu0
      %1160 = vdwg.mxu0
      %v1161 = vpack.c.bf16 %v1158, %v1155
      %v1163 = vunpack.c.l.b16 %v1161
      %v1164 = vunpack.c.h.b16 %v1161
      %v1165 = vpack.c.b16 %v1163, %v1163
      %v1166 = vpack.c.b16 %v1164, %v1164
      %1169 = vst.msk [vmem:[%s554] sm:$0xf] %vm930, %v1165
      %1170 = vst.msk [vmem:[%s554 + $0x4] sm:$0xf] %vm930, %v1166
      %v1171 = vsel %vm933, %v1155, 0.0
      %v1172 = vsel %vm933, %v1158, 0.0
      %v1173 = vadd.f32 %v1171, %v1172
      %v1174 = vrot.slane %v1173, 4
      %v1175 = vadd.f32 %v1173, %v1174
      %v1176 = vrot.slane %v1175, 2
      %v1177 = vadd.f32 %v1175, %v1176
      %v1178 = vrot.slane %v1177, 1
      %v1179 = vadd.f32 %v1177, %v1178
      %v1180 = vmul.f32 %v1155, %v1155
      %v1181 = vmul.f32 %v1158, %v1158
      %v1182 = vsel %vm933, %v1180, 0.0
      %v1183 = vsel %vm933, %v1181, 0.0
      %v1184 = vadd.f32 %v1182, %v1183
      %v1185 = vrot.slane %v1184, 4
      %v1186 = vadd.f32 %v1184, %v1185
      %v1187 = vrot.slane %v1186, 2
      %v1188 = vadd.f32 %v1186, %v1187
      %v1189 = vrot.slane %v1188, 1
      %v1190 = vadd.f32 %v1188, %v1189
      %1192 = vrot.lane.b32.xlu0 %v957, 64
      %v1193 = vpop.permute.xlu0 %1192
      %1196 = vrot.lane.b32.xlu0 %v1190, 64
      %v1197 = vpop.permute.xlu0 %1196
      %v1199 = vsel %vm933, %v943, %v1193
      %v1200 = vsel %vm933, %v1179, %v1197
      %v1203 = vcombine.low %v1199, %v1200
      %v1205 = vunpack.c.l.s4 1966171168
      %v1206 = vunpack.c.0.s8 %v1205
      %v1207 = vlaneseq
      %v1208 = vshrl.u32 %v1207, 7
      %v1209 = vsub.s32 %v1206, %v1208
      %v1210 = vrot.slane %v1203, %v1209
      %v1212 = vunpack.c.l.s4 1966171168
      %v1213 = vunpack.c.0.s8 %v1212
      %v1214 = vlaneseq
      %v1215 = vshrl.u32 %v1214, 7
      %v1216 = vsub.s32 %v1213, %v1215
      %v1217 = vrot.slane %v1210, %v1216
      %v1219 = vlaneseq
      %vm1220 = vcmp.ge.s32.totalorder %v1219, 0
      %vm1221 = vcmp.lt.s32.totalorder %v1219, 256
      %vm1222 = vmand %vm1220, %vm1221
      %1223 = vst.msk [vmem:[%s558] sm:$0x3] %vm1222, %v1217
      %p1224 = scmp.lt.s32.totalorder %s26, 1
      %s1225 = scalar_select %p1224, %s26, 1
      %s1226 = smul.addr %s1225, 2
      %s1227 = smul.addr %s1226, 4
      %s1228 = scalar_lea.vmem %s12, %s1227
      %p1229 = scmp.lt.s32.totalorder %s26, 1
      %s1230 = scalar_select %p1229, %s26, 1
      %s1231 = smul.addr %s1230, 2
      %s1232 = smul.addr %s1231, 4
      %s1233 = scalar_lea.vmem %s13, %s1232
      %p1234 = scmp.lt.s32.totalorder %s26, 1
      %s1235 = scalar_select %p1234, %s26, 1
      %s1236 = smul.addr %s1235, 2
      %s1237 = scalar_lea.vmem %s14, %s1236
      // Predicated region
      $region69: #{gca_forward.8} parent=67 // pred_check
        %p1238 = pneg %p321
      $region70: #{gca_forward.8} parent=67 // pred_check_branch
        %1240 = sbr.rel (%p1238) target = $region72
      $region71: #{gca_forward.8} parent=67 // pred_region
        _
      $region72: #{gca_forward.8} parent=67 // pred_fallthru
        _
      // Predicated region
      $region73: #{gca_forward.8} parent=67 // pred_check
        %p1241 = pneg %p347
      $region74: #{gca_forward.8} parent=67 // pred_check_branch
        %1243 = sbr.rel (%p1241) target = $region76
      $region75: #{gca_forward.8} parent=67 // pred_region
        _
      $region76: #{gca_forward.8} parent=67 // pred_fallthru
        _
      // Predicated region
      $region77: #{gca_forward.8} parent=67 // pred_check
        %p1244 = pneg %p373
      $region78: #{gca_forward.8} parent=67 // pred_check_branch
        %1246 = sbr.rel (%p1244) target = $region80
      $region79: #{gca_forward.8} parent=67 // pred_region
        _
      $region80: #{gca_forward.8} parent=67 // pred_fallthru
        _
    $region68: #{gca_forward.8} parent=5 // pred_fallthru
      _
    %p1247 = scmp.le.s32.totalorder 2, %s21
    // Predicated region
    $region81: #{gca_forward.8} parent=5 // pred_check
      %p1248 = pneg %p1247
    $region82: #{gca_forward.8} parent=5 // pred_check_branch
      %1250 = sbr.rel (%p1248) target = $region84
    $region83: #{gca_forward.8} parent=5 // pred_region
      %s1251 = ssub.s32 %s21, 2
      // Predicated region
      $region85: #{gca_forward.8} parent=83 // pred_check
        %p1252 = pneg %p327
      $region86: #{gca_forward.8} parent=83 // pred_check_branch
        %1254 = sbr.rel (%p1252) target = $region88
      $region87: #{gca_forward.8} parent=83 // pred_region
        %p1255 = scmp.lt.s32.totalorder %s27, 1
        %s1256 = scalar_select %p1255, %s27, 1
        %s1257 = smul.addr %s1256, 2
        %s1258 = smul.addr %s1257, 4
        %s1259 = scalar_lea.vmem %s12, %s1258
      $region88: #{gca_forward.8} parent=83 // pred_fallthru
        _
      // Predicated region
      $region89: #{gca_forward.8} parent=83 // pred_check
        %p1260 = pneg %p353
      $region90: #{gca_forward.8} parent=83 // pred_check_branch
        %1262 = sbr.rel (%p1260) target = $region92
      $region91: #{gca_forward.8} parent=83 // pred_region
        %p1263 = scmp.lt.s32.totalorder %s27, 1
        %s1264 = scalar_select %p1263, %s27, 1
        %s1265 = smul.addr %s1264, 2
        %s1266 = smul.addr %s1265, 4
        %s1267 = scalar_lea.vmem %s13, %s1266
      $region92: #{gca_forward.8} parent=83 // pred_fallthru
        _
      // Predicated region
      $region93: #{gca_forward.8} parent=83 // pred_check
        %p1268 = pneg %p379
      $region94: #{gca_forward.8} parent=83 // pred_check_branch
        %1270 = sbr.rel (%p1268) target = $region96
      $region95: #{gca_forward.8} parent=83 // pred_region
        %p1271 = scmp.lt.s32.totalorder %s27, 1
        %s1272 = scalar_select %p1271, %s27, 1
        %s1273 = smul.addr %s1272, 2
        %s1274 = scalar_lea.vmem %s14, %s1273
      $region96: #{gca_forward.8} parent=83 // pred_fallthru
        _
    $region84: #{gca_forward.8} parent=5 // pred_fallthru
      _
  $region6: #{gca_forward.8} parent=0 // loop_footer
    %s25 = sadd.s32 1, %s21
  $region7: #{gca_forward.8} parent=0 // loop_footer_branch
    %20 = sbr.rel target = $region3
  $region8: #{gca_forward.8} parent=0 // loop_exit
    _

// kernel: gca_forward.12
$region0: #{gca_forward.12}
  #allocation0 [shape = 'u32[]', space=smem, size = 0x4, offset = 0x4, fixed_abs, tag = 'smem constant byte address 0x4 - core index']
  #allocation1 [shape = 'u32[144,128]{1,0:T(1,128)}', space=vmem, size = 0x12000, scoped, tag = 'internal scratch']
  %s0 = inlined_call_operand.vmem [shape: bf16[2,16,32], index: 0, kind: input, shape index: {}]
  %s1 = inlined_call_operand.vmem [shape: bf16[2,16,32], index: 1, kind: input, shape index: {}]
  %s2 = inlined_call_operand.vmem [shape: f32[1,8], index: 2, kind: input, shape index: {}]
  %s3 = inlined_call_operand.vmem [shape: f32[1,8], index: 3, kind: input, shape index: {}]
  %s4 = inlined_call_operand.vmem [shape: bf16[32,8], index: 4, kind: input, shape index: {}]
  %s5 = inlined_call_operand.vmem [shape: f32[1,8], index: 5, kind: input, shape index: {}]
  %s6 = inlined_call_operand.vmem [shape: bf16[8,32], index: 6, kind: input, shape index: {}]
  %s7 = inlined_call_operand.vmem [shape: f32[1,32], index: 7, kind: input, shape index: {}]
  %s8 = inlined_call_operand.vmem [shape: bf16[2,16,32], index: 8, kind: output, shape index: {0}]
  %s9 = inlined_call_operand.vmem [shape: f32[2,1,64], index: 9, kind: output, shape index: {1}]
  %10 = xla_tuple %s8, %s9
  %s11 = sld [smem:[#allocation0]]
  $region73: #{gca_forward.12} parent=0
    _
  %s13 = ssub.s32 1, %s11
  %s14 = scalar_select 0, %s13, %s11
  loop: start=0, step=1, limit=4
  $region2: #{gca_forward.12} parent=0 // loop_pre_header
    _
  $region3: #{gca_forward.12} parent=0 // loop_header
    %s16 = sphi 0, %s20
    %p17 = scmp.ge.s32.totalorder %s16, 4
    %s26 = sphi 0, %s28
    %s29 = sphi 0, %s26
    %s30 = sphi 0, %s29
    %s46 = sphi 0, %s30
    %s52 = sphi 0, %s54
    %s55 = sphi 0, %s52
    %s56 = sphi 0, %s55
    %s72 = sphi 0, %s56
    %s76 = sphi 0, %s76
    %s78 = sphi 0, %s76
    %s79 = sphi 0, %s78
    %s93 = sphi 0, %s79
    %s97 = sphi 0, %s97
    %s99 = sphi 0, %s97
    %s100 = sphi 0, %s99
    %s114 = sphi 0, %s100
    %s118 = sphi 0, %s118
    %s120 = sphi 0, %s118
    %s121 = sphi 0, %s120
    %s135 = sphi 0, %s121
    %s139 = sphi 0, %s139
    %s141 = sphi 0, %s139
    %s142 = sphi 0, %s141
    %s156 = sphi 0, %s142
    %s160 = sphi 0, %s160
    %s162 = sphi 0, %s160
    %s163 = sphi 0, %s162
    %s177 = sphi 0, %s163
    %s181 = sphi 0, %s181
    %s183 = sphi 0, %s181
    %s184 = sphi 0, %s183
    %s198 = sphi 0, %s184
    %s204 = sphi 0, %s206
    %s207 = sphi 0, %s204
    %s208 = sphi 0, %s207
    %s224 = sphi 0, %s208
    %s230 = sphi 0, %s232
    %s233 = sphi 0, %s230
    %s234 = sphi 0, %s233
    %s250 = sphi 0, %s234
  $region4: #{gca_forward.12} parent=0 // loop_header_branch
    %19 = sbr.rel (%p17) target = $region8
  $region5: #{gca_forward.12} parent=0 // loop_body
    %s21 = ssub.s32 %s16, 1
    %s22 = ssub.s32 %s16, 2
    %s23 = sadd.s32 %s16, 1
    %s24 = ssub.s32 %s16, %s23
    %p25 = scmp.eq.s32.totalorder %s24, 0
    %s27 = sadd.s32 %s26, 1
    %s28 = scalar_select %p25, %s26, %s27
    %p31 = pneg %p25
    %p32 = scmp.eq.s32.totalorder %s16, 1
    %p33 = por %p31, %p32
    %p34 = scmp.ne.s32.totalorder %s26, %s29
    %p35 = scmp.eq.s32.totalorder %s16, 0
    %p36 = por %p34, %p35
    %p37 = scmp.ne.s32.totalorder %s26, %s29
    %p38 = scmp.eq.s32.totalorder %s21, 1
    %p39 = por %p37, %p38
    %p40 = scmp.ne.s32.totalorder %s29, %s30
    %p41 = scmp.eq.s32.totalorder %s21, 0
    %p42 = por %p40, %p41
    %p43 = scmp.ne.s32.totalorder %s29, %s30
    %p44 = scmp.eq.s32.totalorder %s22, 1
    %p45 = por %p43, %p44
    %p47 = scmp.ne.s32.totalorder %s30, %s46
    %p48 = scmp.eq.s32.totalorder %s22, 0
    %p49 = por %p47, %p48
    %s50 = ssub.s32 %s16, %s23
    %p51 = scmp.eq.s32.totalorder %s50, 0
    %s53 = sadd.s32 %s52, 1
    %s54 = scalar_select %p51, %s52, %s53
    %p57 = pneg %p51
    %p58 = scmp.eq.s32.totalorder %s16, 1
    %p59 = por %p57, %p58
    %p60 = scmp.ne.s32.totalorder %s52, %s55
    %p61 = scmp.eq.s32.totalorder %s16, 0
    %p62 = por %p60, %p61
    %p63 = scmp.ne.s32.totalorder %s52, %s55
    %p64 = scmp.eq.s32.totalorder %s21, 1
    %p65 = por %p63, %p64
    %p66 = scmp.ne.s32.totalorder %s55, %s56
    %p67 = scmp.eq.s32.totalorder %s21, 0
    %p68 = por %p66, %p67
    %p69 = scmp.ne.s32.totalorder %s55, %s56
    %p70 = scmp.eq.s32.totalorder %s22, 1
    %p71 = por %p69, %p70
    %p73 = scmp.ne.s32.totalorder %s56, %s72
    %p74 = scmp.eq.s32.totalorder %s22, 0
    %p75 = por %p73, %p74
    %s77 = sadd.s32 %s76, 1
    %p80 = scmp.eq.s32.totalorder %s16, 1
    %p81 = scmp.ne.s32.totalorder %s76, %s78
    %p82 = scmp.eq.s32.totalorder %s16, 0
    %p83 = por %p81, %p82
    %p84 = scmp.ne.s32.totalorder %s76, %s78
    %p85 = scmp.eq.s32.totalorder %s21, 1
    %p86 = por %p84, %p85
    %p87 = scmp.ne.s32.totalorder %s78, %s79
    %p88 = scmp.eq.s32.totalorder %s21, 0
    %p89 = por %p87, %p88
    %p90 = scmp.ne.s32.totalorder %s78, %s79
    %p91 = scmp.eq.s32.totalorder %s22, 1
    %p92 = por %p90, %p91
    %p94 = scmp.ne.s32.totalorder %s79, %s93
    %p95 = scmp.eq.s32.totalorder %s22, 0
    %p96 = por %p94, %p95
    %s98 = sadd.s32 %s97, 1
    %p101 = scmp.eq.s32.totalorder %s16, 1
    %p102 = scmp.ne.s32.totalorder %s97, %s99
    %p103 = scmp.eq.s32.totalorder %s16, 0
    %p104 = por %p102, %p103
    %p105 = scmp.ne.s32.totalorder %s97, %s99
    %p106 = scmp.eq.s32.totalorder %s21, 1
    %p107 = por %p105, %p106
    %p108 = scmp.ne.s32.totalorder %s99, %s100
    %p109 = scmp.eq.s32.totalorder %s21, 0
    %p110 = por %p108, %p109
    %p111 = scmp.ne.s32.totalorder %s99, %s100
    %p112 = scmp.eq.s32.totalorder %s22, 1
    %p113 = por %p111, %p112
    %p115 = scmp.ne.s32.totalorder %s100, %s114
    %p116 = scmp.eq.s32.totalorder %s22, 0
    %p117 = por %p115, %p116
    %s119 = sadd.s32 %s118, 1
    %p122 = scmp.eq.s32.totalorder %s16, 1
    %p123 = scmp.ne.s32.totalorder %s118, %s120
    %p124 = scmp.eq.s32.totalorder %s16, 0
    %p125 = por %p123, %p124
    %p126 = scmp.ne.s32.totalorder %s118, %s120
    %p127 = scmp.eq.s32.totalorder %s21, 1
    %p128 = por %p126, %p127
    %p129 = scmp.ne.s32.totalorder %s120, %s121
    %p130 = scmp.eq.s32.totalorder %s21, 0
    %p131 = por %p129, %p130
    %p132 = scmp.ne.s32.totalorder %s120, %s121
    %p133 = scmp.eq.s32.totalorder %s22, 1
    %p134 = por %p132, %p133
    %p136 = scmp.ne.s32.totalorder %s121, %s135
    %p137 = scmp.eq.s32.totalorder %s22, 0
    %p138 = por %p136, %p137
    %s140 = sadd.s32 %s139, 1
    %p143 = scmp.eq.s32.totalorder %s16, 1
    %p144 = scmp.ne.s32.totalorder %s139, %s141
    %p145 = scmp.eq.s32.totalorder %s16, 0
    %p146 = por %p144, %p145
    %p147 = scmp.ne.s32.totalorder %s139, %s141
    %p148 = scmp.eq.s32.totalorder %s21, 1
    %p149 = por %p147, %p148
    %p150 = scmp.ne.s32.totalorder %s141, %s142
    %p151 = scmp.eq.s32.totalorder %s21, 0
    %p152 = por %p150, %p151
    %p153 = scmp.ne.s32.totalorder %s141, %s142
    %p154 = scmp.eq.s32.totalorder %s22, 1
    %p155 = por %p153, %p154
    %p157 = scmp.ne.s32.totalorder %s142, %s156
    %p158 = scmp.eq.s32.totalorder %s22, 0
    %p159 = por %p157, %p158
    %s161 = sadd.s32 %s160, 1
    %p164 = scmp.eq.s32.totalorder %s16, 1
    %p165 = scmp.ne.s32.totalorder %s160, %s162
    %p166 = scmp.eq.s32.totalorder %s16, 0
    %p167 = por %p165, %p166
    %p168 = scmp.ne.s32.totalorder %s160, %s162
    %p169 = scmp.eq.s32.totalorder %s21, 1
    %p170 = por %p168, %p169
    %p171 = scmp.ne.s32.totalorder %s162, %s163
    %p172 = scmp.eq.s32.totalorder %s21, 0
    %p173 = por %p171, %p172
    %p174 = scmp.ne.s32.totalorder %s162, %s163
    %p175 = scmp.eq.s32.totalorder %s22, 1
    %p176 = por %p174, %p175
    %p178 = scmp.ne.s32.totalorder %s163, %s177
    %p179 = scmp.eq.s32.totalorder %s22, 0
    %p180 = por %p178, %p179
    %s182 = sadd.s32 %s181, 1
    %p185 = scmp.eq.s32.totalorder %s16, 1
    %p186 = scmp.ne.s32.totalorder %s181, %s183
    %p187 = scmp.eq.s32.totalorder %s16, 0
    %p188 = por %p186, %p187
    %p189 = scmp.ne.s32.totalorder %s181, %s183
    %p190 = scmp.eq.s32.totalorder %s21, 1
    %p191 = por %p189, %p190
    %p192 = scmp.ne.s32.totalorder %s183, %s184
    %p193 = scmp.eq.s32.totalorder %s21, 0
    %p194 = por %p192, %p193
    %p195 = scmp.ne.s32.totalorder %s183, %s184
    %p196 = scmp.eq.s32.totalorder %s22, 1
    %p197 = por %p195, %p196
    %p199 = scmp.ne.s32.totalorder %s184, %s198
    %p200 = scmp.eq.s32.totalorder %s22, 0
    %p201 = por %p199, %p200
    %s202 = ssub.s32 %s16, %s23
    %p203 = scmp.eq.s32.totalorder %s202, 0
    %s205 = sadd.s32 %s204, 1
    %s206 = scalar_select %p203, %s204, %s205
    %p209 = pneg %p203
    %p210 = scmp.eq.s32.totalorder %s16, 1
    %p211 = por %p209, %p210
    %p212 = scmp.ne.s32.totalorder %s204, %s207
    %p213 = scmp.eq.s32.totalorder %s16, 0
    %p214 = por %p212, %p213
    %p215 = scmp.ne.s32.totalorder %s204, %s207
    %p216 = scmp.eq.s32.totalorder %s21, 1
    %p217 = por %p215, %p216
    %p218 = scmp.ne.s32.totalorder %s207, %s208
    %p219 = scmp.eq.s32.totalorder %s21, 0
    %p220 = por %p218, %p219
    %p221 = scmp.ne.s32.totalorder %s207, %s208
    %p222 = scmp.eq.s32.totalorder %s22, 1
    %p223 = por %p221, %p222
    %p225 = scmp.ne.s32.totalorder %s208, %s224
    %p226 = scmp.eq.s32.totalorder %s22, 0
    %p227 = por %p225, %p226
    %s228 = ssub.s32 %s16, %s23
    %p229 = scmp.eq.s32.totalorder %s228, 0
    %s231 = sadd.s32 %s230, 1
    %s232 = scalar_select %p229, %s230, %s231
    %p235 = pneg %p229
    %p236 = scmp.eq.s32.totalorder %s16, 1
    %p237 = por %p235, %p236
    %p238 = scmp.ne.s32.totalorder %s230, %s233
    %p239 = scmp.eq.s32.totalorder %s16, 0
    %p240 = por %p238, %p239
    %p241 = scmp.ne.s32.totalorder %s230, %s233
    %p242 = scmp.eq.s32.totalorder %s21, 1
    %p243 = por %p241, %p242
    %p244 = scmp.ne.s32.totalorder %s233, %s234
    %p245 = scmp.eq.s32.totalorder %s21, 0
    %p246 = por %p244, %p245
    %p247 = scmp.ne.s32.totalorder %s233, %s234
    %p248 = scmp.eq.s32.totalorder %s22, 1
    %p249 = por %p247, %p248
    %p251 = scmp.ne.s32.totalorder %s234, %s250
    %p252 = scmp.eq.s32.totalorder %s22, 0
    %p253 = por %p251, %p252
    %p254 = scmp.le.s32.totalorder 1, %s16
    %p255 = scmp.lt.s32.totalorder %s16, 3
    %p256 = pnand %p254, %p255
    %p257 = pneg %p256
    // Predicated region
    $region9: #{gca_forward.12} parent=5 // pred_check
      _
    $region10: #{gca_forward.12} parent=5 // pred_check_branch
      %259 = sbr.rel (%p256) target = $region12
    $region11: #{gca_forward.12} parent=5 // pred_region
      %s260 = ssub.s32 %s16, 1
      // Predicated region
      $region13: #{gca_forward.12} parent=11 // pred_check
        %p261 = pneg %p89
      $region14: #{gca_forward.12} parent=11 // pred_check_branch
        %263 = sbr.rel (%p261) target = $region16
      $region15: #{gca_forward.12} parent=11 // pred_region
        _
      $region16: #{gca_forward.12} parent=11 // pred_fallthru
        _
      // Predicated region
      $region17: #{gca_forward.12} parent=11 // pred_check
        %p264 = pneg %p110
      $region18: #{gca_forward.12} parent=11 // pred_check_branch
        %266 = sbr.rel (%p264) target = $region20
      $region19: #{gca_forward.12} parent=11 // pred_region
        _
      $region20: #{gca_forward.12} parent=11 // pred_fallthru
        _
      // Predicated region
      $region21: #{gca_forward.12} parent=11 // pred_check
        %p267 = pneg %p131
      $region22: #{gca_forward.12} parent=11 // pred_check_branch
        %269 = sbr.rel (%p267) target = $region24
      $region23: #{gca_forward.12} parent=11 // pred_region
        _
      $region24: #{gca_forward.12} parent=11 // pred_fallthru
        _
      // Predicated region
      $region25: #{gca_forward.12} parent=11 // pred_check
        %p270 = pneg %p152
      $region26: #{gca_forward.12} parent=11 // pred_check_branch
        %272 = sbr.rel (%p270) target = $region28
      $region27: #{gca_forward.12} parent=11 // pred_region
        _
      $region28: #{gca_forward.12} parent=11 // pred_fallthru
        _
      // Predicated region
      $region29: #{gca_forward.12} parent=11 // pred_check
        %p273 = pneg %p173
      $region30: #{gca_forward.12} parent=11 // pred_check_branch
        %275 = sbr.rel (%p273) target = $region32
      $region31: #{gca_forward.12} parent=11 // pred_region
        _
      $region32: #{gca_forward.12} parent=11 // pred_fallthru
        _
      // Predicated region
      $region33: #{gca_forward.12} parent=11 // pred_check
        %p276 = pneg %p194
      $region34: #{gca_forward.12} parent=11 // pred_check_branch
        %278 = sbr.rel (%p276) target = $region36
      $region35: #{gca_forward.12} parent=11 // pred_region
        _
      $region36: #{gca_forward.12} parent=11 // pred_fallthru
        _
    $region12: #{gca_forward.12} parent=5 // pred_fallthru
      _
    %p279 = scmp.lt.s32.totalorder %s16, 2
    // Predicated region
    $region37: #{gca_forward.12} parent=5 // pred_check
      %p280 = pneg %p279
    $region38: #{gca_forward.12} parent=5 // pred_check_branch
      %282 = sbr.rel (%p280) target = $region40
    $region39: #{gca_forward.12} parent=5 // pred_region
      // Predicated region
      $region41: #{gca_forward.12} parent=39 // pred_check
        %p283 = pneg %p36
      $region42: #{gca_forward.12} parent=39 // pred_check_branch
        %285 = sbr.rel (%p283) target = $region44
      $region43: #{gca_forward.12} parent=39 // pred_region
        %p286 = scmp.lt.s32.totalorder %s16, 1
        %s287 = scalar_select %p286, %s16, 1
        %s288 = smul.addr %s287, 2
        %s289 = smul.addr %s288, 4
        %s290 = scalar_lea.vmem %s0, %s289
      $region44: #{gca_forward.12} parent=39 // pred_fallthru
        _
      // Predicated region
      $region45: #{gca_forward.12} parent=39 // pred_check
        %p291 = pneg %p62
      $region46: #{gca_forward.12} parent=39 // pred_check_branch
        %293 = sbr.rel (%p291) target = $region48
      $region47: #{gca_forward.12} parent=39 // pred_region
        %p294 = scmp.lt.s32.totalorder %s16, 1
        %s295 = scalar_select %p294, %s16, 1
        %s296 = smul.addr %s295, 2
        %s297 = smul.addr %s296, 4
        %s298 = scalar_lea.vmem %s1, %s297
      $region48: #{gca_forward.12} parent=39 // pred_fallthru
        _
    $region40: #{gca_forward.12} parent=5 // pred_fallthru
      _
    %p299 = scmp.le.s32.totalorder 1, %s16
    %p300 = scmp.lt.s32.totalorder %s16, 3
    %p301 = pnand %p299, %p300
    %p302 = pneg %p301
    // Predicated region
    $region49: #{gca_forward.12} parent=5 // pred_check
      _
    $region50: #{gca_forward.12} parent=5 // pred_check_branch
      %304 = sbr.rel (%p301) target = $region52
    $region51: #{gca_forward.12} parent=5 // pred_region
      %s305 = ssub.s32 %s16, 1
      %p306 = scmp.lt.s32.totalorder %s21, 1
      %s307 = scalar_select %p306, %s21, 1
      %s308 = smul.addr %s307, 2
      %s309 = smul.addr %s308, 4
      %s310 = scalar_lea.vmem %s0, %s309
      %p311 = pneg %p42
      %p312 = pneg %p39
      %p313 = scmp.lt.s32.totalorder %s21, 1
      %s314 = scalar_select %p313, %s21, 1
      %s315 = smul.addr %s314, 2
      %s316 = smul.addr %s315, 4
      %s317 = scalar_lea.vmem %s1, %s316
      %p318 = pneg %p68
      %p319 = pneg %p65
      %p320 = pneg %p89
      %p321 = pneg %p86
      %p322 = pneg %p110
      %p323 = pneg %p107
      %p324 = pneg %p131
      %p325 = pneg %p128
      %p326 = pneg %p152
      %p327 = pneg %p149
      %p328 = pneg %p173
      %p329 = pneg %p170
      %p330 = pneg %p194
      %p331 = pneg %p191
      %p332 = pneg %p220
      %p333 = pneg %p217
      %p334 = scmp.lt.s32.totalorder %s21, 1
      %s335 = scalar_select %p334, %s21, 1
      %s336 = smul.addr %s335, 2
      %s337 = smul.addr %s336, 4
      %s338 = scalar_lea.vmem %s8, %s337
      %p339 = pneg %p246
      %p340 = pneg %p243
      %p341 = scmp.lt.s32.totalorder %s21, 1
      %s342 = scalar_select %p341, %s21, 1
      %s343 = scalar_lea.vmem %s9, %s342
      %p344 = scmp.lt.s32.totalorder %s21, 1
      %s345 = scalar_select %p344, %s21, 1
      %s346 = smul.addr %s345, 2
      %s347 = smul.addr %s346, 4
      %s348 = scalar_lea.vmem %s0, %s347
      %p349 = scmp.lt.s32.totalorder %s21, 1
      %s350 = scalar_select %p349, %s21, 1
      %s351 = smul.addr %s350, 2
      %s352 = smul.addr %s351, 4
      %s353 = scalar_lea.vmem %s1, %s352
      %p354 = scmp.lt.s32.totalorder %s21, 1
      %s355 = scalar_select %p354, %s21, 1
      %s356 = smul.addr %s355, 2
      %s357 = smul.addr %s356, 4
      %s358 = scalar_lea.vmem %s8, %s357
      %p359 = scmp.lt.s32.totalorder %s21, 1
      %s360 = scalar_select %p359, %s21, 1
      %s361 = scalar_lea.vmem %s9, %s360
      %v363 = vld [vmem:[%s348] sm:$0xf]
      %v364 = vld [vmem:[%s348 + $0x4] sm:$0xf]
      %v365 = vunpack.c.l.bf16 %v363
      %v366 = vunpack.c.l.bf16 %v364
      %v367 = vld [vmem:[%s353] sm:$0xf]
      %v368 = vld [vmem:[%s353 + $0x4] sm:$0xf]
      %v369 = vunpack.c.l.bf16 %v367
      %v370 = vunpack.c.l.bf16 %v368
      %v371 = vadd.f32 %v365, %v369
      %v372 = vadd.f32 %v366, %v370
      %v373 = vpack.c.bf16 %v372, %v371
      %v374 = vld [vmem:[%s4] sm:$0xf]
      %v375 = vld [vmem:[%s4 + $0x4] sm:$0xf]
      %v376 = vld [vmem:[%s4 + $0x8] sm:$0xf]
      %v377 = vld [vmem:[%s4 + $0xc] sm:$0xf]
      %v378 = vld [vmem:[%s5] sm:$0x1]
      %v380 = vlaneseq
      %v381 = vshrl.u32 %v380, 7
      %v382 = vsub.s32 0, %v381
      %v383 = vrot.slane %v378, %v382
      %v389 = vunpack.c.l.b16 %v374
      %v390 = vunpack.c.l.b16 %v375
      %v391 = vunpack.c.l.b16 %v376
      %v392 = vunpack.c.l.b16 %v377
      %v393 = vpack.c.b16 %v390, %v389
      %v394 = vpack.c.b16 %v392, %v391
      %vm397 = vcmask 261120
      %v399 = vsel %vm397, %v373, 0
      %401 = vmatprep.subr.bf16.mxu0 0
      %402 = vmatpush1.bf16.msra.mxu0 %v393
      %403 = vmatprep.subr.bf16.mxu0 0
      %404 = vmatpush1.bf16.msra.mxu0 %v394
      %405 = vmatprep.subr.bf16.mxu0 0
      %406 = vmatpush1.bf16.msra.mxu0 0
      %407 = vmatprep.subr.bf16.mxu0 0
      %408 = vmatpush1.bf16.msra.mxu0 0
      %409 = vmatprep.subr.bf16.mxu0 0
      %410 = vmatpush1.bf16.msra.mxu0 0
      %411 = vmatprep.subr.bf16.mxu0 0
      %412 = vmatpush1.bf16.msra.mxu0 0
      %413 = vmatprep.subr.bf16.mxu0 0
      %414 = vmatpush1.bf16.msra.mxu0 0
      %415 = vmatprep.subr.bf16.mxu0 0
      %416 = vmatpush1.bf16.msra.mxu0 0
      %417 = vmatprep.subr.bf16.mxu0 0
      %418 = vmatpush1.bf16.msra.mxu0 0
      %419 = vmatprep.subr.bf16.mxu0 0
      %420 = vmatpush1.bf16.msra.mxu0 0
      %421 = vmatprep.subr.bf16.mxu0 0
      %422 = vmatpush1.bf16.msra.mxu0 0
      %423 = vmatprep.subr.bf16.mxu0 0
      %424 = vmatpush1.bf16.msra.mxu0 0
      %425 = vmatprep.subr.bf16.mxu0 0
      %426 = vmatpush1.bf16.msra.mxu0 0
      %427 = vmatprep.subr.bf16.mxu0 0
      %428 = vmatpush1.bf16.msra.mxu0 0
      %429 = vmatprep.subr.bf16.mxu0 0
      %430 = vmatpush1.bf16.msra.mxu0 0
      %431 = vmatprep.subr.bf16.mxu0 0
      %432 = vmatpush1.bf16.msra.mxu0 0
      %433 = vmatprep.mubr.bf16.mxu0 0
      %434 = vmatmul.mubr.bf16.gmra.mrb[0].mxu0 %v399
      %v435 = vpop.f32.mrb[0].mxu0
      %v436 = vadd.f32 %v383, %v435
      %v437 = vpop.f32.mrb[0].mxu0
      %v438 = vpop.f32.mrb[0].mxu0
      %v439 = vadd.f32 %v383, %v438
      %v440 = vpop.f32.mrb[0].mxu0
      %441 = vdwg.mxu0
      %v442 = vld [vmem:[%s2] sm:$0x1]
      %v444 = vlaneseq
      %v445 = vshrl.u32 %v444, 7
      %v446 = vsub.s32 0, %v445
      %v447 = vrot.slane %v442, %v446
      %v449 = vmul.f32 %v436, %v447
      %v450 = vmul.f32 %v439, %v447
      %v451 = vld [vmem:[%s3] sm:$0x1]
      %v453 = vlaneseq
      %v454 = vshrl.u32 %v453, 7
      %v455 = vsub.s32 0, %v454
      %v456 = vrot.slane %v451, %v455
      %v458 = vadd.f32 %v449, %v456
      %v459 = vadd.f32 %v450, %v456
      %v460 = vmax.f32 %v458, 0.0
      %v461 = vmax.f32 %v459, 0.0
      %v462 = vpack.c.bf16 %v461, %v460
      %v463 = vld [vmem:[%s6] sm:$0xf]
      %v464 = vld [vmem:[%s7] sm:$0x1]
      %v466 = vlaneseq
      %v467 = vshrl.u32 %v466, 7
      %v468 = vsub.s32 0, %v467
      %v469 = vrot.slane %v464, %v468
      %vm471 = vcmask 64512
      %v473 = vsel %vm471, %v462, 0
      %vm475 = vcmask 1043456
      %v477 = vsel %vm475, %v463, 0
      %479 = vmatprep.subr.bf16.mxu0 0
      %480 = vmatpush1.bf16.msra.mxu0 %v477
      %481 = vmatprep.subr.bf16.mxu0 0
      %482 = vmatpush1.bf16.msra.mxu0 0
      %483 = vmatprep.subr.bf16.mxu0 0
      %484 = vmatpush1.bf16.msra.mxu0 0
      %485 = vmatprep.subr.bf16.mxu0 0
      %486 = vmatpush1.bf16.msra.mxu0 0
      %487 = vmatprep.subr.bf16.mxu0 0
      %488 = vmatpush1.bf16.msra.mxu0 0
      %489 = vmatprep.subr.bf16.mxu0 0
      %490 = vmatpush1.bf16.msra.mxu0 0
      %491 = vmatprep.subr.bf16.mxu0 0
      %492 = vmatpush1.bf16.msra.mxu0 0
      %493 = vmatprep.subr.bf16.mxu0 0
      %494 = vmatpush1.bf16.msra.mxu0 0
      %495 = vmatprep.subr.bf16.mxu0 0
      %496 = vmatpush1.bf16.msra.mxu0 0
      %497 = vmatprep.subr.bf16.mxu0 0
      %498 = vmatpush1.bf16.msra.mxu0 0
      %499 = vmatprep.subr.bf16.mxu0 0
      %500 = vmatpush1.bf16.msra.mxu0 0
      %501 = vmatprep.subr.bf16.mxu0 0
      %502 = vmatpush1.bf16.msra.mxu0 0
      %503 = vmatprep.subr.bf16.mxu0 0
      %504 = vmatpush1.bf16.msra.mxu0 0
      %505 = vmatprep.subr.bf16.mxu0 0
      %506 = vmatpush1.bf16.msra.mxu0 0
      %507 = vmatprep.subr.bf16.mxu0 0
      %508 = vmatpush1.bf16.msra.mxu0 0
      %509 = vmatprep.subr.bf16.mxu0 0
      %510 = vmatpush1.bf16.msra.mxu0 0
      %511 = vmatprep.mubr.bf16.mxu0 0
      %512 = vmatmul.mubr.bf16.gmra.mrb[0].mxu0 %v473
      %v513 = vpop.f32.mrb[0].mxu0
      %v514 = vadd.f32 %v469, %v513
      %v515 = vpop.f32.mrb[0].mxu0
      %v516 = vpop.f32.mrb[0].mxu0
      %v517 = vadd.f32 %v469, %v516
      %v518 = vpop.f32.mrb[0].mxu0
      %519 = vdwg.mxu0
      %v520 = vpack.c.bf16 %v517, %v514
      %v522 = vunpack.c.l.b16 %v520
      %v523 = vunpack.c.h.b16 %v520
      %v524 = vpack.c.b16 %v522, %v522
      %v525 = vpack.c.b16 %v523, %v523
      %vm528 = vcmask 257024
      %529 = vst.msk [vmem:[%s358] sm:$0xf] %vm528, %v524
      %530 = vst.msk [vmem:[%s358 + $0x4] sm:$0xf] %vm528, %v525
      %v531 = vsel %vm397, %v514, 0.0
      %v532 = vsel %vm397, %v517, 0.0
      %v533 = vadd.f32 %v531, %v532
      %v534 = vrot.slane %v533, 4
      %v535 = vadd.f32 %v533, %v534
      %v536 = vrot.slane %v535, 2
      %v537 = vadd.f32 %v535, %v536
      %v538 = vrot.slane %v537, 1
      %v539 = vadd.f32 %v537, %v538
      %v540 = vmul.f32 %v514, %v514
      %v541 = vmul.f32 %v517, %v517
      %v542 = vsel %vm397, %v540, 0.0
      %v543 = vsel %vm397, %v541, 0.0
      %v544 = vadd.f32 %v542, %v543
      %v545 = vrot.slane %v544, 4
      %v546 = vadd.f32 %v544, %v545
      %v547 = vrot.slane %v546, 2
      %v548 = vadd.f32 %v546, %v547
      %v549 = vrot.slane %v548, 1
      %v550 = vadd.f32 %v548, %v549
      %552 = vrot.lane.b32.xlu0 %v550, 32
      %v553 = vpop.permute.xlu0 %552
      %v555 = vsel %vm397, %v539, %v553
      %vm556 = vcmask 516096
      %557 = vst.msk [vmem:[%s361] sm:$0x1] %vm556, %v555
      %p558 = scmp.lt.s32.totalorder %s21, 1
      %s559 = scalar_select %p558, %s21, 1
      %s560 = smul.addr %s559, 2
      %s561 = smul.addr %s560, 4
      %s562 = scalar_lea.vmem %s8, %s561
      %p563 = scmp.lt.s32.totalorder %s21, 1
      %s564 = scalar_select %p563, %s21, 1
      %s565 = scalar_lea.vmem %s9, %s564
      // Predicated region
      $region53: #{gca_forward.12} parent=51 // pred_check
        %p566 = pneg %p217
      $region54: #{gca_forward.12} parent=51 // pred_check_branch
        %568 = sbr.rel (%p566) target = $region56
      $region55: #{gca_forward.12} parent=51 // pred_region
        _
      $region56: #{gca_forward.12} parent=51 // pred_fallthru
        _
      // Predicated region
      $region57: #{gca_forward.12} parent=51 // pred_check
        %p569 = pneg %p243
      $region58: #{gca_forward.12} parent=51 // pred_check_branch
        %571 = sbr.rel (%p569) target = $region60
      $region59: #{gca_forward.12} parent=51 // pred_region
        _
      $region60: #{gca_forward.12} parent=51 // pred_fallthru
        _
    $region52: #{gca_forward.12} parent=5 // pred_fallthru
      _
    %p572 = scmp.le.s32.totalorder 2, %s16
    // Predicated region
    $region61: #{gca_forward.12} parent=5 // pred_check
      %p573 = pneg %p572
    $region62: #{gca_forward.12} parent=5 // pred_check_branch
      %575 = sbr.rel (%p573) target = $region64
    $region63: #{gca_forward.12} parent=5 // pred_region
      %s576 = ssub.s32 %s16, 2
      // Predicated region
      $region65: #{gca_forward.12} parent=63 // pred_check
        %p577 = pneg %p223
      $region66: #{gca_forward.12} parent=63 // pred_check_branch
        %579 = sbr.rel (%p577) target = $region68
      $region67: #{gca_forward.12} parent=63 // pred_region
        %p580 = scmp.lt.s32.totalorder %s22, 1
        %s581 = scalar_select %p580, %s22, 1
        %s582 = smul.addr %s581, 2
        %s583 = smul.addr %s582, 4
        %s584 = scalar_lea.vmem %s8, %s583
      $region68: #{gca_forward.12} parent=63 // pred_fallthru
        _
      // Predicated region
      $region69: #{gca_forward.12} parent=63 // pred_check
        %p585 = pneg %p249
      $region70: #{gca_forward.12} parent=63 // pred_check_branch
        %587 = sbr.rel (%p585) target = $region72
      $region71: #{gca_forward.12} parent=63 // pred_region
        %p588 = scmp.lt.s32.totalorder %s22, 1
        %s589 = scalar_select %p588, %s22, 1
        %s590 = scalar_lea.vmem %s9, %s589
      $region72: #{gca_forward.12} parent=63 // pred_fallthru
        _
    $region64: #{gca_forward.12} parent=5 // pred_fallthru
      _
  $region6: #{gca_forward.12} parent=0 // loop_footer
    %s20 = sadd.s32 1, %s16
  $region7: #{gca_forward.12} parent=0 // loop_footer_branch
    %15 = sbr.rel target = $region3
  $region8: #{gca_forward.12} parent=0 // loop_exit
    _

// kernel: gca_forward.13
$region0: #{gca_forward.13}
  #allocation0 [shape = 'u32[]', space=smem, size = 0x4, offset = 0x4, fixed_abs, tag = 'smem constant byte address 0x4 - core index']
  #allocation1 [shape = 'u32[144,128]{1,0:T(1,128)}', space=vmem, size = 0x12000, scoped, tag = 'internal scratch']
  %s0 = inlined_call_operand.vmem [shape: bf16[2,16,32], index: 0, kind: input, shape index: {}]
  %s1 = inlined_call_operand.vmem [shape: bf16[2,16,32], index: 1, kind: input, shape index: {}]
  %s2 = inlined_call_operand.vmem [shape: bf16[2,16,32], index: 2, kind: input, shape index: {}]
  %s3 = inlined_call_operand.vmem [shape: f32[2,1,32], index: 3, kind: input, shape index: {}]
  %s4 = inlined_call_operand.vmem [shape: f32[1,32], index: 4, kind: input, shape index: {}]
  %s5 = inlined_call_operand.vmem [shape: f32[1,32], index: 5, kind: input, shape index: {}]
  %s6 = inlined_call_operand.hbm [shape: f32[2,16,32], index: 6, kind: output, shape index: {}]
  %s7 = sld [smem:[#allocation0]]
  $region57: #{gca_forward.13} parent=0
    _
  %s9 = ssub.s32 1, %s7
  %s10 = scalar_select 0, %s9, %s7
  $region1: #{gca_forward.13} parent=0
    #allocation2 [shape = 'u8[16384]{0}', space=vmem, size = 0x4000, scoped, tag = 'output window, operand 0']
    #allocation3 [shape = 's32[2]{0}', space=sflag, size = 0x8, scoped, tag = 'scoped memory for gca_forward.13']
    %11 = vsyncpa [#allocation3], 0
    %s12 = scalar_lea.sflag [#allocation3], 1
    %13 = vsyncpa %s12, 0
    loop: start=0, step=1, limit=4
    $region2: #{gca_forward.13} parent=1 // loop_pre_header
      _
    $region3: #{gca_forward.13} parent=1 // loop_header
      %s15 = sphi 0, %s19
      %p16 = scmp.ge.s32.totalorder %s15, 4
      %s25 = sphi 0, %s27
      %s28 = sphi 0, %s25
      %s29 = sphi 0, %s28
      %s45 = sphi 0, %s29
      %s51 = sphi 0, %s53
      %s54 = sphi 0, %s51
      %s55 = sphi 0, %s54
      %s71 = sphi 0, %s55
      %s77 = sphi 0, %s79
      %s80 = sphi 0, %s77
      %s81 = sphi 0, %s80
      %s97 = sphi 0, %s81
      %s103 = sphi 0, %s105
      %s106 = sphi 0, %s103
      %s107 = sphi 0, %s106
      %s123 = sphi 0, %s107
      %s127 = sphi 0, %s127
      %s129 = sphi 0, %s127
      %s130 = sphi 0, %s129
      %s144 = sphi 0, %s130
      %s148 = sphi 0, %s148
      %s150 = sphi 0, %s148
      %s151 = sphi 0, %s150
      %s165 = sphi 0, %s151
      %s171 = sphi 0, %s173
      %s174 = sphi 0, %s171
      %s175 = sphi 0, %s174
      %s191 = sphi 0, %s175
    $region4: #{gca_forward.13} parent=1 // loop_header_branch
      %18 = sbr.rel (%p16) target = $region8
    $region5: #{gca_forward.13} parent=1 // loop_body
      %s20 = ssub.s32 %s15, 1
      %s21 = ssub.s32 %s15, 2
      %s22 = sadd.s32 %s15, 1
      %s23 = ssub.s32 %s15, %s22
      %p24 = scmp.eq.s32.totalorder %s23, 0
      %s26 = sadd.s32 %s25, 1
      %s27 = scalar_select %p24, %s25, %s26
      %p30 = pneg %p24
      %p31 = scmp.eq.s32.totalorder %s15, 1
      %p32 = por %p30, %p31
      %p33 = scmp.ne.s32.totalorder %s25, %s28
      %p34 = scmp.eq.s32.totalorder %s15, 0
      %p35 = por %p33, %p34
      %p36 = scmp.ne.s32.totalorder %s25, %s28
      %p37 = scmp.eq.s32.totalorder %s20, 1
      %p38 = por %p36, %p37
      %p39 = scmp.ne.s32.totalorder %s28, %s29
      %p40 = scmp.eq.s32.totalorder %s20, 0
      %p41 = por %p39, %p40
      %p42 = scmp.ne.s32.totalorder %s28, %s29
      %p43 = scmp.eq.s32.totalorder %s21, 1
      %p44 = por %p42, %p43
      %p46 = scmp.ne.s32.totalorder %s29, %s45
      %p47 = scmp.eq.s32.totalorder %s21, 0
      %p48 = por %p46, %p47
      %s49 = ssub.s32 %s15, %s22
      %p50 = scmp.eq.s32.totalorder %s49, 0
      %s52 = sadd.s32 %s51, 1
      %s53 = scalar_select %p50, %s51, %s52
      %p56 = pneg %p50
      %p57 = scmp.eq.s32.totalorder %s15, 1
      %p58 = por %p56, %p57
      %p59 = scmp.ne.s32.totalorder %s51, %s54
      %p60 = scmp.eq.s32.totalorder %s15, 0
      %p61 = por %p59, %p60
      %p62 = scmp.ne.s32.totalorder %s51, %s54
      %p63 = scmp.eq.s32.totalorder %s20, 1
      %p64 = por %p62, %p63
      %p65 = scmp.ne.s32.totalorder %s54, %s55
      %p66 = scmp.eq.s32.totalorder %s20, 0
      %p67 = por %p65, %p66
      %p68 = scmp.ne.s32.totalorder %s54, %s55
      %p69 = scmp.eq.s32.totalorder %s21, 1
      %p70 = por %p68, %p69
      %p72 = scmp.ne.s32.totalorder %s55, %s71
      %p73 = scmp.eq.s32.totalorder %s21, 0
      %p74 = por %p72, %p73
      %s75 = ssub.s32 %s15, %s22
      %p76 = scmp.eq.s32.totalorder %s75, 0
      %s78 = sadd.s32 %s77, 1
      %s79 = scalar_select %p76, %s77, %s78
      %p82 = pneg %p76
      %p83 = scmp.eq.s32.totalorder %s15, 1
      %p84 = por %p82, %p83
      %p85 = scmp.ne.s32.totalorder %s77, %s80
      %p86 = scmp.eq.s32.totalorder %s15, 0
      %p87 = por %p85, %p86
      %p88 = scmp.ne.s32.totalorder %s77, %s80
      %p89 = scmp.eq.s32.totalorder %s20, 1
      %p90 = por %p88, %p89
      %p91 = scmp.ne.s32.totalorder %s80, %s81
      %p92 = scmp.eq.s32.totalorder %s20, 0
      %p93 = por %p91, %p92
      %p94 = scmp.ne.s32.totalorder %s80, %s81
      %p95 = scmp.eq.s32.totalorder %s21, 1
      %p96 = por %p94, %p95
      %p98 = scmp.ne.s32.totalorder %s81, %s97
      %p99 = scmp.eq.s32.totalorder %s21, 0
      %p100 = por %p98, %p99
      %s101 = ssub.s32 %s15, %s22
      %p102 = scmp.eq.s32.totalorder %s101, 0
      %s104 = sadd.s32 %s103, 1
      %s105 = scalar_select %p102, %s103, %s104
      %p108 = pneg %p102
      %p109 = scmp.eq.s32.totalorder %s15, 1
      %p110 = por %p108, %p109
      %p111 = scmp.ne.s32.totalorder %s103, %s106
      %p112 = scmp.eq.s32.totalorder %s15, 0
      %p113 = por %p111, %p112
      %p114 = scmp.ne.s32.totalorder %s103, %s106
      %p115 = scmp.eq.s32.totalorder %s20, 1
      %p116 = por %p114, %p115
      %p117 = scmp.ne.s32.totalorder %s106, %s107
      %p118 = scmp.eq.s32.totalorder %s20, 0
      %p119 = por %p117, %p118
      %p120 = scmp.ne.s32.totalorder %s106, %s107
      %p121 = scmp.eq.s32.totalorder %s21, 1
      %p122 = por %p120, %p121
      %p124 = scmp.ne.s32.totalorder %s107, %s123
      %p125 = scmp.eq.s32.totalorder %s21, 0
      %p126 = por %p124, %p125
      %s128 = sadd.s32 %s127, 1
      %p131 = scmp.eq.s32.totalorder %s15, 1
      %p132 = scmp.ne.s32.totalorder %s127, %s129
      %p133 = scmp.eq.s32.totalorder %s15, 0
      %p134 = por %p132, %p133
      %p135 = scmp.ne.s32.totalorder %s127, %s129
      %p136 = scmp.eq.s32.totalorder %s20, 1
      %p137 = por %p135, %p136
      %p138 = scmp.ne.s32.totalorder %s129, %s130
      %p139 = scmp.eq.s32.totalorder %s20, 0
      %p140 = por %p138, %p139
      %p141 = scmp.ne.s32.totalorder %s129, %s130
      %p142 = scmp.eq.s32.totalorder %s21, 1
      %p143 = por %p141, %p142
      %p145 = scmp.ne.s32.totalorder %s130, %s144
      %p146 = scmp.eq.s32.totalorder %s21, 0
      %p147 = por %p145, %p146
      %s149 = sadd.s32 %s148, 1
      %p152 = scmp.eq.s32.totalorder %s15, 1
      %p153 = scmp.ne.s32.totalorder %s148, %s150
      %p154 = scmp.eq.s32.totalorder %s15, 0
      %p155 = por %p153, %p154
      %p156 = scmp.ne.s32.totalorder %s148, %s150
      %p157 = scmp.eq.s32.totalorder %s20, 1
      %p158 = por %p156, %p157
      %p159 = scmp.ne.s32.totalorder %s150, %s151
      %p160 = scmp.eq.s32.totalorder %s20, 0
      %p161 = por %p159, %p160
      %p162 = scmp.ne.s32.totalorder %s150, %s151
      %p163 = scmp.eq.s32.totalorder %s21, 1
      %p164 = por %p162, %p163
      %p166 = scmp.ne.s32.totalorder %s151, %s165
      %p167 = scmp.eq.s32.totalorder %s21, 0
      %p168 = por %p166, %p167
      %s169 = ssub.s32 %s15, %s22
      %p170 = scmp.eq.s32.totalorder %s169, 0
      %s172 = sadd.s32 %s171, 1
      %s173 = scalar_select %p170, %s171, %s172
      %p176 = pneg %p170
      %p177 = scmp.eq.s32.totalorder %s15, 1
      %p178 = por %p176, %p177
      %p179 = scmp.ne.s32.totalorder %s171, %s174
      %p180 = scmp.eq.s32.totalorder %s15, 0
      %p181 = por %p179, %p180
      %p182 = scmp.ne.s32.totalorder %s171, %s174
      %p183 = scmp.eq.s32.totalorder %s20, 1
      %p184 = por %p182, %p183
      %p185 = scmp.ne.s32.totalorder %s174, %s175
      %p186 = scmp.eq.s32.totalorder %s20, 0
      %p187 = por %p185, %p186
      %p188 = scmp.ne.s32.totalorder %s174, %s175
      %p189 = scmp.eq.s32.totalorder %s21, 1
      %p190 = por %p188, %p189
      %p192 = scmp.ne.s32.totalorder %s175, %s191
      %p193 = scmp.eq.s32.totalorder %s21, 0
      %p194 = por %p192, %p193
      %p195 = scmp.le.s32.totalorder 1, %s15
      %p196 = scmp.lt.s32.totalorder %s15, 3
      %p197 = pnand %p195, %p196
      %p198 = pneg %p197
      // Predicated region
      $region9: #{gca_forward.13} parent=5 // pred_check
        _
      $region10: #{gca_forward.13} parent=5 // pred_check_branch
        %200 = sbr.rel (%p197) target = $region12
      $region11: #{gca_forward.13} parent=5 // pred_region
        %s201 = ssub.s32 %s15, 1
        // Predicated region
        $region13: #{gca_forward.13} parent=11 // pred_check
          %p202 = pneg %p140
        $region14: #{gca_forward.13} parent=11 // pred_check_branch
          %204 = sbr.rel (%p202) target = $region16
        $region15: #{gca_forward.13} parent=11 // pred_region
          _
        $region16: #{gca_forward.13} parent=11 // pred_fallthru
          _
        // Predicated region
        $region17: #{gca_forward.13} parent=11 // pred_check
          %p205 = pneg %p161
        $region18: #{gca_forward.13} parent=11 // pred_check_branch
          %207 = sbr.rel (%p205) target = $region20
        $region19: #{gca_forward.13} parent=11 // pred_region
          _
        $region20: #{gca_forward.13} parent=11 // pred_fallthru
          _
      $region12: #{gca_forward.13} parent=5 // pred_fallthru
        _
      %p208 = scmp.lt.s32.totalorder %s15, 2
      // Predicated region
      $region21: #{gca_forward.13} parent=5 // pred_check
        %p209 = pneg %p208
      $region22: #{gca_forward.13} parent=5 // pred_check_branch
        %211 = sbr.rel (%p209) target = $region24
      $region23: #{gca_forward.13} parent=5 // pred_region
        // Predicated region
        $region25: #{gca_forward.13} parent=23 // pred_check
          %p212 = pneg %p35
        $region26: #{gca_forward.13} parent=23 // pred_check_branch
          %214 = sbr.rel (%p212) target = $region28
        $region27: #{gca_forward.13} parent=23 // pred_region
          %p215 = scmp.lt.s32.totalorder %s15, 1
          %s216 = scalar_select %p215, %s15, 1
          %s217 = smul.addr %s216, 2
          %s218 = smul.addr %s217, 4
          %s219 = scalar_lea.vmem %s0, %s218
        $region28: #{gca_forward.13} parent=23 // pred_fallthru
          _
        // Predicated region
        $region29: #{gca_forward.13} parent=23 // pred_check
          %p220 = pneg %p61
        $region30: #{gca_forward.13} parent=23 // pred_check_branch
          %222 = sbr.rel (%p220) target = $region32
        $region31: #{gca_forward.13} parent=23 // pred_region
          %p223 = scmp.lt.s32.totalorder %s15, 1
          %s224 = scalar_select %p223, %s15, 1
          %s225 = smul.addr %s224, 2
          %s226 = smul.addr %s225, 4
          %s227 = scalar_lea.vmem %s1, %s226
        $region32: #{gca_forward.13} parent=23 // pred_fallthru
          _
        // Predicated region
        $region33: #{gca_forward.13} parent=23 // pred_check
          %p228 = pneg %p87
        $region34: #{gca_forward.13} parent=23 // pred_check_branch
          %230 = sbr.rel (%p228) target = $region36
        $region35: #{gca_forward.13} parent=23 // pred_region
          %p231 = scmp.lt.s32.totalorder %s15, 1
          %s232 = scalar_select %p231, %s15, 1
          %s233 = smul.addr %s232, 2
          %s234 = smul.addr %s233, 4
          %s235 = scalar_lea.vmem %s2, %s234
        $region36: #{gca_forward.13} parent=23 // pred_fallthru
          _
        // Predicated region
        $region37: #{gca_forward.13} parent=23 // pred_check
          %p236 = pneg %p113
        $region38: #{gca_forward.13} parent=23 // pred_check_branch
          %238 = sbr.rel (%p236) target = $region40
        $region39: #{gca_forward.13} parent=23 // pred_region
          %p239 = scmp.lt.s32.totalorder %s15, 1
          %s240 = scalar_select %p239, %s15, 1
          %s241 = scalar_lea.vmem %s3, %s240
        $region40: #{gca_forward.13} parent=23 // pred_fallthru
          _
      $region24: #{gca_forward.13} parent=5 // pred_fallthru
        _
      %p242 = scmp.le.s32.totalorder 1, %s15
      %p243 = scmp.lt.s32.totalorder %s15, 3
      %p244 = pnand %p242, %p243
      %p245 = pneg %p244
      // Predicated region
      $region41: #{gca_forward.13} parent=5 // pred_check
        _
      $region42: #{gca_forward.13} parent=5 // pred_check_branch
        %247 = sbr.rel (%p244) target = $region44
      $region43: #{gca_forward.13} parent=5 // pred_region
        %s248 = ssub.s32 %s15, 1
        %p249 = scmp.lt.s32.totalorder %s20, 1
        %s250 = scalar_select %p249, %s20, 1
        %s251 = smul.addr %s250, 2
        %s252 = smul.addr %s251, 4
        %s253 = scalar_lea.vmem %s0, %s252
        %p254 = pneg %p41
        %p255 = pneg %p38
        %p256 = scmp.lt.s32.totalorder %s20, 1
        %s257 = scalar_select %p256, %s20, 1
        %s258 = smul.addr %s257, 2
        %s259 = smul.addr %s258, 4
        %s260 = scalar_lea.vmem %s1, %s259
        %p261 = pneg %p67
        %p262 = pneg %p64
        %p263 = scmp.lt.s32.totalorder %s20, 1
        %s264 = scalar_select %p263, %s20, 1
        %s265 = smul.addr %s264, 2
        %s266 = smul.addr %s265, 4
        %s267 = scalar_lea.vmem %s2, %s266
        %p268 = pneg %p93
        %p269 = pneg %p90
        %p270 = scmp.lt.s32.totalorder %s20, 1
        %s271 = scalar_select %p270, %s20, 1
        %s272 = scalar_lea.vmem %s3, %s271
        %p273 = pneg %p119
        %p274 = pneg %p116
        %p275 = pneg %p140
        %p276 = pneg %p137
        %p277 = pneg %p161
        %p278 = pneg %p158
        %p279 = pneg %p187
        %p280 = pneg %p184
        %s281 = sand.u32 %s174, 1
        %s282 = scalar_lea.sflag [#allocation3], %s281
        %s283 = sand.u32 %s174, 1
        %s284 = smul.addr %s283, 16
        %s285 = scalar_lea.vmem [#allocation2], %s284
        %p286 = scmp.lt.s32.totalorder %s20, 1
        %s287 = scalar_select %p286, %s20, 1
        %s288 = smul.addr %s287, 2
        %s289 = smul.addr %s288, 4
        %s290 = scalar_lea.vmem %s0, %s289
        %p291 = scmp.lt.s32.totalorder %s20, 1
        %s292 = scalar_select %p291, %s20, 1
        %s293 = smul.addr %s292, 2
        %s294 = smul.addr %s293, 4
        %s295 = scalar_lea.vmem %s1, %s294
        %p296 = scmp.lt.s32.totalorder %s20, 1
        %s297 = scalar_select %p296, %s20, 1
        %s298 = smul.addr %s297, 2
        %s299 = smul.addr %s298, 4
        %s300 = scalar_lea.vmem %s2, %s299
        %p301 = scmp.lt.s32.totalorder %s20, 1
        %s302 = scalar_select %p301, %s20, 1
        %s303 = scalar_lea.vmem %s3, %s302
        %v304 = vld [vmem:[%s290] sm:$0xf]
        %v305 = vld [vmem:[%s290 + $0x4] sm:$0xf]
        %v306 = vunpack.c.l.bf16 %v304
        %v307 = vunpack.c.l.bf16 %v305
        %v308 = vld [vmem:[%s295] sm:$0xf]
        %v309 = vld [vmem:[%s295 + $0x4] sm:$0xf]
        %v310 = vunpack.c.l.bf16 %v308
        %v311 = vunpack.c.l.bf16 %v309
        %v312 = vld [vmem:[%s300] sm:$0xf]
        %v313 = vld [vmem:[%s300 + $0x4] sm:$0xf]
        %v314 = vunpack.c.l.bf16 %v312
        %v315 = vunpack.c.l.bf16 %v313
        %v316 = vld [vmem:[%s4] sm:$0x1]
        %v318 = vlaneseq
        %v319 = vshrl.u32 %v318, 7
        %v320 = vsub.s32 0, %v319
        %v321 = vrot.slane %v316, %v320
        %v323 = vmul.f32 %v314, %v321
        %v324 = vmul.f32 %v315, %v321
        %v325 = vld [vmem:[%s5] sm:$0x1]
        %v327 = vlaneseq
        %v328 = vshrl.u32 %v327, 7
        %v329 = vsub.s32 0, %v328
        %v330 = vrot.slane %v325, %v329
        %v332 = vadd.f32 %v323, %v330
        %v333 = vadd.f32 %v324, %v330
        %v334 = vld [vmem:[%s303] sm:$0x1]
        %v336 = vlaneseq
        %v337 = vshrl.u32 %v336, 7
        %v338 = vsub.s32 0, %v337
        %v339 = vrot.slane %v334, %v338
        %v341 = vadd.f32 %v332, %v339
        %v342 = vadd.f32 %v333, %v339
        %v343 = vxor.u32 %v341, 2147483648
        %v344 = vxor.u32 %v342, 2147483648
        %v345 = vmul.f32 %v343, 1.442695
        %v346 = vpow.pop %v345
        %v347 = vmul.f32 %v344, 1.442695
        %v348 = vpow.pop %v347
        %v349 = vadd.f32 %v346, 1.0
        %v350 = vadd.f32 %v348, 1.0
        %v351 = vrcp.pop %v349
        %v352 = vmul.f32 1.0, %v351
        %v353 = vrcp.pop %v350
        %v354 = vmul.f32 1.0, %v353
        %v355 = vmul.f32 %v306, 2.0
        %v356 = vmul.f32 %v307, 2.0
        %v357 = vmul.f32 %v355, %v352
        %v358 = vmul.f32 %v356, %v354
        %v359 = vmul.f32 %v310, 2.0
        %v360 = vmul.f32 %v311, 2.0
        %v361 = vsub.f32 1.0, %v352
        %v362 = vsub.f32 1.0, %v354
        %v363 = vmul.f32 %v359, %v361
        %v364 = vmul.f32 %v360, %v362
        %v365 = vadd.f32 %v357, %v363
        %v366 = vadd.f32 %v358, %v364
        %vm367 = vcmask 261120
        %368 = vst.msk [vmem:[%s285] sm:$0xff] %vm367, %v365
        %369 = vst.msk [vmem:[%s285 + $0x8] sm:$0xff] %vm367, %v366
        %s370 = sand.u32 %s174, 1
        %s371 = scalar_lea.sflag [#allocation3], %s370
        %s372 = sand.u32 %s174, 1
        %s373 = smul.addr %s372, 16
        %s374 = scalar_lea.vmem [#allocation2], %s373
        // Predicated region
        $region45: #{gca_forward.13} parent=43 // pred_check
          %p375 = pneg %p184
        $region46: #{gca_forward.13} parent=43 // pred_check_branch
          %377 = sbr.rel (%p375) target = $region48
        $region47: #{gca_forward.13} parent=43 // pred_region
          %s379 = ssub.s32 256, 256
          %380 = vsyncadd %s371, %s379
          %s381 = smul.addr %s20, 2
          %s382 = smul.addr %s381, 128
          %s383 = scalar_lea.hbm %s6, %s382
          %s384 = sshll.u32 %s374, 4
          %s385 = int_to_ptr.vmem [resolvable:$true] %s384
          %390 = dma.vmem_to_hbm [thread:$0]  %s385, 256, %s383, %s371, 128, 128, 8
        $region48: #{gca_forward.13} parent=43 // pred_fallthru
          _
      $region44: #{gca_forward.13} parent=5 // pred_fallthru
        _
      %p391 = scmp.le.s32.totalorder 2, %s15
      // Predicated region
      $region49: #{gca_forward.13} parent=5 // pred_check
        %p392 = pneg %p391
      $region50: #{gca_forward.13} parent=5 // pred_check_branch
        %394 = sbr.rel (%p392) target = $region52
      $region51: #{gca_forward.13} parent=5 // pred_region
        %s395 = ssub.s32 %s15, 2
        // Predicated region
        $region53: #{gca_forward.13} parent=51 // pred_check
          %p396 = pneg %p190
        $region54: #{gca_forward.13} parent=51 // pred_check_branch
          %398 = sbr.rel (%p396) target = $region56
        $region55: #{gca_forward.13} parent=51 // pred_region
          %s399 = sand.u32 %s175, 1
          %s400 = scalar_lea.sflag [#allocation3], %s399
          %s401 = sand.u32 %s175, 1
          %s402 = smul.addr %s401, 16
          %s403 = scalar_lea.vmem [#allocation2], %s402
          %404 = dma.done %s400, 256
        $region56: #{gca_forward.13} parent=51 // pred_fallthru
          _
      $region52: #{gca_forward.13} parent=5 // pred_fallthru
        _
    $region6: #{gca_forward.13} parent=1 // loop_footer
      %s19 = sadd.s32 1, %s15
    $region7: #{gca_forward.13} parent=1 // loop_footer_branch
      %14 = sbr.rel target = $region3
    $region8: #{gca_forward.13} parent=1 // loop_exit
      _
    %405 = vsyncpa [#allocation3], 1
    %s406 = scalar_lea.sflag [#allocation3], 1
    %407 = vsyncpa %s406, 1

// kernel: gca_forward.11
$region0: #{gca_forward.11}
  #allocation0 [shape = 'u32[]', space=smem, size = 0x4, offset = 0x4, fixed_abs, tag = 'smem constant byte address 0x4 - core index']
  #allocation1 [shape = 'u32[144,128]{1,0:T(1,128)}', space=vmem, size = 0x12000, scoped, tag = 'internal scratch']
  %s0 = inlined_call_operand.vmem [shape: f32[2,32], index: 0, kind: input, shape index: {}]
  %s1 = inlined_call_operand.vmem [shape: bf16[32,8], index: 1, kind: input, shape index: {}]
  %s2 = inlined_call_operand.vmem [shape: f32[1,8], index: 2, kind: input, shape index: {}]
  %s3 = inlined_call_operand.vmem [shape: f32[1,8], index: 3, kind: input, shape index: {}]
  %s4 = inlined_call_operand.vmem [shape: f32[1,8], index: 4, kind: input, shape index: {}]
  %s5 = inlined_call_operand.vmem [shape: bf16[8,32], index: 5, kind: input, shape index: {}]
  %s6 = inlined_call_operand.vmem [shape: f32[1,32], index: 6, kind: input, shape index: {}]
  %s7 = inlined_call_operand.vmem [shape: f32[1,32], index: 7, kind: input, shape index: {}]
  %s8 = inlined_call_operand.vmem [shape: f32[1,32], index: 8, kind: input, shape index: {}]
  %s9 = inlined_call_operand.vmem [shape: f32[2,32], index: 9, kind: output, shape index: {}]
  %s10 = sld [smem:[#allocation0]]
  $region46: #{gca_forward.11} parent=0
    _
  %s12 = ssub.s32 1, %s10
  %s13 = scalar_select 0, %s12, %s10
  // Predicated region
  $region2: #{gca_forward.11} parent=0 // pred_check
    _
  $region3: #{gca_forward.11} parent=0 // pred_check_branch
    %15 = sbr.rel (0) target = $region5
  $region4: #{gca_forward.11} parent=0 // pred_region
    _
  $region5: #{gca_forward.11} parent=0 // pred_fallthru
    _
  // Predicated region
  $region6: #{gca_forward.11} parent=0 // pred_check
    _
  $region7: #{gca_forward.11} parent=0 // pred_check_branch
    %17 = sbr.rel (0) target = $region9
  $region8: #{gca_forward.11} parent=0 // pred_region
    _
  $region9: #{gca_forward.11} parent=0 // pred_fallthru
    _
  // Predicated region
  $region10: #{gca_forward.11} parent=0 // pred_check
    _
  $region11: #{gca_forward.11} parent=0 // pred_check_branch
    %19 = sbr.rel (0) target = $region13
  $region12: #{gca_forward.11} parent=0 // pred_region
    _
  $region13: #{gca_forward.11} parent=0 // pred_fallthru
    _
  // Predicated region
  $region14: #{gca_forward.11} parent=0 // pred_check
    _
  $region15: #{gca_forward.11} parent=0 // pred_check_branch
    %21 = sbr.rel (0) target = $region17
  $region16: #{gca_forward.11} parent=0 // pred_region
    _
  $region17: #{gca_forward.11} parent=0 // pred_fallthru
    _
  // Predicated region
  $region18: #{gca_forward.11} parent=0 // pred_check
    _
  $region19: #{gca_forward.11} parent=0 // pred_check_branch
    %23 = sbr.rel (0) target = $region21
  $region20: #{gca_forward.11} parent=0 // pred_region
    _
  $region21: #{gca_forward.11} parent=0 // pred_fallthru
    _
  // Predicated region
  $region22: #{gca_forward.11} parent=0 // pred_check
    _
  $region23: #{gca_forward.11} parent=0 // pred_check_branch
    %25 = sbr.rel (0) target = $region25
  $region24: #{gca_forward.11} parent=0 // pred_region
    _
  $region25: #{gca_forward.11} parent=0 // pred_fallthru
    _
  // Predicated region
  $region26: #{gca_forward.11} parent=0 // pred_check
    _
  $region27: #{gca_forward.11} parent=0 // pred_check_branch
    %27 = sbr.rel (0) target = $region29
  $region28: #{gca_forward.11} parent=0 // pred_region
    _
  $region29: #{gca_forward.11} parent=0 // pred_fallthru
    _
  // Predicated region
  $region30: #{gca_forward.11} parent=0 // pred_check
    _
  $region31: #{gca_forward.11} parent=0 // pred_check_branch
    %29 = sbr.rel (0) target = $region33
  $region32: #{gca_forward.11} parent=0 // pred_region
    _
  $region33: #{gca_forward.11} parent=0 // pred_fallthru
    _
  // Predicated region
  $region34: #{gca_forward.11} parent=0 // pred_check
    _
  $region35: #{gca_forward.11} parent=0 // pred_check_branch
    %31 = sbr.rel (0) target = $region37
  $region36: #{gca_forward.11} parent=0 // pred_region
    _
  $region37: #{gca_forward.11} parent=0 // pred_fallthru
    _
  %v33 = vld [vmem:[%s0] sm:$0x3]
  %v34 = vpack.c.bf16 %v33, %v33
  %v35 = vld [vmem:[%s1] sm:$0xf]
  %v36 = vld [vmem:[%s1 + $0x4] sm:$0xf]
  %v37 = vld [vmem:[%s1 + $0x8] sm:$0xf]
  %v38 = vld [vmem:[%s1 + $0xc] sm:$0xf]
  %v39 = vld [vmem:[%s2] sm:$0x1]
  %v41 = vlaneseq
  %v42 = vshrl.u32 %v41, 7
  %v43 = vsub.s32 0, %v42
  %v44 = vrot.slane %v39, %v43
  %v50 = vunpack.c.l.b16 %v35
  %v51 = vunpack.c.l.b16 %v36
  %v52 = vunpack.c.l.b16 %v37
  %v53 = vunpack.c.l.b16 %v38
  %v54 = vpack.c.b16 %v51, %v50
  %v55 = vpack.c.b16 %v53, %v52
  %vm58 = vcmask 261120
  %v60 = vsel %vm58, %v34, 0
  %62 = vmatprep.subr.bf16.mxu0 0
  %63 = vmatpush1.bf16.msra.mxu0 %v54
  %64 = vmatprep.subr.bf16.mxu0 0
  %65 = vmatpush1.bf16.msra.mxu0 %v55
  %66 = vmatprep.subr.bf16.mxu0 0
  %67 = vmatpush1.bf16.msra.mxu0 0
  %68 = vmatprep.subr.bf16.mxu0 0
  %69 = vmatpush1.bf16.msra.mxu0 0
  %70 = vmatprep.subr.bf16.mxu0 0
  %71 = vmatpush1.bf16.msra.mxu0 0
  %72 = vmatprep.subr.bf16.mxu0 0
  %73 = vmatpush1.bf16.msra.mxu0 0
  %74 = vmatprep.subr.bf16.mxu0 0
  %75 = vmatpush1.bf16.msra.mxu0 0
  %76 = vmatprep.subr.bf16.mxu0 0
  %77 = vmatpush1.bf16.msra.mxu0 0
  %78 = vmatprep.subr.bf16.mxu0 0
  %79 = vmatpush1.bf16.msra.mxu0 0
  %80 = vmatprep.subr.bf16.mxu0 0
  %81 = vmatpush1.bf16.msra.mxu0 0
  %82 = vmatprep.subr.bf16.mxu0 0
  %83 = vmatpush1.bf16.msra.mxu0 0
  %84 = vmatprep.subr.bf16.mxu0 0
  %85 = vmatpush1.bf16.msra.mxu0 0
  %86 = vmatprep.subr.bf16.mxu0 0
  %87 = vmatpush1.bf16.msra.mxu0 0
  %88 = vmatprep.subr.bf16.mxu0 0
  %89 = vmatpush1.bf16.msra.mxu0 0
  %90 = vmatprep.subr.bf16.mxu0 0
  %91 = vmatpush1.bf16.msra.mxu0 0
  %92 = vmatprep.subr.bf16.mxu0 0
  %93 = vmatpush1.bf16.msra.mxu0 0
  %94 = vmatprep.mubr.bf16.mxu0 0
  %95 = vmatmul.mubr.bf16.gmra.mrb[0].mxu0 %v60
  %v96 = vpop.f32.mrb[0].mxu0
  %v97 = vadd.f32 %v44, %v96
  %v98 = vpop.f32.mrb[0].mxu0
  %v99 = vpop.f32.mrb[0].mxu0
  %v100 = vpop.f32.mrb[0].mxu0
  %101 = vdwg.mxu0
  %vm102 = vcmask 58368
  %v103 = vsel %vm102, %v97, 0.0
  %v104 = vrot.slane %v103, 4
  %v105 = vadd.f32 %v103, %v104
  %v106 = vrot.slane %v105, 2
  %v107 = vadd.f32 %v105, %v106
  %v108 = vrot.slane %v107, 1
  %v109 = vadd.f32 %v107, %v108
  %v110 = vrcp.pop 2.0
  %v111 = vmul.f32 %v109, %v110
  %v112 = vmul.f32 %v97, %v97
  %v113 = vsel %vm102, %v112, 0.0
  %v114 = vrot.slane %v113, 4
  %v115 = vadd.f32 %v113, %v114
  %v116 = vrot.slane %v115, 2
  %v117 = vadd.f32 %v115, %v116
  %v118 = vrot.slane %v117, 1
  %v119 = vadd.f32 %v117, %v118
  %v120 = vmul.f32 %v119, %v110
  %v121 = vmul.f32 %v111, %v111
  %v122 = vsub.f32 %v120, %v121
  %v123 = vmax.f32 %v122, 0.0
  %v124 = vsub.f32 %v97, %v111
  %v125 = vadd.f32 %v123, 1e-05
  %v126 = vrsqrt.pop %v125
  %v127 = vmul.f32 %v124, %v126
  %v128 = vld [vmem:[%s3] sm:$0x1]
  %v130 = vlaneseq
  %v131 = vshrl.u32 %v130, 7
  %v132 = vsub.s32 0, %v131
  %v133 = vrot.slane %v128, %v132
  %v135 = vmul.f32 %v127, %v133
  %v136 = vld [vmem:[%s4] sm:$0x1]
  %v138 = vlaneseq
  %v139 = vshrl.u32 %v138, 7
  %v140 = vsub.s32 0, %v139
  %v141 = vrot.slane %v136, %v140
  %v143 = vadd.f32 %v135, %v141
  %v144 = vmax.f32 %v143, 0.0
  %v145 = vpack.c.bf16 %v144, %v144
  %v146 = vld [vmem:[%s5] sm:$0xf]
  %v147 = vld [vmem:[%s6] sm:$0x1]
  %v149 = vlaneseq
  %v150 = vshrl.u32 %v149, 7
  %v151 = vsub.s32 0, %v150
  %v152 = vrot.slane %v147, %v151
  %vm154 = vcmask 64512
  %v156 = vsel %vm154, %v145, 0
  %vm158 = vcmask 1043456
  %v160 = vsel %vm158, %v146, 0
  %162 = vmatprep.subr.bf16.mxu0 0
  %163 = vmatpush1.bf16.msra.mxu0 %v160
  %164 = vmatprep.subr.bf16.mxu0 0
  %165 = vmatpush1.bf16.msra.mxu0 0
  %166 = vmatprep.subr.bf16.mxu0 0
  %167 = vmatpush1.bf16.msra.mxu0 0
  %168 = vmatprep.subr.bf16.mxu0 0
  %169 = vmatpush1.bf16.msra.mxu0 0
  %170 = vmatprep.subr.bf16.mxu0 0
  %171 = vmatpush1.bf16.msra.mxu0 0
  %172 = vmatprep.subr.bf16.mxu0 0
  %173 = vmatpush1.bf16.msra.mxu0 0
  %174 = vmatprep.subr.bf16.mxu0 0
  %175 = vmatpush1.bf16.msra.mxu0 0
  %176 = vmatprep.subr.bf16.mxu0 0
  %177 = vmatpush1.bf16.msra.mxu0 0
  %178 = vmatprep.subr.bf16.mxu0 0
  %179 = vmatpush1.bf16.msra.mxu0 0
  %180 = vmatprep.subr.bf16.mxu0 0
  %181 = vmatpush1.bf16.msra.mxu0 0
  %182 = vmatprep.subr.bf16.mxu0 0
  %183 = vmatpush1.bf16.msra.mxu0 0
  %184 = vmatprep.subr.bf16.mxu0 0
  %185 = vmatpush1.bf16.msra.mxu0 0
  %186 = vmatprep.subr.bf16.mxu0 0
  %187 = vmatpush1.bf16.msra.mxu0 0
  %188 = vmatprep.subr.bf16.mxu0 0
  %189 = vmatpush1.bf16.msra.mxu0 0
  %190 = vmatprep.subr.bf16.mxu0 0
  %191 = vmatpush1.bf16.msra.mxu0 0
  %192 = vmatprep.subr.bf16.mxu0 0
  %193 = vmatpush1.bf16.msra.mxu0 0
  %194 = vmatprep.mubr.bf16.mxu0 0
  %195 = vmatmul.mubr.bf16.gmra.mrb[0].mxu0 %v156
  %v196 = vpop.f32.mrb[0].mxu0
  %v197 = vadd.f32 %v152, %v196
  %v198 = vpop.f32.mrb[0].mxu0
  %v199 = vpop.f32.mrb[0].mxu0
  %v200 = vpop.f32.mrb[0].mxu0
  %201 = vdwg.mxu0
  %vm202 = vcmask 254976
  %v203 = vsel %vm202, %v197, 0.0
  %v204 = vrot.slane %v203, 4
  %v205 = vadd.f32 %v203, %v204
  %v206 = vrot.slane %v205, 2
  %v207 = vadd.f32 %v205, %v206
  %v208 = vrot.slane %v207, 1
  %v209 = vadd.f32 %v207, %v208
  %v210 = vmul.f32 %v209, %v110
  %v211 = vmul.f32 %v197, %v197
  %v212 = vsel %vm202, %v211, 0.0
  %v213 = vrot.slane %v212, 4
  %v214 = vadd.f32 %v212, %v213
  %v215 = vrot.slane %v214, 2
  %v216 = vadd.f32 %v214, %v215
  %v217 = vrot.slane %v216, 1
  %v218 = vadd.f32 %v216, %v217
  %v219 = vmul.f32 %v218, %v110
  %v220 = vmul.f32 %v210, %v210
  %v221 = vsub.f32 %v219, %v220
  %v222 = vmax.f32 %v221, 0.0
  %v223 = vsub.f32 %v197, %v210
  %v224 = vadd.f32 %v222, 1e-05
  %v225 = vrsqrt.pop %v224
  %v226 = vmul.f32 %v223, %v225
  %v227 = vld [vmem:[%s7] sm:$0x1]
  %v229 = vlaneseq
  %v230 = vshrl.u32 %v229, 7
  %v231 = vsub.s32 0, %v230
  %v232 = vrot.slane %v227, %v231
  %v234 = vmul.f32 %v226, %v232
  %v235 = vld [vmem:[%s8] sm:$0x1]
  %v237 = vlaneseq
  %v238 = vshrl.u32 %v237, 7
  %v239 = vsub.s32 0, %v238
  %v240 = vrot.slane %v235, %v239
  %v242 = vadd.f32 %v234, %v240
  %243 = vst.msk [vmem:[%s9] sm:$0x3] %vm202, %v242
  // Predicated region
  $region38: #{gca_forward.11} parent=0 // pred_check
    _
  $region39: #{gca_forward.11} parent=0 // pred_check_branch
    %245 = sbr.rel (0) target = $region41
  $region40: #{gca_forward.11} parent=0 // pred_region
    _
  $region41: #{gca_forward.11} parent=0 // pred_fallthru
    _
  // Predicated region
  $region42: #{gca_forward.11} parent=0 // pred_check
    _
  $region43: #{gca_forward.11} parent=0 // pred_check_branch
    %247 = sbr.rel (0) target = $region45
  $region44: #{gca_forward.11} parent=0 // pred_region
    _
  $region45: #{gca_forward.11} parent=0 // pred_fallthru
    _

</llo_original>
